<compile_context>
chip_gen: v7x
topology: tpu7x:2x2x1
jax: 0.10.0
libtpu: 0.0.40
codegen_flags: <defaults>
</compile_context>

<pallas_src>
import jax
import jax.numpy as jnp
from jax.experimental import pallas as pl
from jax.experimental.pallas import tpu as pltpu

# Match reference matmul precision to the kernel's f32 MXU matmuls.
jax.config.update("jax_default_matmul_precision", "highest")

N = 16              # number of nodes
IN_CH = 4           # in_channels
HID = 8             # hidden_channels (per-head dim of gat1)
HEADS = 8
GAT_OUT = 16        # gat_out_channels (per-head dim of gat2)
MLP_HID = 64
OUT_CLASSES = 2
NEG_SLOPE = 0.2     # PyG GATConv default leaky_relu slope

LANES = N * HEADS   # 128; attention lane layout: lane = j*HEADS + h (source node j, head h)
MASK_NEG = -1e30


def _leaky(x):
    return jnp.where(x > 0, x, NEG_SLOPE * x)


def gat_mlp_kernel(xm_ref, pw_ref, rrep_ref, out_ref):
    """xm_ref  [6, 16, 128]: 0:x(pad) 1:mask_bias 2:jmask 3:b1 4:bm1_eff 5:bm2  (broadcast-ready)
       pw_ref  [11,128,128]: 0:w1 1:adrep1 2:asrep1 3:w2 4:adrep2 5:asrep2
                             6:SUMT 7:HMASK1 8:HMASK2 9:wm1_eff 10:wm2          (zero-padded)
       rrep_ref[128, 16]   : row-replication matrix rrep[r, j] = (r // HEADS == j)
       out_ref [16, 128]   : logits in lanes [:OUT_CLASSES], remaining lanes zero."""
    f32 = jnp.float32
    x     = xm_ref[0]
    mbias = xm_ref[1]              # 0 where edge j->i (incl. self loop), -1e30 otherwise
    jmask = xm_ref[2]              # jmask[i, j*H+h] = (j == i)
    rrep  = rrep_ref[...]
    sumT  = pw_ref[6]              # sumT[l, l'] = (l % HEADS == l' % HEADS)

    def attention(h_all, adrep, asrep):
        # h_all [16,128]: per-node features, lane = h*C + c (concat layout).
        # Returns normalized attention [16,128], lane = j*HEADS + h (softmax over sources j).
        dst = jnp.dot(h_all, adrep, preferred_element_type=f32)   # a_dst[i,h] at every (j,h) lane
        tmp = jnp.dot(h_all, asrep, preferred_element_type=f32)   # a_src[i,h] at every (j,h) lane
        src = jnp.sum(tmp * jmask, axis=0, keepdims=True)         # [1,128]: a_src[j,h] at lane j*H+h
        smx = jnp.max(tmp, axis=0, keepdims=True)                 # [1,128]: max_j a_src[.,h] per head
        e = _leaky(dst + src)                                     # raw logits
        shift = _leaky(dst + smx)                                 # per-(i,h) upper bound on e
        p = jnp.exp(e - shift + mbias)                            # masked lanes underflow to exactly 0
        den = jnp.maximum(jnp.dot(p, sumT, preferred_element_type=f32), 1e-20)
        return p * pl.reciprocal(den, approx=True)

    def aggregate(attn, h_all, hmask):
        # One-matmul value aggregation via block-diagonal value matrix (rrep @ h_all) * hmask.
        bd = jnp.dot(rrep, h_all, preferred_element_type=f32) * hmask   # [128,128]
        return jnp.dot(attn, bd, preferred_element_type=f32)            # [16,128]

    # ---- GAT layer 1 (8 heads x 8 ch, concat=True) + ReLU ----
    h1 = jnp.dot(x, pw_ref[0], preferred_element_type=f32)              # [16,128] (cols >= 64 zero)
    attn1 = attention(h1, pw_ref[1], pw_ref[2])
    g = jnp.maximum(aggregate(attn1, h1, pw_ref[7]) + xm_ref[3], 0.0)   # + b1, ReLU

    # ---- GAT layer 2 (8 heads x 16 ch, concat=False) ----
    h2 = jnp.dot(g, pw_ref[3], preferred_element_type=f32)              # [16,128]
    attn2 = attention(h2, pw_ref[4], pw_ref[5])
    agg2 = aggregate(attn2, h2, pw_ref[8])                              # per-head outputs [16,128]

    # ---- MLP (gat2 head-mean, gat2 bias and 1/heads folded into wm1_eff / bm1_eff) ----
    z = jnp.maximum(jnp.dot(agg2, pw_ref[9], preferred_element_type=f32) + xm_ref[4], 0.0)
    out_ref[...] = jnp.dot(z, pw_ref[10], preferred_element_type=f32) + xm_ref[5]


def _pad2d(a, rows, cols):
    out = jnp.zeros((rows, cols), jnp.float32)
    return out.at[: a.shape[0], : a.shape[1]].set(a)


def _att_rep(att, c):
    """[HEADS, c] -> [HEADS*c, 128] with rep[h*c+k, j*HEADS+h'] = att[h,k] * (h == h')."""
    blk = att[:, :, None] * jnp.eye(HEADS, dtype=jnp.float32)[:, None, :]   # [H, c, H]
    return jnp.tile(blk.reshape(HEADS * c, HEADS), (1, N))                  # [H*c, 128]


def gat_with_mlp(x, adj, p):
    """x [N, IN_CH]; adj [N, N] dense 0/1 with self-loops (adj[i, j] = 1 iff edge j -> i)."""
    f32 = jnp.float32
    lane = jnp.arange(LANES)

    # --- per-node slab: data, masks, broadcast-ready biases -> [6, 16, 128] ---
    mask_bias = jnp.repeat(jnp.where(adj > 0, 0.0, MASK_NEG).astype(f32), HEADS, axis=1)
    jmask = (lane[None, :] // HEADS == jnp.arange(N)[:, None]).astype(f32)
    bm1_eff = p["b2"] @ p["wm1"] + p["bm1"]                    # gat2 bias folded into MLP bias
    xm = jnp.stack([
        _pad2d(x, N, LANES),
        mask_bias,
        jmask,
        jnp.broadcast_to(_pad2d(p["b1"], 1, LANES), (N, LANES)),
        jnp.broadcast_to(_pad2d(bm1_eff, 1, LANES), (N, LANES)),
        jnp.broadcast_to(_pad2d(p["bm2"], 1, LANES), (N, LANES)),
    ])

    # --- weight / constant slab -> [11, 128, 128] (all zero-padded to full lanes) ---
    sumT = (lane[:, None] % HEADS == lane[None, :] % HEADS).astype(f32)
    hmask1 = (lane[:, None] % HEADS == lane[None, :] // HID).astype(f32)      # 0 for cols >= 64
    hmask2 = (lane[:, None] % HEADS == lane[None, :] // GAT_OUT).astype(f32)
    wm1_eff = jnp.tile(p["wm1"], (HEADS, 1)) / HEADS           # head-mean folded into MLP weight
    pw = jnp.stack([
        _pad2d(p["w1"], LANES, LANES),
        _pad2d(_att_rep(p["ad1"], HID), LANES, LANES),
        _pad2d(_att_rep(p["as1"], HID), LANES, LANES),
        _pad2d(p["w2"], LANES, LANES),
        _att_rep(p["ad2"], GAT_OUT),
        _att_rep(p["as2"], GAT_OUT),
        sumT,
        hmask1,
        hmask2,
        _pad2d(wm1_eff, LANES, LANES),
        _pad2d(p["wm2"], LANES, LANES),
    ])

    rrep = (lane[:, None] // HEADS == jnp.arange(N)[None, :]).astype(f32)     # [128, 16]

    vspec = pl.BlockSpec(memory_space=pltpu.MemorySpace.VMEM)
    out = pl.pallas_call(
        gat_mlp_kernel,
        out_shape=jax.ShapeDtypeStruct((N, LANES), jnp.float32),
        in_specs=[vspec, vspec, vspec],
        out_specs=vspec,
    )(xm, pw, rrep)
    # TODO(synk): for a batch of graphs, add grid=(B,) with dimension_semantics=("parallel",)
    # so both v7x TensorCores are used, and emit one lane-dense [B*N, 128] output slab.
    return out[:, :OUT_CLASSES]


def gat_with_mlp_ref(x, adj, p):
    """Pure-JAX dense reference with identical math (for the correctness check)."""
    mask = adj > 0.0

    def layer(x, W, a_s, a_d, b, heads, out_c, concat):
        h_all = x @ W
        outs = []
        for hd in range(heads):
            h = h_all[:, hd * out_c:(hd + 1) * out_c]
            alpha_src = h @ a_s[hd]
            alpha_dst = h @ a_d[hd]
            e = alpha_dst[:, None] + alpha_src[None, :]
            e = jnp.where(e > 0, e, NEG_SLOPE * e)
            e = jnp.where(mask, e, -1e30)
            e = e - jnp.max(e, axis=1, keepdims=True)
            pp = jnp.where(mask, jnp.exp(e), 0.0)
            attn = pp / jnp.sum(pp, axis=1, keepdims=True)
            outs.append(attn @ h)
        out = jnp.concatenate(outs, axis=1) if concat else sum(outs) / heads
        return out + b

    h1 = jax.nn.relu(layer(x, p["w1"], p["as1"], p["ad1"], p["b1"], HEADS, HID, True))
    h2 = layer(h1, p["w2"], p["as2"], p["ad2"], p["b2"], HEADS, GAT_OUT, False)
    z = jax.nn.relu(h2 @ p["wm1"] + p["bm1"])
    return z @ p["wm2"] + p["bm2"]


if __name__ == "__main__":
    key = jax.random.PRNGKey(0)
    ks = jax.random.split(key, 16)

    x = jax.random.normal(ks[0], (N, IN_CH), jnp.float32)

    # Deterministic graph: bidirectional ring + a few chords; self-loops added
    # (PyG GATConv add_self_loops=True default; they keep every softmax denominator > 0).
    src, dst = [], []
    for i in range(N):
        src += [i, (i + 1) % N]
        dst += [(i + 1) % N, i]
    for i in range(0, N, 4):
        src.append(i)
        dst.append((i + 5) % N)
    src = jnp.array(src, jnp.int32)
    dst = jnp.array(dst, jnp.int32)
    adj = jnp.zeros((N, N), jnp.float32).at[dst, src].set(1.0)
    adj = jnp.maximum(adj, jnp.eye(N, dtype=jnp.float32))

    def init(k, shape, scale=0.2):
        return scale * jax.random.normal(k, shape, jnp.float32)

    params = dict(
        w1=init(ks[1], (IN_CH, HEADS * HID)),
        as1=init(ks[2], (HEADS, HID)),
        ad1=init(ks[3], (HEADS, HID)),
        b1=init(ks[4], (1, HEADS * HID)),
        w2=init(ks[5], (HEADS * HID, HEADS * GAT_OUT)),
        as2=init(ks[6], (HEADS, GAT_OUT)),
        ad2=init(ks[7], (HEADS, GAT_OUT)),
        b2=init(ks[8], (1, GAT_OUT)),
        wm1=init(ks[9], (GAT_OUT, MLP_HID)),
        bm1=init(ks[10], (1, MLP_HID)),
        wm2=init(ks[11], (MLP_HID, OUT_CLASSES)),
        bm2=init(ks[12], (1, OUT_CLASSES)),
    )

    out = jax.block_until_ready(gat_with_mlp(x, adj, params))
    ref = jax.block_until_ready(gat_with_mlp_ref(x, adj, params))
    assert out.shape == (N, OUT_CLASSES)
    assert jnp.allclose(out, ref, rtol=1e-3, atol=1e-3), (out, ref)
    print("KERNEL_OK")
</pallas_src>

<mosaic_0001>
module attributes {stable_mosaic.version = 11 : i64} {
  func.func @gat_mlp_kernel(%arg0: memref<6x16x128xf32, #tpu.memory_space<vmem>>, %arg1: memref<11x128x128xf32, #tpu.memory_space<vmem>>, %arg2: memref<128x16xf32, #tpu.memory_space<vmem>>, %arg3: memref<16x128xf32, #tpu.memory_space<vmem>>) attributes {dimension_semantics = [], scalar_prefetch = 0 : i64, scratch_operands = 0 : i64, tpu.core_type = #tpu.core_type<tc>} {
    %c0 = arith.constant 0 : index
    %c0_0 = arith.constant 0 : index
    %c0_1 = arith.constant 0 : index
    %0 = vector.load %arg0[%c0, %c0_0, %c0_1] : memref<6x16x128xf32, #tpu.memory_space<vmem>>, vector<1x16x128xf32>
    %1 = vector.shape_cast %0 : vector<1x16x128xf32> to vector<16x128xf32>
    %c1 = arith.constant 1 : index
    %c0_2 = arith.constant 0 : index
    %c0_3 = arith.constant 0 : index
    %2 = vector.load %arg0[%c1, %c0_2, %c0_3] : memref<6x16x128xf32, #tpu.memory_space<vmem>>, vector<1x16x128xf32>
    %3 = vector.shape_cast %2 : vector<1x16x128xf32> to vector<16x128xf32>
    %c2 = arith.constant 2 : index
    %c0_4 = arith.constant 0 : index
    %c0_5 = arith.constant 0 : index
    %4 = vector.load %arg0[%c2, %c0_4, %c0_5] : memref<6x16x128xf32, #tpu.memory_space<vmem>>, vector<1x16x128xf32>
    %5 = vector.shape_cast %4 : vector<1x16x128xf32> to vector<16x128xf32>
    %c0_6 = arith.constant 0 : index
    %c0_7 = arith.constant 0 : index
    %6 = vector.load %arg2[%c0_6, %c0_7] : memref<128x16xf32, #tpu.memory_space<vmem>>, vector<128x16xf32>
    %c6 = arith.constant 6 : index
    %c0_8 = arith.constant 0 : index
    %c0_9 = arith.constant 0 : index
    %7 = vector.load %arg1[%c6, %c0_8, %c0_9] : memref<11x128x128xf32, #tpu.memory_space<vmem>>, vector<1x128x128xf32>
    %8 = vector.shape_cast %7 : vector<1x128x128xf32> to vector<128x128xf32>
    %c0_10 = arith.constant 0 : index
    %c0_11 = arith.constant 0 : index
    %c0_12 = arith.constant 0 : index
    %9 = vector.load %arg1[%c0_10, %c0_11, %c0_12] : memref<11x128x128xf32, #tpu.memory_space<vmem>>, vector<1x128x128xf32>
    %10 = vector.shape_cast %9 : vector<1x128x128xf32> to vector<128x128xf32>
    %cst = arith.constant dense<0.000000e+00> : vector<16x128xf32>
    %11 = tpu.matmul %1, %10, %cst {dimension_numbers = #tpu.dot_dimension_numbers<[1], [0], [0], [1], [0, 0, 1, 1], [], []>, precision = #tpu.contract_precision<fp32>} : vector<16x128xf32>, vector<128x128xf32>, vector<16x128xf32> -> vector<16x128xf32>
    %c1_13 = arith.constant 1 : index
    %c0_14 = arith.constant 0 : index
    %c0_15 = arith.constant 0 : index
    %12 = vector.load %arg1[%c1_13, %c0_14, %c0_15] : memref<11x128x128xf32, #tpu.memory_space<vmem>>, vector<1x128x128xf32>
    %13 = vector.shape_cast %12 : vector<1x128x128xf32> to vector<128x128xf32>
    %c2_16 = arith.constant 2 : index
    %c0_17 = arith.constant 0 : index
    %c0_18 = arith.constant 0 : index
    %14 = vector.load %arg1[%c2_16, %c0_17, %c0_18] : memref<11x128x128xf32, #tpu.memory_space<vmem>>, vector<1x128x128xf32>
    %15 = vector.shape_cast %14 : vector<1x128x128xf32> to vector<128x128xf32>
    %cst_19 = arith.constant dense<0.000000e+00> : vector<16x128xf32>
    %16 = tpu.matmul %11, %13, %cst_19 {dimension_numbers = #tpu.dot_dimension_numbers<[1], [0], [0], [1], [0, 0, 1, 1], [], []>, precision = #tpu.contract_precision<fp32>} : vector<16x128xf32>, vector<128x128xf32>, vector<16x128xf32> -> vector<16x128xf32>
    %cst_20 = arith.constant dense<0.000000e+00> : vector<16x128xf32>
    %17 = tpu.matmul %11, %15, %cst_20 {dimension_numbers = #tpu.dot_dimension_numbers<[1], [0], [0], [1], [0, 0, 1, 1], [], []>, precision = #tpu.contract_precision<fp32>} : vector<16x128xf32>, vector<128x128xf32>, vector<16x128xf32> -> vector<16x128xf32>
    %18 = arith.mulf %17, %5 : vector<16x128xf32>
    %cst_21 = arith.constant dense<0.000000e+00> : vector<128xf32>
    %19 = vector.multi_reduction <add>, %18, %cst_21 [0] : vector<16x128xf32> to vector<128xf32>
    %20 = vector.shape_cast %19 : vector<128xf32> to vector<1x128xf32>
    %cst_22 = arith.constant dense<0xFF800000> : vector<128xf32>
    %21 = vector.multi_reduction <maximumf>, %17, %cst_22 [0] : vector<16x128xf32> to vector<128xf32>
    %22 = vector.shape_cast %21 : vector<128xf32> to vector<1x128xf32>
    %23 = vector.broadcast %20 : vector<1x128xf32> to vector<16x128xf32>
    %24 = arith.addf %16, %23 : vector<16x128xf32>
    %cst_23 = arith.constant 0.000000e+00 : f32
    %25 = vector.broadcast %cst_23 : f32 to vector<16x128xf32>
    %26 = arith.cmpf ogt, %24, %25 : vector<16x128xf32>
    %cst_24 = arith.constant 2.000000e-01 : f32
    %27 = vector.broadcast %cst_24 : f32 to vector<16x128xf32>
    %28 = arith.mulf %27, %24 : vector<16x128xf32>
    %29 = arith.select %26, %24, %28 : vector<16x128xi1>, vector<16x128xf32>
    %30 = vector.broadcast %22 : vector<1x128xf32> to vector<16x128xf32>
    %31 = arith.addf %16, %30 : vector<16x128xf32>
    %cst_25 = arith.constant 0.000000e+00 : f32
    %32 = vector.broadcast %cst_25 : f32 to vector<16x128xf32>
    %33 = arith.cmpf ogt, %31, %32 : vector<16x128xf32>
    %cst_26 = arith.constant 2.000000e-01 : f32
    %34 = vector.broadcast %cst_26 : f32 to vector<16x128xf32>
    %35 = arith.mulf %34, %31 : vector<16x128xf32>
    %36 = arith.select %33, %31, %35 : vector<16x128xi1>, vector<16x128xf32>
    %37 = arith.subf %29, %36 : vector<16x128xf32>
    %38 = arith.addf %37, %3 : vector<16x128xf32>
    %39 = math.exp %38 : vector<16x128xf32>
    %cst_27 = arith.constant dense<0.000000e+00> : vector<16x128xf32>
    %40 = tpu.matmul %39, %8, %cst_27 {dimension_numbers = #tpu.dot_dimension_numbers<[1], [0], [0], [1], [0, 0, 1, 1], [], []>, precision = #tpu.contract_precision<fp32>} : vector<16x128xf32>, vector<128x128xf32>, vector<16x128xf32> -> vector<16x128xf32>
    %cst_28 = arith.constant 9.99999968E-21 : f32
    %41 = vector.broadcast %cst_28 : f32 to vector<16x128xf32>
    %42 = arith.maximumf %40, %41 : vector<16x128xf32>
    %43 = tpu.reciprocal %42 {approx = true} : vector<16x128xf32> -> vector<16x128xf32>
    %44 = arith.mulf %39, %43 : vector<16x128xf32>
    %c7 = arith.constant 7 : index
    %c0_29 = arith.constant 0 : index
    %c0_30 = arith.constant 0 : index
    %45 = vector.load %arg1[%c7, %c0_29, %c0_30] : memref<11x128x128xf32, #tpu.memory_space<vmem>>, vector<1x128x128xf32>
    %46 = vector.shape_cast %45 : vector<1x128x128xf32> to vector<128x128xf32>
    %cst_31 = arith.constant dense<0.000000e+00> : vector<128x128xf32>
    %47 = tpu.matmul %6, %11, %cst_31 {dimension_numbers = #tpu.dot_dimension_numbers<[1], [0], [0], [1], [0, 0, 1, 1], [], []>, precision = #tpu.contract_precision<fp32>} : vector<128x16xf32>, vector<16x128xf32>, vector<128x128xf32> -> vector<128x128xf32>
    %48 = arith.mulf %47, %46 : vector<128x128xf32>
    %cst_32 = arith.constant dense<0.000000e+00> : vector<16x128xf32>
    %49 = tpu.matmul %44, %48, %cst_32 {dimension_numbers = #tpu.dot_dimension_numbers<[1], [0], [0], [1], [0, 0, 1, 1], [], []>, precision = #tpu.contract_precision<fp32>} : vector<16x128xf32>, vector<128x128xf32>, vector<16x128xf32> -> vector<16x128xf32>
    %c3 = arith.constant 3 : index
    %c0_33 = arith.constant 0 : index
    %c0_34 = arith.constant 0 : index
    %50 = vector.load %arg0[%c3, %c0_33, %c0_34] : memref<6x16x128xf32, #tpu.memory_space<vmem>>, vector<1x16x128xf32>
    %51 = vector.shape_cast %50 : vector<1x16x128xf32> to vector<16x128xf32>
    %52 = arith.addf %49, %51 : vector<16x128xf32>
    %cst_35 = arith.constant 0.000000e+00 : f32
    %53 = vector.broadcast %cst_35 : f32 to vector<16x128xf32>
    %54 = arith.maximumf %52, %53 : vector<16x128xf32>
    %c3_36 = arith.constant 3 : index
    %c0_37 = arith.constant 0 : index
    %c0_38 = arith.constant 0 : index
    %55 = vector.load %arg1[%c3_36, %c0_37, %c0_38] : memref<11x128x128xf32, #tpu.memory_space<vmem>>, vector<1x128x128xf32>
    %56 = vector.shape_cast %55 : vector<1x128x128xf32> to vector<128x128xf32>
    %cst_39 = arith.constant dense<0.000000e+00> : vector<16x128xf32>
    %57 = tpu.matmul %54, %56, %cst_39 {dimension_numbers = #tpu.dot_dimension_numbers<[1], [0], [0], [1], [0, 0, 1, 1], [], []>, precision = #tpu.contract_precision<fp32>} : vector<16x128xf32>, vector<128x128xf32>, vector<16x128xf32> -> vector<16x128xf32>
    %c4 = arith.constant 4 : index
    %c0_40 = arith.constant 0 : index
    %c0_41 = arith.constant 0 : index
    %58 = vector.load %arg1[%c4, %c0_40, %c0_41] : memref<11x128x128xf32, #tpu.memory_space<vmem>>, vector<1x128x128xf32>
    %59 = vector.shape_cast %58 : vector<1x128x128xf32> to vector<128x128xf32>
    %c5 = arith.constant 5 : index
    %c0_42 = arith.constant 0 : index
    %c0_43 = arith.constant 0 : index
    %60 = vector.load %arg1[%c5, %c0_42, %c0_43] : memref<11x128x128xf32, #tpu.memory_space<vmem>>, vector<1x128x128xf32>
    %61 = vector.shape_cast %60 : vector<1x128x128xf32> to vector<128x128xf32>
    %cst_44 = arith.constant dense<0.000000e+00> : vector<16x128xf32>
    %62 = tpu.matmul %57, %59, %cst_44 {dimension_numbers = #tpu.dot_dimension_numbers<[1], [0], [0], [1], [0, 0, 1, 1], [], []>, precision = #tpu.contract_precision<fp32>} : vector<16x128xf32>, vector<128x128xf32>, vector<16x128xf32> -> vector<16x128xf32>
    %cst_45 = arith.constant dense<0.000000e+00> : vector<16x128xf32>
    %63 = tpu.matmul %57, %61, %cst_45 {dimension_numbers = #tpu.dot_dimension_numbers<[1], [0], [0], [1], [0, 0, 1, 1], [], []>, precision = #tpu.contract_precision<fp32>} : vector<16x128xf32>, vector<128x128xf32>, vector<16x128xf32> -> vector<16x128xf32>
    %64 = arith.mulf %63, %5 : vector<16x128xf32>
    %cst_46 = arith.constant dense<0.000000e+00> : vector<128xf32>
    %65 = vector.multi_reduction <add>, %64, %cst_46 [0] : vector<16x128xf32> to vector<128xf32>
    %66 = vector.shape_cast %65 : vector<128xf32> to vector<1x128xf32>
    %cst_47 = arith.constant dense<0xFF800000> : vector<128xf32>
    %67 = vector.multi_reduction <maximumf>, %63, %cst_47 [0] : vector<16x128xf32> to vector<128xf32>
    %68 = vector.shape_cast %67 : vector<128xf32> to vector<1x128xf32>
    %69 = vector.broadcast %66 : vector<1x128xf32> to vector<16x128xf32>
    %70 = arith.addf %62, %69 : vector<16x128xf32>
    %cst_48 = arith.constant 0.000000e+00 : f32
    %71 = vector.broadcast %cst_48 : f32 to vector<16x128xf32>
    %72 = arith.cmpf ogt, %70, %71 : vector<16x128xf32>
    %cst_49 = arith.constant 2.000000e-01 : f32
    %73 = vector.broadcast %cst_49 : f32 to vector<16x128xf32>
    %74 = arith.mulf %73, %70 : vector<16x128xf32>
    %75 = arith.select %72, %70, %74 : vector<16x128xi1>, vector<16x128xf32>
    %76 = vector.broadcast %68 : vector<1x128xf32> to vector<16x128xf32>
    %77 = arith.addf %62, %76 : vector<16x128xf32>
    %cst_50 = arith.constant 0.000000e+00 : f32
    %78 = vector.broadcast %cst_50 : f32 to vector<16x128xf32>
    %79 = arith.cmpf ogt, %77, %78 : vector<16x128xf32>
    %cst_51 = arith.constant 2.000000e-01 : f32
    %80 = vector.broadcast %cst_51 : f32 to vector<16x128xf32>
    %81 = arith.mulf %80, %77 : vector<16x128xf32>
    %82 = arith.select %79, %77, %81 : vector<16x128xi1>, vector<16x128xf32>
    %83 = arith.subf %75, %82 : vector<16x128xf32>
    %84 = arith.addf %83, %3 : vector<16x128xf32>
    %85 = math.exp %84 : vector<16x128xf32>
    %cst_52 = arith.constant dense<0.000000e+00> : vector<16x128xf32>
    %86 = tpu.matmul %85, %8, %cst_52 {dimension_numbers = #tpu.dot_dimension_numbers<[1], [0], [0], [1], [0, 0, 1, 1], [], []>, precision = #tpu.contract_precision<fp32>} : vector<16x128xf32>, vector<128x128xf32>, vector<16x128xf32> -> vector<16x128xf32>
    %cst_53 = arith.constant 9.99999968E-21 : f32
    %87 = vector.broadcast %cst_53 : f32 to vector<16x128xf32>
    %88 = arith.maximumf %86, %87 : vector<16x128xf32>
    %89 = tpu.reciprocal %88 {approx = true} : vector<16x128xf32> -> vector<16x128xf32>
    %90 = arith.mulf %85, %89 : vector<16x128xf32>
    %c8 = arith.constant 8 : index
    %c0_54 = arith.constant 0 : index
    %c0_55 = arith.constant 0 : index
    %91 = vector.load %arg1[%c8, %c0_54, %c0_55] : memref<11x128x128xf32, #tpu.memory_space<vmem>>, vector<1x128x128xf32>
    %92 = vector.shape_cast %91 : vector<1x128x128xf32> to vector<128x128xf32>
    %cst_56 = arith.constant dense<0.000000e+00> : vector<128x128xf32>
    %93 = tpu.matmul %6, %57, %cst_56 {dimension_numbers = #tpu.dot_dimension_numbers<[1], [0], [0], [1], [0, 0, 1, 1], [], []>, precision = #tpu.contract_precision<fp32>} : vector<128x16xf32>, vector<16x128xf32>, vector<128x128xf32> -> vector<128x128xf32>
    %94 = arith.mulf %93, %92 : vector<128x128xf32>
    %cst_57 = arith.constant dense<0.000000e+00> : vector<16x128xf32>
    %95 = tpu.matmul %90, %94, %cst_57 {dimension_numbers = #tpu.dot_dimension_numbers<[1], [0], [0], [1], [0, 0, 1, 1], [], []>, precision = #tpu.contract_precision<fp32>} : vector<16x128xf32>, vector<128x128xf32>, vector<16x128xf32> -> vector<16x128xf32>
    %c9 = arith.constant 9 : index
    %c0_58 = arith.constant 0 : index
    %c0_59 = arith.constant 0 : index
    %96 = vector.load %arg1[%c9, %c0_58, %c0_59] : memref<11x128x128xf32, #tpu.memory_space<vmem>>, vector<1x128x128xf32>
    %97 = vector.shape_cast %96 : vector<1x128x128xf32> to vector<128x128xf32>
    %cst_60 = arith.constant dense<0.000000e+00> : vector<16x128xf32>
    %98 = tpu.matmul %95, %97, %cst_60 {dimension_numbers = #tpu.dot_dimension_numbers<[1], [0], [0], [1], [0, 0, 1, 1], [], []>, precision = #tpu.contract_precision<fp32>} : vector<16x128xf32>, vector<128x128xf32>, vector<16x128xf32> -> vector<16x128xf32>
    %c4_61 = arith.constant 4 : index
    %c0_62 = arith.constant 0 : index
    %c0_63 = arith.constant 0 : index
    %99 = vector.load %arg0[%c4_61, %c0_62, %c0_63] : memref<6x16x128xf32, #tpu.memory_space<vmem>>, vector<1x16x128xf32>
    %100 = vector.shape_cast %99 : vector<1x16x128xf32> to vector<16x128xf32>
    %101 = arith.addf %98, %100 : vector<16x128xf32>
    %cst_64 = arith.constant 0.000000e+00 : f32
    %102 = vector.broadcast %cst_64 : f32 to vector<16x128xf32>
    %103 = arith.maximumf %101, %102 : vector<16x128xf32>
    %c10 = arith.constant 10 : index
    %c0_65 = arith.constant 0 : index
    %c0_66 = arith.constant 0 : index
    %104 = vector.load %arg1[%c10, %c0_65, %c0_66] : memref<11x128x128xf32, #tpu.memory_space<vmem>>, vector<1x128x128xf32>
    %105 = vector.shape_cast %104 : vector<1x128x128xf32> to vector<128x128xf32>
    %cst_67 = arith.constant dense<0.000000e+00> : vector<16x128xf32>
    %106 = tpu.matmul %103, %105, %cst_67 {dimension_numbers = #tpu.dot_dimension_numbers<[1], [0], [0], [1], [0, 0, 1, 1], [], []>, precision = #tpu.contract_precision<fp32>} : vector<16x128xf32>, vector<128x128xf32>, vector<16x128xf32> -> vector<16x128xf32>
    %c5_68 = arith.constant 5 : index
    %c0_69 = arith.constant 0 : index
    %c0_70 = arith.constant 0 : index
    %107 = vector.load %arg0[%c5_68, %c0_69, %c0_70] : memref<6x16x128xf32, #tpu.memory_space<vmem>>, vector<1x16x128xf32>
    %108 = vector.shape_cast %107 : vector<1x16x128xf32> to vector<16x128xf32>
    %109 = arith.addf %106, %108 : vector<16x128xf32>
    %c0_71 = arith.constant 0 : index
    %c0_72 = arith.constant 0 : index
    %110 = vector.load %arg3[%c0_71, %c0_72] : memref<16x128xf32, #tpu.memory_space<vmem>>, vector<16x128xf32>
    tpu.vector_store %arg3[%c0_71, %c0_72], %109 {strides = array<i32>} : memref<16x128xf32, #tpu.memory_space<vmem>>, vector<16x128xf32>,
    return
  }
}

</mosaic_0001>

<llo_original>
// kernel: tpu_custom_call.1
$region0: #{tpu_custom_call.1}
  #allocation0 [shape = 'u32[]', space=smem, size = 0x4, offset = 0x4, fixed_abs, tag = 'smem constant byte address 0x4 - core index']
  #allocation1 [shape = 'u32[144,128]{1,0:T(1,128)}', space=vmem, size = 0x12000, scoped, tag = 'internal scratch']
  %s0 = inlined_call_operand.vmem [shape: f32[6,16,128], index: 0, kind: input, shape index: {}]
  %s1 = inlined_call_operand.hbm [shape: f32[11,128,128], index: 1, kind: input, shape index: {}]
  %s2 = inlined_call_operand.vmem [shape: f32[128,16], index: 2, kind: input, shape index: {}]
  %s3 = inlined_call_operand.hbm [shape: f32[16,128], index: 3, kind: output, shape index: {}]
  %s4 = sld [smem:[#allocation0]]
  $region26: #{tpu_custom_call.1} parent=0
    _
  %s6 = ssub.s32 1, %s4
  %s7 = scalar_select 0, %s6, %s4
  $region1: #{tpu_custom_call.1} parent=0
    #allocation2 [shape = 'u8[720896]{0}', space=vmem, size = 0xb0000, scoped, tag = 'input window, operand 1, single buffered']
    #allocation3 [shape = 's32[1]{0}', space=sflag, size = 0x4, scoped, tag = 'scoped memory for tpu_custom_call.1']
    #allocation4 [shape = 's32[1]{0}', space=sflag, size = 0x4, scoped, tag = 'scoped memory for tpu_custom_call.1']
    #allocation5 [shape = 'u8[8192]{0}', space=vmem, size = 0x2000, scoped, tag = 'output window, operand 0, single buffered']
    %8 = vsyncpa [#allocation3], 0
    %9 = vsyncpa [#allocation4], 0
    // Predicated region
    $region2: #{tpu_custom_call.1} parent=1 // pred_check
      _
    $region3: #{tpu_custom_call.1} parent=1 // pred_check_branch
      %11 = sbr.rel (0) target = $region5
    $region4: #{tpu_custom_call.1} parent=1 // pred_region
      _
    $region5: #{tpu_custom_call.1} parent=1 // pred_fallthru
      _
    // Predicated region
    $region6: #{tpu_custom_call.1} parent=1 // pred_check
      _
    $region7: #{tpu_custom_call.1} parent=1 // pred_check_branch
      %13 = sbr.rel (0) target = $region9
    $region8: #{tpu_custom_call.1} parent=1 // pred_region
      %s15 = ssub.s32 22528, 22528
      %16 = vsyncadd [#allocation3], %s15
      %s17 = sshll.u32 [#allocation2], 4
      %s18 = int_to_ptr.vmem [resolvable:$true] %s17
      %23 = dma.hbm_to_vmem [thread:$0]  %s1, 22528, %s18, [#allocation3], 128, 128, 8
    $region9: #{tpu_custom_call.1} parent=1 // pred_fallthru
      _
    // Predicated region
    $region10: #{tpu_custom_call.1} parent=1 // pred_check
      _
    $region11: #{tpu_custom_call.1} parent=1 // pred_check_branch
      %25 = sbr.rel (0) target = $region13
    $region12: #{tpu_custom_call.1} parent=1 // pred_region
      _
    $region13: #{tpu_custom_call.1} parent=1 // pred_fallthru
      _
    // Predicated region
    $region14: #{tpu_custom_call.1} parent=1 // pred_check
      _
    $region15: #{tpu_custom_call.1} parent=1 // pred_check_branch
      %27 = sbr.rel (0) target = $region17
    $region16: #{tpu_custom_call.1} parent=1 // pred_region
      %28 = dma.done [#allocation3], 22528
    $region17: #{tpu_custom_call.1} parent=1 // pred_fallthru
      _
    %v29 = vld [vmem:[%s0] sm:$0xff]
    %v30 = vld [vmem:[%s0 + $0x8] sm:$0xff]
    %s31 = scalar_lea.vmem %s0, 16
    %v32 = vld [vmem:[%s31] sm:$0xff]
    %v33 = vld [vmem:[%s31 + $0x8] sm:$0xff]
    %s34 = scalar_lea.vmem %s0, 32
    %v35 = vld [vmem:[%s34] sm:$0xff]
    %v36 = vld [vmem:[%s34 + $0x8] sm:$0xff]
    %v37 = vld [vmem:[%s2] sm:$0xff]
    %v38 = vld [vmem:[%s2 + $0x8] sm:$0xff]
    %v39 = vld [vmem:[%s2 + $0x10] sm:$0xff]
    %v40 = vld [vmem:[%s2 + $0x18] sm:$0xff]
    %v41 = vld [vmem:[%s2 + $0x20] sm:$0xff]
    %v42 = vld [vmem:[%s2 + $0x28] sm:$0xff]
    %v43 = vld [vmem:[%s2 + $0x30] sm:$0xff]
    %v44 = vld [vmem:[%s2 + $0x38] sm:$0xff]
    %v45 = vld [vmem:[%s2 + $0x40] sm:$0xff]
    %v46 = vld [vmem:[%s2 + $0x48] sm:$0xff]
    %v47 = vld [vmem:[%s2 + $0x50] sm:$0xff]
    %v48 = vld [vmem:[%s2 + $0x58] sm:$0xff]
    %v49 = vld [vmem:[%s2 + $0x60] sm:$0xff]
    %v50 = vld [vmem:[%s2 + $0x68] sm:$0xff]
    %v51 = vld [vmem:[%s2 + $0x70] sm:$0xff]
    %v52 = vld [vmem:[%s2 + $0x78] sm:$0xff]
    %s53 = scalar_lea.vmem [#allocation2], 768
    %v54 = vld [vmem:[%s53] sm:$0xff]
    %v55 = vld [vmem:[%s53 + $0x8] sm:$0xff]
    %v56 = vld [vmem:[%s53 + $0x10] sm:$0xff]
    %v57 = vld [vmem:[%s53 + $0x18] sm:$0xff]
    %v58 = vld [vmem:[%s53 + $0x20] sm:$0xff]
    %v59 = vld [vmem:[%s53 + $0x28] sm:$0xff]
    %v60 = vld [vmem:[%s53 + $0x30] sm:$0xff]
    %v61 = vld [vmem:[%s53 + $0x38] sm:$0xff]
    %v62 = vld [vmem:[%s53 + $0x40] sm:$0xff]
    %v63 = vld [vmem:[%s53 + $0x48] sm:$0xff]
    %v64 = vld [vmem:[%s53 + $0x50] sm:$0xff]
    %v65 = vld [vmem:[%s53 + $0x58] sm:$0xff]
    %v66 = vld [vmem:[%s53 + $0x60] sm:$0xff]
    %v67 = vld [vmem:[%s53 + $0x68] sm:$0xff]
    %v68 = vld [vmem:[%s53 + $0x70] sm:$0xff]
    %v69 = vld [vmem:[%s53 + $0x78] sm:$0xff]
    %v70 = vld [vmem:[#allocation2] sm:$0xff]
    %v71 = vld [vmem:[#allocation2 + $0x8] sm:$0xff]
    %v72 = vld [vmem:[#allocation2 + $0x10] sm:$0xff]
    %v73 = vld [vmem:[#allocation2 + $0x18] sm:$0xff]
    %v74 = vld [vmem:[#allocation2 + $0x20] sm:$0xff]
    %v75 = vld [vmem:[#allocation2 + $0x28] sm:$0xff]
    %v76 = vld [vmem:[#allocation2 + $0x30] sm:$0xff]
    %v77 = vld [vmem:[#allocation2 + $0x38] sm:$0xff]
    %v78 = vld [vmem:[#allocation2 + $0x40] sm:$0xff]
    %v79 = vld [vmem:[#allocation2 + $0x48] sm:$0xff]
    %v80 = vld [vmem:[#allocation2 + $0x50] sm:$0xff]
    %v81 = vld [vmem:[#allocation2 + $0x58] sm:$0xff]
    %v82 = vld [vmem:[#allocation2 + $0x60] sm:$0xff]
    %v83 = vld [vmem:[#allocation2 + $0x68] sm:$0xff]
    %v84 = vld [vmem:[#allocation2 + $0x70] sm:$0xff]
    %v85 = vld [vmem:[#allocation2 + $0x78] sm:$0xff]
    %86 = vmatprep.subr.mxu0 0.0
    %v87 = vand.u32 %v70, 4294901760
    %88 = vmatpush1.msra.mxu0 %v87
    %89 = vmatprep.subr.mxu0 0.0
    %v90 = vand.u32 %v71, 4294901760
    %91 = vmatpush1.msra.mxu0 %v90
    %92 = vmatprep.subr.mxu0 0.0
    %v93 = vand.u32 %v72, 4294901760
    %94 = vmatpush1.msra.mxu0 %v93
    %95 = vmatprep.subr.mxu0 0.0
    %v96 = vand.u32 %v73, 4294901760
    %97 = vmatpush1.msra.mxu0 %v96
    %98 = vmatprep.subr.mxu0 0.0
    %v99 = vand.u32 %v74, 4294901760
    %100 = vmatpush1.msra.mxu0 %v99
    %101 = vmatprep.subr.mxu0 0.0
    %v102 = vand.u32 %v75, 4294901760
    %103 = vmatpush1.msra.mxu0 %v102
    %104 = vmatprep.subr.mxu0 0.0
    %v105 = vand.u32 %v76, 4294901760
    %106 = vmatpush1.msra.mxu0 %v105
    %107 = vmatprep.subr.mxu0 0.0
    %v108 = vand.u32 %v77, 4294901760
    %109 = vmatpush1.msra.mxu0 %v108
    %110 = vmatprep.subr.mxu0 0.0
    %v111 = vand.u32 %v78, 4294901760
    %112 = vmatpush1.msra.mxu0 %v111
    %113 = vmatprep.subr.mxu0 0.0
    %v114 = vand.u32 %v79, 4294901760
    %115 = vmatpush1.msra.mxu0 %v114
    %116 = vmatprep.subr.mxu0 0.0
    %v117 = vand.u32 %v80, 4294901760
    %118 = vmatpush1.msra.mxu0 %v117
    %119 = vmatprep.subr.mxu0 0.0
    %v120 = vand.u32 %v81, 4294901760
    %121 = vmatpush1.msra.mxu0 %v120
    %122 = vmatprep.subr.mxu0 0.0
    %v123 = vand.u32 %v82, 4294901760
    %124 = vmatpush1.msra.mxu0 %v123
    %125 = vmatprep.subr.mxu0 0.0
    %v126 = vand.u32 %v83, 4294901760
    %127 = vmatpush1.msra.mxu0 %v126
    %128 = vmatprep.subr.mxu0 0.0
    %v129 = vand.u32 %v84, 4294901760
    %130 = vmatpush1.msra.mxu0 %v129
    %131 = vmatprep.subr.mxu0 0.0
    %v132 = vand.u32 %v85, 4294901760
    %133 = vmatpush1.msra.mxu0 %v132
    %134 = vmatprep.subr.mxu0 0.0
    %135 = vmatpush1.msra.mxu0 0.0
    %136 = vmatprep.subr.mxu0 0.0
    %137 = vmatpush1.msra.mxu0 0.0
    %138 = vmatprep.subr.mxu0 0.0
    %139 = vmatpush1.msra.mxu0 0.0
    %140 = vmatprep.subr.mxu0 0.0
    %141 = vmatpush1.msra.mxu0 0.0
    %142 = vmatprep.subr.mxu0 0.0
    %143 = vmatpush1.msra.mxu0 0.0
    %144 = vmatprep.subr.mxu0 0.0
    %145 = vmatpush1.msra.mxu0 0.0
    %146 = vmatprep.subr.mxu0 0.0
    %147 = vmatpush1.msra.mxu0 0.0
    %148 = vmatprep.subr.mxu0 0.0
    %149 = vmatpush1.msra.mxu0 0.0
    %150 = vmatprep.subr.mxu0 0.0
    %151 = vmatpush1.msra.mxu0 0.0
    %152 = vmatprep.subr.mxu0 0.0
    %153 = vmatpush1.msra.mxu0 0.0
    %154 = vmatprep.subr.mxu0 0.0
    %155 = vmatpush1.msra.mxu0 0.0
    %156 = vmatprep.subr.mxu0 0.0
    %157 = vmatpush1.msra.mxu0 0.0
    %158 = vmatprep.subr.mxu0 0.0
    %159 = vmatpush1.msra.mxu0 0.0
    %160 = vmatprep.subr.mxu0 0.0
    %161 = vmatpush1.msra.mxu0 0.0
    %162 = vmatprep.subr.mxu0 0.0
    %163 = vmatpush1.msra.mxu0 0.0
    %164 = vmatprep.subr.mxu0 0.0
    %165 = vmatpush1.msra.mxu0 0.0
    %166 = vmatprep.mubr.f32.mxu0 0.0
    %v167 = vand.u32 %v29, 4294901760
    %v168 = vsub.f32 %v29, %v167
    %v169 = vand.u32 %v168, 4294901760
    %v170 = vsub.f32 %v168, %v169
    %v171 = vand.u32 %v170, 4294901760
    %172 = vmatmul.mubr.f32.gmra.mrb[0].mxu0 %v171
    %v173 = vpop.f32.mrb[0].mxu0
    %v174 = vadd.f32 0.0, %v173
    %v175 = vpop.f32.mrb[0].mxu0
    %176 = vmatprep.mubr.f32.mxu0 0.0
    %v177 = vand.u32 %v30, 4294901760
    %v178 = vsub.f32 %v30, %v177
    %v179 = vand.u32 %v178, 4294901760
    %v180 = vsub.f32 %v178, %v179
    %v181 = vand.u32 %v180, 4294901760
    %182 = vmatmul.mubr.f32.gmra.mrb[0].mxu0 %v181
    %v183 = vpop.f32.mrb[0].mxu0
    %v184 = vadd.f32 0.0, %v183
    %v185 = vpop.f32.mrb[0].mxu0
    %186 = vdwg.mxu0
    %187 = vmatprep.subr.mxu0 0.0
    %v188 = vand.u32 %v70, 4294901760
    %v189 = vsub.f32 %v70, %v188
    %v190 = vand.u32 %v189, 4294901760
    %v191 = vsub.f32 %v189, %v190
    %v192 = vand.u32 %v191, 4294901760
    %193 = vmatpush1.msra.mxu0 %v192
    %194 = vmatprep.subr.mxu0 0.0
    %v195 = vand.u32 %v71, 4294901760
    %v196 = vsub.f32 %v71, %v195
    %v197 = vand.u32 %v196, 4294901760
    %v198 = vsub.f32 %v196, %v197
    %v199 = vand.u32 %v198, 4294901760
    %200 = vmatpush1.msra.mxu0 %v199
    %201 = vmatprep.subr.mxu0 0.0
    %v202 = vand.u32 %v72, 4294901760
    %v203 = vsub.f32 %v72, %v202
    %v204 = vand.u32 %v203, 4294901760
    %v205 = vsub.f32 %v203, %v204
    %v206 = vand.u32 %v205, 4294901760
    %207 = vmatpush1.msra.mxu0 %v206
    %208 = vmatprep.subr.mxu0 0.0
    %v209 = vand.u32 %v73, 4294901760
    %v210 = vsub.f32 %v73, %v209
    %v211 = vand.u32 %v210, 4294901760
    %v212 = vsub.f32 %v210, %v211
    %v213 = vand.u32 %v212, 4294901760
    %214 = vmatpush1.msra.mxu0 %v213
    %215 = vmatprep.subr.mxu0 0.0
    %v216 = vand.u32 %v74, 4294901760
    %v217 = vsub.f32 %v74, %v216
    %v218 = vand.u32 %v217, 4294901760
    %v219 = vsub.f32 %v217, %v218
    %v220 = vand.u32 %v219, 4294901760
    %221 = vmatpush1.msra.mxu0 %v220
    %222 = vmatprep.subr.mxu0 0.0
    %v223 = vand.u32 %v75, 4294901760
    %v224 = vsub.f32 %v75, %v223
    %v225 = vand.u32 %v224, 4294901760
    %v226 = vsub.f32 %v224, %v225
    %v227 = vand.u32 %v226, 4294901760
    %228 = vmatpush1.msra.mxu0 %v227
    %229 = vmatprep.subr.mxu0 0.0
    %v230 = vand.u32 %v76, 4294901760
    %v231 = vsub.f32 %v76, %v230
    %v232 = vand.u32 %v231, 4294901760
    %v233 = vsub.f32 %v231, %v232
    %v234 = vand.u32 %v233, 4294901760
    %235 = vmatpush1.msra.mxu0 %v234
    %236 = vmatprep.subr.mxu0 0.0
    %v237 = vand.u32 %v77, 4294901760
    %v238 = vsub.f32 %v77, %v237
    %v239 = vand.u32 %v238, 4294901760
    %v240 = vsub.f32 %v238, %v239
    %v241 = vand.u32 %v240, 4294901760
    %242 = vmatpush1.msra.mxu0 %v241
    %243 = vmatprep.subr.mxu0 0.0
    %v244 = vand.u32 %v78, 4294901760
    %v245 = vsub.f32 %v78, %v244
    %v246 = vand.u32 %v245, 4294901760
    %v247 = vsub.f32 %v245, %v246
    %v248 = vand.u32 %v247, 4294901760
    %249 = vmatpush1.msra.mxu0 %v248
    %250 = vmatprep.subr.mxu0 0.0
    %v251 = vand.u32 %v79, 4294901760
    %v252 = vsub.f32 %v79, %v251
    %v253 = vand.u32 %v252, 4294901760
    %v254 = vsub.f32 %v252, %v253
    %v255 = vand.u32 %v254, 4294901760
    %256 = vmatpush1.msra.mxu0 %v255
    %257 = vmatprep.subr.mxu0 0.0
    %v258 = vand.u32 %v80, 4294901760
    %v259 = vsub.f32 %v80, %v258
    %v260 = vand.u32 %v259, 4294901760
    %v261 = vsub.f32 %v259, %v260
    %v262 = vand.u32 %v261, 4294901760
    %263 = vmatpush1.msra.mxu0 %v262
    %264 = vmatprep.subr.mxu0 0.0
    %v265 = vand.u32 %v81, 4294901760
    %v266 = vsub.f32 %v81, %v265
    %v267 = vand.u32 %v266, 4294901760
    %v268 = vsub.f32 %v266, %v267
    %v269 = vand.u32 %v268, 4294901760
    %270 = vmatpush1.msra.mxu0 %v269
    %271 = vmatprep.subr.mxu0 0.0
    %v272 = vand.u32 %v82, 4294901760
    %v273 = vsub.f32 %v82, %v272
    %v274 = vand.u32 %v273, 4294901760
    %v275 = vsub.f32 %v273, %v274
    %v276 = vand.u32 %v275, 4294901760
    %277 = vmatpush1.msra.mxu0 %v276
    %278 = vmatprep.subr.mxu0 0.0
    %v279 = vand.u32 %v83, 4294901760
    %v280 = vsub.f32 %v83, %v279
    %v281 = vand.u32 %v280, 4294901760
    %v282 = vsub.f32 %v280, %v281
    %v283 = vand.u32 %v282, 4294901760
    %284 = vmatpush1.msra.mxu0 %v283
    %285 = vmatprep.subr.mxu0 0.0
    %v286 = vand.u32 %v84, 4294901760
    %v287 = vsub.f32 %v84, %v286
    %v288 = vand.u32 %v287, 4294901760
    %v289 = vsub.f32 %v287, %v288
    %v290 = vand.u32 %v289, 4294901760
    %291 = vmatpush1.msra.mxu0 %v290
    %292 = vmatprep.subr.mxu0 0.0
    %v293 = vand.u32 %v85, 4294901760
    %v294 = vsub.f32 %v85, %v293
    %v295 = vand.u32 %v294, 4294901760
    %v296 = vsub.f32 %v294, %v295
    %v297 = vand.u32 %v296, 4294901760
    %298 = vmatpush1.msra.mxu0 %v297
    %299 = vmatprep.subr.mxu0 0.0
    %300 = vmatpush1.msra.mxu0 0.0
    %301 = vmatprep.subr.mxu0 0.0
    %302 = vmatpush1.msra.mxu0 0.0
    %303 = vmatprep.subr.mxu0 0.0
    %304 = vmatpush1.msra.mxu0 0.0
    %305 = vmatprep.subr.mxu0 0.0
    %306 = vmatpush1.msra.mxu0 0.0
    %307 = vmatprep.subr.mxu0 0.0
    %308 = vmatpush1.msra.mxu0 0.0
    %309 = vmatprep.subr.mxu0 0.0
    %310 = vmatpush1.msra.mxu0 0.0
    %311 = vmatprep.subr.mxu0 0.0
    %312 = vmatpush1.msra.mxu0 0.0
    %313 = vmatprep.subr.mxu0 0.0
    %314 = vmatpush1.msra.mxu0 0.0
    %315 = vmatprep.subr.mxu0 0.0
    %316 = vmatpush1.msra.mxu0 0.0
    %317 = vmatprep.subr.mxu0 0.0
    %318 = vmatpush1.msra.mxu0 0.0
    %319 = vmatprep.subr.mxu0 0.0
    %320 = vmatpush1.msra.mxu0 0.0
    %321 = vmatprep.subr.mxu0 0.0
    %322 = vmatpush1.msra.mxu0 0.0
    %323 = vmatprep.subr.mxu0 0.0
    %324 = vmatpush1.msra.mxu0 0.0
    %325 = vmatprep.subr.mxu0 0.0
    %326 = vmatpush1.msra.mxu0 0.0
    %327 = vmatprep.subr.mxu0 0.0
    %328 = vmatpush1.msra.mxu0 0.0
    %329 = vmatprep.subr.mxu0 0.0
    %330 = vmatpush1.msra.mxu0 0.0
    %331 = vmatprep.mubr.f32.mxu0 0.0
    %v332 = vand.u32 %v29, 4294901760
    %333 = vmatmul.mubr.f32.gmra.mrb[0].mxu0 %v332
    %v334 = vpop.f32.mrb[0].mxu0
    %v335 = vadd.f32 %v174, %v334
    %v336 = vpop.f32.mrb[0].mxu0
    %337 = vmatprep.mubr.f32.mxu0 0.0
    %v338 = vand.u32 %v30, 4294901760
    %339 = vmatmul.mubr.f32.gmra.mrb[0].mxu0 %v338
    %v340 = vpop.f32.mrb[0].mxu0
    %v341 = vadd.f32 %v184, %v340
    %v342 = vpop.f32.mrb[0].mxu0
    %343 = vdwg.mxu0
    %344 = vmatprep.subr.mxu0 0.0
    %v345 = vand.u32 %v70, 4294901760
    %v346 = vsub.f32 %v70, %v345
    %347 = vmatpush1.msra.mxu0 %v346
    %348 = vmatprep.subr.mxu0 0.0
    %v349 = vand.u32 %v71, 4294901760
    %v350 = vsub.f32 %v71, %v349
    %351 = vmatpush1.msra.mxu0 %v350
    %352 = vmatprep.subr.mxu0 0.0
    %v353 = vand.u32 %v72, 4294901760
    %v354 = vsub.f32 %v72, %v353
    %355 = vmatpush1.msra.mxu0 %v354
    %356 = vmatprep.subr.mxu0 0.0
    %v357 = vand.u32 %v73, 4294901760
    %v358 = vsub.f32 %v73, %v357
    %359 = vmatpush1.msra.mxu0 %v358
    %360 = vmatprep.subr.mxu0 0.0
    %v361 = vand.u32 %v74, 4294901760
    %v362 = vsub.f32 %v74, %v361
    %363 = vmatpush1.msra.mxu0 %v362
    %364 = vmatprep.subr.mxu0 0.0
    %v365 = vand.u32 %v75, 4294901760
    %v366 = vsub.f32 %v75, %v365
    %367 = vmatpush1.msra.mxu0 %v366
    %368 = vmatprep.subr.mxu0 0.0
    %v369 = vand.u32 %v76, 4294901760
    %v370 = vsub.f32 %v76, %v369
    %371 = vmatpush1.msra.mxu0 %v370
    %372 = vmatprep.subr.mxu0 0.0
    %v373 = vand.u32 %v77, 4294901760
    %v374 = vsub.f32 %v77, %v373
    %375 = vmatpush1.msra.mxu0 %v374
    %376 = vmatprep.subr.mxu0 0.0
    %v377 = vand.u32 %v78, 4294901760
    %v378 = vsub.f32 %v78, %v377
    %379 = vmatpush1.msra.mxu0 %v378
    %380 = vmatprep.subr.mxu0 0.0
    %v381 = vand.u32 %v79, 4294901760
    %v382 = vsub.f32 %v79, %v381
    %383 = vmatpush1.msra.mxu0 %v382
    %384 = vmatprep.subr.mxu0 0.0
    %v385 = vand.u32 %v80, 4294901760
    %v386 = vsub.f32 %v80, %v385
    %387 = vmatpush1.msra.mxu0 %v386
    %388 = vmatprep.subr.mxu0 0.0
    %v389 = vand.u32 %v81, 4294901760
    %v390 = vsub.f32 %v81, %v389
    %391 = vmatpush1.msra.mxu0 %v390
    %392 = vmatprep.subr.mxu0 0.0
    %v393 = vand.u32 %v82, 4294901760
    %v394 = vsub.f32 %v82, %v393
    %395 = vmatpush1.msra.mxu0 %v394
    %396 = vmatprep.subr.mxu0 0.0
    %v397 = vand.u32 %v83, 4294901760
    %v398 = vsub.f32 %v83, %v397
    %399 = vmatpush1.msra.mxu0 %v398
    %400 = vmatprep.subr.mxu0 0.0
    %v401 = vand.u32 %v84, 4294901760
    %v402 = vsub.f32 %v84, %v401
    %403 = vmatpush1.msra.mxu0 %v402
    %404 = vmatprep.subr.mxu0 0.0
    %v405 = vand.u32 %v85, 4294901760
    %v406 = vsub.f32 %v85, %v405
    %407 = vmatpush1.msra.mxu0 %v406
    %408 = vmatprep.subr.mxu0 0.0
    %409 = vmatpush1.msra.mxu0 0.0
    %410 = vmatprep.subr.mxu0 0.0
    %411 = vmatpush1.msra.mxu0 0.0
    %412 = vmatprep.subr.mxu0 0.0
    %413 = vmatpush1.msra.mxu0 0.0
    %414 = vmatprep.subr.mxu0 0.0
    %415 = vmatpush1.msra.mxu0 0.0
    %416 = vmatprep.subr.mxu0 0.0
    %417 = vmatpush1.msra.mxu0 0.0
    %418 = vmatprep.subr.mxu0 0.0
    %419 = vmatpush1.msra.mxu0 0.0
    %420 = vmatprep.subr.mxu0 0.0
    %421 = vmatpush1.msra.mxu0 0.0
    %422 = vmatprep.subr.mxu0 0.0
    %423 = vmatpush1.msra.mxu0 0.0
    %424 = vmatprep.subr.mxu0 0.0
    %425 = vmatpush1.msra.mxu0 0.0
    %426 = vmatprep.subr.mxu0 0.0
    %427 = vmatpush1.msra.mxu0 0.0
    %428 = vmatprep.subr.mxu0 0.0
    %429 = vmatpush1.msra.mxu0 0.0
    %430 = vmatprep.subr.mxu0 0.0
    %431 = vmatpush1.msra.mxu0 0.0
    %432 = vmatprep.subr.mxu0 0.0
    %433 = vmatpush1.msra.mxu0 0.0
    %434 = vmatprep.subr.mxu0 0.0
    %435 = vmatpush1.msra.mxu0 0.0
    %436 = vmatprep.subr.mxu0 0.0
    %437 = vmatpush1.msra.mxu0 0.0
    %438 = vmatprep.subr.mxu0 0.0
    %439 = vmatpush1.msra.mxu0 0.0
    %440 = vmatprep.mubr.f32.mxu0 0.0
    %v441 = vand.u32 %v29, 4294901760
    %v442 = vsub.f32 %v29, %v441
    %443 = vmatmul.mubr.f32.gmra.mrb[0].mxu0 %v442
    %v444 = vpop.f32.mrb[0].mxu0
    %v445 = vadd.f32 %v335, %v444
    %v446 = vpop.f32.mrb[0].mxu0
    %447 = vmatprep.mubr.f32.mxu0 0.0
    %v448 = vand.u32 %v30, 4294901760
    %v449 = vsub.f32 %v30, %v448
    %450 = vmatmul.mubr.f32.gmra.mrb[0].mxu0 %v449
    %v451 = vpop.f32.mrb[0].mxu0
    %v452 = vadd.f32 %v341, %v451
    %v453 = vpop.f32.mrb[0].mxu0
    %454 = vdwg.mxu0
    %455 = vmatprep.subr.mxu0 0.0
    %v456 = vand.u32 %v70, 4294901760
    %457 = vmatpush1.msra.mxu0 %v456
    %458 = vmatprep.subr.mxu0 0.0
    %v459 = vand.u32 %v71, 4294901760
    %460 = vmatpush1.msra.mxu0 %v459
    %461 = vmatprep.subr.mxu0 0.0
    %v462 = vand.u32 %v72, 4294901760
    %463 = vmatpush1.msra.mxu0 %v462
    %464 = vmatprep.subr.mxu0 0.0
    %v465 = vand.u32 %v73, 4294901760
    %466 = vmatpush1.msra.mxu0 %v465
    %467 = vmatprep.subr.mxu0 0.0
    %v468 = vand.u32 %v74, 4294901760
    %469 = vmatpush1.msra.mxu0 %v468
    %470 = vmatprep.subr.mxu0 0.0
    %v471 = vand.u32 %v75, 4294901760
    %472 = vmatpush1.msra.mxu0 %v471
    %473 = vmatprep.subr.mxu0 0.0
    %v474 = vand.u32 %v76, 4294901760
    %475 = vmatpush1.msra.mxu0 %v474
    %476 = vmatprep.subr.mxu0 0.0
    %v477 = vand.u32 %v77, 4294901760
    %478 = vmatpush1.msra.mxu0 %v477
    %479 = vmatprep.subr.mxu0 0.0
    %v480 = vand.u32 %v78, 4294901760
    %481 = vmatpush1.msra.mxu0 %v480
    %482 = vmatprep.subr.mxu0 0.0
    %v483 = vand.u32 %v79, 4294901760
    %484 = vmatpush1.msra.mxu0 %v483
    %485 = vmatprep.subr.mxu0 0.0
    %v486 = vand.u32 %v80, 4294901760
    %487 = vmatpush1.msra.mxu0 %v486
    %488 = vmatprep.subr.mxu0 0.0
    %v489 = vand.u32 %v81, 4294901760
    %490 = vmatpush1.msra.mxu0 %v489
    %491 = vmatprep.subr.mxu0 0.0
    %v492 = vand.u32 %v82, 4294901760
    %493 = vmatpush1.msra.mxu0 %v492
    %494 = vmatprep.subr.mxu0 0.0
    %v495 = vand.u32 %v83, 4294901760
    %496 = vmatpush1.msra.mxu0 %v495
    %497 = vmatprep.subr.mxu0 0.0
    %v498 = vand.u32 %v84, 4294901760
    %499 = vmatpush1.msra.mxu0 %v498
    %500 = vmatprep.subr.mxu0 0.0
    %v501 = vand.u32 %v85, 4294901760
    %502 = vmatpush1.msra.mxu0 %v501
    %503 = vmatprep.subr.mxu0 0.0
    %504 = vmatpush1.msra.mxu0 0.0
    %505 = vmatprep.subr.mxu0 0.0
    %506 = vmatpush1.msra.mxu0 0.0
    %507 = vmatprep.subr.mxu0 0.0
    %508 = vmatpush1.msra.mxu0 0.0
    %509 = vmatprep.subr.mxu0 0.0
    %510 = vmatpush1.msra.mxu0 0.0
    %511 = vmatprep.subr.mxu0 0.0
    %512 = vmatpush1.msra.mxu0 0.0
    %513 = vmatprep.subr.mxu0 0.0
    %514 = vmatpush1.msra.mxu0 0.0
    %515 = vmatprep.subr.mxu0 0.0
    %516 = vmatpush1.msra.mxu0 0.0
    %517 = vmatprep.subr.mxu0 0.0
    %518 = vmatpush1.msra.mxu0 0.0
    %519 = vmatprep.subr.mxu0 0.0
    %520 = vmatpush1.msra.mxu0 0.0
    %521 = vmatprep.subr.mxu0 0.0
    %522 = vmatpush1.msra.mxu0 0.0
    %523 = vmatprep.subr.mxu0 0.0
    %524 = vmatpush1.msra.mxu0 0.0
    %525 = vmatprep.subr.mxu0 0.0
    %526 = vmatpush1.msra.mxu0 0.0
    %527 = vmatprep.subr.mxu0 0.0
    %528 = vmatpush1.msra.mxu0 0.0
    %529 = vmatprep.subr.mxu0 0.0
    %530 = vmatpush1.msra.mxu0 0.0
    %531 = vmatprep.subr.mxu0 0.0
    %532 = vmatpush1.msra.mxu0 0.0
    %533 = vmatprep.subr.mxu0 0.0
    %534 = vmatpush1.msra.mxu0 0.0
    %535 = vmatprep.mubr.f32.mxu0 0.0
    %v536 = vand.u32 %v29, 4294901760
    %v537 = vsub.f32 %v29, %v536
    %v538 = vand.u32 %v537, 4294901760
    %539 = vmatmul.mubr.f32.gmra.mrb[0].mxu0 %v538
    %v540 = vpop.f32.mrb[0].mxu0
    %v541 = vadd.f32 %v445, %v540
    %v542 = vpop.f32.mrb[0].mxu0
    %543 = vmatprep.mubr.f32.mxu0 0.0
    %v544 = vand.u32 %v30, 4294901760
    %v545 = vsub.f32 %v30, %v544
    %v546 = vand.u32 %v545, 4294901760
    %547 = vmatmul.mubr.f32.gmra.mrb[0].mxu0 %v546
    %v548 = vpop.f32.mrb[0].mxu0
    %v549 = vadd.f32 %v452, %v548
    %v550 = vpop.f32.mrb[0].mxu0
    %551 = vdwg.mxu0
    %552 = vmatprep.subr.mxu0 0.0
    %v553 = vand.u32 %v70, 4294901760
    %v554 = vsub.f32 %v70, %v553
    %v555 = vand.u32 %v554, 4294901760
    %556 = vmatpush1.msra.mxu0 %v555
    %557 = vmatprep.subr.mxu0 0.0
    %v558 = vand.u32 %v71, 4294901760
    %v559 = vsub.f32 %v71, %v558
    %v560 = vand.u32 %v559, 4294901760
    %561 = vmatpush1.msra.mxu0 %v560
    %562 = vmatprep.subr.mxu0 0.0
    %v563 = vand.u32 %v72, 4294901760
    %v564 = vsub.f32 %v72, %v563
    %v565 = vand.u32 %v564, 4294901760
    %566 = vmatpush1.msra.mxu0 %v565
    %567 = vmatprep.subr.mxu0 0.0
    %v568 = vand.u32 %v73, 4294901760
    %v569 = vsub.f32 %v73, %v568
    %v570 = vand.u32 %v569, 4294901760
    %571 = vmatpush1.msra.mxu0 %v570
    %572 = vmatprep.subr.mxu0 0.0
    %v573 = vand.u32 %v74, 4294901760
    %v574 = vsub.f32 %v74, %v573
    %v575 = vand.u32 %v574, 4294901760
    %576 = vmatpush1.msra.mxu0 %v575
    %577 = vmatprep.subr.mxu0 0.0
    %v578 = vand.u32 %v75, 4294901760
    %v579 = vsub.f32 %v75, %v578
    %v580 = vand.u32 %v579, 4294901760
    %581 = vmatpush1.msra.mxu0 %v580
    %582 = vmatprep.subr.mxu0 0.0
    %v583 = vand.u32 %v76, 4294901760
    %v584 = vsub.f32 %v76, %v583
    %v585 = vand.u32 %v584, 4294901760
    %586 = vmatpush1.msra.mxu0 %v585
    %587 = vmatprep.subr.mxu0 0.0
    %v588 = vand.u32 %v77, 4294901760
    %v589 = vsub.f32 %v77, %v588
    %v590 = vand.u32 %v589, 4294901760
    %591 = vmatpush1.msra.mxu0 %v590
    %592 = vmatprep.subr.mxu0 0.0
    %v593 = vand.u32 %v78, 4294901760
    %v594 = vsub.f32 %v78, %v593
    %v595 = vand.u32 %v594, 4294901760
    %596 = vmatpush1.msra.mxu0 %v595
    %597 = vmatprep.subr.mxu0 0.0
    %v598 = vand.u32 %v79, 4294901760
    %v599 = vsub.f32 %v79, %v598
    %v600 = vand.u32 %v599, 4294901760
    %601 = vmatpush1.msra.mxu0 %v600
    %602 = vmatprep.subr.mxu0 0.0
    %v603 = vand.u32 %v80, 4294901760
    %v604 = vsub.f32 %v80, %v603
    %v605 = vand.u32 %v604, 4294901760
    %606 = vmatpush1.msra.mxu0 %v605
    %607 = vmatprep.subr.mxu0 0.0
    %v608 = vand.u32 %v81, 4294901760
    %v609 = vsub.f32 %v81, %v608
    %v610 = vand.u32 %v609, 4294901760
    %611 = vmatpush1.msra.mxu0 %v610
    %612 = vmatprep.subr.mxu0 0.0
    %v613 = vand.u32 %v82, 4294901760
    %v614 = vsub.f32 %v82, %v613
    %v615 = vand.u32 %v614, 4294901760
    %616 = vmatpush1.msra.mxu0 %v615
    %617 = vmatprep.subr.mxu0 0.0
    %v618 = vand.u32 %v83, 4294901760
    %v619 = vsub.f32 %v83, %v618
    %v620 = vand.u32 %v619, 4294901760
    %621 = vmatpush1.msra.mxu0 %v620
    %622 = vmatprep.subr.mxu0 0.0
    %v623 = vand.u32 %v84, 4294901760
    %v624 = vsub.f32 %v84, %v623
    %v625 = vand.u32 %v624, 4294901760
    %626 = vmatpush1.msra.mxu0 %v625
    %627 = vmatprep.subr.mxu0 0.0
    %v628 = vand.u32 %v85, 4294901760
    %v629 = vsub.f32 %v85, %v628
    %v630 = vand.u32 %v629, 4294901760
    %631 = vmatpush1.msra.mxu0 %v630
    %632 = vmatprep.subr.mxu0 0.0
    %633 = vmatpush1.msra.mxu0 0.0
    %634 = vmatprep.subr.mxu0 0.0
    %635 = vmatpush1.msra.mxu0 0.0
    %636 = vmatprep.subr.mxu0 0.0
    %637 = vmatpush1.msra.mxu0 0.0
    %638 = vmatprep.subr.mxu0 0.0
    %639 = vmatpush1.msra.mxu0 0.0
    %640 = vmatprep.subr.mxu0 0.0
    %641 = vmatpush1.msra.mxu0 0.0
    %642 = vmatprep.subr.mxu0 0.0
    %643 = vmatpush1.msra.mxu0 0.0
    %644 = vmatprep.subr.mxu0 0.0
    %645 = vmatpush1.msra.mxu0 0.0
    %646 = vmatprep.subr.mxu0 0.0
    %647 = vmatpush1.msra.mxu0 0.0
    %648 = vmatprep.subr.mxu0 0.0
    %649 = vmatpush1.msra.mxu0 0.0
    %650 = vmatprep.subr.mxu0 0.0
    %651 = vmatpush1.msra.mxu0 0.0
    %652 = vmatprep.subr.mxu0 0.0
    %653 = vmatpush1.msra.mxu0 0.0
    %654 = vmatprep.subr.mxu0 0.0
    %655 = vmatpush1.msra.mxu0 0.0
    %656 = vmatprep.subr.mxu0 0.0
    %657 = vmatpush1.msra.mxu0 0.0
    %658 = vmatprep.subr.mxu0 0.0
    %659 = vmatpush1.msra.mxu0 0.0
    %660 = vmatprep.subr.mxu0 0.0
    %661 = vmatpush1.msra.mxu0 0.0
    %662 = vmatprep.subr.mxu0 0.0
    %663 = vmatpush1.msra.mxu0 0.0
    %664 = vmatprep.mubr.f32.mxu0 0.0
    %v665 = vand.u32 %v29, 4294901760
    %666 = vmatmul.mubr.f32.gmra.mrb[0].mxu0 %v665
    %v667 = vpop.f32.mrb[0].mxu0
    %v668 = vadd.f32 %v541, %v667
    %v669 = vpop.f32.mrb[0].mxu0
    %670 = vmatprep.mubr.f32.mxu0 0.0
    %v671 = vand.u32 %v30, 4294901760
    %672 = vmatmul.mubr.f32.gmra.mrb[0].mxu0 %v671
    %v673 = vpop.f32.mrb[0].mxu0
    %v674 = vadd.f32 %v549, %v673
    %v675 = vpop.f32.mrb[0].mxu0
    %676 = vdwg.mxu0
    %677 = vmatprep.subr.mxu0 0.0
    %v678 = vand.u32 %v70, 4294901760
    %679 = vmatpush1.msra.mxu0 %v678
    %680 = vmatprep.subr.mxu0 0.0
    %v681 = vand.u32 %v71, 4294901760
    %682 = vmatpush1.msra.mxu0 %v681
    %683 = vmatprep.subr.mxu0 0.0
    %v684 = vand.u32 %v72, 4294901760
    %685 = vmatpush1.msra.mxu0 %v684
    %686 = vmatprep.subr.mxu0 0.0
    %v687 = vand.u32 %v73, 4294901760
    %688 = vmatpush1.msra.mxu0 %v687
    %689 = vmatprep.subr.mxu0 0.0
    %v690 = vand.u32 %v74, 4294901760
    %691 = vmatpush1.msra.mxu0 %v690
    %692 = vmatprep.subr.mxu0 0.0
    %v693 = vand.u32 %v75, 4294901760
    %694 = vmatpush1.msra.mxu0 %v693
    %695 = vmatprep.subr.mxu0 0.0
    %v696 = vand.u32 %v76, 4294901760
    %697 = vmatpush1.msra.mxu0 %v696
    %698 = vmatprep.subr.mxu0 0.0
    %v699 = vand.u32 %v77, 4294901760
    %700 = vmatpush1.msra.mxu0 %v699
    %701 = vmatprep.subr.mxu0 0.0
    %v702 = vand.u32 %v78, 4294901760
    %703 = vmatpush1.msra.mxu0 %v702
    %704 = vmatprep.subr.mxu0 0.0
    %v705 = vand.u32 %v79, 4294901760
    %706 = vmatpush1.msra.mxu0 %v705
    %707 = vmatprep.subr.mxu0 0.0
    %v708 = vand.u32 %v80, 4294901760
    %709 = vmatpush1.msra.mxu0 %v708
    %710 = vmatprep.subr.mxu0 0.0
    %v711 = vand.u32 %v81, 4294901760
    %712 = vmatpush1.msra.mxu0 %v711
    %713 = vmatprep.subr.mxu0 0.0
    %v714 = vand.u32 %v82, 4294901760
    %715 = vmatpush1.msra.mxu0 %v714
    %716 = vmatprep.subr.mxu0 0.0
    %v717 = vand.u32 %v83, 4294901760
    %718 = vmatpush1.msra.mxu0 %v717
    %719 = vmatprep.subr.mxu0 0.0
    %v720 = vand.u32 %v84, 4294901760
    %721 = vmatpush1.msra.mxu0 %v720
    %722 = vmatprep.subr.mxu0 0.0
    %v723 = vand.u32 %v85, 4294901760
    %724 = vmatpush1.msra.mxu0 %v723
    %725 = vmatprep.subr.mxu0 0.0
    %726 = vmatpush1.msra.mxu0 0.0
    %727 = vmatprep.subr.mxu0 0.0
    %728 = vmatpush1.msra.mxu0 0.0
    %729 = vmatprep.subr.mxu0 0.0
    %730 = vmatpush1.msra.mxu0 0.0
    %731 = vmatprep.subr.mxu0 0.0
    %732 = vmatpush1.msra.mxu0 0.0
    %733 = vmatprep.subr.mxu0 0.0
    %734 = vmatpush1.msra.mxu0 0.0
    %735 = vmatprep.subr.mxu0 0.0
    %736 = vmatpush1.msra.mxu0 0.0
    %737 = vmatprep.subr.mxu0 0.0
    %738 = vmatpush1.msra.mxu0 0.0
    %739 = vmatprep.subr.mxu0 0.0
    %740 = vmatpush1.msra.mxu0 0.0
    %741 = vmatprep.subr.mxu0 0.0
    %742 = vmatpush1.msra.mxu0 0.0
    %743 = vmatprep.subr.mxu0 0.0
    %744 = vmatpush1.msra.mxu0 0.0
    %745 = vmatprep.subr.mxu0 0.0
    %746 = vmatpush1.msra.mxu0 0.0
    %747 = vmatprep.subr.mxu0 0.0
    %748 = vmatpush1.msra.mxu0 0.0
    %749 = vmatprep.subr.mxu0 0.0
    %750 = vmatpush1.msra.mxu0 0.0
    %751 = vmatprep.subr.mxu0 0.0
    %752 = vmatpush1.msra.mxu0 0.0
    %753 = vmatprep.subr.mxu0 0.0
    %754 = vmatpush1.msra.mxu0 0.0
    %755 = vmatprep.subr.mxu0 0.0
    %756 = vmatpush1.msra.mxu0 0.0
    %757 = vmatprep.mubr.f32.mxu0 0.0
    %v758 = vand.u32 %v29, 4294901760
    %759 = vmatmul.mubr.f32.gmra.mrb[0].mxu0 %v758
    %v760 = vpop.f32.mrb[0].mxu0
    %v761 = vadd.f32 %v668, %v760
    %v762 = vpop.f32.mrb[0].mxu0
    %763 = vmatprep.mubr.f32.mxu0 0.0
    %v764 = vand.u32 %v30, 4294901760
    %765 = vmatmul.mubr.f32.gmra.mrb[0].mxu0 %v764
    %v766 = vpop.f32.mrb[0].mxu0
    %v767 = vadd.f32 %v674, %v766
    %v768 = vpop.f32.mrb[0].mxu0
    %769 = vdwg.mxu0
    %s770 = scalar_lea.vmem [#allocation2], 128
    %v771 = vld [vmem:[%s770] sm:$0xff]
    %v772 = vld [vmem:[%s770 + $0x8] sm:$0xff]
    %v773 = vld [vmem:[%s770 + $0x10] sm:$0xff]
    %v774 = vld [vmem:[%s770 + $0x18] sm:$0xff]
    %v775 = vld [vmem:[%s770 + $0x20] sm:$0xff]
    %v776 = vld [vmem:[%s770 + $0x28] sm:$0xff]
    %v777 = vld [vmem:[%s770 + $0x30] sm:$0xff]
    %v778 = vld [vmem:[%s770 + $0x38] sm:$0xff]
    %v779 = vld [vmem:[%s770 + $0x40] sm:$0xff]
    %v780 = vld [vmem:[%s770 + $0x48] sm:$0xff]
    %v781 = vld [vmem:[%s770 + $0x50] sm:$0xff]
    %v782 = vld [vmem:[%s770 + $0x58] sm:$0xff]
    %v783 = vld [vmem:[%s770 + $0x60] sm:$0xff]
    %v784 = vld [vmem:[%s770 + $0x68] sm:$0xff]
    %v785 = vld [vmem:[%s770 + $0x70] sm:$0xff]
    %v786 = vld [vmem:[%s770 + $0x78] sm:$0xff]
    %s787 = scalar_lea.vmem [#allocation2], 256
    %v788 = vld [vmem:[%s787] sm:$0xff]
    %v789 = vld [vmem:[%s787 + $0x8] sm:$0xff]
    %v790 = vld [vmem:[%s787 + $0x10] sm:$0xff]
    %v791 = vld [vmem:[%s787 + $0x18] sm:$0xff]
    %v792 = vld [vmem:[%s787 + $0x20] sm:$0xff]
    %v793 = vld [vmem:[%s787 + $0x28] sm:$0xff]
    %v794 = vld [vmem:[%s787 + $0x30] sm:$0xff]
    %v795 = vld [vmem:[%s787 + $0x38] sm:$0xff]
    %v796 = vld [vmem:[%s787 + $0x40] sm:$0xff]
    %v797 = vld [vmem:[%s787 + $0x48] sm:$0xff]
    %v798 = vld [vmem:[%s787 + $0x50] sm:$0xff]
    %v799 = vld [vmem:[%s787 + $0x58] sm:$0xff]
    %v800 = vld [vmem:[%s787 + $0x60] sm:$0xff]
    %v801 = vld [vmem:[%s787 + $0x68] sm:$0xff]
    %v802 = vld [vmem:[%s787 + $0x70] sm:$0xff]
    %v803 = vld [vmem:[%s787 + $0x78] sm:$0xff]
    %804 = vmatprep.subr.mxu0 0.0
    %v805 = vand.u32 %v771, 4294901760
    %806 = vmatpush1.msra.mxu0 %v805
    %807 = vmatprep.subr.mxu0 0.0
    %v808 = vand.u32 %v772, 4294901760
    %809 = vmatpush1.msra.mxu0 %v808
    %810 = vmatprep.subr.mxu0 0.0
    %v811 = vand.u32 %v773, 4294901760
    %812 = vmatpush1.msra.mxu0 %v811
    %813 = vmatprep.subr.mxu0 0.0
    %v814 = vand.u32 %v774, 4294901760
    %815 = vmatpush1.msra.mxu0 %v814
    %816 = vmatprep.subr.mxu0 0.0
    %v817 = vand.u32 %v775, 4294901760
    %818 = vmatpush1.msra.mxu0 %v817
    %819 = vmatprep.subr.mxu0 0.0
    %v820 = vand.u32 %v776, 4294901760
    %821 = vmatpush1.msra.mxu0 %v820
    %822 = vmatprep.subr.mxu0 0.0
    %v823 = vand.u32 %v777, 4294901760
    %824 = vmatpush1.msra.mxu0 %v823
    %825 = vmatprep.subr.mxu0 0.0
    %v826 = vand.u32 %v778, 4294901760
    %827 = vmatpush1.msra.mxu0 %v826
    %828 = vmatprep.subr.mxu0 0.0
    %v829 = vand.u32 %v779, 4294901760
    %830 = vmatpush1.msra.mxu0 %v829
    %831 = vmatprep.subr.mxu0 0.0
    %v832 = vand.u32 %v780, 4294901760
    %833 = vmatpush1.msra.mxu0 %v832
    %834 = vmatprep.subr.mxu0 0.0
    %v835 = vand.u32 %v781, 4294901760
    %836 = vmatpush1.msra.mxu0 %v835
    %837 = vmatprep.subr.mxu0 0.0
    %v838 = vand.u32 %v782, 4294901760
    %839 = vmatpush1.msra.mxu0 %v838
    %840 = vmatprep.subr.mxu0 0.0
    %v841 = vand.u32 %v783, 4294901760
    %842 = vmatpush1.msra.mxu0 %v841
    %843 = vmatprep.subr.mxu0 0.0
    %v844 = vand.u32 %v784, 4294901760
    %845 = vmatpush1.msra.mxu0 %v844
    %846 = vmatprep.subr.mxu0 0.0
    %v847 = vand.u32 %v785, 4294901760
    %848 = vmatpush1.msra.mxu0 %v847
    %849 = vmatprep.subr.mxu0 0.0
    %v850 = vand.u32 %v786, 4294901760
    %851 = vmatpush1.msra.mxu0 %v850
    %852 = vmatprep.subr.mxu0 0.0
    %853 = vmatpush1.msra.mxu0 0.0
    %854 = vmatprep.subr.mxu0 0.0
    %855 = vmatpush1.msra.mxu0 0.0
    %856 = vmatprep.subr.mxu0 0.0
    %857 = vmatpush1.msra.mxu0 0.0
    %858 = vmatprep.subr.mxu0 0.0
    %859 = vmatpush1.msra.mxu0 0.0
    %860 = vmatprep.subr.mxu0 0.0
    %861 = vmatpush1.msra.mxu0 0.0
    %862 = vmatprep.subr.mxu0 0.0
    %863 = vmatpush1.msra.mxu0 0.0
    %864 = vmatprep.subr.mxu0 0.0
    %865 = vmatpush1.msra.mxu0 0.0
    %866 = vmatprep.subr.mxu0 0.0
    %867 = vmatpush1.msra.mxu0 0.0
    %868 = vmatprep.subr.mxu0 0.0
    %869 = vmatpush1.msra.mxu0 0.0
    %870 = vmatprep.subr.mxu0 0.0
    %871 = vmatpush1.msra.mxu0 0.0
    %872 = vmatprep.subr.mxu0 0.0
    %873 = vmatpush1.msra.mxu0 0.0
    %874 = vmatprep.subr.mxu0 0.0
    %875 = vmatpush1.msra.mxu0 0.0
    %876 = vmatprep.subr.mxu0 0.0
    %877 = vmatpush1.msra.mxu0 0.0
    %878 = vmatprep.subr.mxu0 0.0
    %879 = vmatpush1.msra.mxu0 0.0
    %880 = vmatprep.subr.mxu0 0.0
    %881 = vmatpush1.msra.mxu0 0.0
    %882 = vmatprep.subr.mxu0 0.0
    %883 = vmatpush1.msra.mxu0 0.0
    %884 = vmatprep.mubr.f32.mxu0 0.0
    %v885 = vand.u32 %v761, 4294901760
    %v886 = vsub.f32 %v761, %v885
    %v887 = vand.u32 %v886, 4294901760
    %v888 = vsub.f32 %v886, %v887
    %v889 = vand.u32 %v888, 4294901760
    %890 = vmatmul.mubr.f32.gmra.mrb[0].mxu0 %v889
    %v891 = vpop.f32.mrb[0].mxu0
    %v892 = vadd.f32 0.0, %v891
    %v893 = vpop.f32.mrb[0].mxu0
    %894 = vmatprep.mubr.f32.mxu0 0.0
    %v895 = vand.u32 %v767, 4294901760
    %v896 = vsub.f32 %v767, %v895
    %v897 = vand.u32 %v896, 4294901760
    %v898 = vsub.f32 %v896, %v897
    %v899 = vand.u32 %v898, 4294901760
    %900 = vmatmul.mubr.f32.gmra.mrb[0].mxu0 %v899
    %v901 = vpop.f32.mrb[0].mxu0
    %v902 = vadd.f32 0.0, %v901
    %v903 = vpop.f32.mrb[0].mxu0
    %904 = vdwg.mxu0
    %905 = vmatprep.subr.mxu0 0.0
    %v906 = vand.u32 %v771, 4294901760
    %v907 = vsub.f32 %v771, %v906
    %v908 = vand.u32 %v907, 4294901760
    %v909 = vsub.f32 %v907, %v908
    %v910 = vand.u32 %v909, 4294901760
    %911 = vmatpush1.msra.mxu0 %v910
    %912 = vmatprep.subr.mxu0 0.0
    %v913 = vand.u32 %v772, 4294901760
    %v914 = vsub.f32 %v772, %v913
    %v915 = vand.u32 %v914, 4294901760
    %v916 = vsub.f32 %v914, %v915
    %v917 = vand.u32 %v916, 4294901760
    %918 = vmatpush1.msra.mxu0 %v917
    %919 = vmatprep.subr.mxu0 0.0
    %v920 = vand.u32 %v773, 4294901760
    %v921 = vsub.f32 %v773, %v920
    %v922 = vand.u32 %v921, 4294901760
    %v923 = vsub.f32 %v921, %v922
    %v924 = vand.u32 %v923, 4294901760
    %925 = vmatpush1.msra.mxu0 %v924
    %926 = vmatprep.subr.mxu0 0.0
    %v927 = vand.u32 %v774, 4294901760
    %v928 = vsub.f32 %v774, %v927
    %v929 = vand.u32 %v928, 4294901760
    %v930 = vsub.f32 %v928, %v929
    %v931 = vand.u32 %v930, 4294901760
    %932 = vmatpush1.msra.mxu0 %v931
    %933 = vmatprep.subr.mxu0 0.0
    %v934 = vand.u32 %v775, 4294901760
    %v935 = vsub.f32 %v775, %v934
    %v936 = vand.u32 %v935, 4294901760
    %v937 = vsub.f32 %v935, %v936
    %v938 = vand.u32 %v937, 4294901760
    %939 = vmatpush1.msra.mxu0 %v938
    %940 = vmatprep.subr.mxu0 0.0
    %v941 = vand.u32 %v776, 4294901760
    %v942 = vsub.f32 %v776, %v941
    %v943 = vand.u32 %v942, 4294901760
    %v944 = vsub.f32 %v942, %v943
    %v945 = vand.u32 %v944, 4294901760
    %946 = vmatpush1.msra.mxu0 %v945
    %947 = vmatprep.subr.mxu0 0.0
    %v948 = vand.u32 %v777, 4294901760
    %v949 = vsub.f32 %v777, %v948
    %v950 = vand.u32 %v949, 4294901760
    %v951 = vsub.f32 %v949, %v950
    %v952 = vand.u32 %v951, 4294901760
    %953 = vmatpush1.msra.mxu0 %v952
    %954 = vmatprep.subr.mxu0 0.0
    %v955 = vand.u32 %v778, 4294901760
    %v956 = vsub.f32 %v778, %v955
    %v957 = vand.u32 %v956, 4294901760
    %v958 = vsub.f32 %v956, %v957
    %v959 = vand.u32 %v958, 4294901760
    %960 = vmatpush1.msra.mxu0 %v959
    %961 = vmatprep.subr.mxu0 0.0
    %v962 = vand.u32 %v779, 4294901760
    %v963 = vsub.f32 %v779, %v962
    %v964 = vand.u32 %v963, 4294901760
    %v965 = vsub.f32 %v963, %v964
    %v966 = vand.u32 %v965, 4294901760
    %967 = vmatpush1.msra.mxu0 %v966
    %968 = vmatprep.subr.mxu0 0.0
    %v969 = vand.u32 %v780, 4294901760
    %v970 = vsub.f32 %v780, %v969
    %v971 = vand.u32 %v970, 4294901760
    %v972 = vsub.f32 %v970, %v971
    %v973 = vand.u32 %v972, 4294901760
    %974 = vmatpush1.msra.mxu0 %v973
    %975 = vmatprep.subr.mxu0 0.0
    %v976 = vand.u32 %v781, 4294901760
    %v977 = vsub.f32 %v781, %v976
    %v978 = vand.u32 %v977, 4294901760
    %v979 = vsub.f32 %v977, %v978
    %v980 = vand.u32 %v979, 4294901760
    %981 = vmatpush1.msra.mxu0 %v980
    %982 = vmatprep.subr.mxu0 0.0
    %v983 = vand.u32 %v782, 4294901760
    %v984 = vsub.f32 %v782, %v983
    %v985 = vand.u32 %v984, 4294901760
    %v986 = vsub.f32 %v984, %v985
    %v987 = vand.u32 %v986, 4294901760
    %988 = vmatpush1.msra.mxu0 %v987
    %989 = vmatprep.subr.mxu0 0.0
    %v990 = vand.u32 %v783, 4294901760
    %v991 = vsub.f32 %v783, %v990
    %v992 = vand.u32 %v991, 4294901760
    %v993 = vsub.f32 %v991, %v992
    %v994 = vand.u32 %v993, 4294901760
    %995 = vmatpush1.msra.mxu0 %v994
    %996 = vmatprep.subr.mxu0 0.0
    %v997 = vand.u32 %v784, 4294901760
    %v998 = vsub.f32 %v784, %v997
    %v999 = vand.u32 %v998, 4294901760
    %v1000 = vsub.f32 %v998, %v999
    %v1001 = vand.u32 %v1000, 4294901760
    %1002 = vmatpush1.msra.mxu0 %v1001
    %1003 = vmatprep.subr.mxu0 0.0
    %v1004 = vand.u32 %v785, 4294901760
    %v1005 = vsub.f32 %v785, %v1004
    %v1006 = vand.u32 %v1005, 4294901760
    %v1007 = vsub.f32 %v1005, %v1006
    %v1008 = vand.u32 %v1007, 4294901760
    %1009 = vmatpush1.msra.mxu0 %v1008
    %1010 = vmatprep.subr.mxu0 0.0
    %v1011 = vand.u32 %v786, 4294901760
    %v1012 = vsub.f32 %v786, %v1011
    %v1013 = vand.u32 %v1012, 4294901760
    %v1014 = vsub.f32 %v1012, %v1013
    %v1015 = vand.u32 %v1014, 4294901760
    %1016 = vmatpush1.msra.mxu0 %v1015
    %1017 = vmatprep.subr.mxu0 0.0
    %1018 = vmatpush1.msra.mxu0 0.0
    %1019 = vmatprep.subr.mxu0 0.0
    %1020 = vmatpush1.msra.mxu0 0.0
    %1021 = vmatprep.subr.mxu0 0.0
    %1022 = vmatpush1.msra.mxu0 0.0
    %1023 = vmatprep.subr.mxu0 0.0
    %1024 = vmatpush1.msra.mxu0 0.0
    %1025 = vmatprep.subr.mxu0 0.0
    %1026 = vmatpush1.msra.mxu0 0.0
    %1027 = vmatprep.subr.mxu0 0.0
    %1028 = vmatpush1.msra.mxu0 0.0
    %1029 = vmatprep.subr.mxu0 0.0
    %1030 = vmatpush1.msra.mxu0 0.0
    %1031 = vmatprep.subr.mxu0 0.0
    %1032 = vmatpush1.msra.mxu0 0.0
    %1033 = vmatprep.subr.mxu0 0.0
    %1034 = vmatpush1.msra.mxu0 0.0
    %1035 = vmatprep.subr.mxu0 0.0
    %1036 = vmatpush1.msra.mxu0 0.0
    %1037 = vmatprep.subr.mxu0 0.0
    %1038 = vmatpush1.msra.mxu0 0.0
    %1039 = vmatprep.subr.mxu0 0.0
    %1040 = vmatpush1.msra.mxu0 0.0
    %1041 = vmatprep.subr.mxu0 0.0
    %1042 = vmatpush1.msra.mxu0 0.0
    %1043 = vmatprep.subr.mxu0 0.0
    %1044 = vmatpush1.msra.mxu0 0.0
    %1045 = vmatprep.subr.mxu0 0.0
    %1046 = vmatpush1.msra.mxu0 0.0
    %1047 = vmatprep.subr.mxu0 0.0
    %1048 = vmatpush1.msra.mxu0 0.0
    %1049 = vmatprep.mubr.f32.mxu0 0.0
    %v1050 = vand.u32 %v761, 4294901760
    %1051 = vmatmul.mubr.f32.gmra.mrb[0].mxu0 %v1050
    %v1052 = vpop.f32.mrb[0].mxu0
    %v1053 = vadd.f32 %v892, %v1052
    %v1054 = vpop.f32.mrb[0].mxu0
    %1055 = vmatprep.mubr.f32.mxu0 0.0
    %v1056 = vand.u32 %v767, 4294901760
    %1057 = vmatmul.mubr.f32.gmra.mrb[0].mxu0 %v1056
    %v1058 = vpop.f32.mrb[0].mxu0
    %v1059 = vadd.f32 %v902, %v1058
    %v1060 = vpop.f32.mrb[0].mxu0
    %1061 = vdwg.mxu0
    %1062 = vmatprep.subr.mxu0 0.0
    %v1063 = vand.u32 %v771, 4294901760
    %v1064 = vsub.f32 %v771, %v1063
    %1065 = vmatpush1.msra.mxu0 %v1064
    %1066 = vmatprep.subr.mxu0 0.0
    %v1067 = vand.u32 %v772, 4294901760
    %v1068 = vsub.f32 %v772, %v1067
    %1069 = vmatpush1.msra.mxu0 %v1068
    %1070 = vmatprep.subr.mxu0 0.0
    %v1071 = vand.u32 %v773, 4294901760
    %v1072 = vsub.f32 %v773, %v1071
    %1073 = vmatpush1.msra.mxu0 %v1072
    %1074 = vmatprep.subr.mxu0 0.0
    %v1075 = vand.u32 %v774, 4294901760
    %v1076 = vsub.f32 %v774, %v1075
    %1077 = vmatpush1.msra.mxu0 %v1076
    %1078 = vmatprep.subr.mxu0 0.0
    %v1079 = vand.u32 %v775, 4294901760
    %v1080 = vsub.f32 %v775, %v1079
    %1081 = vmatpush1.msra.mxu0 %v1080
    %1082 = vmatprep.subr.mxu0 0.0
    %v1083 = vand.u32 %v776, 4294901760
    %v1084 = vsub.f32 %v776, %v1083
    %1085 = vmatpush1.msra.mxu0 %v1084
    %1086 = vmatprep.subr.mxu0 0.0
    %v1087 = vand.u32 %v777, 4294901760
    %v1088 = vsub.f32 %v777, %v1087
    %1089 = vmatpush1.msra.mxu0 %v1088
    %1090 = vmatprep.subr.mxu0 0.0
    %v1091 = vand.u32 %v778, 4294901760
    %v1092 = vsub.f32 %v778, %v1091
    %1093 = vmatpush1.msra.mxu0 %v1092
    %1094 = vmatprep.subr.mxu0 0.0
    %v1095 = vand.u32 %v779, 4294901760
    %v1096 = vsub.f32 %v779, %v1095
    %1097 = vmatpush1.msra.mxu0 %v1096
    %1098 = vmatprep.subr.mxu0 0.0
    %v1099 = vand.u32 %v780, 4294901760
    %v1100 = vsub.f32 %v780, %v1099
    %1101 = vmatpush1.msra.mxu0 %v1100
    %1102 = vmatprep.subr.mxu0 0.0
    %v1103 = vand.u32 %v781, 4294901760
    %v1104 = vsub.f32 %v781, %v1103
    %1105 = vmatpush1.msra.mxu0 %v1104
    %1106 = vmatprep.subr.mxu0 0.0
    %v1107 = vand.u32 %v782, 4294901760
    %v1108 = vsub.f32 %v782, %v1107
    %1109 = vmatpush1.msra.mxu0 %v1108
    %1110 = vmatprep.subr.mxu0 0.0
    %v1111 = vand.u32 %v783, 4294901760
    %v1112 = vsub.f32 %v783, %v1111
    %1113 = vmatpush1.msra.mxu0 %v1112
    %1114 = vmatprep.subr.mxu0 0.0
    %v1115 = vand.u32 %v784, 4294901760
    %v1116 = vsub.f32 %v784, %v1115
    %1117 = vmatpush1.msra.mxu0 %v1116
    %1118 = vmatprep.subr.mxu0 0.0
    %v1119 = vand.u32 %v785, 4294901760
    %v1120 = vsub.f32 %v785, %v1119
    %1121 = vmatpush1.msra.mxu0 %v1120
    %1122 = vmatprep.subr.mxu0 0.0
    %v1123 = vand.u32 %v786, 4294901760
    %v1124 = vsub.f32 %v786, %v1123
    %1125 = vmatpush1.msra.mxu0 %v1124
    %1126 = vmatprep.subr.mxu0 0.0
    %1127 = vmatpush1.msra.mxu0 0.0
    %1128 = vmatprep.subr.mxu0 0.0
    %1129 = vmatpush1.msra.mxu0 0.0
    %1130 = vmatprep.subr.mxu0 0.0
    %1131 = vmatpush1.msra.mxu0 0.0
    %1132 = vmatprep.subr.mxu0 0.0
    %1133 = vmatpush1.msra.mxu0 0.0
    %1134 = vmatprep.subr.mxu0 0.0
    %1135 = vmatpush1.msra.mxu0 0.0
    %1136 = vmatprep.subr.mxu0 0.0
    %1137 = vmatpush1.msra.mxu0 0.0
    %1138 = vmatprep.subr.mxu0 0.0
    %1139 = vmatpush1.msra.mxu0 0.0
    %1140 = vmatprep.subr.mxu0 0.0
    %1141 = vmatpush1.msra.mxu0 0.0
    %1142 = vmatprep.subr.mxu0 0.0
    %1143 = vmatpush1.msra.mxu0 0.0
    %1144 = vmatprep.subr.mxu0 0.0
    %1145 = vmatpush1.msra.mxu0 0.0
    %1146 = vmatprep.subr.mxu0 0.0
    %1147 = vmatpush1.msra.mxu0 0.0
    %1148 = vmatprep.subr.mxu0 0.0
    %1149 = vmatpush1.msra.mxu0 0.0
    %1150 = vmatprep.subr.mxu0 0.0
    %1151 = vmatpush1.msra.mxu0 0.0
    %1152 = vmatprep.subr.mxu0 0.0
    %1153 = vmatpush1.msra.mxu0 0.0
    %1154 = vmatprep.subr.mxu0 0.0
    %1155 = vmatpush1.msra.mxu0 0.0
    %1156 = vmatprep.subr.mxu0 0.0
    %1157 = vmatpush1.msra.mxu0 0.0
    %1158 = vmatprep.mubr.f32.mxu0 0.0
    %v1159 = vand.u32 %v761, 4294901760
    %v1160 = vsub.f32 %v761, %v1159
    %1161 = vmatmul.mubr.f32.gmra.mrb[0].mxu0 %v1160
    %v1162 = vpop.f32.mrb[0].mxu0
    %v1163 = vadd.f32 %v1053, %v1162
    %v1164 = vpop.f32.mrb[0].mxu0
    %1165 = vmatprep.mubr.f32.mxu0 0.0
    %v1166 = vand.u32 %v767, 4294901760
    %v1167 = vsub.f32 %v767, %v1166
    %1168 = vmatmul.mubr.f32.gmra.mrb[0].mxu0 %v1167
    %v1169 = vpop.f32.mrb[0].mxu0
    %v1170 = vadd.f32 %v1059, %v1169
    %v1171 = vpop.f32.mrb[0].mxu0
    %1172 = vdwg.mxu0
    %1173 = vmatprep.subr.mxu0 0.0
    %v1174 = vand.u32 %v771, 4294901760
    %1175 = vmatpush1.msra.mxu0 %v1174
    %1176 = vmatprep.subr.mxu0 0.0
    %v1177 = vand.u32 %v772, 4294901760
    %1178 = vmatpush1.msra.mxu0 %v1177
    %1179 = vmatprep.subr.mxu0 0.0
    %v1180 = vand.u32 %v773, 4294901760
    %1181 = vmatpush1.msra.mxu0 %v1180
    %1182 = vmatprep.subr.mxu0 0.0
    %v1183 = vand.u32 %v774, 4294901760
    %1184 = vmatpush1.msra.mxu0 %v1183
    %1185 = vmatprep.subr.mxu0 0.0
    %v1186 = vand.u32 %v775, 4294901760
    %1187 = vmatpush1.msra.mxu0 %v1186
    %1188 = vmatprep.subr.mxu0 0.0
    %v1189 = vand.u32 %v776, 4294901760
    %1190 = vmatpush1.msra.mxu0 %v1189
    %1191 = vmatprep.subr.mxu0 0.0
    %v1192 = vand.u32 %v777, 4294901760
    %1193 = vmatpush1.msra.mxu0 %v1192
    %1194 = vmatprep.subr.mxu0 0.0
    %v1195 = vand.u32 %v778, 4294901760
    %1196 = vmatpush1.msra.mxu0 %v1195
    %1197 = vmatprep.subr.mxu0 0.0
    %v1198 = vand.u32 %v779, 4294901760
    %1199 = vmatpush1.msra.mxu0 %v1198
    %1200 = vmatprep.subr.mxu0 0.0
    %v1201 = vand.u32 %v780, 4294901760
    %1202 = vmatpush1.msra.mxu0 %v1201
    %1203 = vmatprep.subr.mxu0 0.0
    %v1204 = vand.u32 %v781, 4294901760
    %1205 = vmatpush1.msra.mxu0 %v1204
    %1206 = vmatprep.subr.mxu0 0.0
    %v1207 = vand.u32 %v782, 4294901760
    %1208 = vmatpush1.msra.mxu0 %v1207
    %1209 = vmatprep.subr.mxu0 0.0
    %v1210 = vand.u32 %v783, 4294901760
    %1211 = vmatpush1.msra.mxu0 %v1210
    %1212 = vmatprep.subr.mxu0 0.0
    %v1213 = vand.u32 %v784, 4294901760
    %1214 = vmatpush1.msra.mxu0 %v1213
    %1215 = vmatprep.subr.mxu0 0.0
    %v1216 = vand.u32 %v785, 4294901760
    %1217 = vmatpush1.msra.mxu0 %v1216
    %1218 = vmatprep.subr.mxu0 0.0
    %v1219 = vand.u32 %v786, 4294901760
    %1220 = vmatpush1.msra.mxu0 %v1219
    %1221 = vmatprep.subr.mxu0 0.0
    %1222 = vmatpush1.msra.mxu0 0.0
    %1223 = vmatprep.subr.mxu0 0.0
    %1224 = vmatpush1.msra.mxu0 0.0
    %1225 = vmatprep.subr.mxu0 0.0
    %1226 = vmatpush1.msra.mxu0 0.0
    %1227 = vmatprep.subr.mxu0 0.0
    %1228 = vmatpush1.msra.mxu0 0.0
    %1229 = vmatprep.subr.mxu0 0.0
    %1230 = vmatpush1.msra.mxu0 0.0
    %1231 = vmatprep.subr.mxu0 0.0
    %1232 = vmatpush1.msra.mxu0 0.0
    %1233 = vmatprep.subr.mxu0 0.0
    %1234 = vmatpush1.msra.mxu0 0.0
    %1235 = vmatprep.subr.mxu0 0.0
    %1236 = vmatpush1.msra.mxu0 0.0
    %1237 = vmatprep.subr.mxu0 0.0
    %1238 = vmatpush1.msra.mxu0 0.0
    %1239 = vmatprep.subr.mxu0 0.0
    %1240 = vmatpush1.msra.mxu0 0.0
    %1241 = vmatprep.subr.mxu0 0.0
    %1242 = vmatpush1.msra.mxu0 0.0
    %1243 = vmatprep.subr.mxu0 0.0
    %1244 = vmatpush1.msra.mxu0 0.0
    %1245 = vmatprep.subr.mxu0 0.0
    %1246 = vmatpush1.msra.mxu0 0.0
    %1247 = vmatprep.subr.mxu0 0.0
    %1248 = vmatpush1.msra.mxu0 0.0
    %1249 = vmatprep.subr.mxu0 0.0
    %1250 = vmatpush1.msra.mxu0 0.0
    %1251 = vmatprep.subr.mxu0 0.0
    %1252 = vmatpush1.msra.mxu0 0.0
    %1253 = vmatprep.mubr.f32.mxu0 0.0
    %v1254 = vand.u32 %v761, 4294901760
    %v1255 = vsub.f32 %v761, %v1254
    %v1256 = vand.u32 %v1255, 4294901760
    %1257 = vmatmul.mubr.f32.gmra.mrb[0].mxu0 %v1256
    %v1258 = vpop.f32.mrb[0].mxu0
    %v1259 = vadd.f32 %v1163, %v1258
    %v1260 = vpop.f32.mrb[0].mxu0
    %1261 = vmatprep.mubr.f32.mxu0 0.0
    %v1262 = vand.u32 %v767, 4294901760
    %v1263 = vsub.f32 %v767, %v1262
    %v1264 = vand.u32 %v1263, 4294901760
    %1265 = vmatmul.mubr.f32.gmra.mrb[0].mxu0 %v1264
    %v1266 = vpop.f32.mrb[0].mxu0
    %v1267 = vadd.f32 %v1170, %v1266
    %v1268 = vpop.f32.mrb[0].mxu0
    %1269 = vdwg.mxu0
    %1270 = vmatprep.subr.mxu0 0.0
    %v1271 = vand.u32 %v771, 4294901760
    %v1272 = vsub.f32 %v771, %v1271
    %v1273 = vand.u32 %v1272, 4294901760
    %1274 = vmatpush1.msra.mxu0 %v1273
    %1275 = vmatprep.subr.mxu0 0.0
    %v1276 = vand.u32 %v772, 4294901760
    %v1277 = vsub.f32 %v772, %v1276
    %v1278 = vand.u32 %v1277, 4294901760
    %1279 = vmatpush1.msra.mxu0 %v1278
    %1280 = vmatprep.subr.mxu0 0.0
    %v1281 = vand.u32 %v773, 4294901760
    %v1282 = vsub.f32 %v773, %v1281
    %v1283 = vand.u32 %v1282, 4294901760
    %1284 = vmatpush1.msra.mxu0 %v1283
    %1285 = vmatprep.subr.mxu0 0.0
    %v1286 = vand.u32 %v774, 4294901760
    %v1287 = vsub.f32 %v774, %v1286
    %v1288 = vand.u32 %v1287, 4294901760
    %1289 = vmatpush1.msra.mxu0 %v1288
    %1290 = vmatprep.subr.mxu0 0.0
    %v1291 = vand.u32 %v775, 4294901760
    %v1292 = vsub.f32 %v775, %v1291
    %v1293 = vand.u32 %v1292, 4294901760
    %1294 = vmatpush1.msra.mxu0 %v1293
    %1295 = vmatprep.subr.mxu0 0.0
    %v1296 = vand.u32 %v776, 4294901760
    %v1297 = vsub.f32 %v776, %v1296
    %v1298 = vand.u32 %v1297, 4294901760
    %1299 = vmatpush1.msra.mxu0 %v1298
    %1300 = vmatprep.subr.mxu0 0.0
    %v1301 = vand.u32 %v777, 4294901760
    %v1302 = vsub.f32 %v777, %v1301
    %v1303 = vand.u32 %v1302, 4294901760
    %1304 = vmatpush1.msra.mxu0 %v1303
    %1305 = vmatprep.subr.mxu0 0.0
    %v1306 = vand.u32 %v778, 4294901760
    %v1307 = vsub.f32 %v778, %v1306
    %v1308 = vand.u32 %v1307, 4294901760
    %1309 = vmatpush1.msra.mxu0 %v1308
    %1310 = vmatprep.subr.mxu0 0.0
    %v1311 = vand.u32 %v779, 4294901760
    %v1312 = vsub.f32 %v779, %v1311
    %v1313 = vand.u32 %v1312, 4294901760
    %1314 = vmatpush1.msra.mxu0 %v1313
    %1315 = vmatprep.subr.mxu0 0.0
    %v1316 = vand.u32 %v780, 4294901760
    %v1317 = vsub.f32 %v780, %v1316
    %v1318 = vand.u32 %v1317, 4294901760
    %1319 = vmatpush1.msra.mxu0 %v1318
    %1320 = vmatprep.subr.mxu0 0.0
    %v1321 = vand.u32 %v781, 4294901760
    %v1322 = vsub.f32 %v781, %v1321
    %v1323 = vand.u32 %v1322, 4294901760
    %1324 = vmatpush1.msra.mxu0 %v1323
    %1325 = vmatprep.subr.mxu0 0.0
    %v1326 = vand.u32 %v782, 4294901760
    %v1327 = vsub.f32 %v782, %v1326
    %v1328 = vand.u32 %v1327, 4294901760
    %1329 = vmatpush1.msra.mxu0 %v1328
    %1330 = vmatprep.subr.mxu0 0.0
    %v1331 = vand.u32 %v783, 4294901760
    %v1332 = vsub.f32 %v783, %v1331
    %v1333 = vand.u32 %v1332, 4294901760
    %1334 = vmatpush1.msra.mxu0 %v1333
    %1335 = vmatprep.subr.mxu0 0.0
    %v1336 = vand.u32 %v784, 4294901760
    %v1337 = vsub.f32 %v784, %v1336
    %v1338 = vand.u32 %v1337, 4294901760
    %1339 = vmatpush1.msra.mxu0 %v1338
    %1340 = vmatprep.subr.mxu0 0.0
    %v1341 = vand.u32 %v785, 4294901760
    %v1342 = vsub.f32 %v785, %v1341
    %v1343 = vand.u32 %v1342, 4294901760
    %1344 = vmatpush1.msra.mxu0 %v1343
    %1345 = vmatprep.subr.mxu0 0.0
    %v1346 = vand.u32 %v786, 4294901760
    %v1347 = vsub.f32 %v786, %v1346
    %v1348 = vand.u32 %v1347, 4294901760
    %1349 = vmatpush1.msra.mxu0 %v1348
    %1350 = vmatprep.subr.mxu0 0.0
    %1351 = vmatpush1.msra.mxu0 0.0
    %1352 = vmatprep.subr.mxu0 0.0
    %1353 = vmatpush1.msra.mxu0 0.0
    %1354 = vmatprep.subr.mxu0 0.0
    %1355 = vmatpush1.msra.mxu0 0.0
    %1356 = vmatprep.subr.mxu0 0.0
    %1357 = vmatpush1.msra.mxu0 0.0
    %1358 = vmatprep.subr.mxu0 0.0
    %1359 = vmatpush1.msra.mxu0 0.0
    %1360 = vmatprep.subr.mxu0 0.0
    %1361 = vmatpush1.msra.mxu0 0.0
    %1362 = vmatprep.subr.mxu0 0.0
    %1363 = vmatpush1.msra.mxu0 0.0
    %1364 = vmatprep.subr.mxu0 0.0
    %1365 = vmatpush1.msra.mxu0 0.0
    %1366 = vmatprep.subr.mxu0 0.0
    %1367 = vmatpush1.msra.mxu0 0.0
    %1368 = vmatprep.subr.mxu0 0.0
    %1369 = vmatpush1.msra.mxu0 0.0
    %1370 = vmatprep.subr.mxu0 0.0
    %1371 = vmatpush1.msra.mxu0 0.0
    %1372 = vmatprep.subr.mxu0 0.0
    %1373 = vmatpush1.msra.mxu0 0.0
    %1374 = vmatprep.subr.mxu0 0.0
    %1375 = vmatpush1.msra.mxu0 0.0
    %1376 = vmatprep.subr.mxu0 0.0
    %1377 = vmatpush1.msra.mxu0 0.0
    %1378 = vmatprep.subr.mxu0 0.0
    %1379 = vmatpush1.msra.mxu0 0.0
    %1380 = vmatprep.subr.mxu0 0.0
    %1381 = vmatpush1.msra.mxu0 0.0
    %1382 = vmatprep.mubr.f32.mxu0 0.0
    %v1383 = vand.u32 %v761, 4294901760
    %1384 = vmatmul.mubr.f32.gmra.mrb[0].mxu0 %v1383
    %v1385 = vpop.f32.mrb[0].mxu0
    %v1386 = vadd.f32 %v1259, %v1385
    %v1387 = vpop.f32.mrb[0].mxu0
    %1388 = vmatprep.mubr.f32.mxu0 0.0
    %v1389 = vand.u32 %v767, 4294901760
    %1390 = vmatmul.mubr.f32.gmra.mrb[0].mxu0 %v1389
    %v1391 = vpop.f32.mrb[0].mxu0
    %v1392 = vadd.f32 %v1267, %v1391
    %v1393 = vpop.f32.mrb[0].mxu0
    %1394 = vdwg.mxu0
    %1395 = vmatprep.subr.mxu0 0.0
    %v1396 = vand.u32 %v771, 4294901760
    %1397 = vmatpush1.msra.mxu0 %v1396
    %1398 = vmatprep.subr.mxu0 0.0
    %v1399 = vand.u32 %v772, 4294901760
    %1400 = vmatpush1.msra.mxu0 %v1399
    %1401 = vmatprep.subr.mxu0 0.0
    %v1402 = vand.u32 %v773, 4294901760
    %1403 = vmatpush1.msra.mxu0 %v1402
    %1404 = vmatprep.subr.mxu0 0.0
    %v1405 = vand.u32 %v774, 4294901760
    %1406 = vmatpush1.msra.mxu0 %v1405
    %1407 = vmatprep.subr.mxu0 0.0
    %v1408 = vand.u32 %v775, 4294901760
    %1409 = vmatpush1.msra.mxu0 %v1408
    %1410 = vmatprep.subr.mxu0 0.0
    %v1411 = vand.u32 %v776, 4294901760
    %1412 = vmatpush1.msra.mxu0 %v1411
    %1413 = vmatprep.subr.mxu0 0.0
    %v1414 = vand.u32 %v777, 4294901760
    %1415 = vmatpush1.msra.mxu0 %v1414
    %1416 = vmatprep.subr.mxu0 0.0
    %v1417 = vand.u32 %v778, 4294901760
    %1418 = vmatpush1.msra.mxu0 %v1417
    %1419 = vmatprep.subr.mxu0 0.0
    %v1420 = vand.u32 %v779, 4294901760
    %1421 = vmatpush1.msra.mxu0 %v1420
    %1422 = vmatprep.subr.mxu0 0.0
    %v1423 = vand.u32 %v780, 4294901760
    %1424 = vmatpush1.msra.mxu0 %v1423
    %1425 = vmatprep.subr.mxu0 0.0
    %v1426 = vand.u32 %v781, 4294901760
    %1427 = vmatpush1.msra.mxu0 %v1426
    %1428 = vmatprep.subr.mxu0 0.0
    %v1429 = vand.u32 %v782, 4294901760
    %1430 = vmatpush1.msra.mxu0 %v1429
    %1431 = vmatprep.subr.mxu0 0.0
    %v1432 = vand.u32 %v783, 4294901760
    %1433 = vmatpush1.msra.mxu0 %v1432
    %1434 = vmatprep.subr.mxu0 0.0
    %v1435 = vand.u32 %v784, 4294901760
    %1436 = vmatpush1.msra.mxu0 %v1435
    %1437 = vmatprep.subr.mxu0 0.0
    %v1438 = vand.u32 %v785, 4294901760
    %1439 = vmatpush1.msra.mxu0 %v1438
    %1440 = vmatprep.subr.mxu0 0.0
    %v1441 = vand.u32 %v786, 4294901760
    %1442 = vmatpush1.msra.mxu0 %v1441
    %1443 = vmatprep.subr.mxu0 0.0
    %1444 = vmatpush1.msra.mxu0 0.0
    %1445 = vmatprep.subr.mxu0 0.0
    %1446 = vmatpush1.msra.mxu0 0.0
    %1447 = vmatprep.subr.mxu0 0.0
    %1448 = vmatpush1.msra.mxu0 0.0
    %1449 = vmatprep.subr.mxu0 0.0
    %1450 = vmatpush1.msra.mxu0 0.0
    %1451 = vmatprep.subr.mxu0 0.0
    %1452 = vmatpush1.msra.mxu0 0.0
    %1453 = vmatprep.subr.mxu0 0.0
    %1454 = vmatpush1.msra.mxu0 0.0
    %1455 = vmatprep.subr.mxu0 0.0
    %1456 = vmatpush1.msra.mxu0 0.0
    %1457 = vmatprep.subr.mxu0 0.0
    %1458 = vmatpush1.msra.mxu0 0.0
    %1459 = vmatprep.subr.mxu0 0.0
    %1460 = vmatpush1.msra.mxu0 0.0
    %1461 = vmatprep.subr.mxu0 0.0
    %1462 = vmatpush1.msra.mxu0 0.0
    %1463 = vmatprep.subr.mxu0 0.0
    %1464 = vmatpush1.msra.mxu0 0.0
    %1465 = vmatprep.subr.mxu0 0.0
    %1466 = vmatpush1.msra.mxu0 0.0
    %1467 = vmatprep.subr.mxu0 0.0
    %1468 = vmatpush1.msra.mxu0 0.0
    %1469 = vmatprep.subr.mxu0 0.0
    %1470 = vmatpush1.msra.mxu0 0.0
    %1471 = vmatprep.subr.mxu0 0.0
    %1472 = vmatpush1.msra.mxu0 0.0
    %1473 = vmatprep.subr.mxu0 0.0
    %1474 = vmatpush1.msra.mxu0 0.0
    %1475 = vmatprep.mubr.f32.mxu0 0.0
    %v1476 = vand.u32 %v761, 4294901760
    %1477 = vmatmul.mubr.f32.gmra.mrb[0].mxu0 %v1476
    %v1478 = vpop.f32.mrb[0].mxu0
    %v1479 = vadd.f32 %v1386, %v1478
    %v1480 = vpop.f32.mrb[0].mxu0
    %1481 = vmatprep.mubr.f32.mxu0 0.0
    %v1482 = vand.u32 %v767, 4294901760
    %1483 = vmatmul.mubr.f32.gmra.mrb[0].mxu0 %v1482
    %v1484 = vpop.f32.mrb[0].mxu0
    %v1485 = vadd.f32 %v1392, %v1484
    %v1486 = vpop.f32.mrb[0].mxu0
    %1487 = vdwg.mxu0
    %1488 = vmatprep.subr.mxu0 0.0
    %v1489 = vand.u32 %v788, 4294901760
    %1490 = vmatpush1.msra.mxu0 %v1489
    %1491 = vmatprep.subr.mxu0 0.0
    %v1492 = vand.u32 %v789, 4294901760
    %1493 = vmatpush1.msra.mxu0 %v1492
    %1494 = vmatprep.subr.mxu0 0.0
    %v1495 = vand.u32 %v790, 4294901760
    %1496 = vmatpush1.msra.mxu0 %v1495
    %1497 = vmatprep.subr.mxu0 0.0
    %v1498 = vand.u32 %v791, 4294901760
    %1499 = vmatpush1.msra.mxu0 %v1498
    %1500 = vmatprep.subr.mxu0 0.0
    %v1501 = vand.u32 %v792, 4294901760
    %1502 = vmatpush1.msra.mxu0 %v1501
    %1503 = vmatprep.subr.mxu0 0.0
    %v1504 = vand.u32 %v793, 4294901760
    %1505 = vmatpush1.msra.mxu0 %v1504
    %1506 = vmatprep.subr.mxu0 0.0
    %v1507 = vand.u32 %v794, 4294901760
    %1508 = vmatpush1.msra.mxu0 %v1507
    %1509 = vmatprep.subr.mxu0 0.0
    %v1510 = vand.u32 %v795, 4294901760
    %1511 = vmatpush1.msra.mxu0 %v1510
    %1512 = vmatprep.subr.mxu0 0.0
    %v1513 = vand.u32 %v796, 4294901760
    %1514 = vmatpush1.msra.mxu0 %v1513
    %1515 = vmatprep.subr.mxu0 0.0
    %v1516 = vand.u32 %v797, 4294901760
    %1517 = vmatpush1.msra.mxu0 %v1516
    %1518 = vmatprep.subr.mxu0 0.0
    %v1519 = vand.u32 %v798, 4294901760
    %1520 = vmatpush1.msra.mxu0 %v1519
    %1521 = vmatprep.subr.mxu0 0.0
    %v1522 = vand.u32 %v799, 4294901760
    %1523 = vmatpush1.msra.mxu0 %v1522
    %1524 = vmatprep.subr.mxu0 0.0
    %v1525 = vand.u32 %v800, 4294901760
    %1526 = vmatpush1.msra.mxu0 %v1525
    %1527 = vmatprep.subr.mxu0 0.0
    %v1528 = vand.u32 %v801, 4294901760
    %1529 = vmatpush1.msra.mxu0 %v1528
    %1530 = vmatprep.subr.mxu0 0.0
    %v1531 = vand.u32 %v802, 4294901760
    %1532 = vmatpush1.msra.mxu0 %v1531
    %1533 = vmatprep.subr.mxu0 0.0
    %v1534 = vand.u32 %v803, 4294901760
    %1535 = vmatpush1.msra.mxu0 %v1534
    %1536 = vmatprep.subr.mxu0 0.0
    %1537 = vmatpush1.msra.mxu0 0.0
    %1538 = vmatprep.subr.mxu0 0.0
    %1539 = vmatpush1.msra.mxu0 0.0
    %1540 = vmatprep.subr.mxu0 0.0
    %1541 = vmatpush1.msra.mxu0 0.0
    %1542 = vmatprep.subr.mxu0 0.0
    %1543 = vmatpush1.msra.mxu0 0.0
    %1544 = vmatprep.subr.mxu0 0.0
    %1545 = vmatpush1.msra.mxu0 0.0
    %1546 = vmatprep.subr.mxu0 0.0
    %1547 = vmatpush1.msra.mxu0 0.0
    %1548 = vmatprep.subr.mxu0 0.0
    %1549 = vmatpush1.msra.mxu0 0.0
    %1550 = vmatprep.subr.mxu0 0.0
    %1551 = vmatpush1.msra.mxu0 0.0
    %1552 = vmatprep.subr.mxu0 0.0
    %1553 = vmatpush1.msra.mxu0 0.0
    %1554 = vmatprep.subr.mxu0 0.0
    %1555 = vmatpush1.msra.mxu0 0.0
    %1556 = vmatprep.subr.mxu0 0.0
    %1557 = vmatpush1.msra.mxu0 0.0
    %1558 = vmatprep.subr.mxu0 0.0
    %1559 = vmatpush1.msra.mxu0 0.0
    %1560 = vmatprep.subr.mxu0 0.0
    %1561 = vmatpush1.msra.mxu0 0.0
    %1562 = vmatprep.subr.mxu0 0.0
    %1563 = vmatpush1.msra.mxu0 0.0
    %1564 = vmatprep.subr.mxu0 0.0
    %1565 = vmatpush1.msra.mxu0 0.0
    %1566 = vmatprep.subr.mxu0 0.0
    %1567 = vmatpush1.msra.mxu0 0.0
    %1568 = vmatprep.mubr.f32.mxu0 0.0
    %v1569 = vand.u32 %v761, 4294901760
    %v1570 = vsub.f32 %v761, %v1569
    %v1571 = vand.u32 %v1570, 4294901760
    %v1572 = vsub.f32 %v1570, %v1571
    %v1573 = vand.u32 %v1572, 4294901760
    %1574 = vmatmul.mubr.f32.gmra.mrb[0].mxu0 %v1573
    %v1575 = vpop.f32.mrb[0].mxu0
    %v1576 = vadd.f32 0.0, %v1575
    %v1577 = vpop.f32.mrb[0].mxu0
    %1578 = vmatprep.mubr.f32.mxu0 0.0
    %v1579 = vand.u32 %v767, 4294901760
    %v1580 = vsub.f32 %v767, %v1579
    %v1581 = vand.u32 %v1580, 4294901760
    %v1582 = vsub.f32 %v1580, %v1581
    %v1583 = vand.u32 %v1582, 4294901760
    %1584 = vmatmul.mubr.f32.gmra.mrb[0].mxu0 %v1583
    %v1585 = vpop.f32.mrb[0].mxu0
    %v1586 = vadd.f32 0.0, %v1585
    %v1587 = vpop.f32.mrb[0].mxu0
    %1588 = vdwg.mxu0
    %1589 = vmatprep.subr.mxu0 0.0
    %v1590 = vand.u32 %v788, 4294901760
    %v1591 = vsub.f32 %v788, %v1590
    %v1592 = vand.u32 %v1591, 4294901760
    %v1593 = vsub.f32 %v1591, %v1592
    %v1594 = vand.u32 %v1593, 4294901760
    %1595 = vmatpush1.msra.mxu0 %v1594
    %1596 = vmatprep.subr.mxu0 0.0
    %v1597 = vand.u32 %v789, 4294901760
    %v1598 = vsub.f32 %v789, %v1597
    %v1599 = vand.u32 %v1598, 4294901760
    %v1600 = vsub.f32 %v1598, %v1599
    %v1601 = vand.u32 %v1600, 4294901760
    %1602 = vmatpush1.msra.mxu0 %v1601
    %1603 = vmatprep.subr.mxu0 0.0
    %v1604 = vand.u32 %v790, 4294901760
    %v1605 = vsub.f32 %v790, %v1604
    %v1606 = vand.u32 %v1605, 4294901760
    %v1607 = vsub.f32 %v1605, %v1606
    %v1608 = vand.u32 %v1607, 4294901760
    %1609 = vmatpush1.msra.mxu0 %v1608
    %1610 = vmatprep.subr.mxu0 0.0
    %v1611 = vand.u32 %v791, 4294901760
    %v1612 = vsub.f32 %v791, %v1611
    %v1613 = vand.u32 %v1612, 4294901760
    %v1614 = vsub.f32 %v1612, %v1613
    %v1615 = vand.u32 %v1614, 4294901760
    %1616 = vmatpush1.msra.mxu0 %v1615
    %1617 = vmatprep.subr.mxu0 0.0
    %v1618 = vand.u32 %v792, 4294901760
    %v1619 = vsub.f32 %v792, %v1618
    %v1620 = vand.u32 %v1619, 4294901760
    %v1621 = vsub.f32 %v1619, %v1620
    %v1622 = vand.u32 %v1621, 4294901760
    %1623 = vmatpush1.msra.mxu0 %v1622
    %1624 = vmatprep.subr.mxu0 0.0
    %v1625 = vand.u32 %v793, 4294901760
    %v1626 = vsub.f32 %v793, %v1625
    %v1627 = vand.u32 %v1626, 4294901760
    %v1628 = vsub.f32 %v1626, %v1627
    %v1629 = vand.u32 %v1628, 4294901760
    %1630 = vmatpush1.msra.mxu0 %v1629
    %1631 = vmatprep.subr.mxu0 0.0
    %v1632 = vand.u32 %v794, 4294901760
    %v1633 = vsub.f32 %v794, %v1632
    %v1634 = vand.u32 %v1633, 4294901760
    %v1635 = vsub.f32 %v1633, %v1634
    %v1636 = vand.u32 %v1635, 4294901760
    %1637 = vmatpush1.msra.mxu0 %v1636
    %1638 = vmatprep.subr.mxu0 0.0
    %v1639 = vand.u32 %v795, 4294901760
    %v1640 = vsub.f32 %v795, %v1639
    %v1641 = vand.u32 %v1640, 4294901760
    %v1642 = vsub.f32 %v1640, %v1641
    %v1643 = vand.u32 %v1642, 4294901760
    %1644 = vmatpush1.msra.mxu0 %v1643
    %1645 = vmatprep.subr.mxu0 0.0
    %v1646 = vand.u32 %v796, 4294901760
    %v1647 = vsub.f32 %v796, %v1646
    %v1648 = vand.u32 %v1647, 4294901760
    %v1649 = vsub.f32 %v1647, %v1648
    %v1650 = vand.u32 %v1649, 4294901760
    %1651 = vmatpush1.msra.mxu0 %v1650
    %1652 = vmatprep.subr.mxu0 0.0
    %v1653 = vand.u32 %v797, 4294901760
    %v1654 = vsub.f32 %v797, %v1653
    %v1655 = vand.u32 %v1654, 4294901760
    %v1656 = vsub.f32 %v1654, %v1655
    %v1657 = vand.u32 %v1656, 4294901760
    %1658 = vmatpush1.msra.mxu0 %v1657
    %1659 = vmatprep.subr.mxu0 0.0
    %v1660 = vand.u32 %v798, 4294901760
    %v1661 = vsub.f32 %v798, %v1660
    %v1662 = vand.u32 %v1661, 4294901760
    %v1663 = vsub.f32 %v1661, %v1662
    %v1664 = vand.u32 %v1663, 4294901760
    %1665 = vmatpush1.msra.mxu0 %v1664
    %1666 = vmatprep.subr.mxu0 0.0
    %v1667 = vand.u32 %v799, 4294901760
    %v1668 = vsub.f32 %v799, %v1667
    %v1669 = vand.u32 %v1668, 4294901760
    %v1670 = vsub.f32 %v1668, %v1669
    %v1671 = vand.u32 %v1670, 4294901760
    %1672 = vmatpush1.msra.mxu0 %v1671
    %1673 = vmatprep.subr.mxu0 0.0
    %v1674 = vand.u32 %v800, 4294901760
    %v1675 = vsub.f32 %v800, %v1674
    %v1676 = vand.u32 %v1675, 4294901760
    %v1677 = vsub.f32 %v1675, %v1676
    %v1678 = vand.u32 %v1677, 4294901760
    %1679 = vmatpush1.msra.mxu0 %v1678
    %1680 = vmatprep.subr.mxu0 0.0
    %v1681 = vand.u32 %v801, 4294901760
    %v1682 = vsub.f32 %v801, %v1681
    %v1683 = vand.u32 %v1682, 4294901760
    %v1684 = vsub.f32 %v1682, %v1683
    %v1685 = vand.u32 %v1684, 4294901760
    %1686 = vmatpush1.msra.mxu0 %v1685
    %1687 = vmatprep.subr.mxu0 0.0
    %v1688 = vand.u32 %v802, 4294901760
    %v1689 = vsub.f32 %v802, %v1688
    %v1690 = vand.u32 %v1689, 4294901760
    %v1691 = vsub.f32 %v1689, %v1690
    %v1692 = vand.u32 %v1691, 4294901760
    %1693 = vmatpush1.msra.mxu0 %v1692
    %1694 = vmatprep.subr.mxu0 0.0
    %v1695 = vand.u32 %v803, 4294901760
    %v1696 = vsub.f32 %v803, %v1695
    %v1697 = vand.u32 %v1696, 4294901760
    %v1698 = vsub.f32 %v1696, %v1697
    %v1699 = vand.u32 %v1698, 4294901760
    %1700 = vmatpush1.msra.mxu0 %v1699
    %1701 = vmatprep.subr.mxu0 0.0
    %1702 = vmatpush1.msra.mxu0 0.0
    %1703 = vmatprep.subr.mxu0 0.0
    %1704 = vmatpush1.msra.mxu0 0.0
    %1705 = vmatprep.subr.mxu0 0.0
    %1706 = vmatpush1.msra.mxu0 0.0
    %1707 = vmatprep.subr.mxu0 0.0
    %1708 = vmatpush1.msra.mxu0 0.0
    %1709 = vmatprep.subr.mxu0 0.0
    %1710 = vmatpush1.msra.mxu0 0.0
    %1711 = vmatprep.subr.mxu0 0.0
    %1712 = vmatpush1.msra.mxu0 0.0
    %1713 = vmatprep.subr.mxu0 0.0
    %1714 = vmatpush1.msra.mxu0 0.0
    %1715 = vmatprep.subr.mxu0 0.0
    %1716 = vmatpush1.msra.mxu0 0.0
    %1717 = vmatprep.subr.mxu0 0.0
    %1718 = vmatpush1.msra.mxu0 0.0
    %1719 = vmatprep.subr.mxu0 0.0
    %1720 = vmatpush1.msra.mxu0 0.0
    %1721 = vmatprep.subr.mxu0 0.0
    %1722 = vmatpush1.msra.mxu0 0.0
    %1723 = vmatprep.subr.mxu0 0.0
    %1724 = vmatpush1.msra.mxu0 0.0
    %1725 = vmatprep.subr.mxu0 0.0
    %1726 = vmatpush1.msra.mxu0 0.0
    %1727 = vmatprep.subr.mxu0 0.0
    %1728 = vmatpush1.msra.mxu0 0.0
    %1729 = vmatprep.subr.mxu0 0.0
    %1730 = vmatpush1.msra.mxu0 0.0
    %1731 = vmatprep.subr.mxu0 0.0
    %1732 = vmatpush1.msra.mxu0 0.0
    %1733 = vmatprep.mubr.f32.mxu0 0.0
    %v1734 = vand.u32 %v761, 4294901760
    %1735 = vmatmul.mubr.f32.gmra.mrb[0].mxu0 %v1734
    %v1736 = vpop.f32.mrb[0].mxu0
    %v1737 = vadd.f32 %v1576, %v1736
    %v1738 = vpop.f32.mrb[0].mxu0
    %1739 = vmatprep.mubr.f32.mxu0 0.0
    %v1740 = vand.u32 %v767, 4294901760
    %1741 = vmatmul.mubr.f32.gmra.mrb[0].mxu0 %v1740
    %v1742 = vpop.f32.mrb[0].mxu0
    %v1743 = vadd.f32 %v1586, %v1742
    %v1744 = vpop.f32.mrb[0].mxu0
    %1745 = vdwg.mxu0
    %1746 = vmatprep.subr.mxu0 0.0
    %v1747 = vand.u32 %v788, 4294901760
    %v1748 = vsub.f32 %v788, %v1747
    %1749 = vmatpush1.msra.mxu0 %v1748
    %1750 = vmatprep.subr.mxu0 0.0
    %v1751 = vand.u32 %v789, 4294901760
    %v1752 = vsub.f32 %v789, %v1751
    %1753 = vmatpush1.msra.mxu0 %v1752
    %1754 = vmatprep.subr.mxu0 0.0
    %v1755 = vand.u32 %v790, 4294901760
    %v1756 = vsub.f32 %v790, %v1755
    %1757 = vmatpush1.msra.mxu0 %v1756
    %1758 = vmatprep.subr.mxu0 0.0
    %v1759 = vand.u32 %v791, 4294901760
    %v1760 = vsub.f32 %v791, %v1759
    %1761 = vmatpush1.msra.mxu0 %v1760
    %1762 = vmatprep.subr.mxu0 0.0
    %v1763 = vand.u32 %v792, 4294901760
    %v1764 = vsub.f32 %v792, %v1763
    %1765 = vmatpush1.msra.mxu0 %v1764
    %1766 = vmatprep.subr.mxu0 0.0
    %v1767 = vand.u32 %v793, 4294901760
    %v1768 = vsub.f32 %v793, %v1767
    %1769 = vmatpush1.msra.mxu0 %v1768
    %1770 = vmatprep.subr.mxu0 0.0
    %v1771 = vand.u32 %v794, 4294901760
    %v1772 = vsub.f32 %v794, %v1771
    %1773 = vmatpush1.msra.mxu0 %v1772
    %1774 = vmatprep.subr.mxu0 0.0
    %v1775 = vand.u32 %v795, 4294901760
    %v1776 = vsub.f32 %v795, %v1775
    %1777 = vmatpush1.msra.mxu0 %v1776
    %1778 = vmatprep.subr.mxu0 0.0
    %v1779 = vand.u32 %v796, 4294901760
    %v1780 = vsub.f32 %v796, %v1779
    %1781 = vmatpush1.msra.mxu0 %v1780
    %1782 = vmatprep.subr.mxu0 0.0
    %v1783 = vand.u32 %v797, 4294901760
    %v1784 = vsub.f32 %v797, %v1783
    %1785 = vmatpush1.msra.mxu0 %v1784
    %1786 = vmatprep.subr.mxu0 0.0
    %v1787 = vand.u32 %v798, 4294901760
    %v1788 = vsub.f32 %v798, %v1787
    %1789 = vmatpush1.msra.mxu0 %v1788
    %1790 = vmatprep.subr.mxu0 0.0
    %v1791 = vand.u32 %v799, 4294901760
    %v1792 = vsub.f32 %v799, %v1791
    %1793 = vmatpush1.msra.mxu0 %v1792
    %1794 = vmatprep.subr.mxu0 0.0
    %v1795 = vand.u32 %v800, 4294901760
    %v1796 = vsub.f32 %v800, %v1795
    %1797 = vmatpush1.msra.mxu0 %v1796
    %1798 = vmatprep.subr.mxu0 0.0
    %v1799 = vand.u32 %v801, 4294901760
    %v1800 = vsub.f32 %v801, %v1799
    %1801 = vmatpush1.msra.mxu0 %v1800
    %1802 = vmatprep.subr.mxu0 0.0
    %v1803 = vand.u32 %v802, 4294901760
    %v1804 = vsub.f32 %v802, %v1803
    %1805 = vmatpush1.msra.mxu0 %v1804
    %1806 = vmatprep.subr.mxu0 0.0
    %v1807 = vand.u32 %v803, 4294901760
    %v1808 = vsub.f32 %v803, %v1807
    %1809 = vmatpush1.msra.mxu0 %v1808
    %1810 = vmatprep.subr.mxu0 0.0
    %1811 = vmatpush1.msra.mxu0 0.0
    %1812 = vmatprep.subr.mxu0 0.0
    %1813 = vmatpush1.msra.mxu0 0.0
    %1814 = vmatprep.subr.mxu0 0.0
    %1815 = vmatpush1.msra.mxu0 0.0
    %1816 = vmatprep.subr.mxu0 0.0
    %1817 = vmatpush1.msra.mxu0 0.0
    %1818 = vmatprep.subr.mxu0 0.0
    %1819 = vmatpush1.msra.mxu0 0.0
    %1820 = vmatprep.subr.mxu0 0.0
    %1821 = vmatpush1.msra.mxu0 0.0
    %1822 = vmatprep.subr.mxu0 0.0
    %1823 = vmatpush1.msra.mxu0 0.0
    %1824 = vmatprep.subr.mxu0 0.0
    %1825 = vmatpush1.msra.mxu0 0.0
    %1826 = vmatprep.subr.mxu0 0.0
    %1827 = vmatpush1.msra.mxu0 0.0
    %1828 = vmatprep.subr.mxu0 0.0
    %1829 = vmatpush1.msra.mxu0 0.0
    %1830 = vmatprep.subr.mxu0 0.0
    %1831 = vmatpush1.msra.mxu0 0.0
    %1832 = vmatprep.subr.mxu0 0.0
    %1833 = vmatpush1.msra.mxu0 0.0
    %1834 = vmatprep.subr.mxu0 0.0
    %1835 = vmatpush1.msra.mxu0 0.0
    %1836 = vmatprep.subr.mxu0 0.0
    %1837 = vmatpush1.msra.mxu0 0.0
    %1838 = vmatprep.subr.mxu0 0.0
    %1839 = vmatpush1.msra.mxu0 0.0
    %1840 = vmatprep.subr.mxu0 0.0
    %1841 = vmatpush1.msra.mxu0 0.0
    %1842 = vmatprep.mubr.f32.mxu0 0.0
    %v1843 = vand.u32 %v761, 4294901760
    %v1844 = vsub.f32 %v761, %v1843
    %1845 = vmatmul.mubr.f32.gmra.mrb[0].mxu0 %v1844
    %v1846 = vpop.f32.mrb[0].mxu0
    %v1847 = vadd.f32 %v1737, %v1846
    %v1848 = vpop.f32.mrb[0].mxu0
    %1849 = vmatprep.mubr.f32.mxu0 0.0
    %v1850 = vand.u32 %v767, 4294901760
    %v1851 = vsub.f32 %v767, %v1850
    %1852 = vmatmul.mubr.f32.gmra.mrb[0].mxu0 %v1851
    %v1853 = vpop.f32.mrb[0].mxu0
    %v1854 = vadd.f32 %v1743, %v1853
    %v1855 = vpop.f32.mrb[0].mxu0
    %1856 = vdwg.mxu0
    %1857 = vmatprep.subr.mxu0 0.0
    %v1858 = vand.u32 %v788, 4294901760
    %1859 = vmatpush1.msra.mxu0 %v1858
    %1860 = vmatprep.subr.mxu0 0.0
    %v1861 = vand.u32 %v789, 4294901760
    %1862 = vmatpush1.msra.mxu0 %v1861
    %1863 = vmatprep.subr.mxu0 0.0
    %v1864 = vand.u32 %v790, 4294901760
    %1865 = vmatpush1.msra.mxu0 %v1864
    %1866 = vmatprep.subr.mxu0 0.0
    %v1867 = vand.u32 %v791, 4294901760
    %1868 = vmatpush1.msra.mxu0 %v1867
    %1869 = vmatprep.subr.mxu0 0.0
    %v1870 = vand.u32 %v792, 4294901760
    %1871 = vmatpush1.msra.mxu0 %v1870
    %1872 = vmatprep.subr.mxu0 0.0
    %v1873 = vand.u32 %v793, 4294901760
    %1874 = vmatpush1.msra.mxu0 %v1873
    %1875 = vmatprep.subr.mxu0 0.0
    %v1876 = vand.u32 %v794, 4294901760
    %1877 = vmatpush1.msra.mxu0 %v1876
    %1878 = vmatprep.subr.mxu0 0.0
    %v1879 = vand.u32 %v795, 4294901760
    %1880 = vmatpush1.msra.mxu0 %v1879
    %1881 = vmatprep.subr.mxu0 0.0
    %v1882 = vand.u32 %v796, 4294901760
    %1883 = vmatpush1.msra.mxu0 %v1882
    %1884 = vmatprep.subr.mxu0 0.0
    %v1885 = vand.u32 %v797, 4294901760
    %1886 = vmatpush1.msra.mxu0 %v1885
    %1887 = vmatprep.subr.mxu0 0.0
    %v1888 = vand.u32 %v798, 4294901760
    %1889 = vmatpush1.msra.mxu0 %v1888
    %1890 = vmatprep.subr.mxu0 0.0
    %v1891 = vand.u32 %v799, 4294901760
    %1892 = vmatpush1.msra.mxu0 %v1891
    %1893 = vmatprep.subr.mxu0 0.0
    %v1894 = vand.u32 %v800, 4294901760
    %1895 = vmatpush1.msra.mxu0 %v1894
    %1896 = vmatprep.subr.mxu0 0.0
    %v1897 = vand.u32 %v801, 4294901760
    %1898 = vmatpush1.msra.mxu0 %v1897
    %1899 = vmatprep.subr.mxu0 0.0
    %v1900 = vand.u32 %v802, 4294901760
    %1901 = vmatpush1.msra.mxu0 %v1900
    %1902 = vmatprep.subr.mxu0 0.0
    %v1903 = vand.u32 %v803, 4294901760
    %1904 = vmatpush1.msra.mxu0 %v1903
    %1905 = vmatprep.subr.mxu0 0.0
    %1906 = vmatpush1.msra.mxu0 0.0
    %1907 = vmatprep.subr.mxu0 0.0
    %1908 = vmatpush1.msra.mxu0 0.0
    %1909 = vmatprep.subr.mxu0 0.0
    %1910 = vmatpush1.msra.mxu0 0.0
    %1911 = vmatprep.subr.mxu0 0.0
    %1912 = vmatpush1.msra.mxu0 0.0
    %1913 = vmatprep.subr.mxu0 0.0
    %1914 = vmatpush1.msra.mxu0 0.0
    %1915 = vmatprep.subr.mxu0 0.0
    %1916 = vmatpush1.msra.mxu0 0.0
    %1917 = vmatprep.subr.mxu0 0.0
    %1918 = vmatpush1.msra.mxu0 0.0
    %1919 = vmatprep.subr.mxu0 0.0
    %1920 = vmatpush1.msra.mxu0 0.0
    %1921 = vmatprep.subr.mxu0 0.0
    %1922 = vmatpush1.msra.mxu0 0.0
    %1923 = vmatprep.subr.mxu0 0.0
    %1924 = vmatpush1.msra.mxu0 0.0
    %1925 = vmatprep.subr.mxu0 0.0
    %1926 = vmatpush1.msra.mxu0 0.0
    %1927 = vmatprep.subr.mxu0 0.0
    %1928 = vmatpush1.msra.mxu0 0.0
    %1929 = vmatprep.subr.mxu0 0.0
    %1930 = vmatpush1.msra.mxu0 0.0
    %1931 = vmatprep.subr.mxu0 0.0
    %1932 = vmatpush1.msra.mxu0 0.0
    %1933 = vmatprep.subr.mxu0 0.0
    %1934 = vmatpush1.msra.mxu0 0.0
    %1935 = vmatprep.subr.mxu0 0.0
    %1936 = vmatpush1.msra.mxu0 0.0
    %1937 = vmatprep.mubr.f32.mxu0 0.0
    %v1938 = vand.u32 %v761, 4294901760
    %v1939 = vsub.f32 %v761, %v1938
    %v1940 = vand.u32 %v1939, 4294901760
    %1941 = vmatmul.mubr.f32.gmra.mrb[0].mxu0 %v1940
    %v1942 = vpop.f32.mrb[0].mxu0
    %v1943 = vadd.f32 %v1847, %v1942
    %v1944 = vpop.f32.mrb[0].mxu0
    %1945 = vmatprep.mubr.f32.mxu0 0.0
    %v1946 = vand.u32 %v767, 4294901760
    %v1947 = vsub.f32 %v767, %v1946
    %v1948 = vand.u32 %v1947, 4294901760
    %1949 = vmatmul.mubr.f32.gmra.mrb[0].mxu0 %v1948
    %v1950 = vpop.f32.mrb[0].mxu0
    %v1951 = vadd.f32 %v1854, %v1950
    %v1952 = vpop.f32.mrb[0].mxu0
    %1953 = vdwg.mxu0
    %1954 = vmatprep.subr.mxu0 0.0
    %v1955 = vand.u32 %v788, 4294901760
    %v1956 = vsub.f32 %v788, %v1955
    %v1957 = vand.u32 %v1956, 4294901760
    %1958 = vmatpush1.msra.mxu0 %v1957
    %1959 = vmatprep.subr.mxu0 0.0
    %v1960 = vand.u32 %v789, 4294901760
    %v1961 = vsub.f32 %v789, %v1960
    %v1962 = vand.u32 %v1961, 4294901760
    %1963 = vmatpush1.msra.mxu0 %v1962
    %1964 = vmatprep.subr.mxu0 0.0
    %v1965 = vand.u32 %v790, 4294901760
    %v1966 = vsub.f32 %v790, %v1965
    %v1967 = vand.u32 %v1966, 4294901760
    %1968 = vmatpush1.msra.mxu0 %v1967
    %1969 = vmatprep.subr.mxu0 0.0
    %v1970 = vand.u32 %v791, 4294901760
    %v1971 = vsub.f32 %v791, %v1970
    %v1972 = vand.u32 %v1971, 4294901760
    %1973 = vmatpush1.msra.mxu0 %v1972
    %1974 = vmatprep.subr.mxu0 0.0
    %v1975 = vand.u32 %v792, 4294901760
    %v1976 = vsub.f32 %v792, %v1975
    %v1977 = vand.u32 %v1976, 4294901760
    %1978 = vmatpush1.msra.mxu0 %v1977
    %1979 = vmatprep.subr.mxu0 0.0
    %v1980 = vand.u32 %v793, 4294901760
    %v1981 = vsub.f32 %v793, %v1980
    %v1982 = vand.u32 %v1981, 4294901760
    %1983 = vmatpush1.msra.mxu0 %v1982
    %1984 = vmatprep.subr.mxu0 0.0
    %v1985 = vand.u32 %v794, 4294901760
    %v1986 = vsub.f32 %v794, %v1985
    %v1987 = vand.u32 %v1986, 4294901760
    %1988 = vmatpush1.msra.mxu0 %v1987
    %1989 = vmatprep.subr.mxu0 0.0
    %v1990 = vand.u32 %v795, 4294901760
    %v1991 = vsub.f32 %v795, %v1990
    %v1992 = vand.u32 %v1991, 4294901760
    %1993 = vmatpush1.msra.mxu0 %v1992
    %1994 = vmatprep.subr.mxu0 0.0
    %v1995 = vand.u32 %v796, 4294901760
    %v1996 = vsub.f32 %v796, %v1995
    %v1997 = vand.u32 %v1996, 4294901760
    %1998 = vmatpush1.msra.mxu0 %v1997
    %1999 = vmatprep.subr.mxu0 0.0
    %v2000 = vand.u32 %v797, 4294901760
    %v2001 = vsub.f32 %v797, %v2000
    %v2002 = vand.u32 %v2001, 4294901760
    %2003 = vmatpush1.msra.mxu0 %v2002
    %2004 = vmatprep.subr.mxu0 0.0
    %v2005 = vand.u32 %v798, 4294901760
    %v2006 = vsub.f32 %v798, %v2005
    %v2007 = vand.u32 %v2006, 4294901760
    %2008 = vmatpush1.msra.mxu0 %v2007
    %2009 = vmatprep.subr.mxu0 0.0
    %v2010 = vand.u32 %v799, 4294901760
    %v2011 = vsub.f32 %v799, %v2010
    %v2012 = vand.u32 %v2011, 4294901760
    %2013 = vmatpush1.msra.mxu0 %v2012
    %2014 = vmatprep.subr.mxu0 0.0
    %v2015 = vand.u32 %v800, 4294901760
    %v2016 = vsub.f32 %v800, %v2015
    %v2017 = vand.u32 %v2016, 4294901760
    %2018 = vmatpush1.msra.mxu0 %v2017
    %2019 = vmatprep.subr.mxu0 0.0
    %v2020 = vand.u32 %v801, 4294901760
    %v2021 = vsub.f32 %v801, %v2020
    %v2022 = vand.u32 %v2021, 4294901760
    %2023 = vmatpush1.msra.mxu0 %v2022
    %2024 = vmatprep.subr.mxu0 0.0
    %v2025 = vand.u32 %v802, 4294901760
    %v2026 = vsub.f32 %v802, %v2025
    %v2027 = vand.u32 %v2026, 4294901760
    %2028 = vmatpush1.msra.mxu0 %v2027
    %2029 = vmatprep.subr.mxu0 0.0
    %v2030 = vand.u32 %v803, 4294901760
    %v2031 = vsub.f32 %v803, %v2030
    %v2032 = vand.u32 %v2031, 4294901760
    %2033 = vmatpush1.msra.mxu0 %v2032
    %2034 = vmatprep.subr.mxu0 0.0
    %2035 = vmatpush1.msra.mxu0 0.0
    %2036 = vmatprep.subr.mxu0 0.0
    %2037 = vmatpush1.msra.mxu0 0.0
    %2038 = vmatprep.subr.mxu0 0.0
    %2039 = vmatpush1.msra.mxu0 0.0
    %2040 = vmatprep.subr.mxu0 0.0
    %2041 = vmatpush1.msra.mxu0 0.0
    %2042 = vmatprep.subr.mxu0 0.0
    %2043 = vmatpush1.msra.mxu0 0.0
    %2044 = vmatprep.subr.mxu0 0.0
    %2045 = vmatpush1.msra.mxu0 0.0
    %2046 = vmatprep.subr.mxu0 0.0
    %2047 = vmatpush1.msra.mxu0 0.0
    %2048 = vmatprep.subr.mxu0 0.0
    %2049 = vmatpush1.msra.mxu0 0.0
    %2050 = vmatprep.subr.mxu0 0.0
    %2051 = vmatpush1.msra.mxu0 0.0
    %2052 = vmatprep.subr.mxu0 0.0
    %2053 = vmatpush1.msra.mxu0 0.0
    %2054 = vmatprep.subr.mxu0 0.0
    %2055 = vmatpush1.msra.mxu0 0.0
    %2056 = vmatprep.subr.mxu0 0.0
    %2057 = vmatpush1.msra.mxu0 0.0
    %2058 = vmatprep.subr.mxu0 0.0
    %2059 = vmatpush1.msra.mxu0 0.0
    %2060 = vmatprep.subr.mxu0 0.0
    %2061 = vmatpush1.msra.mxu0 0.0
    %2062 = vmatprep.subr.mxu0 0.0
    %2063 = vmatpush1.msra.mxu0 0.0
    %2064 = vmatprep.subr.mxu0 0.0
    %2065 = vmatpush1.msra.mxu0 0.0
    %2066 = vmatprep.mubr.f32.mxu0 0.0
    %v2067 = vand.u32 %v761, 4294901760
    %2068 = vmatmul.mubr.f32.gmra.mrb[0].mxu0 %v2067
    %v2069 = vpop.f32.mrb[0].mxu0
    %v2070 = vadd.f32 %v1943, %v2069
    %v2071 = vpop.f32.mrb[0].mxu0
    %2072 = vmatprep.mubr.f32.mxu0 0.0
    %v2073 = vand.u32 %v767, 4294901760
    %2074 = vmatmul.mubr.f32.gmra.mrb[0].mxu0 %v2073
    %v2075 = vpop.f32.mrb[0].mxu0
    %v2076 = vadd.f32 %v1951, %v2075
    %v2077 = vpop.f32.mrb[0].mxu0
    %2078 = vdwg.mxu0
    %2079 = vmatprep.subr.mxu0 0.0
    %v2080 = vand.u32 %v788, 4294901760
    %2081 = vmatpush1.msra.mxu0 %v2080
    %2082 = vmatprep.subr.mxu0 0.0
    %v2083 = vand.u32 %v789, 4294901760
    %2084 = vmatpush1.msra.mxu0 %v2083
    %2085 = vmatprep.subr.mxu0 0.0
    %v2086 = vand.u32 %v790, 4294901760
    %2087 = vmatpush1.msra.mxu0 %v2086
    %2088 = vmatprep.subr.mxu0 0.0
    %v2089 = vand.u32 %v791, 4294901760
    %2090 = vmatpush1.msra.mxu0 %v2089
    %2091 = vmatprep.subr.mxu0 0.0
    %v2092 = vand.u32 %v792, 4294901760
    %2093 = vmatpush1.msra.mxu0 %v2092
    %2094 = vmatprep.subr.mxu0 0.0
    %v2095 = vand.u32 %v793, 4294901760
    %2096 = vmatpush1.msra.mxu0 %v2095
    %2097 = vmatprep.subr.mxu0 0.0
    %v2098 = vand.u32 %v794, 4294901760
    %2099 = vmatpush1.msra.mxu0 %v2098
    %2100 = vmatprep.subr.mxu0 0.0
    %v2101 = vand.u32 %v795, 4294901760
    %2102 = vmatpush1.msra.mxu0 %v2101
    %2103 = vmatprep.subr.mxu0 0.0
    %v2104 = vand.u32 %v796, 4294901760
    %2105 = vmatpush1.msra.mxu0 %v2104
    %2106 = vmatprep.subr.mxu0 0.0
    %v2107 = vand.u32 %v797, 4294901760
    %2108 = vmatpush1.msra.mxu0 %v2107
    %2109 = vmatprep.subr.mxu0 0.0
    %v2110 = vand.u32 %v798, 4294901760
    %2111 = vmatpush1.msra.mxu0 %v2110
    %2112 = vmatprep.subr.mxu0 0.0
    %v2113 = vand.u32 %v799, 4294901760
    %2114 = vmatpush1.msra.mxu0 %v2113
    %2115 = vmatprep.subr.mxu0 0.0
    %v2116 = vand.u32 %v800, 4294901760
    %2117 = vmatpush1.msra.mxu0 %v2116
    %2118 = vmatprep.subr.mxu0 0.0
    %v2119 = vand.u32 %v801, 4294901760
    %2120 = vmatpush1.msra.mxu0 %v2119
    %2121 = vmatprep.subr.mxu0 0.0
    %v2122 = vand.u32 %v802, 4294901760
    %2123 = vmatpush1.msra.mxu0 %v2122
    %2124 = vmatprep.subr.mxu0 0.0
    %v2125 = vand.u32 %v803, 4294901760
    %2126 = vmatpush1.msra.mxu0 %v2125
    %2127 = vmatprep.subr.mxu0 0.0
    %2128 = vmatpush1.msra.mxu0 0.0
    %2129 = vmatprep.subr.mxu0 0.0
    %2130 = vmatpush1.msra.mxu0 0.0
    %2131 = vmatprep.subr.mxu0 0.0
    %2132 = vmatpush1.msra.mxu0 0.0
    %2133 = vmatprep.subr.mxu0 0.0
    %2134 = vmatpush1.msra.mxu0 0.0
    %2135 = vmatprep.subr.mxu0 0.0
    %2136 = vmatpush1.msra.mxu0 0.0
    %2137 = vmatprep.subr.mxu0 0.0
    %2138 = vmatpush1.msra.mxu0 0.0
    %2139 = vmatprep.subr.mxu0 0.0
    %2140 = vmatpush1.msra.mxu0 0.0
    %2141 = vmatprep.subr.mxu0 0.0
    %2142 = vmatpush1.msra.mxu0 0.0
    %2143 = vmatprep.subr.mxu0 0.0
    %2144 = vmatpush1.msra.mxu0 0.0
    %2145 = vmatprep.subr.mxu0 0.0
    %2146 = vmatpush1.msra.mxu0 0.0
    %2147 = vmatprep.subr.mxu0 0.0
    %2148 = vmatpush1.msra.mxu0 0.0
    %2149 = vmatprep.subr.mxu0 0.0
    %2150 = vmatpush1.msra.mxu0 0.0
    %2151 = vmatprep.subr.mxu0 0.0
    %2152 = vmatpush1.msra.mxu0 0.0
    %2153 = vmatprep.subr.mxu0 0.0
    %2154 = vmatpush1.msra.mxu0 0.0
    %2155 = vmatprep.subr.mxu0 0.0
    %2156 = vmatpush1.msra.mxu0 0.0
    %2157 = vmatprep.subr.mxu0 0.0
    %2158 = vmatpush1.msra.mxu0 0.0
    %2159 = vmatprep.mubr.f32.mxu0 0.0
    %v2160 = vand.u32 %v761, 4294901760
    %2161 = vmatmul.mubr.f32.gmra.mrb[0].mxu0 %v2160
    %v2162 = vpop.f32.mrb[0].mxu0
    %v2163 = vadd.f32 %v2070, %v2162
    %v2164 = vpop.f32.mrb[0].mxu0
    %2165 = vmatprep.mubr.f32.mxu0 0.0
    %v2166 = vand.u32 %v767, 4294901760
    %2167 = vmatmul.mubr.f32.gmra.mrb[0].mxu0 %v2166
    %v2168 = vpop.f32.mrb[0].mxu0
    %v2169 = vadd.f32 %v2076, %v2168
    %v2170 = vpop.f32.mrb[0].mxu0
    %2171 = vdwg.mxu0
    %v2172 = vmul.f32 %v2163, %v35
    %v2173 = vmul.f32 %v2169, %v36
    %v2174 = vadd.f32 %v2172, %v2173
    %v2175 = vrot.slane %v2174, 4
    %v2176 = vadd.f32 %v2174, %v2175
    %v2177 = vrot.slane %v2176, 2
    %v2178 = vadd.f32 %v2176, %v2177
    %v2179 = vrot.slane %v2178, 1
    %v2180 = vadd.f32 %v2178, %v2179
    %v2181 = vmax.f32 %v2163, %v2169
    %v2182 = vrot.slane %v2181, 4
    %v2183 = vmax.f32 %v2181, %v2182
    %v2184 = vrot.slane %v2183, 2
    %v2185 = vmax.f32 %v2183, %v2184
    %v2186 = vrot.slane %v2185, 1
    %v2187 = vmax.f32 %v2185, %v2186
    %v2188 = vadd.f32 %v1479, %v2180
    %v2189 = vadd.f32 %v1485, %v2180
    %vm2190 = vcmp.gt.f32.partialorder %v2188, 0.0
    %vm2191 = vcmp.gt.f32.partialorder %v2189, 0.0
    %v2192 = vmul.f32 %v2188, 0.2
    %v2193 = vmul.f32 %v2189, 0.2
    %v2194 = vsel %vm2190, %v2188, %v2192
    %v2195 = vsel %vm2191, %v2189, %v2193
    %v2196 = vadd.f32 %v1479, %v2187
    %v2197 = vadd.f32 %v1485, %v2187
    %vm2198 = vcmp.gt.f32.partialorder %v2196, 0.0
    %vm2199 = vcmp.gt.f32.partialorder %v2197, 0.0
    %v2200 = vmul.f32 %v2196, 0.2
    %v2201 = vmul.f32 %v2197, 0.2
    %v2202 = vsel %vm2198, %v2196, %v2200
    %v2203 = vsel %vm2199, %v2197, %v2201
    %v2204 = vsub.f32 %v2194, %v2202
    %v2205 = vsub.f32 %v2195, %v2203
    %v2206 = vadd.f32 %v2204, %v32
    %v2207 = vadd.f32 %v2205, %v33
    %v2208 = vmul.f32 %v2206, 1.442695
    %v2209 = vpow.pop %v2208
    %v2210 = vmul.f32 %v2207, 1.442695
    %v2211 = vpow.pop %v2210
    %2212 = vmatprep.subr.mxu0 0.0
    %v2213 = vand.u32 %v54, 4294901760
    %2214 = vmatpush1.msra.mxu0 %v2213
    %2215 = vmatprep.subr.mxu0 0.0
    %v2216 = vand.u32 %v55, 4294901760
    %2217 = vmatpush1.msra.mxu0 %v2216
    %2218 = vmatprep.subr.mxu0 0.0
    %v2219 = vand.u32 %v56, 4294901760
    %2220 = vmatpush1.msra.mxu0 %v2219
    %2221 = vmatprep.subr.mxu0 0.0
    %v2222 = vand.u32 %v57, 4294901760
    %2223 = vmatpush1.msra.mxu0 %v2222
    %2224 = vmatprep.subr.mxu0 0.0
    %v2225 = vand.u32 %v58, 4294901760
    %2226 = vmatpush1.msra.mxu0 %v2225
    %2227 = vmatprep.subr.mxu0 0.0
    %v2228 = vand.u32 %v59, 4294901760
    %2229 = vmatpush1.msra.mxu0 %v2228
    %2230 = vmatprep.subr.mxu0 0.0
    %v2231 = vand.u32 %v60, 4294901760
    %2232 = vmatpush1.msra.mxu0 %v2231
    %2233 = vmatprep.subr.mxu0 0.0
    %v2234 = vand.u32 %v61, 4294901760
    %2235 = vmatpush1.msra.mxu0 %v2234
    %2236 = vmatprep.subr.mxu0 0.0
    %v2237 = vand.u32 %v62, 4294901760
    %2238 = vmatpush1.msra.mxu0 %v2237
    %2239 = vmatprep.subr.mxu0 0.0
    %v2240 = vand.u32 %v63, 4294901760
    %2241 = vmatpush1.msra.mxu0 %v2240
    %2242 = vmatprep.subr.mxu0 0.0
    %v2243 = vand.u32 %v64, 4294901760
    %2244 = vmatpush1.msra.mxu0 %v2243
    %2245 = vmatprep.subr.mxu0 0.0
    %v2246 = vand.u32 %v65, 4294901760
    %2247 = vmatpush1.msra.mxu0 %v2246
    %2248 = vmatprep.subr.mxu0 0.0
    %v2249 = vand.u32 %v66, 4294901760
    %2250 = vmatpush1.msra.mxu0 %v2249
    %2251 = vmatprep.subr.mxu0 0.0
    %v2252 = vand.u32 %v67, 4294901760
    %2253 = vmatpush1.msra.mxu0 %v2252
    %2254 = vmatprep.subr.mxu0 0.0
    %v2255 = vand.u32 %v68, 4294901760
    %2256 = vmatpush1.msra.mxu0 %v2255
    %2257 = vmatprep.subr.mxu0 0.0
    %v2258 = vand.u32 %v69, 4294901760
    %2259 = vmatpush1.msra.mxu0 %v2258
    %2260 = vmatprep.subr.mxu0 0.0
    %2261 = vmatpush1.msra.mxu0 0.0
    %2262 = vmatprep.subr.mxu0 0.0
    %2263 = vmatpush1.msra.mxu0 0.0
    %2264 = vmatprep.subr.mxu0 0.0
    %2265 = vmatpush1.msra.mxu0 0.0
    %2266 = vmatprep.subr.mxu0 0.0
    %2267 = vmatpush1.msra.mxu0 0.0
    %2268 = vmatprep.subr.mxu0 0.0
    %2269 = vmatpush1.msra.mxu0 0.0
    %2270 = vmatprep.subr.mxu0 0.0
    %2271 = vmatpush1.msra.mxu0 0.0
    %2272 = vmatprep.subr.mxu0 0.0
    %2273 = vmatpush1.msra.mxu0 0.0
    %2274 = vmatprep.subr.mxu0 0.0
    %2275 = vmatpush1.msra.mxu0 0.0
    %2276 = vmatprep.subr.mxu0 0.0
    %2277 = vmatpush1.msra.mxu0 0.0
    %2278 = vmatprep.subr.mxu0 0.0
    %2279 = vmatpush1.msra.mxu0 0.0
    %2280 = vmatprep.subr.mxu0 0.0
    %2281 = vmatpush1.msra.mxu0 0.0
    %2282 = vmatprep.subr.mxu0 0.0
    %2283 = vmatpush1.msra.mxu0 0.0
    %2284 = vmatprep.subr.mxu0 0.0
    %2285 = vmatpush1.msra.mxu0 0.0
    %2286 = vmatprep.subr.mxu0 0.0
    %2287 = vmatpush1.msra.mxu0 0.0
    %2288 = vmatprep.subr.mxu0 0.0
    %2289 = vmatpush1.msra.mxu0 0.0
    %2290 = vmatprep.subr.mxu0 0.0
    %2291 = vmatpush1.msra.mxu0 0.0
    %2292 = vmatprep.mubr.f32.mxu0 0.0
    %v2293 = vand.u32 %v2209, 4294901760
    %v2294 = vsub.f32 %v2209, %v2293
    %v2295 = vand.u32 %v2294, 4294901760
    %v2296 = vsub.f32 %v2294, %v2295
    %v2297 = vand.u32 %v2296, 4294901760
    %2298 = vmatmul.mubr.f32.gmra.mrb[0].mxu0 %v2297
    %v2299 = vpop.f32.mrb[0].mxu0
    %v2300 = vadd.f32 0.0, %v2299
    %v2301 = vpop.f32.mrb[0].mxu0
    %2302 = vmatprep.mubr.f32.mxu0 0.0
    %v2303 = vand.u32 %v2211, 4294901760
    %v2304 = vsub.f32 %v2211, %v2303
    %v2305 = vand.u32 %v2304, 4294901760
    %v2306 = vsub.f32 %v2304, %v2305
    %v2307 = vand.u32 %v2306, 4294901760
    %2308 = vmatmul.mubr.f32.gmra.mrb[0].mxu0 %v2307
    %v2309 = vpop.f32.mrb[0].mxu0
    %v2310 = vadd.f32 0.0, %v2309
    %v2311 = vpop.f32.mrb[0].mxu0
    %2312 = vdwg.mxu0
    %2313 = vmatprep.subr.mxu0 0.0
    %v2314 = vand.u32 %v54, 4294901760
    %v2315 = vsub.f32 %v54, %v2314
    %v2316 = vand.u32 %v2315, 4294901760
    %v2317 = vsub.f32 %v2315, %v2316
    %v2318 = vand.u32 %v2317, 4294901760
    %2319 = vmatpush1.msra.mxu0 %v2318
    %2320 = vmatprep.subr.mxu0 0.0
    %v2321 = vand.u32 %v55, 4294901760
    %v2322 = vsub.f32 %v55, %v2321
    %v2323 = vand.u32 %v2322, 4294901760
    %v2324 = vsub.f32 %v2322, %v2323
    %v2325 = vand.u32 %v2324, 4294901760
    %2326 = vmatpush1.msra.mxu0 %v2325
    %2327 = vmatprep.subr.mxu0 0.0
    %v2328 = vand.u32 %v56, 4294901760
    %v2329 = vsub.f32 %v56, %v2328
    %v2330 = vand.u32 %v2329, 4294901760
    %v2331 = vsub.f32 %v2329, %v2330
    %v2332 = vand.u32 %v2331, 4294901760
    %2333 = vmatpush1.msra.mxu0 %v2332
    %2334 = vmatprep.subr.mxu0 0.0
    %v2335 = vand.u32 %v57, 4294901760
    %v2336 = vsub.f32 %v57, %v2335
    %v2337 = vand.u32 %v2336, 4294901760
    %v2338 = vsub.f32 %v2336, %v2337
    %v2339 = vand.u32 %v2338, 4294901760
    %2340 = vmatpush1.msra.mxu0 %v2339
    %2341 = vmatprep.subr.mxu0 0.0
    %v2342 = vand.u32 %v58, 4294901760
    %v2343 = vsub.f32 %v58, %v2342
    %v2344 = vand.u32 %v2343, 4294901760
    %v2345 = vsub.f32 %v2343, %v2344
    %v2346 = vand.u32 %v2345, 4294901760
    %2347 = vmatpush1.msra.mxu0 %v2346
    %2348 = vmatprep.subr.mxu0 0.0
    %v2349 = vand.u32 %v59, 4294901760
    %v2350 = vsub.f32 %v59, %v2349
    %v2351 = vand.u32 %v2350, 4294901760
    %v2352 = vsub.f32 %v2350, %v2351
    %v2353 = vand.u32 %v2352, 4294901760
    %2354 = vmatpush1.msra.mxu0 %v2353
    %2355 = vmatprep.subr.mxu0 0.0
    %v2356 = vand.u32 %v60, 4294901760
    %v2357 = vsub.f32 %v60, %v2356
    %v2358 = vand.u32 %v2357, 4294901760
    %v2359 = vsub.f32 %v2357, %v2358
    %v2360 = vand.u32 %v2359, 4294901760
    %2361 = vmatpush1.msra.mxu0 %v2360
    %2362 = vmatprep.subr.mxu0 0.0
    %v2363 = vand.u32 %v61, 4294901760
    %v2364 = vsub.f32 %v61, %v2363
    %v2365 = vand.u32 %v2364, 4294901760
    %v2366 = vsub.f32 %v2364, %v2365
    %v2367 = vand.u32 %v2366, 4294901760
    %2368 = vmatpush1.msra.mxu0 %v2367
    %2369 = vmatprep.subr.mxu0 0.0
    %v2370 = vand.u32 %v62, 4294901760
    %v2371 = vsub.f32 %v62, %v2370
    %v2372 = vand.u32 %v2371, 4294901760
    %v2373 = vsub.f32 %v2371, %v2372
    %v2374 = vand.u32 %v2373, 4294901760
    %2375 = vmatpush1.msra.mxu0 %v2374
    %2376 = vmatprep.subr.mxu0 0.0
    %v2377 = vand.u32 %v63, 4294901760
    %v2378 = vsub.f32 %v63, %v2377
    %v2379 = vand.u32 %v2378, 4294901760
    %v2380 = vsub.f32 %v2378, %v2379
    %v2381 = vand.u32 %v2380, 4294901760
    %2382 = vmatpush1.msra.mxu0 %v2381
    %2383 = vmatprep.subr.mxu0 0.0
    %v2384 = vand.u32 %v64, 4294901760
    %v2385 = vsub.f32 %v64, %v2384
    %v2386 = vand.u32 %v2385, 4294901760
    %v2387 = vsub.f32 %v2385, %v2386
    %v2388 = vand.u32 %v2387, 4294901760
    %2389 = vmatpush1.msra.mxu0 %v2388
    %2390 = vmatprep.subr.mxu0 0.0
    %v2391 = vand.u32 %v65, 4294901760
    %v2392 = vsub.f32 %v65, %v2391
    %v2393 = vand.u32 %v2392, 4294901760
    %v2394 = vsub.f32 %v2392, %v2393
    %v2395 = vand.u32 %v2394, 4294901760
    %2396 = vmatpush1.msra.mxu0 %v2395
    %2397 = vmatprep.subr.mxu0 0.0
    %v2398 = vand.u32 %v66, 4294901760
    %v2399 = vsub.f32 %v66, %v2398
    %v2400 = vand.u32 %v2399, 4294901760
    %v2401 = vsub.f32 %v2399, %v2400
    %v2402 = vand.u32 %v2401, 4294901760
    %2403 = vmatpush1.msra.mxu0 %v2402
    %2404 = vmatprep.subr.mxu0 0.0
    %v2405 = vand.u32 %v67, 4294901760
    %v2406 = vsub.f32 %v67, %v2405
    %v2407 = vand.u32 %v2406, 4294901760
    %v2408 = vsub.f32 %v2406, %v2407
    %v2409 = vand.u32 %v2408, 4294901760
    %2410 = vmatpush1.msra.mxu0 %v2409
    %2411 = vmatprep.subr.mxu0 0.0
    %v2412 = vand.u32 %v68, 4294901760
    %v2413 = vsub.f32 %v68, %v2412
    %v2414 = vand.u32 %v2413, 4294901760
    %v2415 = vsub.f32 %v2413, %v2414
    %v2416 = vand.u32 %v2415, 4294901760
    %2417 = vmatpush1.msra.mxu0 %v2416
    %2418 = vmatprep.subr.mxu0 0.0
    %v2419 = vand.u32 %v69, 4294901760
    %v2420 = vsub.f32 %v69, %v2419
    %v2421 = vand.u32 %v2420, 4294901760
    %v2422 = vsub.f32 %v2420, %v2421
    %v2423 = vand.u32 %v2422, 4294901760
    %2424 = vmatpush1.msra.mxu0 %v2423
    %2425 = vmatprep.subr.mxu0 0.0
    %2426 = vmatpush1.msra.mxu0 0.0
    %2427 = vmatprep.subr.mxu0 0.0
    %2428 = vmatpush1.msra.mxu0 0.0
    %2429 = vmatprep.subr.mxu0 0.0
    %2430 = vmatpush1.msra.mxu0 0.0
    %2431 = vmatprep.subr.mxu0 0.0
    %2432 = vmatpush1.msra.mxu0 0.0
    %2433 = vmatprep.subr.mxu0 0.0
    %2434 = vmatpush1.msra.mxu0 0.0
    %2435 = vmatprep.subr.mxu0 0.0
    %2436 = vmatpush1.msra.mxu0 0.0
    %2437 = vmatprep.subr.mxu0 0.0
    %2438 = vmatpush1.msra.mxu0 0.0
    %2439 = vmatprep.subr.mxu0 0.0
    %2440 = vmatpush1.msra.mxu0 0.0
    %2441 = vmatprep.subr.mxu0 0.0
    %2442 = vmatpush1.msra.mxu0 0.0
    %2443 = vmatprep.subr.mxu0 0.0
    %2444 = vmatpush1.msra.mxu0 0.0
    %2445 = vmatprep.subr.mxu0 0.0
    %2446 = vmatpush1.msra.mxu0 0.0
    %2447 = vmatprep.subr.mxu0 0.0
    %2448 = vmatpush1.msra.mxu0 0.0
    %2449 = vmatprep.subr.mxu0 0.0
    %2450 = vmatpush1.msra.mxu0 0.0
    %2451 = vmatprep.subr.mxu0 0.0
    %2452 = vmatpush1.msra.mxu0 0.0
    %2453 = vmatprep.subr.mxu0 0.0
    %2454 = vmatpush1.msra.mxu0 0.0
    %2455 = vmatprep.subr.mxu0 0.0
    %2456 = vmatpush1.msra.mxu0 0.0
    %2457 = vmatprep.mubr.f32.mxu0 0.0
    %v2458 = vand.u32 %v2209, 4294901760
    %2459 = vmatmul.mubr.f32.gmra.mrb[0].mxu0 %v2458
    %v2460 = vpop.f32.mrb[0].mxu0
    %v2461 = vadd.f32 %v2300, %v2460
    %v2462 = vpop.f32.mrb[0].mxu0
    %2463 = vmatprep.mubr.f32.mxu0 0.0
    %v2464 = vand.u32 %v2211, 4294901760
    %2465 = vmatmul.mubr.f32.gmra.mrb[0].mxu0 %v2464
    %v2466 = vpop.f32.mrb[0].mxu0
    %v2467 = vadd.f32 %v2310, %v2466
    %v2468 = vpop.f32.mrb[0].mxu0
    %2469 = vdwg.mxu0
    %2470 = vmatprep.subr.mxu0 0.0
    %v2471 = vand.u32 %v54, 4294901760
    %v2472 = vsub.f32 %v54, %v2471
    %2473 = vmatpush1.msra.mxu0 %v2472
    %2474 = vmatprep.subr.mxu0 0.0
    %v2475 = vand.u32 %v55, 4294901760
    %v2476 = vsub.f32 %v55, %v2475
    %2477 = vmatpush1.msra.mxu0 %v2476
    %2478 = vmatprep.subr.mxu0 0.0
    %v2479 = vand.u32 %v56, 4294901760
    %v2480 = vsub.f32 %v56, %v2479
    %2481 = vmatpush1.msra.mxu0 %v2480
    %2482 = vmatprep.subr.mxu0 0.0
    %v2483 = vand.u32 %v57, 4294901760
    %v2484 = vsub.f32 %v57, %v2483
    %2485 = vmatpush1.msra.mxu0 %v2484
    %2486 = vmatprep.subr.mxu0 0.0
    %v2487 = vand.u32 %v58, 4294901760
    %v2488 = vsub.f32 %v58, %v2487
    %2489 = vmatpush1.msra.mxu0 %v2488
    %2490 = vmatprep.subr.mxu0 0.0
    %v2491 = vand.u32 %v59, 4294901760
    %v2492 = vsub.f32 %v59, %v2491
    %2493 = vmatpush1.msra.mxu0 %v2492
    %2494 = vmatprep.subr.mxu0 0.0
    %v2495 = vand.u32 %v60, 4294901760
    %v2496 = vsub.f32 %v60, %v2495
    %2497 = vmatpush1.msra.mxu0 %v2496
    %2498 = vmatprep.subr.mxu0 0.0
    %v2499 = vand.u32 %v61, 4294901760
    %v2500 = vsub.f32 %v61, %v2499
    %2501 = vmatpush1.msra.mxu0 %v2500
    %2502 = vmatprep.subr.mxu0 0.0
    %v2503 = vand.u32 %v62, 4294901760
    %v2504 = vsub.f32 %v62, %v2503
    %2505 = vmatpush1.msra.mxu0 %v2504
    %2506 = vmatprep.subr.mxu0 0.0
    %v2507 = vand.u32 %v63, 4294901760
    %v2508 = vsub.f32 %v63, %v2507
    %2509 = vmatpush1.msra.mxu0 %v2508
    %2510 = vmatprep.subr.mxu0 0.0
    %v2511 = vand.u32 %v64, 4294901760
    %v2512 = vsub.f32 %v64, %v2511
    %2513 = vmatpush1.msra.mxu0 %v2512
    %2514 = vmatprep.subr.mxu0 0.0
    %v2515 = vand.u32 %v65, 4294901760
    %v2516 = vsub.f32 %v65, %v2515
    %2517 = vmatpush1.msra.mxu0 %v2516
    %2518 = vmatprep.subr.mxu0 0.0
    %v2519 = vand.u32 %v66, 4294901760
    %v2520 = vsub.f32 %v66, %v2519
    %2521 = vmatpush1.msra.mxu0 %v2520
    %2522 = vmatprep.subr.mxu0 0.0
    %v2523 = vand.u32 %v67, 4294901760
    %v2524 = vsub.f32 %v67, %v2523
    %2525 = vmatpush1.msra.mxu0 %v2524
    %2526 = vmatprep.subr.mxu0 0.0
    %v2527 = vand.u32 %v68, 4294901760
    %v2528 = vsub.f32 %v68, %v2527
    %2529 = vmatpush1.msra.mxu0 %v2528
    %2530 = vmatprep.subr.mxu0 0.0
    %v2531 = vand.u32 %v69, 4294901760
    %v2532 = vsub.f32 %v69, %v2531
    %2533 = vmatpush1.msra.mxu0 %v2532
    %2534 = vmatprep.subr.mxu0 0.0
    %2535 = vmatpush1.msra.mxu0 0.0
    %2536 = vmatprep.subr.mxu0 0.0
    %2537 = vmatpush1.msra.mxu0 0.0
    %2538 = vmatprep.subr.mxu0 0.0
    %2539 = vmatpush1.msra.mxu0 0.0
    %2540 = vmatprep.subr.mxu0 0.0
    %2541 = vmatpush1.msra.mxu0 0.0
    %2542 = vmatprep.subr.mxu0 0.0
    %2543 = vmatpush1.msra.mxu0 0.0
    %2544 = vmatprep.subr.mxu0 0.0
    %2545 = vmatpush1.msra.mxu0 0.0
    %2546 = vmatprep.subr.mxu0 0.0
    %2547 = vmatpush1.msra.mxu0 0.0
    %2548 = vmatprep.subr.mxu0 0.0
    %2549 = vmatpush1.msra.mxu0 0.0
    %2550 = vmatprep.subr.mxu0 0.0
    %2551 = vmatpush1.msra.mxu0 0.0
    %2552 = vmatprep.subr.mxu0 0.0
    %2553 = vmatpush1.msra.mxu0 0.0
    %2554 = vmatprep.subr.mxu0 0.0
    %2555 = vmatpush1.msra.mxu0 0.0
    %2556 = vmatprep.subr.mxu0 0.0
    %2557 = vmatpush1.msra.mxu0 0.0
    %2558 = vmatprep.subr.mxu0 0.0
    %2559 = vmatpush1.msra.mxu0 0.0
    %2560 = vmatprep.subr.mxu0 0.0
    %2561 = vmatpush1.msra.mxu0 0.0
    %2562 = vmatprep.subr.mxu0 0.0
    %2563 = vmatpush1.msra.mxu0 0.0
    %2564 = vmatprep.subr.mxu0 0.0
    %2565 = vmatpush1.msra.mxu0 0.0
    %2566 = vmatprep.mubr.f32.mxu0 0.0
    %v2567 = vand.u32 %v2209, 4294901760
    %v2568 = vsub.f32 %v2209, %v2567
    %2569 = vmatmul.mubr.f32.gmra.mrb[0].mxu0 %v2568
    %v2570 = vpop.f32.mrb[0].mxu0
    %v2571 = vadd.f32 %v2461, %v2570
    %v2572 = vpop.f32.mrb[0].mxu0
    %2573 = vmatprep.mubr.f32.mxu0 0.0
    %v2574 = vand.u32 %v2211, 4294901760
    %v2575 = vsub.f32 %v2211, %v2574
    %2576 = vmatmul.mubr.f32.gmra.mrb[0].mxu0 %v2575
    %v2577 = vpop.f32.mrb[0].mxu0
    %v2578 = vadd.f32 %v2467, %v2577
    %v2579 = vpop.f32.mrb[0].mxu0
    %2580 = vdwg.mxu0
    %2581 = vmatprep.subr.mxu0 0.0
    %v2582 = vand.u32 %v54, 4294901760
    %2583 = vmatpush1.msra.mxu0 %v2582
    %2584 = vmatprep.subr.mxu0 0.0
    %v2585 = vand.u32 %v55, 4294901760
    %2586 = vmatpush1.msra.mxu0 %v2585
    %2587 = vmatprep.subr.mxu0 0.0
    %v2588 = vand.u32 %v56, 4294901760
    %2589 = vmatpush1.msra.mxu0 %v2588
    %2590 = vmatprep.subr.mxu0 0.0
    %v2591 = vand.u32 %v57, 4294901760
    %2592 = vmatpush1.msra.mxu0 %v2591
    %2593 = vmatprep.subr.mxu0 0.0
    %v2594 = vand.u32 %v58, 4294901760
    %2595 = vmatpush1.msra.mxu0 %v2594
    %2596 = vmatprep.subr.mxu0 0.0
    %v2597 = vand.u32 %v59, 4294901760
    %2598 = vmatpush1.msra.mxu0 %v2597
    %2599 = vmatprep.subr.mxu0 0.0
    %v2600 = vand.u32 %v60, 4294901760
    %2601 = vmatpush1.msra.mxu0 %v2600
    %2602 = vmatprep.subr.mxu0 0.0
    %v2603 = vand.u32 %v61, 4294901760
    %2604 = vmatpush1.msra.mxu0 %v2603
    %2605 = vmatprep.subr.mxu0 0.0
    %v2606 = vand.u32 %v62, 4294901760
    %2607 = vmatpush1.msra.mxu0 %v2606
    %2608 = vmatprep.subr.mxu0 0.0
    %v2609 = vand.u32 %v63, 4294901760
    %2610 = vmatpush1.msra.mxu0 %v2609
    %2611 = vmatprep.subr.mxu0 0.0
    %v2612 = vand.u32 %v64, 4294901760
    %2613 = vmatpush1.msra.mxu0 %v2612
    %2614 = vmatprep.subr.mxu0 0.0
    %v2615 = vand.u32 %v65, 4294901760
    %2616 = vmatpush1.msra.mxu0 %v2615
    %2617 = vmatprep.subr.mxu0 0.0
    %v2618 = vand.u32 %v66, 4294901760
    %2619 = vmatpush1.msra.mxu0 %v2618
    %2620 = vmatprep.subr.mxu0 0.0
    %v2621 = vand.u32 %v67, 4294901760
    %2622 = vmatpush1.msra.mxu0 %v2621
    %2623 = vmatprep.subr.mxu0 0.0
    %v2624 = vand.u32 %v68, 4294901760
    %2625 = vmatpush1.msra.mxu0 %v2624
    %2626 = vmatprep.subr.mxu0 0.0
    %v2627 = vand.u32 %v69, 4294901760
    %2628 = vmatpush1.msra.mxu0 %v2627
    %2629 = vmatprep.subr.mxu0 0.0
    %2630 = vmatpush1.msra.mxu0 0.0
    %2631 = vmatprep.subr.mxu0 0.0
    %2632 = vmatpush1.msra.mxu0 0.0
    %2633 = vmatprep.subr.mxu0 0.0
    %2634 = vmatpush1.msra.mxu0 0.0
    %2635 = vmatprep.subr.mxu0 0.0
    %2636 = vmatpush1.msra.mxu0 0.0
    %2637 = vmatprep.subr.mxu0 0.0
    %2638 = vmatpush1.msra.mxu0 0.0
    %2639 = vmatprep.subr.mxu0 0.0
    %2640 = vmatpush1.msra.mxu0 0.0
    %2641 = vmatprep.subr.mxu0 0.0
    %2642 = vmatpush1.msra.mxu0 0.0
    %2643 = vmatprep.subr.mxu0 0.0
    %2644 = vmatpush1.msra.mxu0 0.0
    %2645 = vmatprep.subr.mxu0 0.0
    %2646 = vmatpush1.msra.mxu0 0.0
    %2647 = vmatprep.subr.mxu0 0.0
    %2648 = vmatpush1.msra.mxu0 0.0
    %2649 = vmatprep.subr.mxu0 0.0
    %2650 = vmatpush1.msra.mxu0 0.0
    %2651 = vmatprep.subr.mxu0 0.0
    %2652 = vmatpush1.msra.mxu0 0.0
    %2653 = vmatprep.subr.mxu0 0.0
    %2654 = vmatpush1.msra.mxu0 0.0
    %2655 = vmatprep.subr.mxu0 0.0
    %2656 = vmatpush1.msra.mxu0 0.0
    %2657 = vmatprep.subr.mxu0 0.0
    %2658 = vmatpush1.msra.mxu0 0.0
    %2659 = vmatprep.subr.mxu0 0.0
    %2660 = vmatpush1.msra.mxu0 0.0
    %2661 = vmatprep.mubr.f32.mxu0 0.0
    %v2662 = vand.u32 %v2209, 4294901760
    %v2663 = vsub.f32 %v2209, %v2662
    %v2664 = vand.u32 %v2663, 4294901760
    %2665 = vmatmul.mubr.f32.gmra.mrb[0].mxu0 %v2664
    %v2666 = vpop.f32.mrb[0].mxu0
    %v2667 = vadd.f32 %v2571, %v2666
    %v2668 = vpop.f32.mrb[0].mxu0
    %2669 = vmatprep.mubr.f32.mxu0 0.0
    %v2670 = vand.u32 %v2211, 4294901760
    %v2671 = vsub.f32 %v2211, %v2670
    %v2672 = vand.u32 %v2671, 4294901760
    %2673 = vmatmul.mubr.f32.gmra.mrb[0].mxu0 %v2672
    %v2674 = vpop.f32.mrb[0].mxu0
    %v2675 = vadd.f32 %v2578, %v2674
    %v2676 = vpop.f32.mrb[0].mxu0
    %2677 = vdwg.mxu0
    %2678 = vmatprep.subr.mxu0 0.0
    %v2679 = vand.u32 %v54, 4294901760
    %v2680 = vsub.f32 %v54, %v2679
    %v2681 = vand.u32 %v2680, 4294901760
    %2682 = vmatpush1.msra.mxu0 %v2681
    %2683 = vmatprep.subr.mxu0 0.0
    %v2684 = vand.u32 %v55, 4294901760
    %v2685 = vsub.f32 %v55, %v2684
    %v2686 = vand.u32 %v2685, 4294901760
    %2687 = vmatpush1.msra.mxu0 %v2686
    %2688 = vmatprep.subr.mxu0 0.0
    %v2689 = vand.u32 %v56, 4294901760
    %v2690 = vsub.f32 %v56, %v2689
    %v2691 = vand.u32 %v2690, 4294901760
    %2692 = vmatpush1.msra.mxu0 %v2691
    %2693 = vmatprep.subr.mxu0 0.0
    %v2694 = vand.u32 %v57, 4294901760
    %v2695 = vsub.f32 %v57, %v2694
    %v2696 = vand.u32 %v2695, 4294901760
    %2697 = vmatpush1.msra.mxu0 %v2696
    %2698 = vmatprep.subr.mxu0 0.0
    %v2699 = vand.u32 %v58, 4294901760
    %v2700 = vsub.f32 %v58, %v2699
    %v2701 = vand.u32 %v2700, 4294901760
    %2702 = vmatpush1.msra.mxu0 %v2701
    %2703 = vmatprep.subr.mxu0 0.0
    %v2704 = vand.u32 %v59, 4294901760
    %v2705 = vsub.f32 %v59, %v2704
    %v2706 = vand.u32 %v2705, 4294901760
    %2707 = vmatpush1.msra.mxu0 %v2706
    %2708 = vmatprep.subr.mxu0 0.0
    %v2709 = vand.u32 %v60, 4294901760
    %v2710 = vsub.f32 %v60, %v2709
    %v2711 = vand.u32 %v2710, 4294901760
    %2712 = vmatpush1.msra.mxu0 %v2711
    %2713 = vmatprep.subr.mxu0 0.0
    %v2714 = vand.u32 %v61, 4294901760
    %v2715 = vsub.f32 %v61, %v2714
    %v2716 = vand.u32 %v2715, 4294901760
    %2717 = vmatpush1.msra.mxu0 %v2716
    %2718 = vmatprep.subr.mxu0 0.0
    %v2719 = vand.u32 %v62, 4294901760
    %v2720 = vsub.f32 %v62, %v2719
    %v2721 = vand.u32 %v2720, 4294901760
    %2722 = vmatpush1.msra.mxu0 %v2721
    %2723 = vmatprep.subr.mxu0 0.0
    %v2724 = vand.u32 %v63, 4294901760
    %v2725 = vsub.f32 %v63, %v2724
    %v2726 = vand.u32 %v2725, 4294901760
    %2727 = vmatpush1.msra.mxu0 %v2726
    %2728 = vmatprep.subr.mxu0 0.0
    %v2729 = vand.u32 %v64, 4294901760
    %v2730 = vsub.f32 %v64, %v2729
    %v2731 = vand.u32 %v2730, 4294901760
    %2732 = vmatpush1.msra.mxu0 %v2731
    %2733 = vmatprep.subr.mxu0 0.0
    %v2734 = vand.u32 %v65, 4294901760
    %v2735 = vsub.f32 %v65, %v2734
    %v2736 = vand.u32 %v2735, 4294901760
    %2737 = vmatpush1.msra.mxu0 %v2736
    %2738 = vmatprep.subr.mxu0 0.0
    %v2739 = vand.u32 %v66, 4294901760
    %v2740 = vsub.f32 %v66, %v2739
    %v2741 = vand.u32 %v2740, 4294901760
    %2742 = vmatpush1.msra.mxu0 %v2741
    %2743 = vmatprep.subr.mxu0 0.0
    %v2744 = vand.u32 %v67, 4294901760
    %v2745 = vsub.f32 %v67, %v2744
    %v2746 = vand.u32 %v2745, 4294901760
    %2747 = vmatpush1.msra.mxu0 %v2746
    %2748 = vmatprep.subr.mxu0 0.0
    %v2749 = vand.u32 %v68, 4294901760
    %v2750 = vsub.f32 %v68, %v2749
    %v2751 = vand.u32 %v2750, 4294901760
    %2752 = vmatpush1.msra.mxu0 %v2751
    %2753 = vmatprep.subr.mxu0 0.0
    %v2754 = vand.u32 %v69, 4294901760
    %v2755 = vsub.f32 %v69, %v2754
    %v2756 = vand.u32 %v2755, 4294901760
    %2757 = vmatpush1.msra.mxu0 %v2756
    %2758 = vmatprep.subr.mxu0 0.0
    %2759 = vmatpush1.msra.mxu0 0.0
    %2760 = vmatprep.subr.mxu0 0.0
    %2761 = vmatpush1.msra.mxu0 0.0
    %2762 = vmatprep.subr.mxu0 0.0
    %2763 = vmatpush1.msra.mxu0 0.0
    %2764 = vmatprep.subr.mxu0 0.0
    %2765 = vmatpush1.msra.mxu0 0.0
    %2766 = vmatprep.subr.mxu0 0.0
    %2767 = vmatpush1.msra.mxu0 0.0
    %2768 = vmatprep.subr.mxu0 0.0
    %2769 = vmatpush1.msra.mxu0 0.0
    %2770 = vmatprep.subr.mxu0 0.0
    %2771 = vmatpush1.msra.mxu0 0.0
    %2772 = vmatprep.subr.mxu0 0.0
    %2773 = vmatpush1.msra.mxu0 0.0
    %2774 = vmatprep.subr.mxu0 0.0
    %2775 = vmatpush1.msra.mxu0 0.0
    %2776 = vmatprep.subr.mxu0 0.0
    %2777 = vmatpush1.msra.mxu0 0.0
    %2778 = vmatprep.subr.mxu0 0.0
    %2779 = vmatpush1.msra.mxu0 0.0
    %2780 = vmatprep.subr.mxu0 0.0
    %2781 = vmatpush1.msra.mxu0 0.0
    %2782 = vmatprep.subr.mxu0 0.0
    %2783 = vmatpush1.msra.mxu0 0.0
    %2784 = vmatprep.subr.mxu0 0.0
    %2785 = vmatpush1.msra.mxu0 0.0
    %2786 = vmatprep.subr.mxu0 0.0
    %2787 = vmatpush1.msra.mxu0 0.0
    %2788 = vmatprep.subr.mxu0 0.0
    %2789 = vmatpush1.msra.mxu0 0.0
    %2790 = vmatprep.mubr.f32.mxu0 0.0
    %v2791 = vand.u32 %v2209, 4294901760
    %2792 = vmatmul.mubr.f32.gmra.mrb[0].mxu0 %v2791
    %v2793 = vpop.f32.mrb[0].mxu0
    %v2794 = vadd.f32 %v2667, %v2793
    %v2795 = vpop.f32.mrb[0].mxu0
    %2796 = vmatprep.mubr.f32.mxu0 0.0
    %v2797 = vand.u32 %v2211, 4294901760
    %2798 = vmatmul.mubr.f32.gmra.mrb[0].mxu0 %v2797
    %v2799 = vpop.f32.mrb[0].mxu0
    %v2800 = vadd.f32 %v2675, %v2799
    %v2801 = vpop.f32.mrb[0].mxu0
    %2802 = vdwg.mxu0
    %2803 = vmatprep.subr.mxu0 0.0
    %v2804 = vand.u32 %v54, 4294901760
    %2805 = vmatpush1.msra.mxu0 %v2804
    %2806 = vmatprep.subr.mxu0 0.0
    %v2807 = vand.u32 %v55, 4294901760
    %2808 = vmatpush1.msra.mxu0 %v2807
    %2809 = vmatprep.subr.mxu0 0.0
    %v2810 = vand.u32 %v56, 4294901760
    %2811 = vmatpush1.msra.mxu0 %v2810
    %2812 = vmatprep.subr.mxu0 0.0
    %v2813 = vand.u32 %v57, 4294901760
    %2814 = vmatpush1.msra.mxu0 %v2813
    %2815 = vmatprep.subr.mxu0 0.0
    %v2816 = vand.u32 %v58, 4294901760
    %2817 = vmatpush1.msra.mxu0 %v2816
    %2818 = vmatprep.subr.mxu0 0.0
    %v2819 = vand.u32 %v59, 4294901760
    %2820 = vmatpush1.msra.mxu0 %v2819
    %2821 = vmatprep.subr.mxu0 0.0
    %v2822 = vand.u32 %v60, 4294901760
    %2823 = vmatpush1.msra.mxu0 %v2822
    %2824 = vmatprep.subr.mxu0 0.0
    %v2825 = vand.u32 %v61, 4294901760
    %2826 = vmatpush1.msra.mxu0 %v2825
    %2827 = vmatprep.subr.mxu0 0.0
    %v2828 = vand.u32 %v62, 4294901760
    %2829 = vmatpush1.msra.mxu0 %v2828
    %2830 = vmatprep.subr.mxu0 0.0
    %v2831 = vand.u32 %v63, 4294901760
    %2832 = vmatpush1.msra.mxu0 %v2831
    %2833 = vmatprep.subr.mxu0 0.0
    %v2834 = vand.u32 %v64, 4294901760
    %2835 = vmatpush1.msra.mxu0 %v2834
    %2836 = vmatprep.subr.mxu0 0.0
    %v2837 = vand.u32 %v65, 4294901760
    %2838 = vmatpush1.msra.mxu0 %v2837
    %2839 = vmatprep.subr.mxu0 0.0
    %v2840 = vand.u32 %v66, 4294901760
    %2841 = vmatpush1.msra.mxu0 %v2840
    %2842 = vmatprep.subr.mxu0 0.0
    %v2843 = vand.u32 %v67, 4294901760
    %2844 = vmatpush1.msra.mxu0 %v2843
    %2845 = vmatprep.subr.mxu0 0.0
    %v2846 = vand.u32 %v68, 4294901760
    %2847 = vmatpush1.msra.mxu0 %v2846
    %2848 = vmatprep.subr.mxu0 0.0
    %v2849 = vand.u32 %v69, 4294901760
    %2850 = vmatpush1.msra.mxu0 %v2849
    %2851 = vmatprep.subr.mxu0 0.0
    %2852 = vmatpush1.msra.mxu0 0.0
    %2853 = vmatprep.subr.mxu0 0.0
    %2854 = vmatpush1.msra.mxu0 0.0
    %2855 = vmatprep.subr.mxu0 0.0
    %2856 = vmatpush1.msra.mxu0 0.0
    %2857 = vmatprep.subr.mxu0 0.0
    %2858 = vmatpush1.msra.mxu0 0.0
    %2859 = vmatprep.subr.mxu0 0.0
    %2860 = vmatpush1.msra.mxu0 0.0
    %2861 = vmatprep.subr.mxu0 0.0
    %2862 = vmatpush1.msra.mxu0 0.0
    %2863 = vmatprep.subr.mxu0 0.0
    %2864 = vmatpush1.msra.mxu0 0.0
    %2865 = vmatprep.subr.mxu0 0.0
    %2866 = vmatpush1.msra.mxu0 0.0
    %2867 = vmatprep.subr.mxu0 0.0
    %2868 = vmatpush1.msra.mxu0 0.0
    %2869 = vmatprep.subr.mxu0 0.0
    %2870 = vmatpush1.msra.mxu0 0.0
    %2871 = vmatprep.subr.mxu0 0.0
    %2872 = vmatpush1.msra.mxu0 0.0
    %2873 = vmatprep.subr.mxu0 0.0
    %2874 = vmatpush1.msra.mxu0 0.0
    %2875 = vmatprep.subr.mxu0 0.0
    %2876 = vmatpush1.msra.mxu0 0.0
    %2877 = vmatprep.subr.mxu0 0.0
    %2878 = vmatpush1.msra.mxu0 0.0
    %2879 = vmatprep.subr.mxu0 0.0
    %2880 = vmatpush1.msra.mxu0 0.0
    %2881 = vmatprep.subr.mxu0 0.0
    %2882 = vmatpush1.msra.mxu0 0.0
    %2883 = vmatprep.mubr.f32.mxu0 0.0
    %v2884 = vand.u32 %v2209, 4294901760
    %2885 = vmatmul.mubr.f32.gmra.mrb[0].mxu0 %v2884
    %v2886 = vpop.f32.mrb[0].mxu0
    %v2887 = vadd.f32 %v2794, %v2886
    %v2888 = vpop.f32.mrb[0].mxu0
    %2889 = vmatprep.mubr.f32.mxu0 0.0
    %v2890 = vand.u32 %v2211, 4294901760
    %2891 = vmatmul.mubr.f32.gmra.mrb[0].mxu0 %v2890
    %v2892 = vpop.f32.mrb[0].mxu0
    %v2893 = vadd.f32 %v2800, %v2892
    %v2894 = vpop.f32.mrb[0].mxu0
    %2895 = vdwg.mxu0
    %v2896 = vmax.f32 %v2887, 1e-20
    %v2897 = vmax.f32 %v2893, 1e-20
    %v2898 = vrcp.pop %v2896
    %v2899 = vrcp.pop %v2897
    %v2900 = vmul.f32 %v2209, %v2898
    %v2901 = vmul.f32 %v2211, %v2899
    %s2902 = scalar_lea.vmem [#allocation2], 896
    %v2903 = vld [vmem:[%s2902] sm:$0xff]
    %v2904 = vld [vmem:[%s2902 + $0x8] sm:$0xff]
    %v2905 = vld [vmem:[%s2902 + $0x10] sm:$0xff]
    %v2906 = vld [vmem:[%s2902 + $0x18] sm:$0xff]
    %v2907 = vld [vmem:[%s2902 + $0x20] sm:$0xff]
    %v2908 = vld [vmem:[%s2902 + $0x28] sm:$0xff]
    %v2909 = vld [vmem:[%s2902 + $0x30] sm:$0xff]
    %v2910 = vld [vmem:[%s2902 + $0x38] sm:$0xff]
    %v2911 = vld [vmem:[%s2902 + $0x40] sm:$0xff]
    %v2912 = vld [vmem:[%s2902 + $0x48] sm:$0xff]
    %v2913 = vld [vmem:[%s2902 + $0x50] sm:$0xff]
    %v2914 = vld [vmem:[%s2902 + $0x58] sm:$0xff]
    %v2915 = vld [vmem:[%s2902 + $0x60] sm:$0xff]
    %v2916 = vld [vmem:[%s2902 + $0x68] sm:$0xff]
    %v2917 = vld [vmem:[%s2902 + $0x70] sm:$0xff]
    %v2918 = vld [vmem:[%s2902 + $0x78] sm:$0xff]
    %vm2919 = vcmask 130048
    %v2921 = vsel %vm2919, %v37, 0
    %v2924 = vsel %vm2919, %v38, 0
    %v2927 = vsel %vm2919, %v39, 0
    %v2930 = vsel %vm2919, %v40, 0
    %v2933 = vsel %vm2919, %v41, 0
    %v2936 = vsel %vm2919, %v42, 0
    %v2939 = vsel %vm2919, %v43, 0
    %v2942 = vsel %vm2919, %v44, 0
    %v2945 = vsel %vm2919, %v45, 0
    %v2948 = vsel %vm2919, %v46, 0
    %v2951 = vsel %vm2919, %v47, 0
    %v2954 = vsel %vm2919, %v48, 0
    %v2957 = vsel %vm2919, %v49, 0
    %v2960 = vsel %vm2919, %v50, 0
    %v2963 = vsel %vm2919, %v51, 0
    %v2966 = vsel %vm2919, %v52, 0
    %2968 = vmatprep.subr.mxu0 0.0
    %v2969 = vand.u32 %v761, 4294901760
    %2970 = vmatpush1.msra.mxu0 %v2969
    %2971 = vmatprep.subr.mxu0 0.0
    %v2972 = vand.u32 %v767, 4294901760
    %2973 = vmatpush1.msra.mxu0 %v2972
    %2974 = vmatprep.subr.mxu0 0.0
    %2975 = vmatpush1.msra.mxu0 0.0
    %2976 = vmatprep.subr.mxu0 0.0
    %2977 = vmatpush1.msra.mxu0 0.0
    %2978 = vmatprep.subr.mxu0 0.0
    %2979 = vmatpush1.msra.mxu0 0.0
    %2980 = vmatprep.subr.mxu0 0.0
    %2981 = vmatpush1.msra.mxu0 0.0
    %2982 = vmatprep.subr.mxu0 0.0
    %2983 = vmatpush1.msra.mxu0 0.0
    %2984 = vmatprep.subr.mxu0 0.0
    %2985 = vmatpush1.msra.mxu0 0.0
    %2986 = vmatprep.subr.mxu0 0.0
    %2987 = vmatpush1.msra.mxu0 0.0
    %2988 = vmatprep.subr.mxu0 0.0
    %2989 = vmatpush1.msra.mxu0 0.0
    %2990 = vmatprep.subr.mxu0 0.0
    %2991 = vmatpush1.msra.mxu0 0.0
    %2992 = vmatprep.subr.mxu0 0.0
    %2993 = vmatpush1.msra.mxu0 0.0
    %2994 = vmatprep.subr.mxu0 0.0
    %2995 = vmatpush1.msra.mxu0 0.0
    %2996 = vmatprep.subr.mxu0 0.0
    %2997 = vmatpush1.msra.mxu0 0.0
    %2998 = vmatprep.subr.mxu0 0.0
    %2999 = vmatpush1.msra.mxu0 0.0
    %3000 = vmatprep.subr.mxu0 0.0
    %3001 = vmatpush1.msra.mxu0 0.0
    %3002 = vmatprep.subr.mxu0 0.0
    %3003 = vmatpush1.msra.mxu0 0.0
    %3004 = vmatprep.subr.mxu0 0.0
    %3005 = vmatpush1.msra.mxu0 0.0
    %3006 = vmatprep.subr.mxu0 0.0
    %3007 = vmatpush1.msra.mxu0 0.0
    %3008 = vmatprep.subr.mxu0 0.0
    %3009 = vmatpush1.msra.mxu0 0.0
    %3010 = vmatprep.subr.mxu0 0.0
    %3011 = vmatpush1.msra.mxu0 0.0
    %3012 = vmatprep.subr.mxu0 0.0
    %3013 = vmatpush1.msra.mxu0 0.0
    %3014 = vmatprep.subr.mxu0 0.0
    %3015 = vmatpush1.msra.mxu0 0.0
    %3016 = vmatprep.subr.mxu0 0.0
    %3017 = vmatpush1.msra.mxu0 0.0
    %3018 = vmatprep.subr.mxu0 0.0
    %3019 = vmatpush1.msra.mxu0 0.0
    %3020 = vmatprep.subr.mxu0 0.0
    %3021 = vmatpush1.msra.mxu0 0.0
    %3022 = vmatprep.subr.mxu0 0.0
    %3023 = vmatpush1.msra.mxu0 0.0
    %3024 = vmatprep.subr.mxu0 0.0
    %3025 = vmatpush1.msra.mxu0 0.0
    %3026 = vmatprep.subr.mxu0 0.0
    %3027 = vmatpush1.msra.mxu0 0.0
    %3028 = vmatprep.subr.mxu0 0.0
    %3029 = vmatpush1.msra.mxu0 0.0
    %3030 = vmatprep.subr.mxu0 0.0
    %3031 = vmatpush1.msra.mxu0 0.0
    %3032 = vmatprep.subr.mxu0 0.0
    %3033 = vmatpush1.msra.mxu0 0.0
    %3034 = vmatprep.mubr.f32.mxu0 0.0
    %v3035 = vand.u32 %v2921, 4294901760
    %v3036 = vsub.f32 %v2921, %v3035
    %v3037 = vand.u32 %v3036, 4294901760
    %v3038 = vsub.f32 %v3036, %v3037
    %v3039 = vand.u32 %v3038, 4294901760
    %3040 = vmatmul.mubr.f32.gmra.mrb[0].mxu0 %v3039
    %v3041 = vpop.f32.mrb[0].mxu0
    %v3042 = vadd.f32 0.0, %v3041
    %v3043 = vpop.f32.mrb[0].mxu0
    %3044 = vmatprep.mubr.f32.mxu0 0.0
    %v3045 = vand.u32 %v2924, 4294901760
    %v3046 = vsub.f32 %v2924, %v3045
    %v3047 = vand.u32 %v3046, 4294901760
    %v3048 = vsub.f32 %v3046, %v3047
    %v3049 = vand.u32 %v3048, 4294901760
    %3050 = vmatmul.mubr.f32.gmra.mrb[0].mxu0 %v3049
    %v3051 = vpop.f32.mrb[0].mxu0
    %v3052 = vadd.f32 0.0, %v3051
    %v3053 = vpop.f32.mrb[0].mxu0
    %3054 = vmatprep.mubr.f32.mxu0 0.0
    %v3055 = vand.u32 %v2927, 4294901760
    %v3056 = vsub.f32 %v2927, %v3055
    %v3057 = vand.u32 %v3056, 4294901760
    %v3058 = vsub.f32 %v3056, %v3057
    %v3059 = vand.u32 %v3058, 4294901760
    %3060 = vmatmul.mubr.f32.gmra.mrb[0].mxu0 %v3059
    %v3061 = vpop.f32.mrb[0].mxu0
    %v3062 = vadd.f32 0.0, %v3061
    %v3063 = vpop.f32.mrb[0].mxu0
    %3064 = vmatprep.mubr.f32.mxu0 0.0
    %v3065 = vand.u32 %v2930, 4294901760
    %v3066 = vsub.f32 %v2930, %v3065
    %v3067 = vand.u32 %v3066, 4294901760
    %v3068 = vsub.f32 %v3066, %v3067
    %v3069 = vand.u32 %v3068, 4294901760
    %3070 = vmatmul.mubr.f32.gmra.mrb[0].mxu0 %v3069
    %v3071 = vpop.f32.mrb[0].mxu0
    %v3072 = vadd.f32 0.0, %v3071
    %v3073 = vpop.f32.mrb[0].mxu0
    %3074 = vmatprep.mubr.f32.mxu0 0.0
    %v3075 = vand.u32 %v2933, 4294901760
    %v3076 = vsub.f32 %v2933, %v3075
    %v3077 = vand.u32 %v3076, 4294901760
    %v3078 = vsub.f32 %v3076, %v3077
    %v3079 = vand.u32 %v3078, 4294901760
    %3080 = vmatmul.mubr.f32.gmra.mrb[0].mxu0 %v3079
    %v3081 = vpop.f32.mrb[0].mxu0
    %v3082 = vadd.f32 0.0, %v3081
    %v3083 = vpop.f32.mrb[0].mxu0
    %3084 = vmatprep.mubr.f32.mxu0 0.0
    %v3085 = vand.u32 %v2936, 4294901760
    %v3086 = vsub.f32 %v2936, %v3085
    %v3087 = vand.u32 %v3086, 4294901760
    %v3088 = vsub.f32 %v3086, %v3087
    %v3089 = vand.u32 %v3088, 4294901760
    %3090 = vmatmul.mubr.f32.gmra.mrb[0].mxu0 %v3089
    %v3091 = vpop.f32.mrb[0].mxu0
    %v3092 = vadd.f32 0.0, %v3091
    %v3093 = vpop.f32.mrb[0].mxu0
    %3094 = vmatprep.mubr.f32.mxu0 0.0
    %v3095 = vand.u32 %v2939, 4294901760
    %v3096 = vsub.f32 %v2939, %v3095
    %v3097 = vand.u32 %v3096, 4294901760
    %v3098 = vsub.f32 %v3096, %v3097
    %v3099 = vand.u32 %v3098, 4294901760
    %3100 = vmatmul.mubr.f32.gmra.mrb[0].mxu0 %v3099
    %v3101 = vpop.f32.mrb[0].mxu0
    %v3102 = vadd.f32 0.0, %v3101
    %v3103 = vpop.f32.mrb[0].mxu0
    %3104 = vmatprep.mubr.f32.mxu0 0.0
    %v3105 = vand.u32 %v2942, 4294901760
    %v3106 = vsub.f32 %v2942, %v3105
    %v3107 = vand.u32 %v3106, 4294901760
    %v3108 = vsub.f32 %v3106, %v3107
    %v3109 = vand.u32 %v3108, 4294901760
    %3110 = vmatmul.mubr.f32.gmra.mrb[0].mxu0 %v3109
    %v3111 = vpop.f32.mrb[0].mxu0
    %v3112 = vadd.f32 0.0, %v3111
    %v3113 = vpop.f32.mrb[0].mxu0
    %3114 = vmatprep.mubr.f32.mxu0 0.0
    %v3115 = vand.u32 %v2945, 4294901760
    %v3116 = vsub.f32 %v2945, %v3115
    %v3117 = vand.u32 %v3116, 4294901760
    %v3118 = vsub.f32 %v3116, %v3117
    %v3119 = vand.u32 %v3118, 4294901760
    %3120 = vmatmul.mubr.f32.gmra.mrb[0].mxu0 %v3119
    %v3121 = vpop.f32.mrb[0].mxu0
    %v3122 = vadd.f32 0.0, %v3121
    %v3123 = vpop.f32.mrb[0].mxu0
    %3124 = vmatprep.mubr.f32.mxu0 0.0
    %v3125 = vand.u32 %v2948, 4294901760
    %v3126 = vsub.f32 %v2948, %v3125
    %v3127 = vand.u32 %v3126, 4294901760
    %v3128 = vsub.f32 %v3126, %v3127
    %v3129 = vand.u32 %v3128, 4294901760
    %3130 = vmatmul.mubr.f32.gmra.mrb[0].mxu0 %v3129
    %v3131 = vpop.f32.mrb[0].mxu0
    %v3132 = vadd.f32 0.0, %v3131
    %v3133 = vpop.f32.mrb[0].mxu0
    %3134 = vmatprep.mubr.f32.mxu0 0.0
    %v3135 = vand.u32 %v2951, 4294901760
    %v3136 = vsub.f32 %v2951, %v3135
    %v3137 = vand.u32 %v3136, 4294901760
    %v3138 = vsub.f32 %v3136, %v3137
    %v3139 = vand.u32 %v3138, 4294901760
    %3140 = vmatmul.mubr.f32.gmra.mrb[0].mxu0 %v3139
    %v3141 = vpop.f32.mrb[0].mxu0
    %v3142 = vadd.f32 0.0, %v3141
    %v3143 = vpop.f32.mrb[0].mxu0
    %3144 = vmatprep.mubr.f32.mxu0 0.0
    %v3145 = vand.u32 %v2954, 4294901760
    %v3146 = vsub.f32 %v2954, %v3145
    %v3147 = vand.u32 %v3146, 4294901760
    %v3148 = vsub.f32 %v3146, %v3147
    %v3149 = vand.u32 %v3148, 4294901760
    %3150 = vmatmul.mubr.f32.gmra.mrb[0].mxu0 %v3149
    %v3151 = vpop.f32.mrb[0].mxu0
    %v3152 = vadd.f32 0.0, %v3151
    %v3153 = vpop.f32.mrb[0].mxu0
    %3154 = vmatprep.mubr.f32.mxu0 0.0
    %v3155 = vand.u32 %v2957, 4294901760
    %v3156 = vsub.f32 %v2957, %v3155
    %v3157 = vand.u32 %v3156, 4294901760
    %v3158 = vsub.f32 %v3156, %v3157
    %v3159 = vand.u32 %v3158, 4294901760
    %3160 = vmatmul.mubr.f32.gmra.mrb[0].mxu0 %v3159
    %v3161 = vpop.f32.mrb[0].mxu0
    %v3162 = vadd.f32 0.0, %v3161
    %v3163 = vpop.f32.mrb[0].mxu0
    %3164 = vmatprep.mubr.f32.mxu0 0.0
    %v3165 = vand.u32 %v2960, 4294901760
    %v3166 = vsub.f32 %v2960, %v3165
    %v3167 = vand.u32 %v3166, 4294901760
    %v3168 = vsub.f32 %v3166, %v3167
    %v3169 = vand.u32 %v3168, 4294901760
    %3170 = vmatmul.mubr.f32.gmra.mrb[0].mxu0 %v3169
    %v3171 = vpop.f32.mrb[0].mxu0
    %v3172 = vadd.f32 0.0, %v3171
    %v3173 = vpop.f32.mrb[0].mxu0
    %3174 = vmatprep.mubr.f32.mxu0 0.0
    %v3175 = vand.u32 %v2963, 4294901760
    %v3176 = vsub.f32 %v2963, %v3175
    %v3177 = vand.u32 %v3176, 4294901760
    %v3178 = vsub.f32 %v3176, %v3177
    %v3179 = vand.u32 %v3178, 4294901760
    %3180 = vmatmul.mubr.f32.gmra.mrb[0].mxu0 %v3179
    %v3181 = vpop.f32.mrb[0].mxu0
    %v3182 = vadd.f32 0.0, %v3181
    %v3183 = vpop.f32.mrb[0].mxu0
    %3184 = vmatprep.mubr.f32.mxu0 0.0
    %v3185 = vand.u32 %v2966, 4294901760
    %v3186 = vsub.f32 %v2966, %v3185
    %v3187 = vand.u32 %v3186, 4294901760
    %v3188 = vsub.f32 %v3186, %v3187
    %v3189 = vand.u32 %v3188, 4294901760
    %3190 = vmatmul.mubr.f32.gmra.mrb[0].mxu0 %v3189
    %v3191 = vpop.f32.mrb[0].mxu0
    %v3192 = vadd.f32 0.0, %v3191
    %v3193 = vpop.f32.mrb[0].mxu0
    %3194 = vdwg.mxu0
    %3195 = vmatprep.subr.mxu0 0.0
    %v3196 = vand.u32 %v761, 4294901760
    %v3197 = vsub.f32 %v761, %v3196
    %v3198 = vand.u32 %v3197, 4294901760
    %v3199 = vsub.f32 %v3197, %v3198
    %v3200 = vand.u32 %v3199, 4294901760
    %3201 = vmatpush1.msra.mxu0 %v3200
    %3202 = vmatprep.subr.mxu0 0.0
    %v3203 = vand.u32 %v767, 4294901760
    %v3204 = vsub.f32 %v767, %v3203
    %v3205 = vand.u32 %v3204, 4294901760
    %v3206 = vsub.f32 %v3204, %v3205
    %v3207 = vand.u32 %v3206, 4294901760
    %3208 = vmatpush1.msra.mxu0 %v3207
    %3209 = vmatprep.subr.mxu0 0.0
    %3210 = vmatpush1.msra.mxu0 0.0
    %3211 = vmatprep.subr.mxu0 0.0
    %3212 = vmatpush1.msra.mxu0 0.0
    %3213 = vmatprep.subr.mxu0 0.0
    %3214 = vmatpush1.msra.mxu0 0.0
    %3215 = vmatprep.subr.mxu0 0.0
    %3216 = vmatpush1.msra.mxu0 0.0
    %3217 = vmatprep.subr.mxu0 0.0
    %3218 = vmatpush1.msra.mxu0 0.0
    %3219 = vmatprep.subr.mxu0 0.0
    %3220 = vmatpush1.msra.mxu0 0.0
    %3221 = vmatprep.subr.mxu0 0.0
    %3222 = vmatpush1.msra.mxu0 0.0
    %3223 = vmatprep.subr.mxu0 0.0
    %3224 = vmatpush1.msra.mxu0 0.0
    %3225 = vmatprep.subr.mxu0 0.0
    %3226 = vmatpush1.msra.mxu0 0.0
    %3227 = vmatprep.subr.mxu0 0.0
    %3228 = vmatpush1.msra.mxu0 0.0
    %3229 = vmatprep.subr.mxu0 0.0
    %3230 = vmatpush1.msra.mxu0 0.0
    %3231 = vmatprep.subr.mxu0 0.0
    %3232 = vmatpush1.msra.mxu0 0.0
    %3233 = vmatprep.subr.mxu0 0.0
    %3234 = vmatpush1.msra.mxu0 0.0
    %3235 = vmatprep.subr.mxu0 0.0
    %3236 = vmatpush1.msra.mxu0 0.0
    %3237 = vmatprep.subr.mxu0 0.0
    %3238 = vmatpush1.msra.mxu0 0.0
    %3239 = vmatprep.subr.mxu0 0.0
    %3240 = vmatpush1.msra.mxu0 0.0
    %3241 = vmatprep.subr.mxu0 0.0
    %3242 = vmatpush1.msra.mxu0 0.0
    %3243 = vmatprep.subr.mxu0 0.0
    %3244 = vmatpush1.msra.mxu0 0.0
    %3245 = vmatprep.subr.mxu0 0.0
    %3246 = vmatpush1.msra.mxu0 0.0
    %3247 = vmatprep.subr.mxu0 0.0
    %3248 = vmatpush1.msra.mxu0 0.0
    %3249 = vmatprep.subr.mxu0 0.0
    %3250 = vmatpush1.msra.mxu0 0.0
    %3251 = vmatprep.subr.mxu0 0.0
    %3252 = vmatpush1.msra.mxu0 0.0
    %3253 = vmatprep.subr.mxu0 0.0
    %3254 = vmatpush1.msra.mxu0 0.0
    %3255 = vmatprep.subr.mxu0 0.0
    %3256 = vmatpush1.msra.mxu0 0.0
    %3257 = vmatprep.subr.mxu0 0.0
    %3258 = vmatpush1.msra.mxu0 0.0
    %3259 = vmatprep.subr.mxu0 0.0
    %3260 = vmatpush1.msra.mxu0 0.0
    %3261 = vmatprep.subr.mxu0 0.0
    %3262 = vmatpush1.msra.mxu0 0.0
    %3263 = vmatprep.subr.mxu0 0.0
    %3264 = vmatpush1.msra.mxu0 0.0
    %3265 = vmatprep.subr.mxu0 0.0
    %3266 = vmatpush1.msra.mxu0 0.0
    %3267 = vmatprep.subr.mxu0 0.0
    %3268 = vmatpush1.msra.mxu0 0.0
    %3269 = vmatprep.mubr.f32.mxu0 0.0
    %v3270 = vand.u32 %v2921, 4294901760
    %3271 = vmatmul.mubr.f32.gmra.mrb[0].mxu0 %v3270
    %v3272 = vpop.f32.mrb[0].mxu0
    %v3273 = vadd.f32 %v3042, %v3272
    %v3274 = vpop.f32.mrb[0].mxu0
    %3275 = vmatprep.mubr.f32.mxu0 0.0
    %v3276 = vand.u32 %v2924, 4294901760
    %3277 = vmatmul.mubr.f32.gmra.mrb[0].mxu0 %v3276
    %v3278 = vpop.f32.mrb[0].mxu0
    %v3279 = vadd.f32 %v3052, %v3278
    %v3280 = vpop.f32.mrb[0].mxu0
    %3281 = vmatprep.mubr.f32.mxu0 0.0
    %v3282 = vand.u32 %v2927, 4294901760
    %3283 = vmatmul.mubr.f32.gmra.mrb[0].mxu0 %v3282
    %v3284 = vpop.f32.mrb[0].mxu0
    %v3285 = vadd.f32 %v3062, %v3284
    %v3286 = vpop.f32.mrb[0].mxu0
    %3287 = vmatprep.mubr.f32.mxu0 0.0
    %v3288 = vand.u32 %v2930, 4294901760
    %3289 = vmatmul.mubr.f32.gmra.mrb[0].mxu0 %v3288
    %v3290 = vpop.f32.mrb[0].mxu0
    %v3291 = vadd.f32 %v3072, %v3290
    %v3292 = vpop.f32.mrb[0].mxu0
    %3293 = vmatprep.mubr.f32.mxu0 0.0
    %v3294 = vand.u32 %v2933, 4294901760
    %3295 = vmatmul.mubr.f32.gmra.mrb[0].mxu0 %v3294
    %v3296 = vpop.f32.mrb[0].mxu0
    %v3297 = vadd.f32 %v3082, %v3296
    %v3298 = vpop.f32.mrb[0].mxu0
    %3299 = vmatprep.mubr.f32.mxu0 0.0
    %v3300 = vand.u32 %v2936, 4294901760
    %3301 = vmatmul.mubr.f32.gmra.mrb[0].mxu0 %v3300
    %v3302 = vpop.f32.mrb[0].mxu0
    %v3303 = vadd.f32 %v3092, %v3302
    %v3304 = vpop.f32.mrb[0].mxu0
    %3305 = vmatprep.mubr.f32.mxu0 0.0
    %v3306 = vand.u32 %v2939, 4294901760
    %3307 = vmatmul.mubr.f32.gmra.mrb[0].mxu0 %v3306
    %v3308 = vpop.f32.mrb[0].mxu0
    %v3309 = vadd.f32 %v3102, %v3308
    %v3310 = vpop.f32.mrb[0].mxu0
    %3311 = vmatprep.mubr.f32.mxu0 0.0
    %v3312 = vand.u32 %v2942, 4294901760
    %3313 = vmatmul.mubr.f32.gmra.mrb[0].mxu0 %v3312
    %v3314 = vpop.f32.mrb[0].mxu0
    %v3315 = vadd.f32 %v3112, %v3314
    %v3316 = vpop.f32.mrb[0].mxu0
    %3317 = vmatprep.mubr.f32.mxu0 0.0
    %v3318 = vand.u32 %v2945, 4294901760
    %3319 = vmatmul.mubr.f32.gmra.mrb[0].mxu0 %v3318
    %v3320 = vpop.f32.mrb[0].mxu0
    %v3321 = vadd.f32 %v3122, %v3320
    %v3322 = vpop.f32.mrb[0].mxu0
    %3323 = vmatprep.mubr.f32.mxu0 0.0
    %v3324 = vand.u32 %v2948, 4294901760
    %3325 = vmatmul.mubr.f32.gmra.mrb[0].mxu0 %v3324
    %v3326 = vpop.f32.mrb[0].mxu0
    %v3327 = vadd.f32 %v3132, %v3326
    %v3328 = vpop.f32.mrb[0].mxu0
    %3329 = vmatprep.mubr.f32.mxu0 0.0
    %v3330 = vand.u32 %v2951, 4294901760
    %3331 = vmatmul.mubr.f32.gmra.mrb[0].mxu0 %v3330
    %v3332 = vpop.f32.mrb[0].mxu0
    %v3333 = vadd.f32 %v3142, %v3332
    %v3334 = vpop.f32.mrb[0].mxu0
    %3335 = vmatprep.mubr.f32.mxu0 0.0
    %v3336 = vand.u32 %v2954, 4294901760
    %3337 = vmatmul.mubr.f32.gmra.mrb[0].mxu0 %v3336
    %v3338 = vpop.f32.mrb[0].mxu0
    %v3339 = vadd.f32 %v3152, %v3338
    %v3340 = vpop.f32.mrb[0].mxu0
    %3341 = vmatprep.mubr.f32.mxu0 0.0
    %v3342 = vand.u32 %v2957, 4294901760
    %3343 = vmatmul.mubr.f32.gmra.mrb[0].mxu0 %v3342
    %v3344 = vpop.f32.mrb[0].mxu0
    %v3345 = vadd.f32 %v3162, %v3344
    %v3346 = vpop.f32.mrb[0].mxu0
    %3347 = vmatprep.mubr.f32.mxu0 0.0
    %v3348 = vand.u32 %v2960, 4294901760
    %3349 = vmatmul.mubr.f32.gmra.mrb[0].mxu0 %v3348
    %v3350 = vpop.f32.mrb[0].mxu0
    %v3351 = vadd.f32 %v3172, %v3350
    %v3352 = vpop.f32.mrb[0].mxu0
    %3353 = vmatprep.mubr.f32.mxu0 0.0
    %v3354 = vand.u32 %v2963, 4294901760
    %3355 = vmatmul.mubr.f32.gmra.mrb[0].mxu0 %v3354
    %v3356 = vpop.f32.mrb[0].mxu0
    %v3357 = vadd.f32 %v3182, %v3356
    %v3358 = vpop.f32.mrb[0].mxu0
    %3359 = vmatprep.mubr.f32.mxu0 0.0
    %v3360 = vand.u32 %v2966, 4294901760
    %3361 = vmatmul.mubr.f32.gmra.mrb[0].mxu0 %v3360
    %v3362 = vpop.f32.mrb[0].mxu0
    %v3363 = vadd.f32 %v3192, %v3362
    %v3364 = vpop.f32.mrb[0].mxu0
    %3365 = vdwg.mxu0
    %3366 = vmatprep.subr.mxu0 0.0
    %v3367 = vand.u32 %v761, 4294901760
    %v3368 = vsub.f32 %v761, %v3367
    %3369 = vmatpush1.msra.mxu0 %v3368
    %3370 = vmatprep.subr.mxu0 0.0
    %v3371 = vand.u32 %v767, 4294901760
    %v3372 = vsub.f32 %v767, %v3371
    %3373 = vmatpush1.msra.mxu0 %v3372
    %3374 = vmatprep.subr.mxu0 0.0
    %3375 = vmatpush1.msra.mxu0 0.0
    %3376 = vmatprep.subr.mxu0 0.0
    %3377 = vmatpush1.msra.mxu0 0.0
    %3378 = vmatprep.subr.mxu0 0.0
    %3379 = vmatpush1.msra.mxu0 0.0
    %3380 = vmatprep.subr.mxu0 0.0
    %3381 = vmatpush1.msra.mxu0 0.0
    %3382 = vmatprep.subr.mxu0 0.0
    %3383 = vmatpush1.msra.mxu0 0.0
    %3384 = vmatprep.subr.mxu0 0.0
    %3385 = vmatpush1.msra.mxu0 0.0
    %3386 = vmatprep.subr.mxu0 0.0
    %3387 = vmatpush1.msra.mxu0 0.0
    %3388 = vmatprep.subr.mxu0 0.0
    %3389 = vmatpush1.msra.mxu0 0.0
    %3390 = vmatprep.subr.mxu0 0.0
    %3391 = vmatpush1.msra.mxu0 0.0
    %3392 = vmatprep.subr.mxu0 0.0
    %3393 = vmatpush1.msra.mxu0 0.0
    %3394 = vmatprep.subr.mxu0 0.0
    %3395 = vmatpush1.msra.mxu0 0.0
    %3396 = vmatprep.subr.mxu0 0.0
    %3397 = vmatpush1.msra.mxu0 0.0
    %3398 = vmatprep.subr.mxu0 0.0
    %3399 = vmatpush1.msra.mxu0 0.0
    %3400 = vmatprep.subr.mxu0 0.0
    %3401 = vmatpush1.msra.mxu0 0.0
    %3402 = vmatprep.subr.mxu0 0.0
    %3403 = vmatpush1.msra.mxu0 0.0
    %3404 = vmatprep.subr.mxu0 0.0
    %3405 = vmatpush1.msra.mxu0 0.0
    %3406 = vmatprep.subr.mxu0 0.0
    %3407 = vmatpush1.msra.mxu0 0.0
    %3408 = vmatprep.subr.mxu0 0.0
    %3409 = vmatpush1.msra.mxu0 0.0
    %3410 = vmatprep.subr.mxu0 0.0
    %3411 = vmatpush1.msra.mxu0 0.0
    %3412 = vmatprep.subr.mxu0 0.0
    %3413 = vmatpush1.msra.mxu0 0.0
    %3414 = vmatprep.subr.mxu0 0.0
    %3415 = vmatpush1.msra.mxu0 0.0
    %3416 = vmatprep.subr.mxu0 0.0
    %3417 = vmatpush1.msra.mxu0 0.0
    %3418 = vmatprep.subr.mxu0 0.0
    %3419 = vmatpush1.msra.mxu0 0.0
    %3420 = vmatprep.subr.mxu0 0.0
    %3421 = vmatpush1.msra.mxu0 0.0
    %3422 = vmatprep.subr.mxu0 0.0
    %3423 = vmatpush1.msra.mxu0 0.0
    %3424 = vmatprep.subr.mxu0 0.0
    %3425 = vmatpush1.msra.mxu0 0.0
    %3426 = vmatprep.subr.mxu0 0.0
    %3427 = vmatpush1.msra.mxu0 0.0
    %3428 = vmatprep.subr.mxu0 0.0
    %3429 = vmatpush1.msra.mxu0 0.0
    %3430 = vmatprep.subr.mxu0 0.0
    %3431 = vmatpush1.msra.mxu0 0.0
    %3432 = vmatprep.subr.mxu0 0.0
    %3433 = vmatpush1.msra.mxu0 0.0
    %3434 = vmatprep.mubr.f32.mxu0 0.0
    %v3435 = vand.u32 %v2921, 4294901760
    %v3436 = vsub.f32 %v2921, %v3435
    %3437 = vmatmul.mubr.f32.gmra.mrb[0].mxu0 %v3436
    %v3438 = vpop.f32.mrb[0].mxu0
    %v3439 = vadd.f32 %v3273, %v3438
    %v3440 = vpop.f32.mrb[0].mxu0
    %3441 = vmatprep.mubr.f32.mxu0 0.0
    %v3442 = vand.u32 %v2924, 4294901760
    %v3443 = vsub.f32 %v2924, %v3442
    %3444 = vmatmul.mubr.f32.gmra.mrb[0].mxu0 %v3443
    %v3445 = vpop.f32.mrb[0].mxu0
    %v3446 = vadd.f32 %v3279, %v3445
    %v3447 = vpop.f32.mrb[0].mxu0
    %3448 = vmatprep.mubr.f32.mxu0 0.0
    %v3449 = vand.u32 %v2927, 4294901760
    %v3450 = vsub.f32 %v2927, %v3449
    %3451 = vmatmul.mubr.f32.gmra.mrb[0].mxu0 %v3450
    %v3452 = vpop.f32.mrb[0].mxu0
    %v3453 = vadd.f32 %v3285, %v3452
    %v3454 = vpop.f32.mrb[0].mxu0
    %3455 = vmatprep.mubr.f32.mxu0 0.0
    %v3456 = vand.u32 %v2930, 4294901760
    %v3457 = vsub.f32 %v2930, %v3456
    %3458 = vmatmul.mubr.f32.gmra.mrb[0].mxu0 %v3457
    %v3459 = vpop.f32.mrb[0].mxu0
    %v3460 = vadd.f32 %v3291, %v3459
    %v3461 = vpop.f32.mrb[0].mxu0
    %3462 = vmatprep.mubr.f32.mxu0 0.0
    %v3463 = vand.u32 %v2933, 4294901760
    %v3464 = vsub.f32 %v2933, %v3463
    %3465 = vmatmul.mubr.f32.gmra.mrb[0].mxu0 %v3464
    %v3466 = vpop.f32.mrb[0].mxu0
    %v3467 = vadd.f32 %v3297, %v3466
    %v3468 = vpop.f32.mrb[0].mxu0
    %3469 = vmatprep.mubr.f32.mxu0 0.0
    %v3470 = vand.u32 %v2936, 4294901760
    %v3471 = vsub.f32 %v2936, %v3470
    %3472 = vmatmul.mubr.f32.gmra.mrb[0].mxu0 %v3471
    %v3473 = vpop.f32.mrb[0].mxu0
    %v3474 = vadd.f32 %v3303, %v3473
    %v3475 = vpop.f32.mrb[0].mxu0
    %3476 = vmatprep.mubr.f32.mxu0 0.0
    %v3477 = vand.u32 %v2939, 4294901760
    %v3478 = vsub.f32 %v2939, %v3477
    %3479 = vmatmul.mubr.f32.gmra.mrb[0].mxu0 %v3478
    %v3480 = vpop.f32.mrb[0].mxu0
    %v3481 = vadd.f32 %v3309, %v3480
    %v3482 = vpop.f32.mrb[0].mxu0
    %3483 = vmatprep.mubr.f32.mxu0 0.0
    %v3484 = vand.u32 %v2942, 4294901760
    %v3485 = vsub.f32 %v2942, %v3484
    %3486 = vmatmul.mubr.f32.gmra.mrb[0].mxu0 %v3485
    %v3487 = vpop.f32.mrb[0].mxu0
    %v3488 = vadd.f32 %v3315, %v3487
    %v3489 = vpop.f32.mrb[0].mxu0
    %3490 = vmatprep.mubr.f32.mxu0 0.0
    %v3491 = vand.u32 %v2945, 4294901760
    %v3492 = vsub.f32 %v2945, %v3491
    %3493 = vmatmul.mubr.f32.gmra.mrb[0].mxu0 %v3492
    %v3494 = vpop.f32.mrb[0].mxu0
    %v3495 = vadd.f32 %v3321, %v3494
    %v3496 = vpop.f32.mrb[0].mxu0
    %3497 = vmatprep.mubr.f32.mxu0 0.0
    %v3498 = vand.u32 %v2948, 4294901760
    %v3499 = vsub.f32 %v2948, %v3498
    %3500 = vmatmul.mubr.f32.gmra.mrb[0].mxu0 %v3499
    %v3501 = vpop.f32.mrb[0].mxu0
    %v3502 = vadd.f32 %v3327, %v3501
    %v3503 = vpop.f32.mrb[0].mxu0
    %3504 = vmatprep.mubr.f32.mxu0 0.0
    %v3505 = vand.u32 %v2951, 4294901760
    %v3506 = vsub.f32 %v2951, %v3505
    %3507 = vmatmul.mubr.f32.gmra.mrb[0].mxu0 %v3506
    %v3508 = vpop.f32.mrb[0].mxu0
    %v3509 = vadd.f32 %v3333, %v3508
    %v3510 = vpop.f32.mrb[0].mxu0
    %3511 = vmatprep.mubr.f32.mxu0 0.0
    %v3512 = vand.u32 %v2954, 4294901760
    %v3513 = vsub.f32 %v2954, %v3512
    %3514 = vmatmul.mubr.f32.gmra.mrb[0].mxu0 %v3513
    %v3515 = vpop.f32.mrb[0].mxu0
    %v3516 = vadd.f32 %v3339, %v3515
    %v3517 = vpop.f32.mrb[0].mxu0
    %3518 = vmatprep.mubr.f32.mxu0 0.0
    %v3519 = vand.u32 %v2957, 4294901760
    %v3520 = vsub.f32 %v2957, %v3519
    %3521 = vmatmul.mubr.f32.gmra.mrb[0].mxu0 %v3520
    %v3522 = vpop.f32.mrb[0].mxu0
    %v3523 = vadd.f32 %v3345, %v3522
    %v3524 = vpop.f32.mrb[0].mxu0
    %3525 = vmatprep.mubr.f32.mxu0 0.0
    %v3526 = vand.u32 %v2960, 4294901760
    %v3527 = vsub.f32 %v2960, %v3526
    %3528 = vmatmul.mubr.f32.gmra.mrb[0].mxu0 %v3527
    %v3529 = vpop.f32.mrb[0].mxu0
    %v3530 = vadd.f32 %v3351, %v3529
    %v3531 = vpop.f32.mrb[0].mxu0
    %3532 = vmatprep.mubr.f32.mxu0 0.0
    %v3533 = vand.u32 %v2963, 4294901760
    %v3534 = vsub.f32 %v2963, %v3533
    %3535 = vmatmul.mubr.f32.gmra.mrb[0].mxu0 %v3534
    %v3536 = vpop.f32.mrb[0].mxu0
    %v3537 = vadd.f32 %v3357, %v3536
    %v3538 = vpop.f32.mrb[0].mxu0
    %3539 = vmatprep.mubr.f32.mxu0 0.0
    %v3540 = vand.u32 %v2966, 4294901760
    %v3541 = vsub.f32 %v2966, %v3540
    %3542 = vmatmul.mubr.f32.gmra.mrb[0].mxu0 %v3541
    %v3543 = vpop.f32.mrb[0].mxu0
    %v3544 = vadd.f32 %v3363, %v3543
    %v3545 = vpop.f32.mrb[0].mxu0
    %3546 = vdwg.mxu0
    %3547 = vmatprep.subr.mxu0 0.0
    %v3548 = vand.u32 %v761, 4294901760
    %3549 = vmatpush1.msra.mxu0 %v3548
    %3550 = vmatprep.subr.mxu0 0.0
    %v3551 = vand.u32 %v767, 4294901760
    %3552 = vmatpush1.msra.mxu0 %v3551
    %3553 = vmatprep.subr.mxu0 0.0
    %3554 = vmatpush1.msra.mxu0 0.0
    %3555 = vmatprep.subr.mxu0 0.0
    %3556 = vmatpush1.msra.mxu0 0.0
    %3557 = vmatprep.subr.mxu0 0.0
    %3558 = vmatpush1.msra.mxu0 0.0
    %3559 = vmatprep.subr.mxu0 0.0
    %3560 = vmatpush1.msra.mxu0 0.0
    %3561 = vmatprep.subr.mxu0 0.0
    %3562 = vmatpush1.msra.mxu0 0.0
    %3563 = vmatprep.subr.mxu0 0.0
    %3564 = vmatpush1.msra.mxu0 0.0
    %3565 = vmatprep.subr.mxu0 0.0
    %3566 = vmatpush1.msra.mxu0 0.0
    %3567 = vmatprep.subr.mxu0 0.0
    %3568 = vmatpush1.msra.mxu0 0.0
    %3569 = vmatprep.subr.mxu0 0.0
    %3570 = vmatpush1.msra.mxu0 0.0
    %3571 = vmatprep.subr.mxu0 0.0
    %3572 = vmatpush1.msra.mxu0 0.0
    %3573 = vmatprep.subr.mxu0 0.0
    %3574 = vmatpush1.msra.mxu0 0.0
    %3575 = vmatprep.subr.mxu0 0.0
    %3576 = vmatpush1.msra.mxu0 0.0
    %3577 = vmatprep.subr.mxu0 0.0
    %3578 = vmatpush1.msra.mxu0 0.0
    %3579 = vmatprep.subr.mxu0 0.0
    %3580 = vmatpush1.msra.mxu0 0.0
    %3581 = vmatprep.subr.mxu0 0.0
    %3582 = vmatpush1.msra.mxu0 0.0
    %3583 = vmatprep.subr.mxu0 0.0
    %3584 = vmatpush1.msra.mxu0 0.0
    %3585 = vmatprep.subr.mxu0 0.0
    %3586 = vmatpush1.msra.mxu0 0.0
    %3587 = vmatprep.subr.mxu0 0.0
    %3588 = vmatpush1.msra.mxu0 0.0
    %3589 = vmatprep.subr.mxu0 0.0
    %3590 = vmatpush1.msra.mxu0 0.0
    %3591 = vmatprep.subr.mxu0 0.0
    %3592 = vmatpush1.msra.mxu0 0.0
    %3593 = vmatprep.subr.mxu0 0.0
    %3594 = vmatpush1.msra.mxu0 0.0
    %3595 = vmatprep.subr.mxu0 0.0
    %3596 = vmatpush1.msra.mxu0 0.0
    %3597 = vmatprep.subr.mxu0 0.0
    %3598 = vmatpush1.msra.mxu0 0.0
    %3599 = vmatprep.subr.mxu0 0.0
    %3600 = vmatpush1.msra.mxu0 0.0
    %3601 = vmatprep.subr.mxu0 0.0
    %3602 = vmatpush1.msra.mxu0 0.0
    %3603 = vmatprep.subr.mxu0 0.0
    %3604 = vmatpush1.msra.mxu0 0.0
    %3605 = vmatprep.subr.mxu0 0.0
    %3606 = vmatpush1.msra.mxu0 0.0
    %3607 = vmatprep.subr.mxu0 0.0
    %3608 = vmatpush1.msra.mxu0 0.0
    %3609 = vmatprep.subr.mxu0 0.0
    %3610 = vmatpush1.msra.mxu0 0.0
    %3611 = vmatprep.subr.mxu0 0.0
    %3612 = vmatpush1.msra.mxu0 0.0
    %3613 = vmatprep.mubr.f32.mxu0 0.0
    %v3614 = vand.u32 %v2921, 4294901760
    %v3615 = vsub.f32 %v2921, %v3614
    %v3616 = vand.u32 %v3615, 4294901760
    %3617 = vmatmul.mubr.f32.gmra.mrb[0].mxu0 %v3616
    %v3618 = vpop.f32.mrb[0].mxu0
    %v3619 = vadd.f32 %v3439, %v3618
    %v3620 = vpop.f32.mrb[0].mxu0
    %3621 = vmatprep.mubr.f32.mxu0 0.0
    %v3622 = vand.u32 %v2924, 4294901760
    %v3623 = vsub.f32 %v2924, %v3622
    %v3624 = vand.u32 %v3623, 4294901760
    %3625 = vmatmul.mubr.f32.gmra.mrb[0].mxu0 %v3624
    %v3626 = vpop.f32.mrb[0].mxu0
    %v3627 = vadd.f32 %v3446, %v3626
    %v3628 = vpop.f32.mrb[0].mxu0
    %3629 = vmatprep.mubr.f32.mxu0 0.0
    %v3630 = vand.u32 %v2927, 4294901760
    %v3631 = vsub.f32 %v2927, %v3630
    %v3632 = vand.u32 %v3631, 4294901760
    %3633 = vmatmul.mubr.f32.gmra.mrb[0].mxu0 %v3632
    %v3634 = vpop.f32.mrb[0].mxu0
    %v3635 = vadd.f32 %v3453, %v3634
    %v3636 = vpop.f32.mrb[0].mxu0
    %3637 = vmatprep.mubr.f32.mxu0 0.0
    %v3638 = vand.u32 %v2930, 4294901760
    %v3639 = vsub.f32 %v2930, %v3638
    %v3640 = vand.u32 %v3639, 4294901760
    %3641 = vmatmul.mubr.f32.gmra.mrb[0].mxu0 %v3640
    %v3642 = vpop.f32.mrb[0].mxu0
    %v3643 = vadd.f32 %v3460, %v3642
    %v3644 = vpop.f32.mrb[0].mxu0
    %3645 = vmatprep.mubr.f32.mxu0 0.0
    %v3646 = vand.u32 %v2933, 4294901760
    %v3647 = vsub.f32 %v2933, %v3646
    %v3648 = vand.u32 %v3647, 4294901760
    %3649 = vmatmul.mubr.f32.gmra.mrb[0].mxu0 %v3648
    %v3650 = vpop.f32.mrb[0].mxu0
    %v3651 = vadd.f32 %v3467, %v3650
    %v3652 = vpop.f32.mrb[0].mxu0
    %3653 = vmatprep.mubr.f32.mxu0 0.0
    %v3654 = vand.u32 %v2936, 4294901760
    %v3655 = vsub.f32 %v2936, %v3654
    %v3656 = vand.u32 %v3655, 4294901760
    %3657 = vmatmul.mubr.f32.gmra.mrb[0].mxu0 %v3656
    %v3658 = vpop.f32.mrb[0].mxu0
    %v3659 = vadd.f32 %v3474, %v3658
    %v3660 = vpop.f32.mrb[0].mxu0
    %3661 = vmatprep.mubr.f32.mxu0 0.0
    %v3662 = vand.u32 %v2939, 4294901760
    %v3663 = vsub.f32 %v2939, %v3662
    %v3664 = vand.u32 %v3663, 4294901760
    %3665 = vmatmul.mubr.f32.gmra.mrb[0].mxu0 %v3664
    %v3666 = vpop.f32.mrb[0].mxu0
    %v3667 = vadd.f32 %v3481, %v3666
    %v3668 = vpop.f32.mrb[0].mxu0
    %3669 = vmatprep.mubr.f32.mxu0 0.0
    %v3670 = vand.u32 %v2942, 4294901760
    %v3671 = vsub.f32 %v2942, %v3670
    %v3672 = vand.u32 %v3671, 4294901760
    %3673 = vmatmul.mubr.f32.gmra.mrb[0].mxu0 %v3672
    %v3674 = vpop.f32.mrb[0].mxu0
    %v3675 = vadd.f32 %v3488, %v3674
    %v3676 = vpop.f32.mrb[0].mxu0
    %3677 = vmatprep.mubr.f32.mxu0 0.0
    %v3678 = vand.u32 %v2945, 4294901760
    %v3679 = vsub.f32 %v2945, %v3678
    %v3680 = vand.u32 %v3679, 4294901760
    %3681 = vmatmul.mubr.f32.gmra.mrb[0].mxu0 %v3680
    %v3682 = vpop.f32.mrb[0].mxu0
    %v3683 = vadd.f32 %v3495, %v3682
    %v3684 = vpop.f32.mrb[0].mxu0
    %3685 = vmatprep.mubr.f32.mxu0 0.0
    %v3686 = vand.u32 %v2948, 4294901760
    %v3687 = vsub.f32 %v2948, %v3686
    %v3688 = vand.u32 %v3687, 4294901760
    %3689 = vmatmul.mubr.f32.gmra.mrb[0].mxu0 %v3688
    %v3690 = vpop.f32.mrb[0].mxu0
    %v3691 = vadd.f32 %v3502, %v3690
    %v3692 = vpop.f32.mrb[0].mxu0
    %3693 = vmatprep.mubr.f32.mxu0 0.0
    %v3694 = vand.u32 %v2951, 4294901760
    %v3695 = vsub.f32 %v2951, %v3694
    %v3696 = vand.u32 %v3695, 4294901760
    %3697 = vmatmul.mubr.f32.gmra.mrb[0].mxu0 %v3696
    %v3698 = vpop.f32.mrb[0].mxu0
    %v3699 = vadd.f32 %v3509, %v3698
    %v3700 = vpop.f32.mrb[0].mxu0
    %3701 = vmatprep.mubr.f32.mxu0 0.0
    %v3702 = vand.u32 %v2954, 4294901760
    %v3703 = vsub.f32 %v2954, %v3702
    %v3704 = vand.u32 %v3703, 4294901760
    %3705 = vmatmul.mubr.f32.gmra.mrb[0].mxu0 %v3704
    %v3706 = vpop.f32.mrb[0].mxu0
    %v3707 = vadd.f32 %v3516, %v3706
    %v3708 = vpop.f32.mrb[0].mxu0
    %3709 = vmatprep.mubr.f32.mxu0 0.0
    %v3710 = vand.u32 %v2957, 4294901760
    %v3711 = vsub.f32 %v2957, %v3710
    %v3712 = vand.u32 %v3711, 4294901760
    %3713 = vmatmul.mubr.f32.gmra.mrb[0].mxu0 %v3712
    %v3714 = vpop.f32.mrb[0].mxu0
    %v3715 = vadd.f32 %v3523, %v3714
    %v3716 = vpop.f32.mrb[0].mxu0
    %3717 = vmatprep.mubr.f32.mxu0 0.0
    %v3718 = vand.u32 %v2960, 4294901760
    %v3719 = vsub.f32 %v2960, %v3718
    %v3720 = vand.u32 %v3719, 4294901760
    %3721 = vmatmul.mubr.f32.gmra.mrb[0].mxu0 %v3720
    %v3722 = vpop.f32.mrb[0].mxu0
    %v3723 = vadd.f32 %v3530, %v3722
    %v3724 = vpop.f32.mrb[0].mxu0
    %3725 = vmatprep.mubr.f32.mxu0 0.0
    %v3726 = vand.u32 %v2963, 4294901760
    %v3727 = vsub.f32 %v2963, %v3726
    %v3728 = vand.u32 %v3727, 4294901760
    %3729 = vmatmul.mubr.f32.gmra.mrb[0].mxu0 %v3728
    %v3730 = vpop.f32.mrb[0].mxu0
    %v3731 = vadd.f32 %v3537, %v3730
    %v3732 = vpop.f32.mrb[0].mxu0
    %3733 = vmatprep.mubr.f32.mxu0 0.0
    %v3734 = vand.u32 %v2966, 4294901760
    %v3735 = vsub.f32 %v2966, %v3734
    %v3736 = vand.u32 %v3735, 4294901760
    %3737 = vmatmul.mubr.f32.gmra.mrb[0].mxu0 %v3736
    %v3738 = vpop.f32.mrb[0].mxu0
    %v3739 = vadd.f32 %v3544, %v3738
    %v3740 = vpop.f32.mrb[0].mxu0
    %3741 = vdwg.mxu0
    %3742 = vmatprep.subr.mxu0 0.0
    %v3743 = vand.u32 %v761, 4294901760
    %v3744 = vsub.f32 %v761, %v3743
    %v3745 = vand.u32 %v3744, 4294901760
    %3746 = vmatpush1.msra.mxu0 %v3745
    %3747 = vmatprep.subr.mxu0 0.0
    %v3748 = vand.u32 %v767, 4294901760
    %v3749 = vsub.f32 %v767, %v3748
    %v3750 = vand.u32 %v3749, 4294901760
    %3751 = vmatpush1.msra.mxu0 %v3750
    %3752 = vmatprep.subr.mxu0 0.0
    %3753 = vmatpush1.msra.mxu0 0.0
    %3754 = vmatprep.subr.mxu0 0.0
    %3755 = vmatpush1.msra.mxu0 0.0
    %3756 = vmatprep.subr.mxu0 0.0
    %3757 = vmatpush1.msra.mxu0 0.0
    %3758 = vmatprep.subr.mxu0 0.0
    %3759 = vmatpush1.msra.mxu0 0.0
    %3760 = vmatprep.subr.mxu0 0.0
    %3761 = vmatpush1.msra.mxu0 0.0
    %3762 = vmatprep.subr.mxu0 0.0
    %3763 = vmatpush1.msra.mxu0 0.0
    %3764 = vmatprep.subr.mxu0 0.0
    %3765 = vmatpush1.msra.mxu0 0.0
    %3766 = vmatprep.subr.mxu0 0.0
    %3767 = vmatpush1.msra.mxu0 0.0
    %3768 = vmatprep.subr.mxu0 0.0
    %3769 = vmatpush1.msra.mxu0 0.0
    %3770 = vmatprep.subr.mxu0 0.0
    %3771 = vmatpush1.msra.mxu0 0.0
    %3772 = vmatprep.subr.mxu0 0.0
    %3773 = vmatpush1.msra.mxu0 0.0
    %3774 = vmatprep.subr.mxu0 0.0
    %3775 = vmatpush1.msra.mxu0 0.0
    %3776 = vmatprep.subr.mxu0 0.0
    %3777 = vmatpush1.msra.mxu0 0.0
    %3778 = vmatprep.subr.mxu0 0.0
    %3779 = vmatpush1.msra.mxu0 0.0
    %3780 = vmatprep.subr.mxu0 0.0
    %3781 = vmatpush1.msra.mxu0 0.0
    %3782 = vmatprep.subr.mxu0 0.0
    %3783 = vmatpush1.msra.mxu0 0.0
    %3784 = vmatprep.subr.mxu0 0.0
    %3785 = vmatpush1.msra.mxu0 0.0
    %3786 = vmatprep.subr.mxu0 0.0
    %3787 = vmatpush1.msra.mxu0 0.0
    %3788 = vmatprep.subr.mxu0 0.0
    %3789 = vmatpush1.msra.mxu0 0.0
    %3790 = vmatprep.subr.mxu0 0.0
    %3791 = vmatpush1.msra.mxu0 0.0
    %3792 = vmatprep.subr.mxu0 0.0
    %3793 = vmatpush1.msra.mxu0 0.0
    %3794 = vmatprep.subr.mxu0 0.0
    %3795 = vmatpush1.msra.mxu0 0.0
    %3796 = vmatprep.subr.mxu0 0.0
    %3797 = vmatpush1.msra.mxu0 0.0
    %3798 = vmatprep.subr.mxu0 0.0
    %3799 = vmatpush1.msra.mxu0 0.0
    %3800 = vmatprep.subr.mxu0 0.0
    %3801 = vmatpush1.msra.mxu0 0.0
    %3802 = vmatprep.subr.mxu0 0.0
    %3803 = vmatpush1.msra.mxu0 0.0
    %3804 = vmatprep.subr.mxu0 0.0
    %3805 = vmatpush1.msra.mxu0 0.0
    %3806 = vmatprep.subr.mxu0 0.0
    %3807 = vmatpush1.msra.mxu0 0.0
    %3808 = vmatprep.subr.mxu0 0.0
    %3809 = vmatpush1.msra.mxu0 0.0
    %3810 = vmatprep.subr.mxu0 0.0
    %3811 = vmatpush1.msra.mxu0 0.0
    %3812 = vmatprep.mubr.f32.mxu0 0.0
    %v3813 = vand.u32 %v2921, 4294901760
    %3814 = vmatmul.mubr.f32.gmra.mrb[0].mxu0 %v3813
    %v3815 = vpop.f32.mrb[0].mxu0
    %v3816 = vadd.f32 %v3619, %v3815
    %v3817 = vpop.f32.mrb[0].mxu0
    %3818 = vmatprep.mubr.f32.mxu0 0.0
    %v3819 = vand.u32 %v2924, 4294901760
    %3820 = vmatmul.mubr.f32.gmra.mrb[0].mxu0 %v3819
    %v3821 = vpop.f32.mrb[0].mxu0
    %v3822 = vadd.f32 %v3627, %v3821
    %v3823 = vpop.f32.mrb[0].mxu0
    %3824 = vmatprep.mubr.f32.mxu0 0.0
    %v3825 = vand.u32 %v2927, 4294901760
    %3826 = vmatmul.mubr.f32.gmra.mrb[0].mxu0 %v3825
    %v3827 = vpop.f32.mrb[0].mxu0
    %v3828 = vadd.f32 %v3635, %v3827
    %v3829 = vpop.f32.mrb[0].mxu0
    %3830 = vmatprep.mubr.f32.mxu0 0.0
    %v3831 = vand.u32 %v2930, 4294901760
    %3832 = vmatmul.mubr.f32.gmra.mrb[0].mxu0 %v3831
    %v3833 = vpop.f32.mrb[0].mxu0
    %v3834 = vadd.f32 %v3643, %v3833
    %v3835 = vpop.f32.mrb[0].mxu0
    %3836 = vmatprep.mubr.f32.mxu0 0.0
    %v3837 = vand.u32 %v2933, 4294901760
    %3838 = vmatmul.mubr.f32.gmra.mrb[0].mxu0 %v3837
    %v3839 = vpop.f32.mrb[0].mxu0
    %v3840 = vadd.f32 %v3651, %v3839
    %v3841 = vpop.f32.mrb[0].mxu0
    %3842 = vmatprep.mubr.f32.mxu0 0.0
    %v3843 = vand.u32 %v2936, 4294901760
    %3844 = vmatmul.mubr.f32.gmra.mrb[0].mxu0 %v3843
    %v3845 = vpop.f32.mrb[0].mxu0
    %v3846 = vadd.f32 %v3659, %v3845
    %v3847 = vpop.f32.mrb[0].mxu0
    %3848 = vmatprep.mubr.f32.mxu0 0.0
    %v3849 = vand.u32 %v2939, 4294901760
    %3850 = vmatmul.mubr.f32.gmra.mrb[0].mxu0 %v3849
    %v3851 = vpop.f32.mrb[0].mxu0
    %v3852 = vadd.f32 %v3667, %v3851
    %v3853 = vpop.f32.mrb[0].mxu0
    %3854 = vmatprep.mubr.f32.mxu0 0.0
    %v3855 = vand.u32 %v2942, 4294901760
    %3856 = vmatmul.mubr.f32.gmra.mrb[0].mxu0 %v3855
    %v3857 = vpop.f32.mrb[0].mxu0
    %v3858 = vadd.f32 %v3675, %v3857
    %v3859 = vpop.f32.mrb[0].mxu0
    %3860 = vmatprep.mubr.f32.mxu0 0.0
    %v3861 = vand.u32 %v2945, 4294901760
    %3862 = vmatmul.mubr.f32.gmra.mrb[0].mxu0 %v3861
    %v3863 = vpop.f32.mrb[0].mxu0
    %v3864 = vadd.f32 %v3683, %v3863
    %v3865 = vpop.f32.mrb[0].mxu0
    %3866 = vmatprep.mubr.f32.mxu0 0.0
    %v3867 = vand.u32 %v2948, 4294901760
    %3868 = vmatmul.mubr.f32.gmra.mrb[0].mxu0 %v3867
    %v3869 = vpop.f32.mrb[0].mxu0
    %v3870 = vadd.f32 %v3691, %v3869
    %v3871 = vpop.f32.mrb[0].mxu0
    %3872 = vmatprep.mubr.f32.mxu0 0.0
    %v3873 = vand.u32 %v2951, 4294901760
    %3874 = vmatmul.mubr.f32.gmra.mrb[0].mxu0 %v3873
    %v3875 = vpop.f32.mrb[0].mxu0
    %v3876 = vadd.f32 %v3699, %v3875
    %v3877 = vpop.f32.mrb[0].mxu0
    %3878 = vmatprep.mubr.f32.mxu0 0.0
    %v3879 = vand.u32 %v2954, 4294901760
    %3880 = vmatmul.mubr.f32.gmra.mrb[0].mxu0 %v3879
    %v3881 = vpop.f32.mrb[0].mxu0
    %v3882 = vadd.f32 %v3707, %v3881
    %v3883 = vpop.f32.mrb[0].mxu0
    %3884 = vmatprep.mubr.f32.mxu0 0.0
    %v3885 = vand.u32 %v2957, 4294901760
    %3886 = vmatmul.mubr.f32.gmra.mrb[0].mxu0 %v3885
    %v3887 = vpop.f32.mrb[0].mxu0
    %v3888 = vadd.f32 %v3715, %v3887
    %v3889 = vpop.f32.mrb[0].mxu0
    %3890 = vmatprep.mubr.f32.mxu0 0.0
    %v3891 = vand.u32 %v2960, 4294901760
    %3892 = vmatmul.mubr.f32.gmra.mrb[0].mxu0 %v3891
    %v3893 = vpop.f32.mrb[0].mxu0
    %v3894 = vadd.f32 %v3723, %v3893
    %v3895 = vpop.f32.mrb[0].mxu0
    %3896 = vmatprep.mubr.f32.mxu0 0.0
    %v3897 = vand.u32 %v2963, 4294901760
    %3898 = vmatmul.mubr.f32.gmra.mrb[0].mxu0 %v3897
    %v3899 = vpop.f32.mrb[0].mxu0
    %v3900 = vadd.f32 %v3731, %v3899
    %v3901 = vpop.f32.mrb[0].mxu0
    %3902 = vmatprep.mubr.f32.mxu0 0.0
    %v3903 = vand.u32 %v2966, 4294901760
    %3904 = vmatmul.mubr.f32.gmra.mrb[0].mxu0 %v3903
    %v3905 = vpop.f32.mrb[0].mxu0
    %v3906 = vadd.f32 %v3739, %v3905
    %v3907 = vpop.f32.mrb[0].mxu0
    %3908 = vdwg.mxu0
    %3909 = vmatprep.subr.mxu0 0.0
    %v3910 = vand.u32 %v761, 4294901760
    %3911 = vmatpush1.msra.mxu0 %v3910
    %3912 = vmatprep.subr.mxu0 0.0
    %v3913 = vand.u32 %v767, 4294901760
    %3914 = vmatpush1.msra.mxu0 %v3913
    %3915 = vmatprep.subr.mxu0 0.0
    %3916 = vmatpush1.msra.mxu0 0.0
    %3917 = vmatprep.subr.mxu0 0.0
    %3918 = vmatpush1.msra.mxu0 0.0
    %3919 = vmatprep.subr.mxu0 0.0
    %3920 = vmatpush1.msra.mxu0 0.0
    %3921 = vmatprep.subr.mxu0 0.0
    %3922 = vmatpush1.msra.mxu0 0.0
    %3923 = vmatprep.subr.mxu0 0.0
    %3924 = vmatpush1.msra.mxu0 0.0
    %3925 = vmatprep.subr.mxu0 0.0
    %3926 = vmatpush1.msra.mxu0 0.0
    %3927 = vmatprep.subr.mxu0 0.0
    %3928 = vmatpush1.msra.mxu0 0.0
    %3929 = vmatprep.subr.mxu0 0.0
    %3930 = vmatpush1.msra.mxu0 0.0
    %3931 = vmatprep.subr.mxu0 0.0
    %3932 = vmatpush1.msra.mxu0 0.0
    %3933 = vmatprep.subr.mxu0 0.0
    %3934 = vmatpush1.msra.mxu0 0.0
    %3935 = vmatprep.subr.mxu0 0.0
    %3936 = vmatpush1.msra.mxu0 0.0
    %3937 = vmatprep.subr.mxu0 0.0
    %3938 = vmatpush1.msra.mxu0 0.0
    %3939 = vmatprep.subr.mxu0 0.0
    %3940 = vmatpush1.msra.mxu0 0.0
    %3941 = vmatprep.subr.mxu0 0.0
    %3942 = vmatpush1.msra.mxu0 0.0
    %3943 = vmatprep.subr.mxu0 0.0
    %3944 = vmatpush1.msra.mxu0 0.0
    %3945 = vmatprep.subr.mxu0 0.0
    %3946 = vmatpush1.msra.mxu0 0.0
    %3947 = vmatprep.subr.mxu0 0.0
    %3948 = vmatpush1.msra.mxu0 0.0
    %3949 = vmatprep.subr.mxu0 0.0
    %3950 = vmatpush1.msra.mxu0 0.0
    %3951 = vmatprep.subr.mxu0 0.0
    %3952 = vmatpush1.msra.mxu0 0.0
    %3953 = vmatprep.subr.mxu0 0.0
    %3954 = vmatpush1.msra.mxu0 0.0
    %3955 = vmatprep.subr.mxu0 0.0
    %3956 = vmatpush1.msra.mxu0 0.0
    %3957 = vmatprep.subr.mxu0 0.0
    %3958 = vmatpush1.msra.mxu0 0.0
    %3959 = vmatprep.subr.mxu0 0.0
    %3960 = vmatpush1.msra.mxu0 0.0
    %3961 = vmatprep.subr.mxu0 0.0
    %3962 = vmatpush1.msra.mxu0 0.0
    %3963 = vmatprep.subr.mxu0 0.0
    %3964 = vmatpush1.msra.mxu0 0.0
    %3965 = vmatprep.subr.mxu0 0.0
    %3966 = vmatpush1.msra.mxu0 0.0
    %3967 = vmatprep.subr.mxu0 0.0
    %3968 = vmatpush1.msra.mxu0 0.0
    %3969 = vmatprep.subr.mxu0 0.0
    %3970 = vmatpush1.msra.mxu0 0.0
    %3971 = vmatprep.subr.mxu0 0.0
    %3972 = vmatpush1.msra.mxu0 0.0
    %3973 = vmatprep.subr.mxu0 0.0
    %3974 = vmatpush1.msra.mxu0 0.0
    %3975 = vmatprep.mubr.f32.mxu0 0.0
    %v3976 = vand.u32 %v2921, 4294901760
    %3977 = vmatmul.mubr.f32.gmra.mrb[0].mxu0 %v3976
    %v3978 = vpop.f32.mrb[0].mxu0
    %v3979 = vadd.f32 %v3816, %v3978
    %v3980 = vpop.f32.mrb[0].mxu0
    %3981 = vmatprep.mubr.f32.mxu0 0.0
    %v3982 = vand.u32 %v2924, 4294901760
    %3983 = vmatmul.mubr.f32.gmra.mrb[0].mxu0 %v3982
    %v3984 = vpop.f32.mrb[0].mxu0
    %v3985 = vadd.f32 %v3822, %v3984
    %v3986 = vpop.f32.mrb[0].mxu0
    %3987 = vmatprep.mubr.f32.mxu0 0.0
    %v3988 = vand.u32 %v2927, 4294901760
    %3989 = vmatmul.mubr.f32.gmra.mrb[0].mxu0 %v3988
    %v3990 = vpop.f32.mrb[0].mxu0
    %v3991 = vadd.f32 %v3828, %v3990
    %v3992 = vpop.f32.mrb[0].mxu0
    %3993 = vmatprep.mubr.f32.mxu0 0.0
    %v3994 = vand.u32 %v2930, 4294901760
    %3995 = vmatmul.mubr.f32.gmra.mrb[0].mxu0 %v3994
    %v3996 = vpop.f32.mrb[0].mxu0
    %v3997 = vadd.f32 %v3834, %v3996
    %v3998 = vpop.f32.mrb[0].mxu0
    %3999 = vmatprep.mubr.f32.mxu0 0.0
    %v4000 = vand.u32 %v2933, 4294901760
    %4001 = vmatmul.mubr.f32.gmra.mrb[0].mxu0 %v4000
    %v4002 = vpop.f32.mrb[0].mxu0
    %v4003 = vadd.f32 %v3840, %v4002
    %v4004 = vpop.f32.mrb[0].mxu0
    %4005 = vmatprep.mubr.f32.mxu0 0.0
    %v4006 = vand.u32 %v2936, 4294901760
    %4007 = vmatmul.mubr.f32.gmra.mrb[0].mxu0 %v4006
    %v4008 = vpop.f32.mrb[0].mxu0
    %v4009 = vadd.f32 %v3846, %v4008
    %v4010 = vpop.f32.mrb[0].mxu0
    %4011 = vmatprep.mubr.f32.mxu0 0.0
    %v4012 = vand.u32 %v2939, 4294901760
    %4013 = vmatmul.mubr.f32.gmra.mrb[0].mxu0 %v4012
    %v4014 = vpop.f32.mrb[0].mxu0
    %v4015 = vadd.f32 %v3852, %v4014
    %v4016 = vpop.f32.mrb[0].mxu0
    %4017 = vmatprep.mubr.f32.mxu0 0.0
    %v4018 = vand.u32 %v2942, 4294901760
    %4019 = vmatmul.mubr.f32.gmra.mrb[0].mxu0 %v4018
    %v4020 = vpop.f32.mrb[0].mxu0
    %v4021 = vadd.f32 %v3858, %v4020
    %v4022 = vpop.f32.mrb[0].mxu0
    %4023 = vmatprep.mubr.f32.mxu0 0.0
    %v4024 = vand.u32 %v2945, 4294901760
    %4025 = vmatmul.mubr.f32.gmra.mrb[0].mxu0 %v4024
    %v4026 = vpop.f32.mrb[0].mxu0
    %v4027 = vadd.f32 %v3864, %v4026
    %v4028 = vpop.f32.mrb[0].mxu0
    %4029 = vmatprep.mubr.f32.mxu0 0.0
    %v4030 = vand.u32 %v2948, 4294901760
    %4031 = vmatmul.mubr.f32.gmra.mrb[0].mxu0 %v4030
    %v4032 = vpop.f32.mrb[0].mxu0
    %v4033 = vadd.f32 %v3870, %v4032
    %v4034 = vpop.f32.mrb[0].mxu0
    %4035 = vmatprep.mubr.f32.mxu0 0.0
    %v4036 = vand.u32 %v2951, 4294901760
    %4037 = vmatmul.mubr.f32.gmra.mrb[0].mxu0 %v4036
    %v4038 = vpop.f32.mrb[0].mxu0
    %v4039 = vadd.f32 %v3876, %v4038
    %v4040 = vpop.f32.mrb[0].mxu0
    %4041 = vmatprep.mubr.f32.mxu0 0.0
    %v4042 = vand.u32 %v2954, 4294901760
    %4043 = vmatmul.mubr.f32.gmra.mrb[0].mxu0 %v4042
    %v4044 = vpop.f32.mrb[0].mxu0
    %v4045 = vadd.f32 %v3882, %v4044
    %v4046 = vpop.f32.mrb[0].mxu0
    %4047 = vmatprep.mubr.f32.mxu0 0.0
    %v4048 = vand.u32 %v2957, 4294901760
    %4049 = vmatmul.mubr.f32.gmra.mrb[0].mxu0 %v4048
    %v4050 = vpop.f32.mrb[0].mxu0
    %v4051 = vadd.f32 %v3888, %v4050
    %v4052 = vpop.f32.mrb[0].mxu0
    %4053 = vmatprep.mubr.f32.mxu0 0.0
    %v4054 = vand.u32 %v2960, 4294901760
    %4055 = vmatmul.mubr.f32.gmra.mrb[0].mxu0 %v4054
    %v4056 = vpop.f32.mrb[0].mxu0
    %v4057 = vadd.f32 %v3894, %v4056
    %v4058 = vpop.f32.mrb[0].mxu0
    %4059 = vmatprep.mubr.f32.mxu0 0.0
    %v4060 = vand.u32 %v2963, 4294901760
    %4061 = vmatmul.mubr.f32.gmra.mrb[0].mxu0 %v4060
    %v4062 = vpop.f32.mrb[0].mxu0
    %v4063 = vadd.f32 %v3900, %v4062
    %v4064 = vpop.f32.mrb[0].mxu0
    %4065 = vmatprep.mubr.f32.mxu0 0.0
    %v4066 = vand.u32 %v2966, 4294901760
    %4067 = vmatmul.mubr.f32.gmra.mrb[0].mxu0 %v4066
    %v4068 = vpop.f32.mrb[0].mxu0
    %v4069 = vadd.f32 %v3906, %v4068
    %v4070 = vpop.f32.mrb[0].mxu0
    %4071 = vdwg.mxu0
    %v4072 = vmul.f32 %v3979, %v2903
    %v4073 = vmul.f32 %v3985, %v2904
    %v4074 = vmul.f32 %v3991, %v2905
    %v4075 = vmul.f32 %v3997, %v2906
    %v4076 = vmul.f32 %v4003, %v2907
    %v4077 = vmul.f32 %v4009, %v2908
    %v4078 = vmul.f32 %v4015, %v2909
    %v4079 = vmul.f32 %v4021, %v2910
    %v4080 = vmul.f32 %v4027, %v2911
    %v4081 = vmul.f32 %v4033, %v2912
    %v4082 = vmul.f32 %v4039, %v2913
    %v4083 = vmul.f32 %v4045, %v2914
    %v4084 = vmul.f32 %v4051, %v2915
    %v4085 = vmul.f32 %v4057, %v2916
    %v4086 = vmul.f32 %v4063, %v2917
    %v4087 = vmul.f32 %v4069, %v2918
    %s4088 = scalar_lea.vmem %s0, 48
    %v4089 = vld [vmem:[%s4088] sm:$0xff]
    %v4090 = vld [vmem:[%s4088 + $0x8] sm:$0xff]
    %4091 = vmatprep.subr.mxu0 0.0
    %v4092 = vand.u32 %v4072, 4294901760
    %4093 = vmatpush1.msra.mxu0 %v4092
    %4094 = vmatprep.subr.mxu0 0.0
    %v4095 = vand.u32 %v4073, 4294901760
    %4096 = vmatpush1.msra.mxu0 %v4095
    %4097 = vmatprep.subr.mxu0 0.0
    %v4098 = vand.u32 %v4074, 4294901760
    %4099 = vmatpush1.msra.mxu0 %v4098
    %4100 = vmatprep.subr.mxu0 0.0
    %v4101 = vand.u32 %v4075, 4294901760
    %4102 = vmatpush1.msra.mxu0 %v4101
    %4103 = vmatprep.subr.mxu0 0.0
    %v4104 = vand.u32 %v4076, 4294901760
    %4105 = vmatpush1.msra.mxu0 %v4104
    %4106 = vmatprep.subr.mxu0 0.0
    %v4107 = vand.u32 %v4077, 4294901760
    %4108 = vmatpush1.msra.mxu0 %v4107
    %4109 = vmatprep.subr.mxu0 0.0
    %v4110 = vand.u32 %v4078, 4294901760
    %4111 = vmatpush1.msra.mxu0 %v4110
    %4112 = vmatprep.subr.mxu0 0.0
    %v4113 = vand.u32 %v4079, 4294901760
    %4114 = vmatpush1.msra.mxu0 %v4113
    %4115 = vmatprep.subr.mxu0 0.0
    %v4116 = vand.u32 %v4080, 4294901760
    %4117 = vmatpush1.msra.mxu0 %v4116
    %4118 = vmatprep.subr.mxu0 0.0
    %v4119 = vand.u32 %v4081, 4294901760
    %4120 = vmatpush1.msra.mxu0 %v4119
    %4121 = vmatprep.subr.mxu0 0.0
    %v4122 = vand.u32 %v4082, 4294901760
    %4123 = vmatpush1.msra.mxu0 %v4122
    %4124 = vmatprep.subr.mxu0 0.0
    %v4125 = vand.u32 %v4083, 4294901760
    %4126 = vmatpush1.msra.mxu0 %v4125
    %4127 = vmatprep.subr.mxu0 0.0
    %v4128 = vand.u32 %v4084, 4294901760
    %4129 = vmatpush1.msra.mxu0 %v4128
    %4130 = vmatprep.subr.mxu0 0.0
    %v4131 = vand.u32 %v4085, 4294901760
    %4132 = vmatpush1.msra.mxu0 %v4131
    %4133 = vmatprep.subr.mxu0 0.0
    %v4134 = vand.u32 %v4086, 4294901760
    %4135 = vmatpush1.msra.mxu0 %v4134
    %4136 = vmatprep.subr.mxu0 0.0
    %v4137 = vand.u32 %v4087, 4294901760
    %4138 = vmatpush1.msra.mxu0 %v4137
    %4139 = vmatprep.subr.mxu0 0.0
    %4140 = vmatpush1.msra.mxu0 0.0
    %4141 = vmatprep.subr.mxu0 0.0
    %4142 = vmatpush1.msra.mxu0 0.0
    %4143 = vmatprep.subr.mxu0 0.0
    %4144 = vmatpush1.msra.mxu0 0.0
    %4145 = vmatprep.subr.mxu0 0.0
    %4146 = vmatpush1.msra.mxu0 0.0
    %4147 = vmatprep.subr.mxu0 0.0
    %4148 = vmatpush1.msra.mxu0 0.0
    %4149 = vmatprep.subr.mxu0 0.0
    %4150 = vmatpush1.msra.mxu0 0.0
    %4151 = vmatprep.subr.mxu0 0.0
    %4152 = vmatpush1.msra.mxu0 0.0
    %4153 = vmatprep.subr.mxu0 0.0
    %4154 = vmatpush1.msra.mxu0 0.0
    %4155 = vmatprep.subr.mxu0 0.0
    %4156 = vmatpush1.msra.mxu0 0.0
    %4157 = vmatprep.subr.mxu0 0.0
    %4158 = vmatpush1.msra.mxu0 0.0
    %4159 = vmatprep.subr.mxu0 0.0
    %4160 = vmatpush1.msra.mxu0 0.0
    %4161 = vmatprep.subr.mxu0 0.0
    %4162 = vmatpush1.msra.mxu0 0.0
    %4163 = vmatprep.subr.mxu0 0.0
    %4164 = vmatpush1.msra.mxu0 0.0
    %4165 = vmatprep.subr.mxu0 0.0
    %4166 = vmatpush1.msra.mxu0 0.0
    %4167 = vmatprep.subr.mxu0 0.0
    %4168 = vmatpush1.msra.mxu0 0.0
    %4169 = vmatprep.subr.mxu0 0.0
    %4170 = vmatpush1.msra.mxu0 0.0
    %4171 = vmatprep.mubr.f32.mxu0 0.0
    %v4172 = vand.u32 %v2900, 4294901760
    %v4173 = vsub.f32 %v2900, %v4172
    %v4174 = vand.u32 %v4173, 4294901760
    %v4175 = vsub.f32 %v4173, %v4174
    %v4176 = vand.u32 %v4175, 4294901760
    %4177 = vmatmul.mubr.f32.gmra.mrb[0].mxu0 %v4176
    %v4178 = vpop.f32.mrb[0].mxu0
    %v4179 = vadd.f32 %v4089, %v4178
    %v4180 = vpop.f32.mrb[0].mxu0
    %4181 = vmatprep.mubr.f32.mxu0 0.0
    %v4182 = vand.u32 %v2901, 4294901760
    %v4183 = vsub.f32 %v2901, %v4182
    %v4184 = vand.u32 %v4183, 4294901760
    %v4185 = vsub.f32 %v4183, %v4184
    %v4186 = vand.u32 %v4185, 4294901760
    %4187 = vmatmul.mubr.f32.gmra.mrb[0].mxu0 %v4186
    %v4188 = vpop.f32.mrb[0].mxu0
    %v4189 = vadd.f32 %v4090, %v4188
    %v4190 = vpop.f32.mrb[0].mxu0
    %4191 = vdwg.mxu0
    %4192 = vmatprep.subr.mxu0 0.0
    %v4193 = vand.u32 %v4072, 4294901760
    %v4194 = vsub.f32 %v4072, %v4193
    %v4195 = vand.u32 %v4194, 4294901760
    %v4196 = vsub.f32 %v4194, %v4195
    %v4197 = vand.u32 %v4196, 4294901760
    %4198 = vmatpush1.msra.mxu0 %v4197
    %4199 = vmatprep.subr.mxu0 0.0
    %v4200 = vand.u32 %v4073, 4294901760
    %v4201 = vsub.f32 %v4073, %v4200
    %v4202 = vand.u32 %v4201, 4294901760
    %v4203 = vsub.f32 %v4201, %v4202
    %v4204 = vand.u32 %v4203, 4294901760
    %4205 = vmatpush1.msra.mxu0 %v4204
    %4206 = vmatprep.subr.mxu0 0.0
    %v4207 = vand.u32 %v4074, 4294901760
    %v4208 = vsub.f32 %v4074, %v4207
    %v4209 = vand.u32 %v4208, 4294901760
    %v4210 = vsub.f32 %v4208, %v4209
    %v4211 = vand.u32 %v4210, 4294901760
    %4212 = vmatpush1.msra.mxu0 %v4211
    %4213 = vmatprep.subr.mxu0 0.0
    %v4214 = vand.u32 %v4075, 4294901760
    %v4215 = vsub.f32 %v4075, %v4214
    %v4216 = vand.u32 %v4215, 4294901760
    %v4217 = vsub.f32 %v4215, %v4216
    %v4218 = vand.u32 %v4217, 4294901760
    %4219 = vmatpush1.msra.mxu0 %v4218
    %4220 = vmatprep.subr.mxu0 0.0
    %v4221 = vand.u32 %v4076, 4294901760
    %v4222 = vsub.f32 %v4076, %v4221
    %v4223 = vand.u32 %v4222, 4294901760
    %v4224 = vsub.f32 %v4222, %v4223
    %v4225 = vand.u32 %v4224, 4294901760
    %4226 = vmatpush1.msra.mxu0 %v4225
    %4227 = vmatprep.subr.mxu0 0.0
    %v4228 = vand.u32 %v4077, 4294901760
    %v4229 = vsub.f32 %v4077, %v4228
    %v4230 = vand.u32 %v4229, 4294901760
    %v4231 = vsub.f32 %v4229, %v4230
    %v4232 = vand.u32 %v4231, 4294901760
    %4233 = vmatpush1.msra.mxu0 %v4232
    %4234 = vmatprep.subr.mxu0 0.0
    %v4235 = vand.u32 %v4078, 4294901760
    %v4236 = vsub.f32 %v4078, %v4235
    %v4237 = vand.u32 %v4236, 4294901760
    %v4238 = vsub.f32 %v4236, %v4237
    %v4239 = vand.u32 %v4238, 4294901760
    %4240 = vmatpush1.msra.mxu0 %v4239
    %4241 = vmatprep.subr.mxu0 0.0
    %v4242 = vand.u32 %v4079, 4294901760
    %v4243 = vsub.f32 %v4079, %v4242
    %v4244 = vand.u32 %v4243, 4294901760
    %v4245 = vsub.f32 %v4243, %v4244
    %v4246 = vand.u32 %v4245, 4294901760
    %4247 = vmatpush1.msra.mxu0 %v4246
    %4248 = vmatprep.subr.mxu0 0.0
    %v4249 = vand.u32 %v4080, 4294901760
    %v4250 = vsub.f32 %v4080, %v4249
    %v4251 = vand.u32 %v4250, 4294901760
    %v4252 = vsub.f32 %v4250, %v4251
    %v4253 = vand.u32 %v4252, 4294901760
    %4254 = vmatpush1.msra.mxu0 %v4253
    %4255 = vmatprep.subr.mxu0 0.0
    %v4256 = vand.u32 %v4081, 4294901760
    %v4257 = vsub.f32 %v4081, %v4256
    %v4258 = vand.u32 %v4257, 4294901760
    %v4259 = vsub.f32 %v4257, %v4258
    %v4260 = vand.u32 %v4259, 4294901760
    %4261 = vmatpush1.msra.mxu0 %v4260
    %4262 = vmatprep.subr.mxu0 0.0
    %v4263 = vand.u32 %v4082, 4294901760
    %v4264 = vsub.f32 %v4082, %v4263
    %v4265 = vand.u32 %v4264, 4294901760
    %v4266 = vsub.f32 %v4264, %v4265
    %v4267 = vand.u32 %v4266, 4294901760
    %4268 = vmatpush1.msra.mxu0 %v4267
    %4269 = vmatprep.subr.mxu0 0.0
    %v4270 = vand.u32 %v4083, 4294901760
    %v4271 = vsub.f32 %v4083, %v4270
    %v4272 = vand.u32 %v4271, 4294901760
    %v4273 = vsub.f32 %v4271, %v4272
    %v4274 = vand.u32 %v4273, 4294901760
    %4275 = vmatpush1.msra.mxu0 %v4274
    %4276 = vmatprep.subr.mxu0 0.0
    %v4277 = vand.u32 %v4084, 4294901760
    %v4278 = vsub.f32 %v4084, %v4277
    %v4279 = vand.u32 %v4278, 4294901760
    %v4280 = vsub.f32 %v4278, %v4279
    %v4281 = vand.u32 %v4280, 4294901760
    %4282 = vmatpush1.msra.mxu0 %v4281
    %4283 = vmatprep.subr.mxu0 0.0
    %v4284 = vand.u32 %v4085, 4294901760
    %v4285 = vsub.f32 %v4085, %v4284
    %v4286 = vand.u32 %v4285, 4294901760
    %v4287 = vsub.f32 %v4285, %v4286
    %v4288 = vand.u32 %v4287, 4294901760
    %4289 = vmatpush1.msra.mxu0 %v4288
    %4290 = vmatprep.subr.mxu0 0.0
    %v4291 = vand.u32 %v4086, 4294901760
    %v4292 = vsub.f32 %v4086, %v4291
    %v4293 = vand.u32 %v4292, 4294901760
    %v4294 = vsub.f32 %v4292, %v4293
    %v4295 = vand.u32 %v4294, 4294901760
    %4296 = vmatpush1.msra.mxu0 %v4295
    %4297 = vmatprep.subr.mxu0 0.0
    %v4298 = vand.u32 %v4087, 4294901760
    %v4299 = vsub.f32 %v4087, %v4298
    %v4300 = vand.u32 %v4299, 4294901760
    %v4301 = vsub.f32 %v4299, %v4300
    %v4302 = vand.u32 %v4301, 4294901760
    %4303 = vmatpush1.msra.mxu0 %v4302
    %4304 = vmatprep.subr.mxu0 0.0
    %4305 = vmatpush1.msra.mxu0 0.0
    %4306 = vmatprep.subr.mxu0 0.0
    %4307 = vmatpush1.msra.mxu0 0.0
    %4308 = vmatprep.subr.mxu0 0.0
    %4309 = vmatpush1.msra.mxu0 0.0
    %4310 = vmatprep.subr.mxu0 0.0
    %4311 = vmatpush1.msra.mxu0 0.0
    %4312 = vmatprep.subr.mxu0 0.0
    %4313 = vmatpush1.msra.mxu0 0.0
    %4314 = vmatprep.subr.mxu0 0.0
    %4315 = vmatpush1.msra.mxu0 0.0
    %4316 = vmatprep.subr.mxu0 0.0
    %4317 = vmatpush1.msra.mxu0 0.0
    %4318 = vmatprep.subr.mxu0 0.0
    %4319 = vmatpush1.msra.mxu0 0.0
    %4320 = vmatprep.subr.mxu0 0.0
    %4321 = vmatpush1.msra.mxu0 0.0
    %4322 = vmatprep.subr.mxu0 0.0
    %4323 = vmatpush1.msra.mxu0 0.0
    %4324 = vmatprep.subr.mxu0 0.0
    %4325 = vmatpush1.msra.mxu0 0.0
    %4326 = vmatprep.subr.mxu0 0.0
    %4327 = vmatpush1.msra.mxu0 0.0
    %4328 = vmatprep.subr.mxu0 0.0
    %4329 = vmatpush1.msra.mxu0 0.0
    %4330 = vmatprep.subr.mxu0 0.0
    %4331 = vmatpush1.msra.mxu0 0.0
    %4332 = vmatprep.subr.mxu0 0.0
    %4333 = vmatpush1.msra.mxu0 0.0
    %4334 = vmatprep.subr.mxu0 0.0
    %4335 = vmatpush1.msra.mxu0 0.0
    %4336 = vmatprep.mubr.f32.mxu0 0.0
    %v4337 = vand.u32 %v2900, 4294901760
    %4338 = vmatmul.mubr.f32.gmra.mrb[0].mxu0 %v4337
    %v4339 = vpop.f32.mrb[0].mxu0
    %v4340 = vadd.f32 %v4179, %v4339
    %v4341 = vpop.f32.mrb[0].mxu0
    %4342 = vmatprep.mubr.f32.mxu0 0.0
    %v4343 = vand.u32 %v2901, 4294901760
    %4344 = vmatmul.mubr.f32.gmra.mrb[0].mxu0 %v4343
    %v4345 = vpop.f32.mrb[0].mxu0
    %v4346 = vadd.f32 %v4189, %v4345
    %v4347 = vpop.f32.mrb[0].mxu0
    %4348 = vdwg.mxu0
    %4349 = vmatprep.subr.mxu0 0.0
    %v4350 = vand.u32 %v4072, 4294901760
    %v4351 = vsub.f32 %v4072, %v4350
    %4352 = vmatpush1.msra.mxu0 %v4351
    %4353 = vmatprep.subr.mxu0 0.0
    %v4354 = vand.u32 %v4073, 4294901760
    %v4355 = vsub.f32 %v4073, %v4354
    %4356 = vmatpush1.msra.mxu0 %v4355
    %4357 = vmatprep.subr.mxu0 0.0
    %v4358 = vand.u32 %v4074, 4294901760
    %v4359 = vsub.f32 %v4074, %v4358
    %4360 = vmatpush1.msra.mxu0 %v4359
    %4361 = vmatprep.subr.mxu0 0.0
    %v4362 = vand.u32 %v4075, 4294901760
    %v4363 = vsub.f32 %v4075, %v4362
    %4364 = vmatpush1.msra.mxu0 %v4363
    %4365 = vmatprep.subr.mxu0 0.0
    %v4366 = vand.u32 %v4076, 4294901760
    %v4367 = vsub.f32 %v4076, %v4366
    %4368 = vmatpush1.msra.mxu0 %v4367
    %4369 = vmatprep.subr.mxu0 0.0
    %v4370 = vand.u32 %v4077, 4294901760
    %v4371 = vsub.f32 %v4077, %v4370
    %4372 = vmatpush1.msra.mxu0 %v4371
    %4373 = vmatprep.subr.mxu0 0.0
    %v4374 = vand.u32 %v4078, 4294901760
    %v4375 = vsub.f32 %v4078, %v4374
    %4376 = vmatpush1.msra.mxu0 %v4375
    %4377 = vmatprep.subr.mxu0 0.0
    %v4378 = vand.u32 %v4079, 4294901760
    %v4379 = vsub.f32 %v4079, %v4378
    %4380 = vmatpush1.msra.mxu0 %v4379
    %4381 = vmatprep.subr.mxu0 0.0
    %v4382 = vand.u32 %v4080, 4294901760
    %v4383 = vsub.f32 %v4080, %v4382
    %4384 = vmatpush1.msra.mxu0 %v4383
    %4385 = vmatprep.subr.mxu0 0.0
    %v4386 = vand.u32 %v4081, 4294901760
    %v4387 = vsub.f32 %v4081, %v4386
    %4388 = vmatpush1.msra.mxu0 %v4387
    %4389 = vmatprep.subr.mxu0 0.0
    %v4390 = vand.u32 %v4082, 4294901760
    %v4391 = vsub.f32 %v4082, %v4390
    %4392 = vmatpush1.msra.mxu0 %v4391
    %4393 = vmatprep.subr.mxu0 0.0
    %v4394 = vand.u32 %v4083, 4294901760
    %v4395 = vsub.f32 %v4083, %v4394
    %4396 = vmatpush1.msra.mxu0 %v4395
    %4397 = vmatprep.subr.mxu0 0.0
    %v4398 = vand.u32 %v4084, 4294901760
    %v4399 = vsub.f32 %v4084, %v4398
    %4400 = vmatpush1.msra.mxu0 %v4399
    %4401 = vmatprep.subr.mxu0 0.0
    %v4402 = vand.u32 %v4085, 4294901760
    %v4403 = vsub.f32 %v4085, %v4402
    %4404 = vmatpush1.msra.mxu0 %v4403
    %4405 = vmatprep.subr.mxu0 0.0
    %v4406 = vand.u32 %v4086, 4294901760
    %v4407 = vsub.f32 %v4086, %v4406
    %4408 = vmatpush1.msra.mxu0 %v4407
    %4409 = vmatprep.subr.mxu0 0.0
    %v4410 = vand.u32 %v4087, 4294901760
    %v4411 = vsub.f32 %v4087, %v4410
    %4412 = vmatpush1.msra.mxu0 %v4411
    %4413 = vmatprep.subr.mxu0 0.0
    %4414 = vmatpush1.msra.mxu0 0.0
    %4415 = vmatprep.subr.mxu0 0.0
    %4416 = vmatpush1.msra.mxu0 0.0
    %4417 = vmatprep.subr.mxu0 0.0
    %4418 = vmatpush1.msra.mxu0 0.0
    %4419 = vmatprep.subr.mxu0 0.0
    %4420 = vmatpush1.msra.mxu0 0.0
    %4421 = vmatprep.subr.mxu0 0.0
    %4422 = vmatpush1.msra.mxu0 0.0
    %4423 = vmatprep.subr.mxu0 0.0
    %4424 = vmatpush1.msra.mxu0 0.0
    %4425 = vmatprep.subr.mxu0 0.0
    %4426 = vmatpush1.msra.mxu0 0.0
    %4427 = vmatprep.subr.mxu0 0.0
    %4428 = vmatpush1.msra.mxu0 0.0
    %4429 = vmatprep.subr.mxu0 0.0
    %4430 = vmatpush1.msra.mxu0 0.0
    %4431 = vmatprep.subr.mxu0 0.0
    %4432 = vmatpush1.msra.mxu0 0.0
    %4433 = vmatprep.subr.mxu0 0.0
    %4434 = vmatpush1.msra.mxu0 0.0
    %4435 = vmatprep.subr.mxu0 0.0
    %4436 = vmatpush1.msra.mxu0 0.0
    %4437 = vmatprep.subr.mxu0 0.0
    %4438 = vmatpush1.msra.mxu0 0.0
    %4439 = vmatprep.subr.mxu0 0.0
    %4440 = vmatpush1.msra.mxu0 0.0
    %4441 = vmatprep.subr.mxu0 0.0
    %4442 = vmatpush1.msra.mxu0 0.0
    %4443 = vmatprep.subr.mxu0 0.0
    %4444 = vmatpush1.msra.mxu0 0.0
    %4445 = vmatprep.mubr.f32.mxu0 0.0
    %v4446 = vand.u32 %v2900, 4294901760
    %v4447 = vsub.f32 %v2900, %v4446
    %4448 = vmatmul.mubr.f32.gmra.mrb[0].mxu0 %v4447
    %v4449 = vpop.f32.mrb[0].mxu0
    %v4450 = vadd.f32 %v4340, %v4449
    %v4451 = vpop.f32.mrb[0].mxu0
    %4452 = vmatprep.mubr.f32.mxu0 0.0
    %v4453 = vand.u32 %v2901, 4294901760
    %v4454 = vsub.f32 %v2901, %v4453
    %4455 = vmatmul.mubr.f32.gmra.mrb[0].mxu0 %v4454
    %v4456 = vpop.f32.mrb[0].mxu0
    %v4457 = vadd.f32 %v4346, %v4456
    %v4458 = vpop.f32.mrb[0].mxu0
    %4459 = vdwg.mxu0
    %4460 = vmatprep.subr.mxu0 0.0
    %v4461 = vand.u32 %v4072, 4294901760
    %4462 = vmatpush1.msra.mxu0 %v4461
    %4463 = vmatprep.subr.mxu0 0.0
    %v4464 = vand.u32 %v4073, 4294901760
    %4465 = vmatpush1.msra.mxu0 %v4464
    %4466 = vmatprep.subr.mxu0 0.0
    %v4467 = vand.u32 %v4074, 4294901760
    %4468 = vmatpush1.msra.mxu0 %v4467
    %4469 = vmatprep.subr.mxu0 0.0
    %v4470 = vand.u32 %v4075, 4294901760
    %4471 = vmatpush1.msra.mxu0 %v4470
    %4472 = vmatprep.subr.mxu0 0.0
    %v4473 = vand.u32 %v4076, 4294901760
    %4474 = vmatpush1.msra.mxu0 %v4473
    %4475 = vmatprep.subr.mxu0 0.0
    %v4476 = vand.u32 %v4077, 4294901760
    %4477 = vmatpush1.msra.mxu0 %v4476
    %4478 = vmatprep.subr.mxu0 0.0
    %v4479 = vand.u32 %v4078, 4294901760
    %4480 = vmatpush1.msra.mxu0 %v4479
    %4481 = vmatprep.subr.mxu0 0.0
    %v4482 = vand.u32 %v4079, 4294901760
    %4483 = vmatpush1.msra.mxu0 %v4482
    %4484 = vmatprep.subr.mxu0 0.0
    %v4485 = vand.u32 %v4080, 4294901760
    %4486 = vmatpush1.msra.mxu0 %v4485
    %4487 = vmatprep.subr.mxu0 0.0
    %v4488 = vand.u32 %v4081, 4294901760
    %4489 = vmatpush1.msra.mxu0 %v4488
    %4490 = vmatprep.subr.mxu0 0.0
    %v4491 = vand.u32 %v4082, 4294901760
    %4492 = vmatpush1.msra.mxu0 %v4491
    %4493 = vmatprep.subr.mxu0 0.0
    %v4494 = vand.u32 %v4083, 4294901760
    %4495 = vmatpush1.msra.mxu0 %v4494
    %4496 = vmatprep.subr.mxu0 0.0
    %v4497 = vand.u32 %v4084, 4294901760
    %4498 = vmatpush1.msra.mxu0 %v4497
    %4499 = vmatprep.subr.mxu0 0.0
    %v4500 = vand.u32 %v4085, 4294901760
    %4501 = vmatpush1.msra.mxu0 %v4500
    %4502 = vmatprep.subr.mxu0 0.0
    %v4503 = vand.u32 %v4086, 4294901760
    %4504 = vmatpush1.msra.mxu0 %v4503
    %4505 = vmatprep.subr.mxu0 0.0
    %v4506 = vand.u32 %v4087, 4294901760
    %4507 = vmatpush1.msra.mxu0 %v4506
    %4508 = vmatprep.subr.mxu0 0.0
    %4509 = vmatpush1.msra.mxu0 0.0
    %4510 = vmatprep.subr.mxu0 0.0
    %4511 = vmatpush1.msra.mxu0 0.0
    %4512 = vmatprep.subr.mxu0 0.0
    %4513 = vmatpush1.msra.mxu0 0.0
    %4514 = vmatprep.subr.mxu0 0.0
    %4515 = vmatpush1.msra.mxu0 0.0
    %4516 = vmatprep.subr.mxu0 0.0
    %4517 = vmatpush1.msra.mxu0 0.0
    %4518 = vmatprep.subr.mxu0 0.0
    %4519 = vmatpush1.msra.mxu0 0.0
    %4520 = vmatprep.subr.mxu0 0.0
    %4521 = vmatpush1.msra.mxu0 0.0
    %4522 = vmatprep.subr.mxu0 0.0
    %4523 = vmatpush1.msra.mxu0 0.0
    %4524 = vmatprep.subr.mxu0 0.0
    %4525 = vmatpush1.msra.mxu0 0.0
    %4526 = vmatprep.subr.mxu0 0.0
    %4527 = vmatpush1.msra.mxu0 0.0
    %4528 = vmatprep.subr.mxu0 0.0
    %4529 = vmatpush1.msra.mxu0 0.0
    %4530 = vmatprep.subr.mxu0 0.0
    %4531 = vmatpush1.msra.mxu0 0.0
    %4532 = vmatprep.subr.mxu0 0.0
    %4533 = vmatpush1.msra.mxu0 0.0
    %4534 = vmatprep.subr.mxu0 0.0
    %4535 = vmatpush1.msra.mxu0 0.0
    %4536 = vmatprep.subr.mxu0 0.0
    %4537 = vmatpush1.msra.mxu0 0.0
    %4538 = vmatprep.subr.mxu0 0.0
    %4539 = vmatpush1.msra.mxu0 0.0
    %4540 = vmatprep.mubr.f32.mxu0 0.0
    %v4541 = vand.u32 %v2900, 4294901760
    %v4542 = vsub.f32 %v2900, %v4541
    %v4543 = vand.u32 %v4542, 4294901760
    %4544 = vmatmul.mubr.f32.gmra.mrb[0].mxu0 %v4543
    %v4545 = vpop.f32.mrb[0].mxu0
    %v4546 = vadd.f32 %v4450, %v4545
    %v4547 = vpop.f32.mrb[0].mxu0
    %4548 = vmatprep.mubr.f32.mxu0 0.0
    %v4549 = vand.u32 %v2901, 4294901760
    %v4550 = vsub.f32 %v2901, %v4549
    %v4551 = vand.u32 %v4550, 4294901760
    %4552 = vmatmul.mubr.f32.gmra.mrb[0].mxu0 %v4551
    %v4553 = vpop.f32.mrb[0].mxu0
    %v4554 = vadd.f32 %v4457, %v4553
    %v4555 = vpop.f32.mrb[0].mxu0
    %4556 = vdwg.mxu0
    %4557 = vmatprep.subr.mxu0 0.0
    %v4558 = vand.u32 %v4072, 4294901760
    %v4559 = vsub.f32 %v4072, %v4558
    %v4560 = vand.u32 %v4559, 4294901760
    %4561 = vmatpush1.msra.mxu0 %v4560
    %4562 = vmatprep.subr.mxu0 0.0
    %v4563 = vand.u32 %v4073, 4294901760
    %v4564 = vsub.f32 %v4073, %v4563
    %v4565 = vand.u32 %v4564, 4294901760
    %4566 = vmatpush1.msra.mxu0 %v4565
    %4567 = vmatprep.subr.mxu0 0.0
    %v4568 = vand.u32 %v4074, 4294901760
    %v4569 = vsub.f32 %v4074, %v4568
    %v4570 = vand.u32 %v4569, 4294901760
    %4571 = vmatpush1.msra.mxu0 %v4570
    %4572 = vmatprep.subr.mxu0 0.0
    %v4573 = vand.u32 %v4075, 4294901760
    %v4574 = vsub.f32 %v4075, %v4573
    %v4575 = vand.u32 %v4574, 4294901760
    %4576 = vmatpush1.msra.mxu0 %v4575
    %4577 = vmatprep.subr.mxu0 0.0
    %v4578 = vand.u32 %v4076, 4294901760
    %v4579 = vsub.f32 %v4076, %v4578
    %v4580 = vand.u32 %v4579, 4294901760
    %4581 = vmatpush1.msra.mxu0 %v4580
    %4582 = vmatprep.subr.mxu0 0.0
    %v4583 = vand.u32 %v4077, 4294901760
    %v4584 = vsub.f32 %v4077, %v4583
    %v4585 = vand.u32 %v4584, 4294901760
    %4586 = vmatpush1.msra.mxu0 %v4585
    %4587 = vmatprep.subr.mxu0 0.0
    %v4588 = vand.u32 %v4078, 4294901760
    %v4589 = vsub.f32 %v4078, %v4588
    %v4590 = vand.u32 %v4589, 4294901760
    %4591 = vmatpush1.msra.mxu0 %v4590
    %4592 = vmatprep.subr.mxu0 0.0
    %v4593 = vand.u32 %v4079, 4294901760
    %v4594 = vsub.f32 %v4079, %v4593
    %v4595 = vand.u32 %v4594, 4294901760
    %4596 = vmatpush1.msra.mxu0 %v4595
    %4597 = vmatprep.subr.mxu0 0.0
    %v4598 = vand.u32 %v4080, 4294901760
    %v4599 = vsub.f32 %v4080, %v4598
    %v4600 = vand.u32 %v4599, 4294901760
    %4601 = vmatpush1.msra.mxu0 %v4600
    %4602 = vmatprep.subr.mxu0 0.0
    %v4603 = vand.u32 %v4081, 4294901760
    %v4604 = vsub.f32 %v4081, %v4603
    %v4605 = vand.u32 %v4604, 4294901760
    %4606 = vmatpush1.msra.mxu0 %v4605
    %4607 = vmatprep.subr.mxu0 0.0
    %v4608 = vand.u32 %v4082, 4294901760
    %v4609 = vsub.f32 %v4082, %v4608
    %v4610 = vand.u32 %v4609, 4294901760
    %4611 = vmatpush1.msra.mxu0 %v4610
    %4612 = vmatprep.subr.mxu0 0.0
    %v4613 = vand.u32 %v4083, 4294901760
    %v4614 = vsub.f32 %v4083, %v4613
    %v4615 = vand.u32 %v4614, 4294901760
    %4616 = vmatpush1.msra.mxu0 %v4615
    %4617 = vmatprep.subr.mxu0 0.0
    %v4618 = vand.u32 %v4084, 4294901760
    %v4619 = vsub.f32 %v4084, %v4618
    %v4620 = vand.u32 %v4619, 4294901760
    %4621 = vmatpush1.msra.mxu0 %v4620
    %4622 = vmatprep.subr.mxu0 0.0
    %v4623 = vand.u32 %v4085, 4294901760
    %v4624 = vsub.f32 %v4085, %v4623
    %v4625 = vand.u32 %v4624, 4294901760
    %4626 = vmatpush1.msra.mxu0 %v4625
    %4627 = vmatprep.subr.mxu0 0.0
    %v4628 = vand.u32 %v4086, 4294901760
    %v4629 = vsub.f32 %v4086, %v4628
    %v4630 = vand.u32 %v4629, 4294901760
    %4631 = vmatpush1.msra.mxu0 %v4630
    %4632 = vmatprep.subr.mxu0 0.0
    %v4633 = vand.u32 %v4087, 4294901760
    %v4634 = vsub.f32 %v4087, %v4633
    %v4635 = vand.u32 %v4634, 4294901760
    %4636 = vmatpush1.msra.mxu0 %v4635
    %4637 = vmatprep.subr.mxu0 0.0
    %4638 = vmatpush1.msra.mxu0 0.0
    %4639 = vmatprep.subr.mxu0 0.0
    %4640 = vmatpush1.msra.mxu0 0.0
    %4641 = vmatprep.subr.mxu0 0.0
    %4642 = vmatpush1.msra.mxu0 0.0
    %4643 = vmatprep.subr.mxu0 0.0
    %4644 = vmatpush1.msra.mxu0 0.0
    %4645 = vmatprep.subr.mxu0 0.0
    %4646 = vmatpush1.msra.mxu0 0.0
    %4647 = vmatprep.subr.mxu0 0.0
    %4648 = vmatpush1.msra.mxu0 0.0
    %4649 = vmatprep.subr.mxu0 0.0
    %4650 = vmatpush1.msra.mxu0 0.0
    %4651 = vmatprep.subr.mxu0 0.0
    %4652 = vmatpush1.msra.mxu0 0.0
    %4653 = vmatprep.subr.mxu0 0.0
    %4654 = vmatpush1.msra.mxu0 0.0
    %4655 = vmatprep.subr.mxu0 0.0
    %4656 = vmatpush1.msra.mxu0 0.0
    %4657 = vmatprep.subr.mxu0 0.0
    %4658 = vmatpush1.msra.mxu0 0.0
    %4659 = vmatprep.subr.mxu0 0.0
    %4660 = vmatpush1.msra.mxu0 0.0
    %4661 = vmatprep.subr.mxu0 0.0
    %4662 = vmatpush1.msra.mxu0 0.0
    %4663 = vmatprep.subr.mxu0 0.0
    %4664 = vmatpush1.msra.mxu0 0.0
    %4665 = vmatprep.subr.mxu0 0.0
    %4666 = vmatpush1.msra.mxu0 0.0
    %4667 = vmatprep.subr.mxu0 0.0
    %4668 = vmatpush1.msra.mxu0 0.0
    %4669 = vmatprep.mubr.f32.mxu0 0.0
    %v4670 = vand.u32 %v2900, 4294901760
    %4671 = vmatmul.mubr.f32.gmra.mrb[0].mxu0 %v4670
    %v4672 = vpop.f32.mrb[0].mxu0
    %v4673 = vadd.f32 %v4546, %v4672
    %v4674 = vpop.f32.mrb[0].mxu0
    %4675 = vmatprep.mubr.f32.mxu0 0.0
    %v4676 = vand.u32 %v2901, 4294901760
    %4677 = vmatmul.mubr.f32.gmra.mrb[0].mxu0 %v4676
    %v4678 = vpop.f32.mrb[0].mxu0
    %v4679 = vadd.f32 %v4554, %v4678
    %v4680 = vpop.f32.mrb[0].mxu0
    %4681 = vdwg.mxu0
    %4682 = vmatprep.subr.mxu0 0.0
    %v4683 = vand.u32 %v4072, 4294901760
    %4684 = vmatpush1.msra.mxu0 %v4683
    %4685 = vmatprep.subr.mxu0 0.0
    %v4686 = vand.u32 %v4073, 4294901760
    %4687 = vmatpush1.msra.mxu0 %v4686
    %4688 = vmatprep.subr.mxu0 0.0
    %v4689 = vand.u32 %v4074, 4294901760
    %4690 = vmatpush1.msra.mxu0 %v4689
    %4691 = vmatprep.subr.mxu0 0.0
    %v4692 = vand.u32 %v4075, 4294901760
    %4693 = vmatpush1.msra.mxu0 %v4692
    %4694 = vmatprep.subr.mxu0 0.0
    %v4695 = vand.u32 %v4076, 4294901760
    %4696 = vmatpush1.msra.mxu0 %v4695
    %4697 = vmatprep.subr.mxu0 0.0
    %v4698 = vand.u32 %v4077, 4294901760
    %4699 = vmatpush1.msra.mxu0 %v4698
    %4700 = vmatprep.subr.mxu0 0.0
    %v4701 = vand.u32 %v4078, 4294901760
    %4702 = vmatpush1.msra.mxu0 %v4701
    %4703 = vmatprep.subr.mxu0 0.0
    %v4704 = vand.u32 %v4079, 4294901760
    %4705 = vmatpush1.msra.mxu0 %v4704
    %4706 = vmatprep.subr.mxu0 0.0
    %v4707 = vand.u32 %v4080, 4294901760
    %4708 = vmatpush1.msra.mxu0 %v4707
    %4709 = vmatprep.subr.mxu0 0.0
    %v4710 = vand.u32 %v4081, 4294901760
    %4711 = vmatpush1.msra.mxu0 %v4710
    %4712 = vmatprep.subr.mxu0 0.0
    %v4713 = vand.u32 %v4082, 4294901760
    %4714 = vmatpush1.msra.mxu0 %v4713
    %4715 = vmatprep.subr.mxu0 0.0
    %v4716 = vand.u32 %v4083, 4294901760
    %4717 = vmatpush1.msra.mxu0 %v4716
    %4718 = vmatprep.subr.mxu0 0.0
    %v4719 = vand.u32 %v4084, 4294901760
    %4720 = vmatpush1.msra.mxu0 %v4719
    %4721 = vmatprep.subr.mxu0 0.0
    %v4722 = vand.u32 %v4085, 4294901760
    %4723 = vmatpush1.msra.mxu0 %v4722
    %4724 = vmatprep.subr.mxu0 0.0
    %v4725 = vand.u32 %v4086, 4294901760
    %4726 = vmatpush1.msra.mxu0 %v4725
    %4727 = vmatprep.subr.mxu0 0.0
    %v4728 = vand.u32 %v4087, 4294901760
    %4729 = vmatpush1.msra.mxu0 %v4728
    %4730 = vmatprep.subr.mxu0 0.0
    %4731 = vmatpush1.msra.mxu0 0.0
    %4732 = vmatprep.subr.mxu0 0.0
    %4733 = vmatpush1.msra.mxu0 0.0
    %4734 = vmatprep.subr.mxu0 0.0
    %4735 = vmatpush1.msra.mxu0 0.0
    %4736 = vmatprep.subr.mxu0 0.0
    %4737 = vmatpush1.msra.mxu0 0.0
    %4738 = vmatprep.subr.mxu0 0.0
    %4739 = vmatpush1.msra.mxu0 0.0
    %4740 = vmatprep.subr.mxu0 0.0
    %4741 = vmatpush1.msra.mxu0 0.0
    %4742 = vmatprep.subr.mxu0 0.0
    %4743 = vmatpush1.msra.mxu0 0.0
    %4744 = vmatprep.subr.mxu0 0.0
    %4745 = vmatpush1.msra.mxu0 0.0
    %4746 = vmatprep.subr.mxu0 0.0
    %4747 = vmatpush1.msra.mxu0 0.0
    %4748 = vmatprep.subr.mxu0 0.0
    %4749 = vmatpush1.msra.mxu0 0.0
    %4750 = vmatprep.subr.mxu0 0.0
    %4751 = vmatpush1.msra.mxu0 0.0
    %4752 = vmatprep.subr.mxu0 0.0
    %4753 = vmatpush1.msra.mxu0 0.0
    %4754 = vmatprep.subr.mxu0 0.0
    %4755 = vmatpush1.msra.mxu0 0.0
    %4756 = vmatprep.subr.mxu0 0.0
    %4757 = vmatpush1.msra.mxu0 0.0
    %4758 = vmatprep.subr.mxu0 0.0
    %4759 = vmatpush1.msra.mxu0 0.0
    %4760 = vmatprep.subr.mxu0 0.0
    %4761 = vmatpush1.msra.mxu0 0.0
    %4762 = vmatprep.mubr.f32.mxu0 0.0
    %v4763 = vand.u32 %v2900, 4294901760
    %4764 = vmatmul.mubr.f32.gmra.mrb[0].mxu0 %v4763
    %v4765 = vpop.f32.mrb[0].mxu0
    %v4766 = vadd.f32 %v4673, %v4765
    %v4767 = vpop.f32.mrb[0].mxu0
    %4768 = vmatprep.mubr.f32.mxu0 0.0
    %v4769 = vand.u32 %v2901, 4294901760
    %4770 = vmatmul.mubr.f32.gmra.mrb[0].mxu0 %v4769
    %v4771 = vpop.f32.mrb[0].mxu0
    %v4772 = vadd.f32 %v4679, %v4771
    %v4773 = vpop.f32.mrb[0].mxu0
    %4774 = vdwg.mxu0
    %v4775 = vmax.f32 %v4766, 0.0
    %v4776 = vmax.f32 %v4772, 0.0
    %s4777 = scalar_lea.vmem [#allocation2], 384
    %v4778 = vld [vmem:[%s4777] sm:$0xff]
    %v4779 = vld [vmem:[%s4777 + $0x8] sm:$0xff]
    %v4780 = vld [vmem:[%s4777 + $0x10] sm:$0xff]
    %v4781 = vld [vmem:[%s4777 + $0x18] sm:$0xff]
    %v4782 = vld [vmem:[%s4777 + $0x20] sm:$0xff]
    %v4783 = vld [vmem:[%s4777 + $0x28] sm:$0xff]
    %v4784 = vld [vmem:[%s4777 + $0x30] sm:$0xff]
    %v4785 = vld [vmem:[%s4777 + $0x38] sm:$0xff]
    %v4786 = vld [vmem:[%s4777 + $0x40] sm:$0xff]
    %v4787 = vld [vmem:[%s4777 + $0x48] sm:$0xff]
    %v4788 = vld [vmem:[%s4777 + $0x50] sm:$0xff]
    %v4789 = vld [vmem:[%s4777 + $0x58] sm:$0xff]
    %v4790 = vld [vmem:[%s4777 + $0x60] sm:$0xff]
    %v4791 = vld [vmem:[%s4777 + $0x68] sm:$0xff]
    %v4792 = vld [vmem:[%s4777 + $0x70] sm:$0xff]
    %v4793 = vld [vmem:[%s4777 + $0x78] sm:$0xff]
    %4794 = vmatprep.subr.mxu0 0.0
    %v4795 = vand.u32 %v4778, 4294901760
    %4796 = vmatpush1.msra.mxu0 %v4795
    %4797 = vmatprep.subr.mxu0 0.0
    %v4798 = vand.u32 %v4779, 4294901760
    %4799 = vmatpush1.msra.mxu0 %v4798
    %4800 = vmatprep.subr.mxu0 0.0
    %v4801 = vand.u32 %v4780, 4294901760
    %4802 = vmatpush1.msra.mxu0 %v4801
    %4803 = vmatprep.subr.mxu0 0.0
    %v4804 = vand.u32 %v4781, 4294901760
    %4805 = vmatpush1.msra.mxu0 %v4804
    %4806 = vmatprep.subr.mxu0 0.0
    %v4807 = vand.u32 %v4782, 4294901760
    %4808 = vmatpush1.msra.mxu0 %v4807
    %4809 = vmatprep.subr.mxu0 0.0
    %v4810 = vand.u32 %v4783, 4294901760
    %4811 = vmatpush1.msra.mxu0 %v4810
    %4812 = vmatprep.subr.mxu0 0.0
    %v4813 = vand.u32 %v4784, 4294901760
    %4814 = vmatpush1.msra.mxu0 %v4813
    %4815 = vmatprep.subr.mxu0 0.0
    %v4816 = vand.u32 %v4785, 4294901760
    %4817 = vmatpush1.msra.mxu0 %v4816
    %4818 = vmatprep.subr.mxu0 0.0
    %v4819 = vand.u32 %v4786, 4294901760
    %4820 = vmatpush1.msra.mxu0 %v4819
    %4821 = vmatprep.subr.mxu0 0.0
    %v4822 = vand.u32 %v4787, 4294901760
    %4823 = vmatpush1.msra.mxu0 %v4822
    %4824 = vmatprep.subr.mxu0 0.0
    %v4825 = vand.u32 %v4788, 4294901760
    %4826 = vmatpush1.msra.mxu0 %v4825
    %4827 = vmatprep.subr.mxu0 0.0
    %v4828 = vand.u32 %v4789, 4294901760
    %4829 = vmatpush1.msra.mxu0 %v4828
    %4830 = vmatprep.subr.mxu0 0.0
    %v4831 = vand.u32 %v4790, 4294901760
    %4832 = vmatpush1.msra.mxu0 %v4831
    %4833 = vmatprep.subr.mxu0 0.0
    %v4834 = vand.u32 %v4791, 4294901760
    %4835 = vmatpush1.msra.mxu0 %v4834
    %4836 = vmatprep.subr.mxu0 0.0
    %v4837 = vand.u32 %v4792, 4294901760
    %4838 = vmatpush1.msra.mxu0 %v4837
    %4839 = vmatprep.subr.mxu0 0.0
    %v4840 = vand.u32 %v4793, 4294901760
    %4841 = vmatpush1.msra.mxu0 %v4840
    %4842 = vmatprep.subr.mxu0 0.0
    %4843 = vmatpush1.msra.mxu0 0.0
    %4844 = vmatprep.subr.mxu0 0.0
    %4845 = vmatpush1.msra.mxu0 0.0
    %4846 = vmatprep.subr.mxu0 0.0
    %4847 = vmatpush1.msra.mxu0 0.0
    %4848 = vmatprep.subr.mxu0 0.0
    %4849 = vmatpush1.msra.mxu0 0.0
    %4850 = vmatprep.subr.mxu0 0.0
    %4851 = vmatpush1.msra.mxu0 0.0
    %4852 = vmatprep.subr.mxu0 0.0
    %4853 = vmatpush1.msra.mxu0 0.0
    %4854 = vmatprep.subr.mxu0 0.0
    %4855 = vmatpush1.msra.mxu0 0.0
    %4856 = vmatprep.subr.mxu0 0.0
    %4857 = vmatpush1.msra.mxu0 0.0
    %4858 = vmatprep.subr.mxu0 0.0
    %4859 = vmatpush1.msra.mxu0 0.0
    %4860 = vmatprep.subr.mxu0 0.0
    %4861 = vmatpush1.msra.mxu0 0.0
    %4862 = vmatprep.subr.mxu0 0.0
    %4863 = vmatpush1.msra.mxu0 0.0
    %4864 = vmatprep.subr.mxu0 0.0
    %4865 = vmatpush1.msra.mxu0 0.0
    %4866 = vmatprep.subr.mxu0 0.0
    %4867 = vmatpush1.msra.mxu0 0.0
    %4868 = vmatprep.subr.mxu0 0.0
    %4869 = vmatpush1.msra.mxu0 0.0
    %4870 = vmatprep.subr.mxu0 0.0
    %4871 = vmatpush1.msra.mxu0 0.0
    %4872 = vmatprep.subr.mxu0 0.0
    %4873 = vmatpush1.msra.mxu0 0.0
    %4874 = vmatprep.mubr.f32.mxu0 0.0
    %v4875 = vand.u32 %v4775, 4294901760
    %v4876 = vsub.f32 %v4775, %v4875
    %v4877 = vand.u32 %v4876, 4294901760
    %v4878 = vsub.f32 %v4876, %v4877
    %v4879 = vand.u32 %v4878, 4294901760
    %4880 = vmatmul.mubr.f32.gmra.mrb[0].mxu0 %v4879
    %v4881 = vpop.f32.mrb[0].mxu0
    %v4882 = vadd.f32 0.0, %v4881
    %v4883 = vpop.f32.mrb[0].mxu0
    %4884 = vmatprep.mubr.f32.mxu0 0.0
    %v4885 = vand.u32 %v4776, 4294901760
    %v4886 = vsub.f32 %v4776, %v4885
    %v4887 = vand.u32 %v4886, 4294901760
    %v4888 = vsub.f32 %v4886, %v4887
    %v4889 = vand.u32 %v4888, 4294901760
    %4890 = vmatmul.mubr.f32.gmra.mrb[0].mxu0 %v4889
    %v4891 = vpop.f32.mrb[0].mxu0
    %v4892 = vadd.f32 0.0, %v4891
    %v4893 = vpop.f32.mrb[0].mxu0
    %4894 = vdwg.mxu0
    %4895 = vmatprep.subr.mxu0 0.0
    %v4896 = vand.u32 %v4778, 4294901760
    %v4897 = vsub.f32 %v4778, %v4896
    %v4898 = vand.u32 %v4897, 4294901760
    %v4899 = vsub.f32 %v4897, %v4898
    %v4900 = vand.u32 %v4899, 4294901760
    %4901 = vmatpush1.msra.mxu0 %v4900
    %4902 = vmatprep.subr.mxu0 0.0
    %v4903 = vand.u32 %v4779, 4294901760
    %v4904 = vsub.f32 %v4779, %v4903
    %v4905 = vand.u32 %v4904, 4294901760
    %v4906 = vsub.f32 %v4904, %v4905
    %v4907 = vand.u32 %v4906, 4294901760
    %4908 = vmatpush1.msra.mxu0 %v4907
    %4909 = vmatprep.subr.mxu0 0.0
    %v4910 = vand.u32 %v4780, 4294901760
    %v4911 = vsub.f32 %v4780, %v4910
    %v4912 = vand.u32 %v4911, 4294901760
    %v4913 = vsub.f32 %v4911, %v4912
    %v4914 = vand.u32 %v4913, 4294901760
    %4915 = vmatpush1.msra.mxu0 %v4914
    %4916 = vmatprep.subr.mxu0 0.0
    %v4917 = vand.u32 %v4781, 4294901760
    %v4918 = vsub.f32 %v4781, %v4917
    %v4919 = vand.u32 %v4918, 4294901760
    %v4920 = vsub.f32 %v4918, %v4919
    %v4921 = vand.u32 %v4920, 4294901760
    %4922 = vmatpush1.msra.mxu0 %v4921
    %4923 = vmatprep.subr.mxu0 0.0
    %v4924 = vand.u32 %v4782, 4294901760
    %v4925 = vsub.f32 %v4782, %v4924
    %v4926 = vand.u32 %v4925, 4294901760
    %v4927 = vsub.f32 %v4925, %v4926
    %v4928 = vand.u32 %v4927, 4294901760
    %4929 = vmatpush1.msra.mxu0 %v4928
    %4930 = vmatprep.subr.mxu0 0.0
    %v4931 = vand.u32 %v4783, 4294901760
    %v4932 = vsub.f32 %v4783, %v4931
    %v4933 = vand.u32 %v4932, 4294901760
    %v4934 = vsub.f32 %v4932, %v4933
    %v4935 = vand.u32 %v4934, 4294901760
    %4936 = vmatpush1.msra.mxu0 %v4935
    %4937 = vmatprep.subr.mxu0 0.0
    %v4938 = vand.u32 %v4784, 4294901760
    %v4939 = vsub.f32 %v4784, %v4938
    %v4940 = vand.u32 %v4939, 4294901760
    %v4941 = vsub.f32 %v4939, %v4940
    %v4942 = vand.u32 %v4941, 4294901760
    %4943 = vmatpush1.msra.mxu0 %v4942
    %4944 = vmatprep.subr.mxu0 0.0
    %v4945 = vand.u32 %v4785, 4294901760
    %v4946 = vsub.f32 %v4785, %v4945
    %v4947 = vand.u32 %v4946, 4294901760
    %v4948 = vsub.f32 %v4946, %v4947
    %v4949 = vand.u32 %v4948, 4294901760
    %4950 = vmatpush1.msra.mxu0 %v4949
    %4951 = vmatprep.subr.mxu0 0.0
    %v4952 = vand.u32 %v4786, 4294901760
    %v4953 = vsub.f32 %v4786, %v4952
    %v4954 = vand.u32 %v4953, 4294901760
    %v4955 = vsub.f32 %v4953, %v4954
    %v4956 = vand.u32 %v4955, 4294901760
    %4957 = vmatpush1.msra.mxu0 %v4956
    %4958 = vmatprep.subr.mxu0 0.0
    %v4959 = vand.u32 %v4787, 4294901760
    %v4960 = vsub.f32 %v4787, %v4959
    %v4961 = vand.u32 %v4960, 4294901760
    %v4962 = vsub.f32 %v4960, %v4961
    %v4963 = vand.u32 %v4962, 4294901760
    %4964 = vmatpush1.msra.mxu0 %v4963
    %4965 = vmatprep.subr.mxu0 0.0
    %v4966 = vand.u32 %v4788, 4294901760
    %v4967 = vsub.f32 %v4788, %v4966
    %v4968 = vand.u32 %v4967, 4294901760
    %v4969 = vsub.f32 %v4967, %v4968
    %v4970 = vand.u32 %v4969, 4294901760
    %4971 = vmatpush1.msra.mxu0 %v4970
    %4972 = vmatprep.subr.mxu0 0.0
    %v4973 = vand.u32 %v4789, 4294901760
    %v4974 = vsub.f32 %v4789, %v4973
    %v4975 = vand.u32 %v4974, 4294901760
    %v4976 = vsub.f32 %v4974, %v4975
    %v4977 = vand.u32 %v4976, 4294901760
    %4978 = vmatpush1.msra.mxu0 %v4977
    %4979 = vmatprep.subr.mxu0 0.0
    %v4980 = vand.u32 %v4790, 4294901760
    %v4981 = vsub.f32 %v4790, %v4980
    %v4982 = vand.u32 %v4981, 4294901760
    %v4983 = vsub.f32 %v4981, %v4982
    %v4984 = vand.u32 %v4983, 4294901760
    %4985 = vmatpush1.msra.mxu0 %v4984
    %4986 = vmatprep.subr.mxu0 0.0
    %v4987 = vand.u32 %v4791, 4294901760
    %v4988 = vsub.f32 %v4791, %v4987
    %v4989 = vand.u32 %v4988, 4294901760
    %v4990 = vsub.f32 %v4988, %v4989
    %v4991 = vand.u32 %v4990, 4294901760
    %4992 = vmatpush1.msra.mxu0 %v4991
    %4993 = vmatprep.subr.mxu0 0.0
    %v4994 = vand.u32 %v4792, 4294901760
    %v4995 = vsub.f32 %v4792, %v4994
    %v4996 = vand.u32 %v4995, 4294901760
    %v4997 = vsub.f32 %v4995, %v4996
    %v4998 = vand.u32 %v4997, 4294901760
    %4999 = vmatpush1.msra.mxu0 %v4998
    %5000 = vmatprep.subr.mxu0 0.0
    %v5001 = vand.u32 %v4793, 4294901760
    %v5002 = vsub.f32 %v4793, %v5001
    %v5003 = vand.u32 %v5002, 4294901760
    %v5004 = vsub.f32 %v5002, %v5003
    %v5005 = vand.u32 %v5004, 4294901760
    %5006 = vmatpush1.msra.mxu0 %v5005
    %5007 = vmatprep.subr.mxu0 0.0
    %5008 = vmatpush1.msra.mxu0 0.0
    %5009 = vmatprep.subr.mxu0 0.0
    %5010 = vmatpush1.msra.mxu0 0.0
    %5011 = vmatprep.subr.mxu0 0.0
    %5012 = vmatpush1.msra.mxu0 0.0
    %5013 = vmatprep.subr.mxu0 0.0
    %5014 = vmatpush1.msra.mxu0 0.0
    %5015 = vmatprep.subr.mxu0 0.0
    %5016 = vmatpush1.msra.mxu0 0.0
    %5017 = vmatprep.subr.mxu0 0.0
    %5018 = vmatpush1.msra.mxu0 0.0
    %5019 = vmatprep.subr.mxu0 0.0
    %5020 = vmatpush1.msra.mxu0 0.0
    %5021 = vmatprep.subr.mxu0 0.0
    %5022 = vmatpush1.msra.mxu0 0.0
    %5023 = vmatprep.subr.mxu0 0.0
    %5024 = vmatpush1.msra.mxu0 0.0
    %5025 = vmatprep.subr.mxu0 0.0
    %5026 = vmatpush1.msra.mxu0 0.0
    %5027 = vmatprep.subr.mxu0 0.0
    %5028 = vmatpush1.msra.mxu0 0.0
    %5029 = vmatprep.subr.mxu0 0.0
    %5030 = vmatpush1.msra.mxu0 0.0
    %5031 = vmatprep.subr.mxu0 0.0
    %5032 = vmatpush1.msra.mxu0 0.0
    %5033 = vmatprep.subr.mxu0 0.0
    %5034 = vmatpush1.msra.mxu0 0.0
    %5035 = vmatprep.subr.mxu0 0.0
    %5036 = vmatpush1.msra.mxu0 0.0
    %5037 = vmatprep.subr.mxu0 0.0
    %5038 = vmatpush1.msra.mxu0 0.0
    %5039 = vmatprep.mubr.f32.mxu0 0.0
    %v5040 = vand.u32 %v4775, 4294901760
    %5041 = vmatmul.mubr.f32.gmra.mrb[0].mxu0 %v5040
    %v5042 = vpop.f32.mrb[0].mxu0
    %v5043 = vadd.f32 %v4882, %v5042
    %v5044 = vpop.f32.mrb[0].mxu0
    %5045 = vmatprep.mubr.f32.mxu0 0.0
    %v5046 = vand.u32 %v4776, 4294901760
    %5047 = vmatmul.mubr.f32.gmra.mrb[0].mxu0 %v5046
    %v5048 = vpop.f32.mrb[0].mxu0
    %v5049 = vadd.f32 %v4892, %v5048
    %v5050 = vpop.f32.mrb[0].mxu0
    %5051 = vdwg.mxu0
    %5052 = vmatprep.subr.mxu0 0.0
    %v5053 = vand.u32 %v4778, 4294901760
    %v5054 = vsub.f32 %v4778, %v5053
    %5055 = vmatpush1.msra.mxu0 %v5054
    %5056 = vmatprep.subr.mxu0 0.0
    %v5057 = vand.u32 %v4779, 4294901760
    %v5058 = vsub.f32 %v4779, %v5057
    %5059 = vmatpush1.msra.mxu0 %v5058
    %5060 = vmatprep.subr.mxu0 0.0
    %v5061 = vand.u32 %v4780, 4294901760
    %v5062 = vsub.f32 %v4780, %v5061
    %5063 = vmatpush1.msra.mxu0 %v5062
    %5064 = vmatprep.subr.mxu0 0.0
    %v5065 = vand.u32 %v4781, 4294901760
    %v5066 = vsub.f32 %v4781, %v5065
    %5067 = vmatpush1.msra.mxu0 %v5066
    %5068 = vmatprep.subr.mxu0 0.0
    %v5069 = vand.u32 %v4782, 4294901760
    %v5070 = vsub.f32 %v4782, %v5069
    %5071 = vmatpush1.msra.mxu0 %v5070
    %5072 = vmatprep.subr.mxu0 0.0
    %v5073 = vand.u32 %v4783, 4294901760
    %v5074 = vsub.f32 %v4783, %v5073
    %5075 = vmatpush1.msra.mxu0 %v5074
    %5076 = vmatprep.subr.mxu0 0.0
    %v5077 = vand.u32 %v4784, 4294901760
    %v5078 = vsub.f32 %v4784, %v5077
    %5079 = vmatpush1.msra.mxu0 %v5078
    %5080 = vmatprep.subr.mxu0 0.0
    %v5081 = vand.u32 %v4785, 4294901760
    %v5082 = vsub.f32 %v4785, %v5081
    %5083 = vmatpush1.msra.mxu0 %v5082
    %5084 = vmatprep.subr.mxu0 0.0
    %v5085 = vand.u32 %v4786, 4294901760
    %v5086 = vsub.f32 %v4786, %v5085
    %5087 = vmatpush1.msra.mxu0 %v5086
    %5088 = vmatprep.subr.mxu0 0.0
    %v5089 = vand.u32 %v4787, 4294901760
    %v5090 = vsub.f32 %v4787, %v5089
    %5091 = vmatpush1.msra.mxu0 %v5090
    %5092 = vmatprep.subr.mxu0 0.0
    %v5093 = vand.u32 %v4788, 4294901760
    %v5094 = vsub.f32 %v4788, %v5093
    %5095 = vmatpush1.msra.mxu0 %v5094
    %5096 = vmatprep.subr.mxu0 0.0
    %v5097 = vand.u32 %v4789, 4294901760
    %v5098 = vsub.f32 %v4789, %v5097
    %5099 = vmatpush1.msra.mxu0 %v5098
    %5100 = vmatprep.subr.mxu0 0.0
    %v5101 = vand.u32 %v4790, 4294901760
    %v5102 = vsub.f32 %v4790, %v5101
    %5103 = vmatpush1.msra.mxu0 %v5102
    %5104 = vmatprep.subr.mxu0 0.0
    %v5105 = vand.u32 %v4791, 4294901760
    %v5106 = vsub.f32 %v4791, %v5105
    %5107 = vmatpush1.msra.mxu0 %v5106
    %5108 = vmatprep.subr.mxu0 0.0
    %v5109 = vand.u32 %v4792, 4294901760
    %v5110 = vsub.f32 %v4792, %v5109
    %5111 = vmatpush1.msra.mxu0 %v5110
    %5112 = vmatprep.subr.mxu0 0.0
    %v5113 = vand.u32 %v4793, 4294901760
    %v5114 = vsub.f32 %v4793, %v5113
    %5115 = vmatpush1.msra.mxu0 %v5114
    %5116 = vmatprep.subr.mxu0 0.0
    %5117 = vmatpush1.msra.mxu0 0.0
    %5118 = vmatprep.subr.mxu0 0.0
    %5119 = vmatpush1.msra.mxu0 0.0
    %5120 = vmatprep.subr.mxu0 0.0
    %5121 = vmatpush1.msra.mxu0 0.0
    %5122 = vmatprep.subr.mxu0 0.0
    %5123 = vmatpush1.msra.mxu0 0.0
    %5124 = vmatprep.subr.mxu0 0.0
    %5125 = vmatpush1.msra.mxu0 0.0
    %5126 = vmatprep.subr.mxu0 0.0
    %5127 = vmatpush1.msra.mxu0 0.0
    %5128 = vmatprep.subr.mxu0 0.0
    %5129 = vmatpush1.msra.mxu0 0.0
    %5130 = vmatprep.subr.mxu0 0.0
    %5131 = vmatpush1.msra.mxu0 0.0
    %5132 = vmatprep.subr.mxu0 0.0
    %5133 = vmatpush1.msra.mxu0 0.0
    %5134 = vmatprep.subr.mxu0 0.0
    %5135 = vmatpush1.msra.mxu0 0.0
    %5136 = vmatprep.subr.mxu0 0.0
    %5137 = vmatpush1.msra.mxu0 0.0
    %5138 = vmatprep.subr.mxu0 0.0
    %5139 = vmatpush1.msra.mxu0 0.0
    %5140 = vmatprep.subr.mxu0 0.0
    %5141 = vmatpush1.msra.mxu0 0.0
    %5142 = vmatprep.subr.mxu0 0.0
    %5143 = vmatpush1.msra.mxu0 0.0
    %5144 = vmatprep.subr.mxu0 0.0
    %5145 = vmatpush1.msra.mxu0 0.0
    %5146 = vmatprep.subr.mxu0 0.0
    %5147 = vmatpush1.msra.mxu0 0.0
    %5148 = vmatprep.mubr.f32.mxu0 0.0
    %v5149 = vand.u32 %v4775, 4294901760
    %v5150 = vsub.f32 %v4775, %v5149
    %5151 = vmatmul.mubr.f32.gmra.mrb[0].mxu0 %v5150
    %v5152 = vpop.f32.mrb[0].mxu0
    %v5153 = vadd.f32 %v5043, %v5152
    %v5154 = vpop.f32.mrb[0].mxu0
    %5155 = vmatprep.mubr.f32.mxu0 0.0
    %v5156 = vand.u32 %v4776, 4294901760
    %v5157 = vsub.f32 %v4776, %v5156
    %5158 = vmatmul.mubr.f32.gmra.mrb[0].mxu0 %v5157
    %v5159 = vpop.f32.mrb[0].mxu0
    %v5160 = vadd.f32 %v5049, %v5159
    %v5161 = vpop.f32.mrb[0].mxu0
    %5162 = vdwg.mxu0
    %5163 = vmatprep.subr.mxu0 0.0
    %v5164 = vand.u32 %v4778, 4294901760
    %5165 = vmatpush1.msra.mxu0 %v5164
    %5166 = vmatprep.subr.mxu0 0.0
    %v5167 = vand.u32 %v4779, 4294901760
    %5168 = vmatpush1.msra.mxu0 %v5167
    %5169 = vmatprep.subr.mxu0 0.0
    %v5170 = vand.u32 %v4780, 4294901760
    %5171 = vmatpush1.msra.mxu0 %v5170
    %5172 = vmatprep.subr.mxu0 0.0
    %v5173 = vand.u32 %v4781, 4294901760
    %5174 = vmatpush1.msra.mxu0 %v5173
    %5175 = vmatprep.subr.mxu0 0.0
    %v5176 = vand.u32 %v4782, 4294901760
    %5177 = vmatpush1.msra.mxu0 %v5176
    %5178 = vmatprep.subr.mxu0 0.0
    %v5179 = vand.u32 %v4783, 4294901760
    %5180 = vmatpush1.msra.mxu0 %v5179
    %5181 = vmatprep.subr.mxu0 0.0
    %v5182 = vand.u32 %v4784, 4294901760
    %5183 = vmatpush1.msra.mxu0 %v5182
    %5184 = vmatprep.subr.mxu0 0.0
    %v5185 = vand.u32 %v4785, 4294901760
    %5186 = vmatpush1.msra.mxu0 %v5185
    %5187 = vmatprep.subr.mxu0 0.0
    %v5188 = vand.u32 %v4786, 4294901760
    %5189 = vmatpush1.msra.mxu0 %v5188
    %5190 = vmatprep.subr.mxu0 0.0
    %v5191 = vand.u32 %v4787, 4294901760
    %5192 = vmatpush1.msra.mxu0 %v5191
    %5193 = vmatprep.subr.mxu0 0.0
    %v5194 = vand.u32 %v4788, 4294901760
    %5195 = vmatpush1.msra.mxu0 %v5194
    %5196 = vmatprep.subr.mxu0 0.0
    %v5197 = vand.u32 %v4789, 4294901760
    %5198 = vmatpush1.msra.mxu0 %v5197
    %5199 = vmatprep.subr.mxu0 0.0
    %v5200 = vand.u32 %v4790, 4294901760
    %5201 = vmatpush1.msra.mxu0 %v5200
    %5202 = vmatprep.subr.mxu0 0.0
    %v5203 = vand.u32 %v4791, 4294901760
    %5204 = vmatpush1.msra.mxu0 %v5203
    %5205 = vmatprep.subr.mxu0 0.0
    %v5206 = vand.u32 %v4792, 4294901760
    %5207 = vmatpush1.msra.mxu0 %v5206
    %5208 = vmatprep.subr.mxu0 0.0
    %v5209 = vand.u32 %v4793, 4294901760
    %5210 = vmatpush1.msra.mxu0 %v5209
    %5211 = vmatprep.subr.mxu0 0.0
    %5212 = vmatpush1.msra.mxu0 0.0
    %5213 = vmatprep.subr.mxu0 0.0
    %5214 = vmatpush1.msra.mxu0 0.0
    %5215 = vmatprep.subr.mxu0 0.0
    %5216 = vmatpush1.msra.mxu0 0.0
    %5217 = vmatprep.subr.mxu0 0.0
    %5218 = vmatpush1.msra.mxu0 0.0
    %5219 = vmatprep.subr.mxu0 0.0
    %5220 = vmatpush1.msra.mxu0 0.0
    %5221 = vmatprep.subr.mxu0 0.0
    %5222 = vmatpush1.msra.mxu0 0.0
    %5223 = vmatprep.subr.mxu0 0.0
    %5224 = vmatpush1.msra.mxu0 0.0
    %5225 = vmatprep.subr.mxu0 0.0
    %5226 = vmatpush1.msra.mxu0 0.0
    %5227 = vmatprep.subr.mxu0 0.0
    %5228 = vmatpush1.msra.mxu0 0.0
    %5229 = vmatprep.subr.mxu0 0.0
    %5230 = vmatpush1.msra.mxu0 0.0
    %5231 = vmatprep.subr.mxu0 0.0
    %5232 = vmatpush1.msra.mxu0 0.0
    %5233 = vmatprep.subr.mxu0 0.0
    %5234 = vmatpush1.msra.mxu0 0.0
    %5235 = vmatprep.subr.mxu0 0.0
    %5236 = vmatpush1.msra.mxu0 0.0
    %5237 = vmatprep.subr.mxu0 0.0
    %5238 = vmatpush1.msra.mxu0 0.0
    %5239 = vmatprep.subr.mxu0 0.0
    %5240 = vmatpush1.msra.mxu0 0.0
    %5241 = vmatprep.subr.mxu0 0.0
    %5242 = vmatpush1.msra.mxu0 0.0
    %5243 = vmatprep.mubr.f32.mxu0 0.0
    %v5244 = vand.u32 %v4775, 4294901760
    %v5245 = vsub.f32 %v4775, %v5244
    %v5246 = vand.u32 %v5245, 4294901760
    %5247 = vmatmul.mubr.f32.gmra.mrb[0].mxu0 %v5246
    %v5248 = vpop.f32.mrb[0].mxu0
    %v5249 = vadd.f32 %v5153, %v5248
    %v5250 = vpop.f32.mrb[0].mxu0
    %5251 = vmatprep.mubr.f32.mxu0 0.0
    %v5252 = vand.u32 %v4776, 4294901760
    %v5253 = vsub.f32 %v4776, %v5252
    %v5254 = vand.u32 %v5253, 4294901760
    %5255 = vmatmul.mubr.f32.gmra.mrb[0].mxu0 %v5254
    %v5256 = vpop.f32.mrb[0].mxu0
    %v5257 = vadd.f32 %v5160, %v5256
    %v5258 = vpop.f32.mrb[0].mxu0
    %5259 = vdwg.mxu0
    %5260 = vmatprep.subr.mxu0 0.0
    %v5261 = vand.u32 %v4778, 4294901760
    %v5262 = vsub.f32 %v4778, %v5261
    %v5263 = vand.u32 %v5262, 4294901760
    %5264 = vmatpush1.msra.mxu0 %v5263
    %5265 = vmatprep.subr.mxu0 0.0
    %v5266 = vand.u32 %v4779, 4294901760
    %v5267 = vsub.f32 %v4779, %v5266
    %v5268 = vand.u32 %v5267, 4294901760
    %5269 = vmatpush1.msra.mxu0 %v5268
    %5270 = vmatprep.subr.mxu0 0.0
    %v5271 = vand.u32 %v4780, 4294901760
    %v5272 = vsub.f32 %v4780, %v5271
    %v5273 = vand.u32 %v5272, 4294901760
    %5274 = vmatpush1.msra.mxu0 %v5273
    %5275 = vmatprep.subr.mxu0 0.0
    %v5276 = vand.u32 %v4781, 4294901760
    %v5277 = vsub.f32 %v4781, %v5276
    %v5278 = vand.u32 %v5277, 4294901760
    %5279 = vmatpush1.msra.mxu0 %v5278
    %5280 = vmatprep.subr.mxu0 0.0
    %v5281 = vand.u32 %v4782, 4294901760
    %v5282 = vsub.f32 %v4782, %v5281
    %v5283 = vand.u32 %v5282, 4294901760
    %5284 = vmatpush1.msra.mxu0 %v5283
    %5285 = vmatprep.subr.mxu0 0.0
    %v5286 = vand.u32 %v4783, 4294901760
    %v5287 = vsub.f32 %v4783, %v5286
    %v5288 = vand.u32 %v5287, 4294901760
    %5289 = vmatpush1.msra.mxu0 %v5288
    %5290 = vmatprep.subr.mxu0 0.0
    %v5291 = vand.u32 %v4784, 4294901760
    %v5292 = vsub.f32 %v4784, %v5291
    %v5293 = vand.u32 %v5292, 4294901760
    %5294 = vmatpush1.msra.mxu0 %v5293
    %5295 = vmatprep.subr.mxu0 0.0
    %v5296 = vand.u32 %v4785, 4294901760
    %v5297 = vsub.f32 %v4785, %v5296
    %v5298 = vand.u32 %v5297, 4294901760
    %5299 = vmatpush1.msra.mxu0 %v5298
    %5300 = vmatprep.subr.mxu0 0.0
    %v5301 = vand.u32 %v4786, 4294901760
    %v5302 = vsub.f32 %v4786, %v5301
    %v5303 = vand.u32 %v5302, 4294901760
    %5304 = vmatpush1.msra.mxu0 %v5303
    %5305 = vmatprep.subr.mxu0 0.0
    %v5306 = vand.u32 %v4787, 4294901760
    %v5307 = vsub.f32 %v4787, %v5306
    %v5308 = vand.u32 %v5307, 4294901760
    %5309 = vmatpush1.msra.mxu0 %v5308
    %5310 = vmatprep.subr.mxu0 0.0
    %v5311 = vand.u32 %v4788, 4294901760
    %v5312 = vsub.f32 %v4788, %v5311
    %v5313 = vand.u32 %v5312, 4294901760
    %5314 = vmatpush1.msra.mxu0 %v5313
    %5315 = vmatprep.subr.mxu0 0.0
    %v5316 = vand.u32 %v4789, 4294901760
    %v5317 = vsub.f32 %v4789, %v5316
    %v5318 = vand.u32 %v5317, 4294901760
    %5319 = vmatpush1.msra.mxu0 %v5318
    %5320 = vmatprep.subr.mxu0 0.0
    %v5321 = vand.u32 %v4790, 4294901760
    %v5322 = vsub.f32 %v4790, %v5321
    %v5323 = vand.u32 %v5322, 4294901760
    %5324 = vmatpush1.msra.mxu0 %v5323
    %5325 = vmatprep.subr.mxu0 0.0
    %v5326 = vand.u32 %v4791, 4294901760
    %v5327 = vsub.f32 %v4791, %v5326
    %v5328 = vand.u32 %v5327, 4294901760
    %5329 = vmatpush1.msra.mxu0 %v5328
    %5330 = vmatprep.subr.mxu0 0.0
    %v5331 = vand.u32 %v4792, 4294901760
    %v5332 = vsub.f32 %v4792, %v5331
    %v5333 = vand.u32 %v5332, 4294901760
    %5334 = vmatpush1.msra.mxu0 %v5333
    %5335 = vmatprep.subr.mxu0 0.0
    %v5336 = vand.u32 %v4793, 4294901760
    %v5337 = vsub.f32 %v4793, %v5336
    %v5338 = vand.u32 %v5337, 4294901760
    %5339 = vmatpush1.msra.mxu0 %v5338
    %5340 = vmatprep.subr.mxu0 0.0
    %5341 = vmatpush1.msra.mxu0 0.0
    %5342 = vmatprep.subr.mxu0 0.0
    %5343 = vmatpush1.msra.mxu0 0.0
    %5344 = vmatprep.subr.mxu0 0.0
    %5345 = vmatpush1.msra.mxu0 0.0
    %5346 = vmatprep.subr.mxu0 0.0
    %5347 = vmatpush1.msra.mxu0 0.0
    %5348 = vmatprep.subr.mxu0 0.0
    %5349 = vmatpush1.msra.mxu0 0.0
    %5350 = vmatprep.subr.mxu0 0.0
    %5351 = vmatpush1.msra.mxu0 0.0
    %5352 = vmatprep.subr.mxu0 0.0
    %5353 = vmatpush1.msra.mxu0 0.0
    %5354 = vmatprep.subr.mxu0 0.0
    %5355 = vmatpush1.msra.mxu0 0.0
    %5356 = vmatprep.subr.mxu0 0.0
    %5357 = vmatpush1.msra.mxu0 0.0
    %5358 = vmatprep.subr.mxu0 0.0
    %5359 = vmatpush1.msra.mxu0 0.0
    %5360 = vmatprep.subr.mxu0 0.0
    %5361 = vmatpush1.msra.mxu0 0.0
    %5362 = vmatprep.subr.mxu0 0.0
    %5363 = vmatpush1.msra.mxu0 0.0
    %5364 = vmatprep.subr.mxu0 0.0
    %5365 = vmatpush1.msra.mxu0 0.0
    %5366 = vmatprep.subr.mxu0 0.0
    %5367 = vmatpush1.msra.mxu0 0.0
    %5368 = vmatprep.subr.mxu0 0.0
    %5369 = vmatpush1.msra.mxu0 0.0
    %5370 = vmatprep.subr.mxu0 0.0
    %5371 = vmatpush1.msra.mxu0 0.0
    %5372 = vmatprep.mubr.f32.mxu0 0.0
    %v5373 = vand.u32 %v4775, 4294901760
    %5374 = vmatmul.mubr.f32.gmra.mrb[0].mxu0 %v5373
    %v5375 = vpop.f32.mrb[0].mxu0
    %v5376 = vadd.f32 %v5249, %v5375
    %v5377 = vpop.f32.mrb[0].mxu0
    %5378 = vmatprep.mubr.f32.mxu0 0.0
    %v5379 = vand.u32 %v4776, 4294901760
    %5380 = vmatmul.mubr.f32.gmra.mrb[0].mxu0 %v5379
    %v5381 = vpop.f32.mrb[0].mxu0
    %v5382 = vadd.f32 %v5257, %v5381
    %v5383 = vpop.f32.mrb[0].mxu0
    %5384 = vdwg.mxu0
    %5385 = vmatprep.subr.mxu0 0.0
    %v5386 = vand.u32 %v4778, 4294901760
    %5387 = vmatpush1.msra.mxu0 %v5386
    %5388 = vmatprep.subr.mxu0 0.0
    %v5389 = vand.u32 %v4779, 4294901760
    %5390 = vmatpush1.msra.mxu0 %v5389
    %5391 = vmatprep.subr.mxu0 0.0
    %v5392 = vand.u32 %v4780, 4294901760
    %5393 = vmatpush1.msra.mxu0 %v5392
    %5394 = vmatprep.subr.mxu0 0.0
    %v5395 = vand.u32 %v4781, 4294901760
    %5396 = vmatpush1.msra.mxu0 %v5395
    %5397 = vmatprep.subr.mxu0 0.0
    %v5398 = vand.u32 %v4782, 4294901760
    %5399 = vmatpush1.msra.mxu0 %v5398
    %5400 = vmatprep.subr.mxu0 0.0
    %v5401 = vand.u32 %v4783, 4294901760
    %5402 = vmatpush1.msra.mxu0 %v5401
    %5403 = vmatprep.subr.mxu0 0.0
    %v5404 = vand.u32 %v4784, 4294901760
    %5405 = vmatpush1.msra.mxu0 %v5404
    %5406 = vmatprep.subr.mxu0 0.0
    %v5407 = vand.u32 %v4785, 4294901760
    %5408 = vmatpush1.msra.mxu0 %v5407
    %5409 = vmatprep.subr.mxu0 0.0
    %v5410 = vand.u32 %v4786, 4294901760
    %5411 = vmatpush1.msra.mxu0 %v5410
    %5412 = vmatprep.subr.mxu0 0.0
    %v5413 = vand.u32 %v4787, 4294901760
    %5414 = vmatpush1.msra.mxu0 %v5413
    %5415 = vmatprep.subr.mxu0 0.0
    %v5416 = vand.u32 %v4788, 4294901760
    %5417 = vmatpush1.msra.mxu0 %v5416
    %5418 = vmatprep.subr.mxu0 0.0
    %v5419 = vand.u32 %v4789, 4294901760
    %5420 = vmatpush1.msra.mxu0 %v5419
    %5421 = vmatprep.subr.mxu0 0.0
    %v5422 = vand.u32 %v4790, 4294901760
    %5423 = vmatpush1.msra.mxu0 %v5422
    %5424 = vmatprep.subr.mxu0 0.0
    %v5425 = vand.u32 %v4791, 4294901760
    %5426 = vmatpush1.msra.mxu0 %v5425
    %5427 = vmatprep.subr.mxu0 0.0
    %v5428 = vand.u32 %v4792, 4294901760
    %5429 = vmatpush1.msra.mxu0 %v5428
    %5430 = vmatprep.subr.mxu0 0.0
    %v5431 = vand.u32 %v4793, 4294901760
    %5432 = vmatpush1.msra.mxu0 %v5431
    %5433 = vmatprep.subr.mxu0 0.0
    %5434 = vmatpush1.msra.mxu0 0.0
    %5435 = vmatprep.subr.mxu0 0.0
    %5436 = vmatpush1.msra.mxu0 0.0
    %5437 = vmatprep.subr.mxu0 0.0
    %5438 = vmatpush1.msra.mxu0 0.0
    %5439 = vmatprep.subr.mxu0 0.0
    %5440 = vmatpush1.msra.mxu0 0.0
    %5441 = vmatprep.subr.mxu0 0.0
    %5442 = vmatpush1.msra.mxu0 0.0
    %5443 = vmatprep.subr.mxu0 0.0
    %5444 = vmatpush1.msra.mxu0 0.0
    %5445 = vmatprep.subr.mxu0 0.0
    %5446 = vmatpush1.msra.mxu0 0.0
    %5447 = vmatprep.subr.mxu0 0.0
    %5448 = vmatpush1.msra.mxu0 0.0
    %5449 = vmatprep.subr.mxu0 0.0
    %5450 = vmatpush1.msra.mxu0 0.0
    %5451 = vmatprep.subr.mxu0 0.0
    %5452 = vmatpush1.msra.mxu0 0.0
    %5453 = vmatprep.subr.mxu0 0.0
    %5454 = vmatpush1.msra.mxu0 0.0
    %5455 = vmatprep.subr.mxu0 0.0
    %5456 = vmatpush1.msra.mxu0 0.0
    %5457 = vmatprep.subr.mxu0 0.0
    %5458 = vmatpush1.msra.mxu0 0.0
    %5459 = vmatprep.subr.mxu0 0.0
    %5460 = vmatpush1.msra.mxu0 0.0
    %5461 = vmatprep.subr.mxu0 0.0
    %5462 = vmatpush1.msra.mxu0 0.0
    %5463 = vmatprep.subr.mxu0 0.0
    %5464 = vmatpush1.msra.mxu0 0.0
    %5465 = vmatprep.mubr.f32.mxu0 0.0
    %v5466 = vand.u32 %v4775, 4294901760
    %5467 = vmatmul.mubr.f32.gmra.mrb[0].mxu0 %v5466
    %v5468 = vpop.f32.mrb[0].mxu0
    %v5469 = vadd.f32 %v5376, %v5468
    %v5470 = vpop.f32.mrb[0].mxu0
    %5471 = vmatprep.mubr.f32.mxu0 0.0
    %v5472 = vand.u32 %v4776, 4294901760
    %5473 = vmatmul.mubr.f32.gmra.mrb[0].mxu0 %v5472
    %v5474 = vpop.f32.mrb[0].mxu0
    %v5475 = vadd.f32 %v5382, %v5474
    %v5476 = vpop.f32.mrb[0].mxu0
    %5477 = vdwg.mxu0
    %s5478 = scalar_lea.vmem [#allocation2], 512
    %v5479 = vld [vmem:[%s5478] sm:$0xff]
    %v5480 = vld [vmem:[%s5478 + $0x8] sm:$0xff]
    %v5481 = vld [vmem:[%s5478 + $0x10] sm:$0xff]
    %v5482 = vld [vmem:[%s5478 + $0x18] sm:$0xff]
    %v5483 = vld [vmem:[%s5478 + $0x20] sm:$0xff]
    %v5484 = vld [vmem:[%s5478 + $0x28] sm:$0xff]
    %v5485 = vld [vmem:[%s5478 + $0x30] sm:$0xff]
    %v5486 = vld [vmem:[%s5478 + $0x38] sm:$0xff]
    %v5487 = vld [vmem:[%s5478 + $0x40] sm:$0xff]
    %v5488 = vld [vmem:[%s5478 + $0x48] sm:$0xff]
    %v5489 = vld [vmem:[%s5478 + $0x50] sm:$0xff]
    %v5490 = vld [vmem:[%s5478 + $0x58] sm:$0xff]
    %v5491 = vld [vmem:[%s5478 + $0x60] sm:$0xff]
    %v5492 = vld [vmem:[%s5478 + $0x68] sm:$0xff]
    %v5493 = vld [vmem:[%s5478 + $0x70] sm:$0xff]
    %v5494 = vld [vmem:[%s5478 + $0x78] sm:$0xff]
    %s5495 = scalar_lea.vmem [#allocation2], 640
    %v5496 = vld [vmem:[%s5495] sm:$0xff]
    %v5497 = vld [vmem:[%s5495 + $0x8] sm:$0xff]
    %v5498 = vld [vmem:[%s5495 + $0x10] sm:$0xff]
    %v5499 = vld [vmem:[%s5495 + $0x18] sm:$0xff]
    %v5500 = vld [vmem:[%s5495 + $0x20] sm:$0xff]
    %v5501 = vld [vmem:[%s5495 + $0x28] sm:$0xff]
    %v5502 = vld [vmem:[%s5495 + $0x30] sm:$0xff]
    %v5503 = vld [vmem:[%s5495 + $0x38] sm:$0xff]
    %v5504 = vld [vmem:[%s5495 + $0x40] sm:$0xff]
    %v5505 = vld [vmem:[%s5495 + $0x48] sm:$0xff]
    %v5506 = vld [vmem:[%s5495 + $0x50] sm:$0xff]
    %v5507 = vld [vmem:[%s5495 + $0x58] sm:$0xff]
    %v5508 = vld [vmem:[%s5495 + $0x60] sm:$0xff]
    %v5509 = vld [vmem:[%s5495 + $0x68] sm:$0xff]
    %v5510 = vld [vmem:[%s5495 + $0x70] sm:$0xff]
    %v5511 = vld [vmem:[%s5495 + $0x78] sm:$0xff]
    %5512 = vmatprep.subr.mxu0 0.0
    %v5513 = vand.u32 %v5479, 4294901760
    %5514 = vmatpush1.msra.mxu0 %v5513
    %5515 = vmatprep.subr.mxu0 0.0
    %v5516 = vand.u32 %v5480, 4294901760
    %5517 = vmatpush1.msra.mxu0 %v5516
    %5518 = vmatprep.subr.mxu0 0.0
    %v5519 = vand.u32 %v5481, 4294901760
    %5520 = vmatpush1.msra.mxu0 %v5519
    %5521 = vmatprep.subr.mxu0 0.0
    %v5522 = vand.u32 %v5482, 4294901760
    %5523 = vmatpush1.msra.mxu0 %v5522
    %5524 = vmatprep.subr.mxu0 0.0
    %v5525 = vand.u32 %v5483, 4294901760
    %5526 = vmatpush1.msra.mxu0 %v5525
    %5527 = vmatprep.subr.mxu0 0.0
    %v5528 = vand.u32 %v5484, 4294901760
    %5529 = vmatpush1.msra.mxu0 %v5528
    %5530 = vmatprep.subr.mxu0 0.0
    %v5531 = vand.u32 %v5485, 4294901760
    %5532 = vmatpush1.msra.mxu0 %v5531
    %5533 = vmatprep.subr.mxu0 0.0
    %v5534 = vand.u32 %v5486, 4294901760
    %5535 = vmatpush1.msra.mxu0 %v5534
    %5536 = vmatprep.subr.mxu0 0.0
    %v5537 = vand.u32 %v5487, 4294901760
    %5538 = vmatpush1.msra.mxu0 %v5537
    %5539 = vmatprep.subr.mxu0 0.0
    %v5540 = vand.u32 %v5488, 4294901760
    %5541 = vmatpush1.msra.mxu0 %v5540
    %5542 = vmatprep.subr.mxu0 0.0
    %v5543 = vand.u32 %v5489, 4294901760
    %5544 = vmatpush1.msra.mxu0 %v5543
    %5545 = vmatprep.subr.mxu0 0.0
    %v5546 = vand.u32 %v5490, 4294901760
    %5547 = vmatpush1.msra.mxu0 %v5546
    %5548 = vmatprep.subr.mxu0 0.0
    %v5549 = vand.u32 %v5491, 4294901760
    %5550 = vmatpush1.msra.mxu0 %v5549
    %5551 = vmatprep.subr.mxu0 0.0
    %v5552 = vand.u32 %v5492, 4294901760
    %5553 = vmatpush1.msra.mxu0 %v5552
    %5554 = vmatprep.subr.mxu0 0.0
    %v5555 = vand.u32 %v5493, 4294901760
    %5556 = vmatpush1.msra.mxu0 %v5555
    %5557 = vmatprep.subr.mxu0 0.0
    %v5558 = vand.u32 %v5494, 4294901760
    %5559 = vmatpush1.msra.mxu0 %v5558
    %5560 = vmatprep.subr.mxu0 0.0
    %5561 = vmatpush1.msra.mxu0 0.0
    %5562 = vmatprep.subr.mxu0 0.0
    %5563 = vmatpush1.msra.mxu0 0.0
    %5564 = vmatprep.subr.mxu0 0.0
    %5565 = vmatpush1.msra.mxu0 0.0
    %5566 = vmatprep.subr.mxu0 0.0
    %5567 = vmatpush1.msra.mxu0 0.0
    %5568 = vmatprep.subr.mxu0 0.0
    %5569 = vmatpush1.msra.mxu0 0.0
    %5570 = vmatprep.subr.mxu0 0.0
    %5571 = vmatpush1.msra.mxu0 0.0
    %5572 = vmatprep.subr.mxu0 0.0
    %5573 = vmatpush1.msra.mxu0 0.0
    %5574 = vmatprep.subr.mxu0 0.0
    %5575 = vmatpush1.msra.mxu0 0.0
    %5576 = vmatprep.subr.mxu0 0.0
    %5577 = vmatpush1.msra.mxu0 0.0
    %5578 = vmatprep.subr.mxu0 0.0
    %5579 = vmatpush1.msra.mxu0 0.0
    %5580 = vmatprep.subr.mxu0 0.0
    %5581 = vmatpush1.msra.mxu0 0.0
    %5582 = vmatprep.subr.mxu0 0.0
    %5583 = vmatpush1.msra.mxu0 0.0
    %5584 = vmatprep.subr.mxu0 0.0
    %5585 = vmatpush1.msra.mxu0 0.0
    %5586 = vmatprep.subr.mxu0 0.0
    %5587 = vmatpush1.msra.mxu0 0.0
    %5588 = vmatprep.subr.mxu0 0.0
    %5589 = vmatpush1.msra.mxu0 0.0
    %5590 = vmatprep.subr.mxu0 0.0
    %5591 = vmatpush1.msra.mxu0 0.0
    %5592 = vmatprep.mubr.f32.mxu0 0.0
    %v5593 = vand.u32 %v5469, 4294901760
    %v5594 = vsub.f32 %v5469, %v5593
    %v5595 = vand.u32 %v5594, 4294901760
    %v5596 = vsub.f32 %v5594, %v5595
    %v5597 = vand.u32 %v5596, 4294901760
    %5598 = vmatmul.mubr.f32.gmra.mrb[0].mxu0 %v5597
    %v5599 = vpop.f32.mrb[0].mxu0
    %v5600 = vadd.f32 0.0, %v5599
    %v5601 = vpop.f32.mrb[0].mxu0
    %5602 = vmatprep.mubr.f32.mxu0 0.0
    %v5603 = vand.u32 %v5475, 4294901760
    %v5604 = vsub.f32 %v5475, %v5603
    %v5605 = vand.u32 %v5604, 4294901760
    %v5606 = vsub.f32 %v5604, %v5605
    %v5607 = vand.u32 %v5606, 4294901760
    %5608 = vmatmul.mubr.f32.gmra.mrb[0].mxu0 %v5607
    %v5609 = vpop.f32.mrb[0].mxu0
    %v5610 = vadd.f32 0.0, %v5609
    %v5611 = vpop.f32.mrb[0].mxu0
    %5612 = vdwg.mxu0
    %5613 = vmatprep.subr.mxu0 0.0
    %v5614 = vand.u32 %v5479, 4294901760
    %v5615 = vsub.f32 %v5479, %v5614
    %v5616 = vand.u32 %v5615, 4294901760
    %v5617 = vsub.f32 %v5615, %v5616
    %v5618 = vand.u32 %v5617, 4294901760
    %5619 = vmatpush1.msra.mxu0 %v5618
    %5620 = vmatprep.subr.mxu0 0.0
    %v5621 = vand.u32 %v5480, 4294901760
    %v5622 = vsub.f32 %v5480, %v5621
    %v5623 = vand.u32 %v5622, 4294901760
    %v5624 = vsub.f32 %v5622, %v5623
    %v5625 = vand.u32 %v5624, 4294901760
    %5626 = vmatpush1.msra.mxu0 %v5625
    %5627 = vmatprep.subr.mxu0 0.0
    %v5628 = vand.u32 %v5481, 4294901760
    %v5629 = vsub.f32 %v5481, %v5628
    %v5630 = vand.u32 %v5629, 4294901760
    %v5631 = vsub.f32 %v5629, %v5630
    %v5632 = vand.u32 %v5631, 4294901760
    %5633 = vmatpush1.msra.mxu0 %v5632
    %5634 = vmatprep.subr.mxu0 0.0
    %v5635 = vand.u32 %v5482, 4294901760
    %v5636 = vsub.f32 %v5482, %v5635
    %v5637 = vand.u32 %v5636, 4294901760
    %v5638 = vsub.f32 %v5636, %v5637
    %v5639 = vand.u32 %v5638, 4294901760
    %5640 = vmatpush1.msra.mxu0 %v5639
    %5641 = vmatprep.subr.mxu0 0.0
    %v5642 = vand.u32 %v5483, 4294901760
    %v5643 = vsub.f32 %v5483, %v5642
    %v5644 = vand.u32 %v5643, 4294901760
    %v5645 = vsub.f32 %v5643, %v5644
    %v5646 = vand.u32 %v5645, 4294901760
    %5647 = vmatpush1.msra.mxu0 %v5646
    %5648 = vmatprep.subr.mxu0 0.0
    %v5649 = vand.u32 %v5484, 4294901760
    %v5650 = vsub.f32 %v5484, %v5649
    %v5651 = vand.u32 %v5650, 4294901760
    %v5652 = vsub.f32 %v5650, %v5651
    %v5653 = vand.u32 %v5652, 4294901760
    %5654 = vmatpush1.msra.mxu0 %v5653
    %5655 = vmatprep.subr.mxu0 0.0
    %v5656 = vand.u32 %v5485, 4294901760
    %v5657 = vsub.f32 %v5485, %v5656
    %v5658 = vand.u32 %v5657, 4294901760
    %v5659 = vsub.f32 %v5657, %v5658
    %v5660 = vand.u32 %v5659, 4294901760
    %5661 = vmatpush1.msra.mxu0 %v5660
    %5662 = vmatprep.subr.mxu0 0.0
    %v5663 = vand.u32 %v5486, 4294901760
    %v5664 = vsub.f32 %v5486, %v5663
    %v5665 = vand.u32 %v5664, 4294901760
    %v5666 = vsub.f32 %v5664, %v5665
    %v5667 = vand.u32 %v5666, 4294901760
    %5668 = vmatpush1.msra.mxu0 %v5667
    %5669 = vmatprep.subr.mxu0 0.0
    %v5670 = vand.u32 %v5487, 4294901760
    %v5671 = vsub.f32 %v5487, %v5670
    %v5672 = vand.u32 %v5671, 4294901760
    %v5673 = vsub.f32 %v5671, %v5672
    %v5674 = vand.u32 %v5673, 4294901760
    %5675 = vmatpush1.msra.mxu0 %v5674
    %5676 = vmatprep.subr.mxu0 0.0
    %v5677 = vand.u32 %v5488, 4294901760
    %v5678 = vsub.f32 %v5488, %v5677
    %v5679 = vand.u32 %v5678, 4294901760
    %v5680 = vsub.f32 %v5678, %v5679
    %v5681 = vand.u32 %v5680, 4294901760
    %5682 = vmatpush1.msra.mxu0 %v5681
    %5683 = vmatprep.subr.mxu0 0.0
    %v5684 = vand.u32 %v5489, 4294901760
    %v5685 = vsub.f32 %v5489, %v5684
    %v5686 = vand.u32 %v5685, 4294901760
    %v5687 = vsub.f32 %v5685, %v5686
    %v5688 = vand.u32 %v5687, 4294901760
    %5689 = vmatpush1.msra.mxu0 %v5688
    %5690 = vmatprep.subr.mxu0 0.0
    %v5691 = vand.u32 %v5490, 4294901760
    %v5692 = vsub.f32 %v5490, %v5691
    %v5693 = vand.u32 %v5692, 4294901760
    %v5694 = vsub.f32 %v5692, %v5693
    %v5695 = vand.u32 %v5694, 4294901760
    %5696 = vmatpush1.msra.mxu0 %v5695
    %5697 = vmatprep.subr.mxu0 0.0
    %v5698 = vand.u32 %v5491, 4294901760
    %v5699 = vsub.f32 %v5491, %v5698
    %v5700 = vand.u32 %v5699, 4294901760
    %v5701 = vsub.f32 %v5699, %v5700
    %v5702 = vand.u32 %v5701, 4294901760
    %5703 = vmatpush1.msra.mxu0 %v5702
    %5704 = vmatprep.subr.mxu0 0.0
    %v5705 = vand.u32 %v5492, 4294901760
    %v5706 = vsub.f32 %v5492, %v5705
    %v5707 = vand.u32 %v5706, 4294901760
    %v5708 = vsub.f32 %v5706, %v5707
    %v5709 = vand.u32 %v5708, 4294901760
    %5710 = vmatpush1.msra.mxu0 %v5709
    %5711 = vmatprep.subr.mxu0 0.0
    %v5712 = vand.u32 %v5493, 4294901760
    %v5713 = vsub.f32 %v5493, %v5712
    %v5714 = vand.u32 %v5713, 4294901760
    %v5715 = vsub.f32 %v5713, %v5714
    %v5716 = vand.u32 %v5715, 4294901760
    %5717 = vmatpush1.msra.mxu0 %v5716
    %5718 = vmatprep.subr.mxu0 0.0
    %v5719 = vand.u32 %v5494, 4294901760
    %v5720 = vsub.f32 %v5494, %v5719
    %v5721 = vand.u32 %v5720, 4294901760
    %v5722 = vsub.f32 %v5720, %v5721
    %v5723 = vand.u32 %v5722, 4294901760
    %5724 = vmatpush1.msra.mxu0 %v5723
    %5725 = vmatprep.subr.mxu0 0.0
    %5726 = vmatpush1.msra.mxu0 0.0
    %5727 = vmatprep.subr.mxu0 0.0
    %5728 = vmatpush1.msra.mxu0 0.0
    %5729 = vmatprep.subr.mxu0 0.0
    %5730 = vmatpush1.msra.mxu0 0.0
    %5731 = vmatprep.subr.mxu0 0.0
    %5732 = vmatpush1.msra.mxu0 0.0
    %5733 = vmatprep.subr.mxu0 0.0
    %5734 = vmatpush1.msra.mxu0 0.0
    %5735 = vmatprep.subr.mxu0 0.0
    %5736 = vmatpush1.msra.mxu0 0.0
    %5737 = vmatprep.subr.mxu0 0.0
    %5738 = vmatpush1.msra.mxu0 0.0
    %5739 = vmatprep.subr.mxu0 0.0
    %5740 = vmatpush1.msra.mxu0 0.0
    %5741 = vmatprep.subr.mxu0 0.0
    %5742 = vmatpush1.msra.mxu0 0.0
    %5743 = vmatprep.subr.mxu0 0.0
    %5744 = vmatpush1.msra.mxu0 0.0
    %5745 = vmatprep.subr.mxu0 0.0
    %5746 = vmatpush1.msra.mxu0 0.0
    %5747 = vmatprep.subr.mxu0 0.0
    %5748 = vmatpush1.msra.mxu0 0.0
    %5749 = vmatprep.subr.mxu0 0.0
    %5750 = vmatpush1.msra.mxu0 0.0
    %5751 = vmatprep.subr.mxu0 0.0
    %5752 = vmatpush1.msra.mxu0 0.0
    %5753 = vmatprep.subr.mxu0 0.0
    %5754 = vmatpush1.msra.mxu0 0.0
    %5755 = vmatprep.subr.mxu0 0.0
    %5756 = vmatpush1.msra.mxu0 0.0
    %5757 = vmatprep.mubr.f32.mxu0 0.0
    %v5758 = vand.u32 %v5469, 4294901760
    %5759 = vmatmul.mubr.f32.gmra.mrb[0].mxu0 %v5758
    %v5760 = vpop.f32.mrb[0].mxu0
    %v5761 = vadd.f32 %v5600, %v5760
    %v5762 = vpop.f32.mrb[0].mxu0
    %5763 = vmatprep.mubr.f32.mxu0 0.0
    %v5764 = vand.u32 %v5475, 4294901760
    %5765 = vmatmul.mubr.f32.gmra.mrb[0].mxu0 %v5764
    %v5766 = vpop.f32.mrb[0].mxu0
    %v5767 = vadd.f32 %v5610, %v5766
    %v5768 = vpop.f32.mrb[0].mxu0
    %5769 = vdwg.mxu0
    %5770 = vmatprep.subr.mxu0 0.0
    %v5771 = vand.u32 %v5479, 4294901760
    %v5772 = vsub.f32 %v5479, %v5771
    %5773 = vmatpush1.msra.mxu0 %v5772
    %5774 = vmatprep.subr.mxu0 0.0
    %v5775 = vand.u32 %v5480, 4294901760
    %v5776 = vsub.f32 %v5480, %v5775
    %5777 = vmatpush1.msra.mxu0 %v5776
    %5778 = vmatprep.subr.mxu0 0.0
    %v5779 = vand.u32 %v5481, 4294901760
    %v5780 = vsub.f32 %v5481, %v5779
    %5781 = vmatpush1.msra.mxu0 %v5780
    %5782 = vmatprep.subr.mxu0 0.0
    %v5783 = vand.u32 %v5482, 4294901760
    %v5784 = vsub.f32 %v5482, %v5783
    %5785 = vmatpush1.msra.mxu0 %v5784
    %5786 = vmatprep.subr.mxu0 0.0
    %v5787 = vand.u32 %v5483, 4294901760
    %v5788 = vsub.f32 %v5483, %v5787
    %5789 = vmatpush1.msra.mxu0 %v5788
    %5790 = vmatprep.subr.mxu0 0.0
    %v5791 = vand.u32 %v5484, 4294901760
    %v5792 = vsub.f32 %v5484, %v5791
    %5793 = vmatpush1.msra.mxu0 %v5792
    %5794 = vmatprep.subr.mxu0 0.0
    %v5795 = vand.u32 %v5485, 4294901760
    %v5796 = vsub.f32 %v5485, %v5795
    %5797 = vmatpush1.msra.mxu0 %v5796
    %5798 = vmatprep.subr.mxu0 0.0
    %v5799 = vand.u32 %v5486, 4294901760
    %v5800 = vsub.f32 %v5486, %v5799
    %5801 = vmatpush1.msra.mxu0 %v5800
    %5802 = vmatprep.subr.mxu0 0.0
    %v5803 = vand.u32 %v5487, 4294901760
    %v5804 = vsub.f32 %v5487, %v5803
    %5805 = vmatpush1.msra.mxu0 %v5804
    %5806 = vmatprep.subr.mxu0 0.0
    %v5807 = vand.u32 %v5488, 4294901760
    %v5808 = vsub.f32 %v5488, %v5807
    %5809 = vmatpush1.msra.mxu0 %v5808
    %5810 = vmatprep.subr.mxu0 0.0
    %v5811 = vand.u32 %v5489, 4294901760
    %v5812 = vsub.f32 %v5489, %v5811
    %5813 = vmatpush1.msra.mxu0 %v5812
    %5814 = vmatprep.subr.mxu0 0.0
    %v5815 = vand.u32 %v5490, 4294901760
    %v5816 = vsub.f32 %v5490, %v5815
    %5817 = vmatpush1.msra.mxu0 %v5816
    %5818 = vmatprep.subr.mxu0 0.0
    %v5819 = vand.u32 %v5491, 4294901760
    %v5820 = vsub.f32 %v5491, %v5819
    %5821 = vmatpush1.msra.mxu0 %v5820
    %5822 = vmatprep.subr.mxu0 0.0
    %v5823 = vand.u32 %v5492, 4294901760
    %v5824 = vsub.f32 %v5492, %v5823
    %5825 = vmatpush1.msra.mxu0 %v5824
    %5826 = vmatprep.subr.mxu0 0.0
    %v5827 = vand.u32 %v5493, 4294901760
    %v5828 = vsub.f32 %v5493, %v5827
    %5829 = vmatpush1.msra.mxu0 %v5828
    %5830 = vmatprep.subr.mxu0 0.0
    %v5831 = vand.u32 %v5494, 4294901760
    %v5832 = vsub.f32 %v5494, %v5831
    %5833 = vmatpush1.msra.mxu0 %v5832
    %5834 = vmatprep.subr.mxu0 0.0
    %5835 = vmatpush1.msra.mxu0 0.0
    %5836 = vmatprep.subr.mxu0 0.0
    %5837 = vmatpush1.msra.mxu0 0.0
    %5838 = vmatprep.subr.mxu0 0.0
    %5839 = vmatpush1.msra.mxu0 0.0
    %5840 = vmatprep.subr.mxu0 0.0
    %5841 = vmatpush1.msra.mxu0 0.0
    %5842 = vmatprep.subr.mxu0 0.0
    %5843 = vmatpush1.msra.mxu0 0.0
    %5844 = vmatprep.subr.mxu0 0.0
    %5845 = vmatpush1.msra.mxu0 0.0
    %5846 = vmatprep.subr.mxu0 0.0
    %5847 = vmatpush1.msra.mxu0 0.0
    %5848 = vmatprep.subr.mxu0 0.0
    %5849 = vmatpush1.msra.mxu0 0.0
    %5850 = vmatprep.subr.mxu0 0.0
    %5851 = vmatpush1.msra.mxu0 0.0
    %5852 = vmatprep.subr.mxu0 0.0
    %5853 = vmatpush1.msra.mxu0 0.0
    %5854 = vmatprep.subr.mxu0 0.0
    %5855 = vmatpush1.msra.mxu0 0.0
    %5856 = vmatprep.subr.mxu0 0.0
    %5857 = vmatpush1.msra.mxu0 0.0
    %5858 = vmatprep.subr.mxu0 0.0
    %5859 = vmatpush1.msra.mxu0 0.0
    %5860 = vmatprep.subr.mxu0 0.0
    %5861 = vmatpush1.msra.mxu0 0.0
    %5862 = vmatprep.subr.mxu0 0.0
    %5863 = vmatpush1.msra.mxu0 0.0
    %5864 = vmatprep.subr.mxu0 0.0
    %5865 = vmatpush1.msra.mxu0 0.0
    %5866 = vmatprep.mubr.f32.mxu0 0.0
    %v5867 = vand.u32 %v5469, 4294901760
    %v5868 = vsub.f32 %v5469, %v5867
    %5869 = vmatmul.mubr.f32.gmra.mrb[0].mxu0 %v5868
    %v5870 = vpop.f32.mrb[0].mxu0
    %v5871 = vadd.f32 %v5761, %v5870
    %v5872 = vpop.f32.mrb[0].mxu0
    %5873 = vmatprep.mubr.f32.mxu0 0.0
    %v5874 = vand.u32 %v5475, 4294901760
    %v5875 = vsub.f32 %v5475, %v5874
    %5876 = vmatmul.mubr.f32.gmra.mrb[0].mxu0 %v5875
    %v5877 = vpop.f32.mrb[0].mxu0
    %v5878 = vadd.f32 %v5767, %v5877
    %v5879 = vpop.f32.mrb[0].mxu0
    %5880 = vdwg.mxu0
    %5881 = vmatprep.subr.mxu0 0.0
    %v5882 = vand.u32 %v5479, 4294901760
    %5883 = vmatpush1.msra.mxu0 %v5882
    %5884 = vmatprep.subr.mxu0 0.0
    %v5885 = vand.u32 %v5480, 4294901760
    %5886 = vmatpush1.msra.mxu0 %v5885
    %5887 = vmatprep.subr.mxu0 0.0
    %v5888 = vand.u32 %v5481, 4294901760
    %5889 = vmatpush1.msra.mxu0 %v5888
    %5890 = vmatprep.subr.mxu0 0.0
    %v5891 = vand.u32 %v5482, 4294901760
    %5892 = vmatpush1.msra.mxu0 %v5891
    %5893 = vmatprep.subr.mxu0 0.0
    %v5894 = vand.u32 %v5483, 4294901760
    %5895 = vmatpush1.msra.mxu0 %v5894
    %5896 = vmatprep.subr.mxu0 0.0
    %v5897 = vand.u32 %v5484, 4294901760
    %5898 = vmatpush1.msra.mxu0 %v5897
    %5899 = vmatprep.subr.mxu0 0.0
    %v5900 = vand.u32 %v5485, 4294901760
    %5901 = vmatpush1.msra.mxu0 %v5900
    %5902 = vmatprep.subr.mxu0 0.0
    %v5903 = vand.u32 %v5486, 4294901760
    %5904 = vmatpush1.msra.mxu0 %v5903
    %5905 = vmatprep.subr.mxu0 0.0
    %v5906 = vand.u32 %v5487, 4294901760
    %5907 = vmatpush1.msra.mxu0 %v5906
    %5908 = vmatprep.subr.mxu0 0.0
    %v5909 = vand.u32 %v5488, 4294901760
    %5910 = vmatpush1.msra.mxu0 %v5909
    %5911 = vmatprep.subr.mxu0 0.0
    %v5912 = vand.u32 %v5489, 4294901760
    %5913 = vmatpush1.msra.mxu0 %v5912
    %5914 = vmatprep.subr.mxu0 0.0
    %v5915 = vand.u32 %v5490, 4294901760
    %5916 = vmatpush1.msra.mxu0 %v5915
    %5917 = vmatprep.subr.mxu0 0.0
    %v5918 = vand.u32 %v5491, 4294901760
    %5919 = vmatpush1.msra.mxu0 %v5918
    %5920 = vmatprep.subr.mxu0 0.0
    %v5921 = vand.u32 %v5492, 4294901760
    %5922 = vmatpush1.msra.mxu0 %v5921
    %5923 = vmatprep.subr.mxu0 0.0
    %v5924 = vand.u32 %v5493, 4294901760
    %5925 = vmatpush1.msra.mxu0 %v5924
    %5926 = vmatprep.subr.mxu0 0.0
    %v5927 = vand.u32 %v5494, 4294901760
    %5928 = vmatpush1.msra.mxu0 %v5927
    %5929 = vmatprep.subr.mxu0 0.0
    %5930 = vmatpush1.msra.mxu0 0.0
    %5931 = vmatprep.subr.mxu0 0.0
    %5932 = vmatpush1.msra.mxu0 0.0
    %5933 = vmatprep.subr.mxu0 0.0
    %5934 = vmatpush1.msra.mxu0 0.0
    %5935 = vmatprep.subr.mxu0 0.0
    %5936 = vmatpush1.msra.mxu0 0.0
    %5937 = vmatprep.subr.mxu0 0.0
    %5938 = vmatpush1.msra.mxu0 0.0
    %5939 = vmatprep.subr.mxu0 0.0
    %5940 = vmatpush1.msra.mxu0 0.0
    %5941 = vmatprep.subr.mxu0 0.0
    %5942 = vmatpush1.msra.mxu0 0.0
    %5943 = vmatprep.subr.mxu0 0.0
    %5944 = vmatpush1.msra.mxu0 0.0
    %5945 = vmatprep.subr.mxu0 0.0
    %5946 = vmatpush1.msra.mxu0 0.0
    %5947 = vmatprep.subr.mxu0 0.0
    %5948 = vmatpush1.msra.mxu0 0.0
    %5949 = vmatprep.subr.mxu0 0.0
    %5950 = vmatpush1.msra.mxu0 0.0
    %5951 = vmatprep.subr.mxu0 0.0
    %5952 = vmatpush1.msra.mxu0 0.0
    %5953 = vmatprep.subr.mxu0 0.0
    %5954 = vmatpush1.msra.mxu0 0.0
    %5955 = vmatprep.subr.mxu0 0.0
    %5956 = vmatpush1.msra.mxu0 0.0
    %5957 = vmatprep.subr.mxu0 0.0
    %5958 = vmatpush1.msra.mxu0 0.0
    %5959 = vmatprep.subr.mxu0 0.0
    %5960 = vmatpush1.msra.mxu0 0.0
    %5961 = vmatprep.mubr.f32.mxu0 0.0
    %v5962 = vand.u32 %v5469, 4294901760
    %v5963 = vsub.f32 %v5469, %v5962
    %v5964 = vand.u32 %v5963, 4294901760
    %5965 = vmatmul.mubr.f32.gmra.mrb[0].mxu0 %v5964
    %v5966 = vpop.f32.mrb[0].mxu0
    %v5967 = vadd.f32 %v5871, %v5966
    %v5968 = vpop.f32.mrb[0].mxu0
    %5969 = vmatprep.mubr.f32.mxu0 0.0
    %v5970 = vand.u32 %v5475, 4294901760
    %v5971 = vsub.f32 %v5475, %v5970
    %v5972 = vand.u32 %v5971, 4294901760
    %5973 = vmatmul.mubr.f32.gmra.mrb[0].mxu0 %v5972
    %v5974 = vpop.f32.mrb[0].mxu0
    %v5975 = vadd.f32 %v5878, %v5974
    %v5976 = vpop.f32.mrb[0].mxu0
    %5977 = vdwg.mxu0
    %5978 = vmatprep.subr.mxu0 0.0
    %v5979 = vand.u32 %v5479, 4294901760
    %v5980 = vsub.f32 %v5479, %v5979
    %v5981 = vand.u32 %v5980, 4294901760
    %5982 = vmatpush1.msra.mxu0 %v5981
    %5983 = vmatprep.subr.mxu0 0.0
    %v5984 = vand.u32 %v5480, 4294901760
    %v5985 = vsub.f32 %v5480, %v5984
    %v5986 = vand.u32 %v5985, 4294901760
    %5987 = vmatpush1.msra.mxu0 %v5986
    %5988 = vmatprep.subr.mxu0 0.0
    %v5989 = vand.u32 %v5481, 4294901760
    %v5990 = vsub.f32 %v5481, %v5989
    %v5991 = vand.u32 %v5990, 4294901760
    %5992 = vmatpush1.msra.mxu0 %v5991
    %5993 = vmatprep.subr.mxu0 0.0
    %v5994 = vand.u32 %v5482, 4294901760
    %v5995 = vsub.f32 %v5482, %v5994
    %v5996 = vand.u32 %v5995, 4294901760
    %5997 = vmatpush1.msra.mxu0 %v5996
    %5998 = vmatprep.subr.mxu0 0.0
    %v5999 = vand.u32 %v5483, 4294901760
    %v6000 = vsub.f32 %v5483, %v5999
    %v6001 = vand.u32 %v6000, 4294901760
    %6002 = vmatpush1.msra.mxu0 %v6001
    %6003 = vmatprep.subr.mxu0 0.0
    %v6004 = vand.u32 %v5484, 4294901760
    %v6005 = vsub.f32 %v5484, %v6004
    %v6006 = vand.u32 %v6005, 4294901760
    %6007 = vmatpush1.msra.mxu0 %v6006
    %6008 = vmatprep.subr.mxu0 0.0
    %v6009 = vand.u32 %v5485, 4294901760
    %v6010 = vsub.f32 %v5485, %v6009
    %v6011 = vand.u32 %v6010, 4294901760
    %6012 = vmatpush1.msra.mxu0 %v6011
    %6013 = vmatprep.subr.mxu0 0.0
    %v6014 = vand.u32 %v5486, 4294901760
    %v6015 = vsub.f32 %v5486, %v6014
    %v6016 = vand.u32 %v6015, 4294901760
    %6017 = vmatpush1.msra.mxu0 %v6016
    %6018 = vmatprep.subr.mxu0 0.0
    %v6019 = vand.u32 %v5487, 4294901760
    %v6020 = vsub.f32 %v5487, %v6019
    %v6021 = vand.u32 %v6020, 4294901760
    %6022 = vmatpush1.msra.mxu0 %v6021
    %6023 = vmatprep.subr.mxu0 0.0
    %v6024 = vand.u32 %v5488, 4294901760
    %v6025 = vsub.f32 %v5488, %v6024
    %v6026 = vand.u32 %v6025, 4294901760
    %6027 = vmatpush1.msra.mxu0 %v6026
    %6028 = vmatprep.subr.mxu0 0.0
    %v6029 = vand.u32 %v5489, 4294901760
    %v6030 = vsub.f32 %v5489, %v6029
    %v6031 = vand.u32 %v6030, 4294901760
    %6032 = vmatpush1.msra.mxu0 %v6031
    %6033 = vmatprep.subr.mxu0 0.0
    %v6034 = vand.u32 %v5490, 4294901760
    %v6035 = vsub.f32 %v5490, %v6034
    %v6036 = vand.u32 %v6035, 4294901760
    %6037 = vmatpush1.msra.mxu0 %v6036
    %6038 = vmatprep.subr.mxu0 0.0
    %v6039 = vand.u32 %v5491, 4294901760
    %v6040 = vsub.f32 %v5491, %v6039
    %v6041 = vand.u32 %v6040, 4294901760
    %6042 = vmatpush1.msra.mxu0 %v6041
    %6043 = vmatprep.subr.mxu0 0.0
    %v6044 = vand.u32 %v5492, 4294901760
    %v6045 = vsub.f32 %v5492, %v6044
    %v6046 = vand.u32 %v6045, 4294901760
    %6047 = vmatpush1.msra.mxu0 %v6046
    %6048 = vmatprep.subr.mxu0 0.0
    %v6049 = vand.u32 %v5493, 4294901760
    %v6050 = vsub.f32 %v5493, %v6049
    %v6051 = vand.u32 %v6050, 4294901760
    %6052 = vmatpush1.msra.mxu0 %v6051
    %6053 = vmatprep.subr.mxu0 0.0
    %v6054 = vand.u32 %v5494, 4294901760
    %v6055 = vsub.f32 %v5494, %v6054
    %v6056 = vand.u32 %v6055, 4294901760
    %6057 = vmatpush1.msra.mxu0 %v6056
    %6058 = vmatprep.subr.mxu0 0.0
    %6059 = vmatpush1.msra.mxu0 0.0
    %6060 = vmatprep.subr.mxu0 0.0
    %6061 = vmatpush1.msra.mxu0 0.0
    %6062 = vmatprep.subr.mxu0 0.0
    %6063 = vmatpush1.msra.mxu0 0.0
    %6064 = vmatprep.subr.mxu0 0.0
    %6065 = vmatpush1.msra.mxu0 0.0
    %6066 = vmatprep.subr.mxu0 0.0
    %6067 = vmatpush1.msra.mxu0 0.0
    %6068 = vmatprep.subr.mxu0 0.0
    %6069 = vmatpush1.msra.mxu0 0.0
    %6070 = vmatprep.subr.mxu0 0.0
    %6071 = vmatpush1.msra.mxu0 0.0
    %6072 = vmatprep.subr.mxu0 0.0
    %6073 = vmatpush1.msra.mxu0 0.0
    %6074 = vmatprep.subr.mxu0 0.0
    %6075 = vmatpush1.msra.mxu0 0.0
    %6076 = vmatprep.subr.mxu0 0.0
    %6077 = vmatpush1.msra.mxu0 0.0
    %6078 = vmatprep.subr.mxu0 0.0
    %6079 = vmatpush1.msra.mxu0 0.0
    %6080 = vmatprep.subr.mxu0 0.0
    %6081 = vmatpush1.msra.mxu0 0.0
    %6082 = vmatprep.subr.mxu0 0.0
    %6083 = vmatpush1.msra.mxu0 0.0
    %6084 = vmatprep.subr.mxu0 0.0
    %6085 = vmatpush1.msra.mxu0 0.0
    %6086 = vmatprep.subr.mxu0 0.0
    %6087 = vmatpush1.msra.mxu0 0.0
    %6088 = vmatprep.subr.mxu0 0.0
    %6089 = vmatpush1.msra.mxu0 0.0
    %6090 = vmatprep.mubr.f32.mxu0 0.0
    %v6091 = vand.u32 %v5469, 4294901760
    %6092 = vmatmul.mubr.f32.gmra.mrb[0].mxu0 %v6091
    %v6093 = vpop.f32.mrb[0].mxu0
    %v6094 = vadd.f32 %v5967, %v6093
    %v6095 = vpop.f32.mrb[0].mxu0
    %6096 = vmatprep.mubr.f32.mxu0 0.0
    %v6097 = vand.u32 %v5475, 4294901760
    %6098 = vmatmul.mubr.f32.gmra.mrb[0].mxu0 %v6097
    %v6099 = vpop.f32.mrb[0].mxu0
    %v6100 = vadd.f32 %v5975, %v6099
    %v6101 = vpop.f32.mrb[0].mxu0
    %6102 = vdwg.mxu0
    %6103 = vmatprep.subr.mxu0 0.0
    %v6104 = vand.u32 %v5479, 4294901760
    %6105 = vmatpush1.msra.mxu0 %v6104
    %6106 = vmatprep.subr.mxu0 0.0
    %v6107 = vand.u32 %v5480, 4294901760
    %6108 = vmatpush1.msra.mxu0 %v6107
    %6109 = vmatprep.subr.mxu0 0.0
    %v6110 = vand.u32 %v5481, 4294901760
    %6111 = vmatpush1.msra.mxu0 %v6110
    %6112 = vmatprep.subr.mxu0 0.0
    %v6113 = vand.u32 %v5482, 4294901760
    %6114 = vmatpush1.msra.mxu0 %v6113
    %6115 = vmatprep.subr.mxu0 0.0
    %v6116 = vand.u32 %v5483, 4294901760
    %6117 = vmatpush1.msra.mxu0 %v6116
    %6118 = vmatprep.subr.mxu0 0.0
    %v6119 = vand.u32 %v5484, 4294901760
    %6120 = vmatpush1.msra.mxu0 %v6119
    %6121 = vmatprep.subr.mxu0 0.0
    %v6122 = vand.u32 %v5485, 4294901760
    %6123 = vmatpush1.msra.mxu0 %v6122
    %6124 = vmatprep.subr.mxu0 0.0
    %v6125 = vand.u32 %v5486, 4294901760
    %6126 = vmatpush1.msra.mxu0 %v6125
    %6127 = vmatprep.subr.mxu0 0.0
    %v6128 = vand.u32 %v5487, 4294901760
    %6129 = vmatpush1.msra.mxu0 %v6128
    %6130 = vmatprep.subr.mxu0 0.0
    %v6131 = vand.u32 %v5488, 4294901760
    %6132 = vmatpush1.msra.mxu0 %v6131
    %6133 = vmatprep.subr.mxu0 0.0
    %v6134 = vand.u32 %v5489, 4294901760
    %6135 = vmatpush1.msra.mxu0 %v6134
    %6136 = vmatprep.subr.mxu0 0.0
    %v6137 = vand.u32 %v5490, 4294901760
    %6138 = vmatpush1.msra.mxu0 %v6137
    %6139 = vmatprep.subr.mxu0 0.0
    %v6140 = vand.u32 %v5491, 4294901760
    %6141 = vmatpush1.msra.mxu0 %v6140
    %6142 = vmatprep.subr.mxu0 0.0
    %v6143 = vand.u32 %v5492, 4294901760
    %6144 = vmatpush1.msra.mxu0 %v6143
    %6145 = vmatprep.subr.mxu0 0.0
    %v6146 = vand.u32 %v5493, 4294901760
    %6147 = vmatpush1.msra.mxu0 %v6146
    %6148 = vmatprep.subr.mxu0 0.0
    %v6149 = vand.u32 %v5494, 4294901760
    %6150 = vmatpush1.msra.mxu0 %v6149
    %6151 = vmatprep.subr.mxu0 0.0
    %6152 = vmatpush1.msra.mxu0 0.0
    %6153 = vmatprep.subr.mxu0 0.0
    %6154 = vmatpush1.msra.mxu0 0.0
    %6155 = vmatprep.subr.mxu0 0.0
    %6156 = vmatpush1.msra.mxu0 0.0
    %6157 = vmatprep.subr.mxu0 0.0
    %6158 = vmatpush1.msra.mxu0 0.0
    %6159 = vmatprep.subr.mxu0 0.0
    %6160 = vmatpush1.msra.mxu0 0.0
    %6161 = vmatprep.subr.mxu0 0.0
    %6162 = vmatpush1.msra.mxu0 0.0
    %6163 = vmatprep.subr.mxu0 0.0
    %6164 = vmatpush1.msra.mxu0 0.0
    %6165 = vmatprep.subr.mxu0 0.0
    %6166 = vmatpush1.msra.mxu0 0.0
    %6167 = vmatprep.subr.mxu0 0.0
    %6168 = vmatpush1.msra.mxu0 0.0
    %6169 = vmatprep.subr.mxu0 0.0
    %6170 = vmatpush1.msra.mxu0 0.0
    %6171 = vmatprep.subr.mxu0 0.0
    %6172 = vmatpush1.msra.mxu0 0.0
    %6173 = vmatprep.subr.mxu0 0.0
    %6174 = vmatpush1.msra.mxu0 0.0
    %6175 = vmatprep.subr.mxu0 0.0
    %6176 = vmatpush1.msra.mxu0 0.0
    %6177 = vmatprep.subr.mxu0 0.0
    %6178 = vmatpush1.msra.mxu0 0.0
    %6179 = vmatprep.subr.mxu0 0.0
    %6180 = vmatpush1.msra.mxu0 0.0
    %6181 = vmatprep.subr.mxu0 0.0
    %6182 = vmatpush1.msra.mxu0 0.0
    %6183 = vmatprep.mubr.f32.mxu0 0.0
    %v6184 = vand.u32 %v5469, 4294901760
    %6185 = vmatmul.mubr.f32.gmra.mrb[0].mxu0 %v6184
    %v6186 = vpop.f32.mrb[0].mxu0
    %v6187 = vadd.f32 %v6094, %v6186
    %v6188 = vpop.f32.mrb[0].mxu0
    %6189 = vmatprep.mubr.f32.mxu0 0.0
    %v6190 = vand.u32 %v5475, 4294901760
    %6191 = vmatmul.mubr.f32.gmra.mrb[0].mxu0 %v6190
    %v6192 = vpop.f32.mrb[0].mxu0
    %v6193 = vadd.f32 %v6100, %v6192
    %v6194 = vpop.f32.mrb[0].mxu0
    %6195 = vdwg.mxu0
    %6196 = vmatprep.subr.mxu0 0.0
    %v6197 = vand.u32 %v5496, 4294901760
    %6198 = vmatpush1.msra.mxu0 %v6197
    %6199 = vmatprep.subr.mxu0 0.0
    %v6200 = vand.u32 %v5497, 4294901760
    %6201 = vmatpush1.msra.mxu0 %v6200
    %6202 = vmatprep.subr.mxu0 0.0
    %v6203 = vand.u32 %v5498, 4294901760
    %6204 = vmatpush1.msra.mxu0 %v6203
    %6205 = vmatprep.subr.mxu0 0.0
    %v6206 = vand.u32 %v5499, 4294901760
    %6207 = vmatpush1.msra.mxu0 %v6206
    %6208 = vmatprep.subr.mxu0 0.0
    %v6209 = vand.u32 %v5500, 4294901760
    %6210 = vmatpush1.msra.mxu0 %v6209
    %6211 = vmatprep.subr.mxu0 0.0
    %v6212 = vand.u32 %v5501, 4294901760
    %6213 = vmatpush1.msra.mxu0 %v6212
    %6214 = vmatprep.subr.mxu0 0.0
    %v6215 = vand.u32 %v5502, 4294901760
    %6216 = vmatpush1.msra.mxu0 %v6215
    %6217 = vmatprep.subr.mxu0 0.0
    %v6218 = vand.u32 %v5503, 4294901760
    %6219 = vmatpush1.msra.mxu0 %v6218
    %6220 = vmatprep.subr.mxu0 0.0
    %v6221 = vand.u32 %v5504, 4294901760
    %6222 = vmatpush1.msra.mxu0 %v6221
    %6223 = vmatprep.subr.mxu0 0.0
    %v6224 = vand.u32 %v5505, 4294901760
    %6225 = vmatpush1.msra.mxu0 %v6224
    %6226 = vmatprep.subr.mxu0 0.0
    %v6227 = vand.u32 %v5506, 4294901760
    %6228 = vmatpush1.msra.mxu0 %v6227
    %6229 = vmatprep.subr.mxu0 0.0
    %v6230 = vand.u32 %v5507, 4294901760
    %6231 = vmatpush1.msra.mxu0 %v6230
    %6232 = vmatprep.subr.mxu0 0.0
    %v6233 = vand.u32 %v5508, 4294901760
    %6234 = vmatpush1.msra.mxu0 %v6233
    %6235 = vmatprep.subr.mxu0 0.0
    %v6236 = vand.u32 %v5509, 4294901760
    %6237 = vmatpush1.msra.mxu0 %v6236
    %6238 = vmatprep.subr.mxu0 0.0
    %v6239 = vand.u32 %v5510, 4294901760
    %6240 = vmatpush1.msra.mxu0 %v6239
    %6241 = vmatprep.subr.mxu0 0.0
    %v6242 = vand.u32 %v5511, 4294901760
    %6243 = vmatpush1.msra.mxu0 %v6242
    %6244 = vmatprep.subr.mxu0 0.0
    %6245 = vmatpush1.msra.mxu0 0.0
    %6246 = vmatprep.subr.mxu0 0.0
    %6247 = vmatpush1.msra.mxu0 0.0
    %6248 = vmatprep.subr.mxu0 0.0
    %6249 = vmatpush1.msra.mxu0 0.0
    %6250 = vmatprep.subr.mxu0 0.0
    %6251 = vmatpush1.msra.mxu0 0.0
    %6252 = vmatprep.subr.mxu0 0.0
    %6253 = vmatpush1.msra.mxu0 0.0
    %6254 = vmatprep.subr.mxu0 0.0
    %6255 = vmatpush1.msra.mxu0 0.0
    %6256 = vmatprep.subr.mxu0 0.0
    %6257 = vmatpush1.msra.mxu0 0.0
    %6258 = vmatprep.subr.mxu0 0.0
    %6259 = vmatpush1.msra.mxu0 0.0
    %6260 = vmatprep.subr.mxu0 0.0
    %6261 = vmatpush1.msra.mxu0 0.0
    %6262 = vmatprep.subr.mxu0 0.0
    %6263 = vmatpush1.msra.mxu0 0.0
    %6264 = vmatprep.subr.mxu0 0.0
    %6265 = vmatpush1.msra.mxu0 0.0
    %6266 = vmatprep.subr.mxu0 0.0
    %6267 = vmatpush1.msra.mxu0 0.0
    %6268 = vmatprep.subr.mxu0 0.0
    %6269 = vmatpush1.msra.mxu0 0.0
    %6270 = vmatprep.subr.mxu0 0.0
    %6271 = vmatpush1.msra.mxu0 0.0
    %6272 = vmatprep.subr.mxu0 0.0
    %6273 = vmatpush1.msra.mxu0 0.0
    %6274 = vmatprep.subr.mxu0 0.0
    %6275 = vmatpush1.msra.mxu0 0.0
    %6276 = vmatprep.mubr.f32.mxu0 0.0
    %v6277 = vand.u32 %v5469, 4294901760
    %v6278 = vsub.f32 %v5469, %v6277
    %v6279 = vand.u32 %v6278, 4294901760
    %v6280 = vsub.f32 %v6278, %v6279
    %v6281 = vand.u32 %v6280, 4294901760
    %6282 = vmatmul.mubr.f32.gmra.mrb[0].mxu0 %v6281
    %v6283 = vpop.f32.mrb[0].mxu0
    %v6284 = vadd.f32 0.0, %v6283
    %v6285 = vpop.f32.mrb[0].mxu0
    %6286 = vmatprep.mubr.f32.mxu0 0.0
    %v6287 = vand.u32 %v5475, 4294901760
    %v6288 = vsub.f32 %v5475, %v6287
    %v6289 = vand.u32 %v6288, 4294901760
    %v6290 = vsub.f32 %v6288, %v6289
    %v6291 = vand.u32 %v6290, 4294901760
    %6292 = vmatmul.mubr.f32.gmra.mrb[0].mxu0 %v6291
    %v6293 = vpop.f32.mrb[0].mxu0
    %v6294 = vadd.f32 0.0, %v6293
    %v6295 = vpop.f32.mrb[0].mxu0
    %6296 = vdwg.mxu0
    %6297 = vmatprep.subr.mxu0 0.0
    %v6298 = vand.u32 %v5496, 4294901760
    %v6299 = vsub.f32 %v5496, %v6298
    %v6300 = vand.u32 %v6299, 4294901760
    %v6301 = vsub.f32 %v6299, %v6300
    %v6302 = vand.u32 %v6301, 4294901760
    %6303 = vmatpush1.msra.mxu0 %v6302
    %6304 = vmatprep.subr.mxu0 0.0
    %v6305 = vand.u32 %v5497, 4294901760
    %v6306 = vsub.f32 %v5497, %v6305
    %v6307 = vand.u32 %v6306, 4294901760
    %v6308 = vsub.f32 %v6306, %v6307
    %v6309 = vand.u32 %v6308, 4294901760
    %6310 = vmatpush1.msra.mxu0 %v6309
    %6311 = vmatprep.subr.mxu0 0.0
    %v6312 = vand.u32 %v5498, 4294901760
    %v6313 = vsub.f32 %v5498, %v6312
    %v6314 = vand.u32 %v6313, 4294901760
    %v6315 = vsub.f32 %v6313, %v6314
    %v6316 = vand.u32 %v6315, 4294901760
    %6317 = vmatpush1.msra.mxu0 %v6316
    %6318 = vmatprep.subr.mxu0 0.0
    %v6319 = vand.u32 %v5499, 4294901760
    %v6320 = vsub.f32 %v5499, %v6319
    %v6321 = vand.u32 %v6320, 4294901760
    %v6322 = vsub.f32 %v6320, %v6321
    %v6323 = vand.u32 %v6322, 4294901760
    %6324 = vmatpush1.msra.mxu0 %v6323
    %6325 = vmatprep.subr.mxu0 0.0
    %v6326 = vand.u32 %v5500, 4294901760
    %v6327 = vsub.f32 %v5500, %v6326
    %v6328 = vand.u32 %v6327, 4294901760
    %v6329 = vsub.f32 %v6327, %v6328
    %v6330 = vand.u32 %v6329, 4294901760
    %6331 = vmatpush1.msra.mxu0 %v6330
    %6332 = vmatprep.subr.mxu0 0.0
    %v6333 = vand.u32 %v5501, 4294901760
    %v6334 = vsub.f32 %v5501, %v6333
    %v6335 = vand.u32 %v6334, 4294901760
    %v6336 = vsub.f32 %v6334, %v6335
    %v6337 = vand.u32 %v6336, 4294901760
    %6338 = vmatpush1.msra.mxu0 %v6337
    %6339 = vmatprep.subr.mxu0 0.0
    %v6340 = vand.u32 %v5502, 4294901760
    %v6341 = vsub.f32 %v5502, %v6340
    %v6342 = vand.u32 %v6341, 4294901760
    %v6343 = vsub.f32 %v6341, %v6342
    %v6344 = vand.u32 %v6343, 4294901760
    %6345 = vmatpush1.msra.mxu0 %v6344
    %6346 = vmatprep.subr.mxu0 0.0
    %v6347 = vand.u32 %v5503, 4294901760
    %v6348 = vsub.f32 %v5503, %v6347
    %v6349 = vand.u32 %v6348, 4294901760
    %v6350 = vsub.f32 %v6348, %v6349
    %v6351 = vand.u32 %v6350, 4294901760
    %6352 = vmatpush1.msra.mxu0 %v6351
    %6353 = vmatprep.subr.mxu0 0.0
    %v6354 = vand.u32 %v5504, 4294901760
    %v6355 = vsub.f32 %v5504, %v6354
    %v6356 = vand.u32 %v6355, 4294901760
    %v6357 = vsub.f32 %v6355, %v6356
    %v6358 = vand.u32 %v6357, 4294901760
    %6359 = vmatpush1.msra.mxu0 %v6358
    %6360 = vmatprep.subr.mxu0 0.0
    %v6361 = vand.u32 %v5505, 4294901760
    %v6362 = vsub.f32 %v5505, %v6361
    %v6363 = vand.u32 %v6362, 4294901760
    %v6364 = vsub.f32 %v6362, %v6363
    %v6365 = vand.u32 %v6364, 4294901760
    %6366 = vmatpush1.msra.mxu0 %v6365
    %6367 = vmatprep.subr.mxu0 0.0
    %v6368 = vand.u32 %v5506, 4294901760
    %v6369 = vsub.f32 %v5506, %v6368
    %v6370 = vand.u32 %v6369, 4294901760
    %v6371 = vsub.f32 %v6369, %v6370
    %v6372 = vand.u32 %v6371, 4294901760
    %6373 = vmatpush1.msra.mxu0 %v6372
    %6374 = vmatprep.subr.mxu0 0.0
    %v6375 = vand.u32 %v5507, 4294901760
    %v6376 = vsub.f32 %v5507, %v6375
    %v6377 = vand.u32 %v6376, 4294901760
    %v6378 = vsub.f32 %v6376, %v6377
    %v6379 = vand.u32 %v6378, 4294901760
    %6380 = vmatpush1.msra.mxu0 %v6379
    %6381 = vmatprep.subr.mxu0 0.0
    %v6382 = vand.u32 %v5508, 4294901760
    %v6383 = vsub.f32 %v5508, %v6382
    %v6384 = vand.u32 %v6383, 4294901760
    %v6385 = vsub.f32 %v6383, %v6384
    %v6386 = vand.u32 %v6385, 4294901760
    %6387 = vmatpush1.msra.mxu0 %v6386
    %6388 = vmatprep.subr.mxu0 0.0
    %v6389 = vand.u32 %v5509, 4294901760
    %v6390 = vsub.f32 %v5509, %v6389
    %v6391 = vand.u32 %v6390, 4294901760
    %v6392 = vsub.f32 %v6390, %v6391
    %v6393 = vand.u32 %v6392, 4294901760
    %6394 = vmatpush1.msra.mxu0 %v6393
    %6395 = vmatprep.subr.mxu0 0.0
    %v6396 = vand.u32 %v5510, 4294901760
    %v6397 = vsub.f32 %v5510, %v6396
    %v6398 = vand.u32 %v6397, 4294901760
    %v6399 = vsub.f32 %v6397, %v6398
    %v6400 = vand.u32 %v6399, 4294901760
    %6401 = vmatpush1.msra.mxu0 %v6400
    %6402 = vmatprep.subr.mxu0 0.0
    %v6403 = vand.u32 %v5511, 4294901760
    %v6404 = vsub.f32 %v5511, %v6403
    %v6405 = vand.u32 %v6404, 4294901760
    %v6406 = vsub.f32 %v6404, %v6405
    %v6407 = vand.u32 %v6406, 4294901760
    %6408 = vmatpush1.msra.mxu0 %v6407
    %6409 = vmatprep.subr.mxu0 0.0
    %6410 = vmatpush1.msra.mxu0 0.0
    %6411 = vmatprep.subr.mxu0 0.0
    %6412 = vmatpush1.msra.mxu0 0.0
    %6413 = vmatprep.subr.mxu0 0.0
    %6414 = vmatpush1.msra.mxu0 0.0
    %6415 = vmatprep.subr.mxu0 0.0
    %6416 = vmatpush1.msra.mxu0 0.0
    %6417 = vmatprep.subr.mxu0 0.0
    %6418 = vmatpush1.msra.mxu0 0.0
    %6419 = vmatprep.subr.mxu0 0.0
    %6420 = vmatpush1.msra.mxu0 0.0
    %6421 = vmatprep.subr.mxu0 0.0
    %6422 = vmatpush1.msra.mxu0 0.0
    %6423 = vmatprep.subr.mxu0 0.0
    %6424 = vmatpush1.msra.mxu0 0.0
    %6425 = vmatprep.subr.mxu0 0.0
    %6426 = vmatpush1.msra.mxu0 0.0
    %6427 = vmatprep.subr.mxu0 0.0
    %6428 = vmatpush1.msra.mxu0 0.0
    %6429 = vmatprep.subr.mxu0 0.0
    %6430 = vmatpush1.msra.mxu0 0.0
    %6431 = vmatprep.subr.mxu0 0.0
    %6432 = vmatpush1.msra.mxu0 0.0
    %6433 = vmatprep.subr.mxu0 0.0
    %6434 = vmatpush1.msra.mxu0 0.0
    %6435 = vmatprep.subr.mxu0 0.0
    %6436 = vmatpush1.msra.mxu0 0.0
    %6437 = vmatprep.subr.mxu0 0.0
    %6438 = vmatpush1.msra.mxu0 0.0
    %6439 = vmatprep.subr.mxu0 0.0
    %6440 = vmatpush1.msra.mxu0 0.0
    %6441 = vmatprep.mubr.f32.mxu0 0.0
    %v6442 = vand.u32 %v5469, 4294901760
    %6443 = vmatmul.mubr.f32.gmra.mrb[0].mxu0 %v6442
    %v6444 = vpop.f32.mrb[0].mxu0
    %v6445 = vadd.f32 %v6284, %v6444
    %v6446 = vpop.f32.mrb[0].mxu0
    %6447 = vmatprep.mubr.f32.mxu0 0.0
    %v6448 = vand.u32 %v5475, 4294901760
    %6449 = vmatmul.mubr.f32.gmra.mrb[0].mxu0 %v6448
    %v6450 = vpop.f32.mrb[0].mxu0
    %v6451 = vadd.f32 %v6294, %v6450
    %v6452 = vpop.f32.mrb[0].mxu0
    %6453 = vdwg.mxu0
    %6454 = vmatprep.subr.mxu0 0.0
    %v6455 = vand.u32 %v5496, 4294901760
    %v6456 = vsub.f32 %v5496, %v6455
    %6457 = vmatpush1.msra.mxu0 %v6456
    %6458 = vmatprep.subr.mxu0 0.0
    %v6459 = vand.u32 %v5497, 4294901760
    %v6460 = vsub.f32 %v5497, %v6459
    %6461 = vmatpush1.msra.mxu0 %v6460
    %6462 = vmatprep.subr.mxu0 0.0
    %v6463 = vand.u32 %v5498, 4294901760
    %v6464 = vsub.f32 %v5498, %v6463
    %6465 = vmatpush1.msra.mxu0 %v6464
    %6466 = vmatprep.subr.mxu0 0.0
    %v6467 = vand.u32 %v5499, 4294901760
    %v6468 = vsub.f32 %v5499, %v6467
    %6469 = vmatpush1.msra.mxu0 %v6468
    %6470 = vmatprep.subr.mxu0 0.0
    %v6471 = vand.u32 %v5500, 4294901760
    %v6472 = vsub.f32 %v5500, %v6471
    %6473 = vmatpush1.msra.mxu0 %v6472
    %6474 = vmatprep.subr.mxu0 0.0
    %v6475 = vand.u32 %v5501, 4294901760
    %v6476 = vsub.f32 %v5501, %v6475
    %6477 = vmatpush1.msra.mxu0 %v6476
    %6478 = vmatprep.subr.mxu0 0.0
    %v6479 = vand.u32 %v5502, 4294901760
    %v6480 = vsub.f32 %v5502, %v6479
    %6481 = vmatpush1.msra.mxu0 %v6480
    %6482 = vmatprep.subr.mxu0 0.0
    %v6483 = vand.u32 %v5503, 4294901760
    %v6484 = vsub.f32 %v5503, %v6483
    %6485 = vmatpush1.msra.mxu0 %v6484
    %6486 = vmatprep.subr.mxu0 0.0
    %v6487 = vand.u32 %v5504, 4294901760
    %v6488 = vsub.f32 %v5504, %v6487
    %6489 = vmatpush1.msra.mxu0 %v6488
    %6490 = vmatprep.subr.mxu0 0.0
    %v6491 = vand.u32 %v5505, 4294901760
    %v6492 = vsub.f32 %v5505, %v6491
    %6493 = vmatpush1.msra.mxu0 %v6492
    %6494 = vmatprep.subr.mxu0 0.0
    %v6495 = vand.u32 %v5506, 4294901760
    %v6496 = vsub.f32 %v5506, %v6495
    %6497 = vmatpush1.msra.mxu0 %v6496
    %6498 = vmatprep.subr.mxu0 0.0
    %v6499 = vand.u32 %v5507, 4294901760
    %v6500 = vsub.f32 %v5507, %v6499
    %6501 = vmatpush1.msra.mxu0 %v6500
    %6502 = vmatprep.subr.mxu0 0.0
    %v6503 = vand.u32 %v5508, 4294901760
    %v6504 = vsub.f32 %v5508, %v6503
    %6505 = vmatpush1.msra.mxu0 %v6504
    %6506 = vmatprep.subr.mxu0 0.0
    %v6507 = vand.u32 %v5509, 4294901760
    %v6508 = vsub.f32 %v5509, %v6507
    %6509 = vmatpush1.msra.mxu0 %v6508
    %6510 = vmatprep.subr.mxu0 0.0
    %v6511 = vand.u32 %v5510, 4294901760
    %v6512 = vsub.f32 %v5510, %v6511
    %6513 = vmatpush1.msra.mxu0 %v6512
    %6514 = vmatprep.subr.mxu0 0.0
    %v6515 = vand.u32 %v5511, 4294901760
    %v6516 = vsub.f32 %v5511, %v6515
    %6517 = vmatpush1.msra.mxu0 %v6516
    %6518 = vmatprep.subr.mxu0 0.0
    %6519 = vmatpush1.msra.mxu0 0.0
    %6520 = vmatprep.subr.mxu0 0.0
    %6521 = vmatpush1.msra.mxu0 0.0
    %6522 = vmatprep.subr.mxu0 0.0
    %6523 = vmatpush1.msra.mxu0 0.0
    %6524 = vmatprep.subr.mxu0 0.0
    %6525 = vmatpush1.msra.mxu0 0.0
    %6526 = vmatprep.subr.mxu0 0.0
    %6527 = vmatpush1.msra.mxu0 0.0
    %6528 = vmatprep.subr.mxu0 0.0
    %6529 = vmatpush1.msra.mxu0 0.0
    %6530 = vmatprep.subr.mxu0 0.0
    %6531 = vmatpush1.msra.mxu0 0.0
    %6532 = vmatprep.subr.mxu0 0.0
    %6533 = vmatpush1.msra.mxu0 0.0
    %6534 = vmatprep.subr.mxu0 0.0
    %6535 = vmatpush1.msra.mxu0 0.0
    %6536 = vmatprep.subr.mxu0 0.0
    %6537 = vmatpush1.msra.mxu0 0.0
    %6538 = vmatprep.subr.mxu0 0.0
    %6539 = vmatpush1.msra.mxu0 0.0
    %6540 = vmatprep.subr.mxu0 0.0
    %6541 = vmatpush1.msra.mxu0 0.0
    %6542 = vmatprep.subr.mxu0 0.0
    %6543 = vmatpush1.msra.mxu0 0.0
    %6544 = vmatprep.subr.mxu0 0.0
    %6545 = vmatpush1.msra.mxu0 0.0
    %6546 = vmatprep.subr.mxu0 0.0
    %6547 = vmatpush1.msra.mxu0 0.0
    %6548 = vmatprep.subr.mxu0 0.0
    %6549 = vmatpush1.msra.mxu0 0.0
    %6550 = vmatprep.mubr.f32.mxu0 0.0
    %v6551 = vand.u32 %v5469, 4294901760
    %v6552 = vsub.f32 %v5469, %v6551
    %6553 = vmatmul.mubr.f32.gmra.mrb[0].mxu0 %v6552
    %v6554 = vpop.f32.mrb[0].mxu0
    %v6555 = vadd.f32 %v6445, %v6554
    %v6556 = vpop.f32.mrb[0].mxu0
    %6557 = vmatprep.mubr.f32.mxu0 0.0
    %v6558 = vand.u32 %v5475, 4294901760
    %v6559 = vsub.f32 %v5475, %v6558
    %6560 = vmatmul.mubr.f32.gmra.mrb[0].mxu0 %v6559
    %v6561 = vpop.f32.mrb[0].mxu0
    %v6562 = vadd.f32 %v6451, %v6561
    %v6563 = vpop.f32.mrb[0].mxu0
    %6564 = vdwg.mxu0
    %6565 = vmatprep.subr.mxu0 0.0
    %v6566 = vand.u32 %v5496, 4294901760
    %6567 = vmatpush1.msra.mxu0 %v6566
    %6568 = vmatprep.subr.mxu0 0.0
    %v6569 = vand.u32 %v5497, 4294901760
    %6570 = vmatpush1.msra.mxu0 %v6569
    %6571 = vmatprep.subr.mxu0 0.0
    %v6572 = vand.u32 %v5498, 4294901760
    %6573 = vmatpush1.msra.mxu0 %v6572
    %6574 = vmatprep.subr.mxu0 0.0
    %v6575 = vand.u32 %v5499, 4294901760
    %6576 = vmatpush1.msra.mxu0 %v6575
    %6577 = vmatprep.subr.mxu0 0.0
    %v6578 = vand.u32 %v5500, 4294901760
    %6579 = vmatpush1.msra.mxu0 %v6578
    %6580 = vmatprep.subr.mxu0 0.0
    %v6581 = vand.u32 %v5501, 4294901760
    %6582 = vmatpush1.msra.mxu0 %v6581
    %6583 = vmatprep.subr.mxu0 0.0
    %v6584 = vand.u32 %v5502, 4294901760
    %6585 = vmatpush1.msra.mxu0 %v6584
    %6586 = vmatprep.subr.mxu0 0.0
    %v6587 = vand.u32 %v5503, 4294901760
    %6588 = vmatpush1.msra.mxu0 %v6587
    %6589 = vmatprep.subr.mxu0 0.0
    %v6590 = vand.u32 %v5504, 4294901760
    %6591 = vmatpush1.msra.mxu0 %v6590
    %6592 = vmatprep.subr.mxu0 0.0
    %v6593 = vand.u32 %v5505, 4294901760
    %6594 = vmatpush1.msra.mxu0 %v6593
    %6595 = vmatprep.subr.mxu0 0.0
    %v6596 = vand.u32 %v5506, 4294901760
    %6597 = vmatpush1.msra.mxu0 %v6596
    %6598 = vmatprep.subr.mxu0 0.0
    %v6599 = vand.u32 %v5507, 4294901760
    %6600 = vmatpush1.msra.mxu0 %v6599
    %6601 = vmatprep.subr.mxu0 0.0
    %v6602 = vand.u32 %v5508, 4294901760
    %6603 = vmatpush1.msra.mxu0 %v6602
    %6604 = vmatprep.subr.mxu0 0.0
    %v6605 = vand.u32 %v5509, 4294901760
    %6606 = vmatpush1.msra.mxu0 %v6605
    %6607 = vmatprep.subr.mxu0 0.0
    %v6608 = vand.u32 %v5510, 4294901760
    %6609 = vmatpush1.msra.mxu0 %v6608
    %6610 = vmatprep.subr.mxu0 0.0
    %v6611 = vand.u32 %v5511, 4294901760
    %6612 = vmatpush1.msra.mxu0 %v6611
    %6613 = vmatprep.subr.mxu0 0.0
    %6614 = vmatpush1.msra.mxu0 0.0
    %6615 = vmatprep.subr.mxu0 0.0
    %6616 = vmatpush1.msra.mxu0 0.0
    %6617 = vmatprep.subr.mxu0 0.0
    %6618 = vmatpush1.msra.mxu0 0.0
    %6619 = vmatprep.subr.mxu0 0.0
    %6620 = vmatpush1.msra.mxu0 0.0
    %6621 = vmatprep.subr.mxu0 0.0
    %6622 = vmatpush1.msra.mxu0 0.0
    %6623 = vmatprep.subr.mxu0 0.0
    %6624 = vmatpush1.msra.mxu0 0.0
    %6625 = vmatprep.subr.mxu0 0.0
    %6626 = vmatpush1.msra.mxu0 0.0
    %6627 = vmatprep.subr.mxu0 0.0
    %6628 = vmatpush1.msra.mxu0 0.0
    %6629 = vmatprep.subr.mxu0 0.0
    %6630 = vmatpush1.msra.mxu0 0.0
    %6631 = vmatprep.subr.mxu0 0.0
    %6632 = vmatpush1.msra.mxu0 0.0
    %6633 = vmatprep.subr.mxu0 0.0
    %6634 = vmatpush1.msra.mxu0 0.0
    %6635 = vmatprep.subr.mxu0 0.0
    %6636 = vmatpush1.msra.mxu0 0.0
    %6637 = vmatprep.subr.mxu0 0.0
    %6638 = vmatpush1.msra.mxu0 0.0
    %6639 = vmatprep.subr.mxu0 0.0
    %6640 = vmatpush1.msra.mxu0 0.0
    %6641 = vmatprep.subr.mxu0 0.0
    %6642 = vmatpush1.msra.mxu0 0.0
    %6643 = vmatprep.subr.mxu0 0.0
    %6644 = vmatpush1.msra.mxu0 0.0
    %6645 = vmatprep.mubr.f32.mxu0 0.0
    %v6646 = vand.u32 %v5469, 4294901760
    %v6647 = vsub.f32 %v5469, %v6646
    %v6648 = vand.u32 %v6647, 4294901760
    %6649 = vmatmul.mubr.f32.gmra.mrb[0].mxu0 %v6648
    %v6650 = vpop.f32.mrb[0].mxu0
    %v6651 = vadd.f32 %v6555, %v6650
    %v6652 = vpop.f32.mrb[0].mxu0
    %6653 = vmatprep.mubr.f32.mxu0 0.0
    %v6654 = vand.u32 %v5475, 4294901760
    %v6655 = vsub.f32 %v5475, %v6654
    %v6656 = vand.u32 %v6655, 4294901760
    %6657 = vmatmul.mubr.f32.gmra.mrb[0].mxu0 %v6656
    %v6658 = vpop.f32.mrb[0].mxu0
    %v6659 = vadd.f32 %v6562, %v6658
    %v6660 = vpop.f32.mrb[0].mxu0
    %6661 = vdwg.mxu0
    %6662 = vmatprep.subr.mxu0 0.0
    %v6663 = vand.u32 %v5496, 4294901760
    %v6664 = vsub.f32 %v5496, %v6663
    %v6665 = vand.u32 %v6664, 4294901760
    %6666 = vmatpush1.msra.mxu0 %v6665
    %6667 = vmatprep.subr.mxu0 0.0
    %v6668 = vand.u32 %v5497, 4294901760
    %v6669 = vsub.f32 %v5497, %v6668
    %v6670 = vand.u32 %v6669, 4294901760
    %6671 = vmatpush1.msra.mxu0 %v6670
    %6672 = vmatprep.subr.mxu0 0.0
    %v6673 = vand.u32 %v5498, 4294901760
    %v6674 = vsub.f32 %v5498, %v6673
    %v6675 = vand.u32 %v6674, 4294901760
    %6676 = vmatpush1.msra.mxu0 %v6675
    %6677 = vmatprep.subr.mxu0 0.0
    %v6678 = vand.u32 %v5499, 4294901760
    %v6679 = vsub.f32 %v5499, %v6678
    %v6680 = vand.u32 %v6679, 4294901760
    %6681 = vmatpush1.msra.mxu0 %v6680
    %6682 = vmatprep.subr.mxu0 0.0
    %v6683 = vand.u32 %v5500, 4294901760
    %v6684 = vsub.f32 %v5500, %v6683
    %v6685 = vand.u32 %v6684, 4294901760
    %6686 = vmatpush1.msra.mxu0 %v6685
    %6687 = vmatprep.subr.mxu0 0.0
    %v6688 = vand.u32 %v5501, 4294901760
    %v6689 = vsub.f32 %v5501, %v6688
    %v6690 = vand.u32 %v6689, 4294901760
    %6691 = vmatpush1.msra.mxu0 %v6690
    %6692 = vmatprep.subr.mxu0 0.0
    %v6693 = vand.u32 %v5502, 4294901760
    %v6694 = vsub.f32 %v5502, %v6693
    %v6695 = vand.u32 %v6694, 4294901760
    %6696 = vmatpush1.msra.mxu0 %v6695
    %6697 = vmatprep.subr.mxu0 0.0
    %v6698 = vand.u32 %v5503, 4294901760
    %v6699 = vsub.f32 %v5503, %v6698
    %v6700 = vand.u32 %v6699, 4294901760
    %6701 = vmatpush1.msra.mxu0 %v6700
    %6702 = vmatprep.subr.mxu0 0.0
    %v6703 = vand.u32 %v5504, 4294901760
    %v6704 = vsub.f32 %v5504, %v6703
    %v6705 = vand.u32 %v6704, 4294901760
    %6706 = vmatpush1.msra.mxu0 %v6705
    %6707 = vmatprep.subr.mxu0 0.0
    %v6708 = vand.u32 %v5505, 4294901760
    %v6709 = vsub.f32 %v5505, %v6708
    %v6710 = vand.u32 %v6709, 4294901760
    %6711 = vmatpush1.msra.mxu0 %v6710
    %6712 = vmatprep.subr.mxu0 0.0
    %v6713 = vand.u32 %v5506, 4294901760
    %v6714 = vsub.f32 %v5506, %v6713
    %v6715 = vand.u32 %v6714, 4294901760
    %6716 = vmatpush1.msra.mxu0 %v6715
    %6717 = vmatprep.subr.mxu0 0.0
    %v6718 = vand.u32 %v5507, 4294901760
    %v6719 = vsub.f32 %v5507, %v6718
    %v6720 = vand.u32 %v6719, 4294901760
    %6721 = vmatpush1.msra.mxu0 %v6720
    %6722 = vmatprep.subr.mxu0 0.0
    %v6723 = vand.u32 %v5508, 4294901760
    %v6724 = vsub.f32 %v5508, %v6723
    %v6725 = vand.u32 %v6724, 4294901760
    %6726 = vmatpush1.msra.mxu0 %v6725
    %6727 = vmatprep.subr.mxu0 0.0
    %v6728 = vand.u32 %v5509, 4294901760
    %v6729 = vsub.f32 %v5509, %v6728
    %v6730 = vand.u32 %v6729, 4294901760
    %6731 = vmatpush1.msra.mxu0 %v6730
    %6732 = vmatprep.subr.mxu0 0.0
    %v6733 = vand.u32 %v5510, 4294901760
    %v6734 = vsub.f32 %v5510, %v6733
    %v6735 = vand.u32 %v6734, 4294901760
    %6736 = vmatpush1.msra.mxu0 %v6735
    %6737 = vmatprep.subr.mxu0 0.0
    %v6738 = vand.u32 %v5511, 4294901760
    %v6739 = vsub.f32 %v5511, %v6738
    %v6740 = vand.u32 %v6739, 4294901760
    %6741 = vmatpush1.msra.mxu0 %v6740
    %6742 = vmatprep.subr.mxu0 0.0
    %6743 = vmatpush1.msra.mxu0 0.0
    %6744 = vmatprep.subr.mxu0 0.0
    %6745 = vmatpush1.msra.mxu0 0.0
    %6746 = vmatprep.subr.mxu0 0.0
    %6747 = vmatpush1.msra.mxu0 0.0
    %6748 = vmatprep.subr.mxu0 0.0
    %6749 = vmatpush1.msra.mxu0 0.0
    %6750 = vmatprep.subr.mxu0 0.0
    %6751 = vmatpush1.msra.mxu0 0.0
    %6752 = vmatprep.subr.mxu0 0.0
    %6753 = vmatpush1.msra.mxu0 0.0
    %6754 = vmatprep.subr.mxu0 0.0
    %6755 = vmatpush1.msra.mxu0 0.0
    %6756 = vmatprep.subr.mxu0 0.0
    %6757 = vmatpush1.msra.mxu0 0.0
    %6758 = vmatprep.subr.mxu0 0.0
    %6759 = vmatpush1.msra.mxu0 0.0
    %6760 = vmatprep.subr.mxu0 0.0
    %6761 = vmatpush1.msra.mxu0 0.0
    %6762 = vmatprep.subr.mxu0 0.0
    %6763 = vmatpush1.msra.mxu0 0.0
    %6764 = vmatprep.subr.mxu0 0.0
    %6765 = vmatpush1.msra.mxu0 0.0
    %6766 = vmatprep.subr.mxu0 0.0
    %6767 = vmatpush1.msra.mxu0 0.0
    %6768 = vmatprep.subr.mxu0 0.0
    %6769 = vmatpush1.msra.mxu0 0.0
    %6770 = vmatprep.subr.mxu0 0.0
    %6771 = vmatpush1.msra.mxu0 0.0
    %6772 = vmatprep.subr.mxu0 0.0
    %6773 = vmatpush1.msra.mxu0 0.0
    %6774 = vmatprep.mubr.f32.mxu0 0.0
    %v6775 = vand.u32 %v5469, 4294901760
    %6776 = vmatmul.mubr.f32.gmra.mrb[0].mxu0 %v6775
    %v6777 = vpop.f32.mrb[0].mxu0
    %v6778 = vadd.f32 %v6651, %v6777
    %v6779 = vpop.f32.mrb[0].mxu0
    %6780 = vmatprep.mubr.f32.mxu0 0.0
    %v6781 = vand.u32 %v5475, 4294901760
    %6782 = vmatmul.mubr.f32.gmra.mrb[0].mxu0 %v6781
    %v6783 = vpop.f32.mrb[0].mxu0
    %v6784 = vadd.f32 %v6659, %v6783
    %v6785 = vpop.f32.mrb[0].mxu0
    %6786 = vdwg.mxu0
    %6787 = vmatprep.subr.mxu0 0.0
    %v6788 = vand.u32 %v5496, 4294901760
    %6789 = vmatpush1.msra.mxu0 %v6788
    %6790 = vmatprep.subr.mxu0 0.0
    %v6791 = vand.u32 %v5497, 4294901760
    %6792 = vmatpush1.msra.mxu0 %v6791
    %6793 = vmatprep.subr.mxu0 0.0
    %v6794 = vand.u32 %v5498, 4294901760
    %6795 = vmatpush1.msra.mxu0 %v6794
    %6796 = vmatprep.subr.mxu0 0.0
    %v6797 = vand.u32 %v5499, 4294901760
    %6798 = vmatpush1.msra.mxu0 %v6797
    %6799 = vmatprep.subr.mxu0 0.0
    %v6800 = vand.u32 %v5500, 4294901760
    %6801 = vmatpush1.msra.mxu0 %v6800
    %6802 = vmatprep.subr.mxu0 0.0
    %v6803 = vand.u32 %v5501, 4294901760
    %6804 = vmatpush1.msra.mxu0 %v6803
    %6805 = vmatprep.subr.mxu0 0.0
    %v6806 = vand.u32 %v5502, 4294901760
    %6807 = vmatpush1.msra.mxu0 %v6806
    %6808 = vmatprep.subr.mxu0 0.0
    %v6809 = vand.u32 %v5503, 4294901760
    %6810 = vmatpush1.msra.mxu0 %v6809
    %6811 = vmatprep.subr.mxu0 0.0
    %v6812 = vand.u32 %v5504, 4294901760
    %6813 = vmatpush1.msra.mxu0 %v6812
    %6814 = vmatprep.subr.mxu0 0.0
    %v6815 = vand.u32 %v5505, 4294901760
    %6816 = vmatpush1.msra.mxu0 %v6815
    %6817 = vmatprep.subr.mxu0 0.0
    %v6818 = vand.u32 %v5506, 4294901760
    %6819 = vmatpush1.msra.mxu0 %v6818
    %6820 = vmatprep.subr.mxu0 0.0
    %v6821 = vand.u32 %v5507, 4294901760
    %6822 = vmatpush1.msra.mxu0 %v6821
    %6823 = vmatprep.subr.mxu0 0.0
    %v6824 = vand.u32 %v5508, 4294901760
    %6825 = vmatpush1.msra.mxu0 %v6824
    %6826 = vmatprep.subr.mxu0 0.0
    %v6827 = vand.u32 %v5509, 4294901760
    %6828 = vmatpush1.msra.mxu0 %v6827
    %6829 = vmatprep.subr.mxu0 0.0
    %v6830 = vand.u32 %v5510, 4294901760
    %6831 = vmatpush1.msra.mxu0 %v6830
    %6832 = vmatprep.subr.mxu0 0.0
    %v6833 = vand.u32 %v5511, 4294901760
    %6834 = vmatpush1.msra.mxu0 %v6833
    %6835 = vmatprep.subr.mxu0 0.0
    %6836 = vmatpush1.msra.mxu0 0.0
    %6837 = vmatprep.subr.mxu0 0.0
    %6838 = vmatpush1.msra.mxu0 0.0
    %6839 = vmatprep.subr.mxu0 0.0
    %6840 = vmatpush1.msra.mxu0 0.0
    %6841 = vmatprep.subr.mxu0 0.0
    %6842 = vmatpush1.msra.mxu0 0.0
    %6843 = vmatprep.subr.mxu0 0.0
    %6844 = vmatpush1.msra.mxu0 0.0
    %6845 = vmatprep.subr.mxu0 0.0
    %6846 = vmatpush1.msra.mxu0 0.0
    %6847 = vmatprep.subr.mxu0 0.0
    %6848 = vmatpush1.msra.mxu0 0.0
    %6849 = vmatprep.subr.mxu0 0.0
    %6850 = vmatpush1.msra.mxu0 0.0
    %6851 = vmatprep.subr.mxu0 0.0
    %6852 = vmatpush1.msra.mxu0 0.0
    %6853 = vmatprep.subr.mxu0 0.0
    %6854 = vmatpush1.msra.mxu0 0.0
    %6855 = vmatprep.subr.mxu0 0.0
    %6856 = vmatpush1.msra.mxu0 0.0
    %6857 = vmatprep.subr.mxu0 0.0
    %6858 = vmatpush1.msra.mxu0 0.0
    %6859 = vmatprep.subr.mxu0 0.0
    %6860 = vmatpush1.msra.mxu0 0.0
    %6861 = vmatprep.subr.mxu0 0.0
    %6862 = vmatpush1.msra.mxu0 0.0
    %6863 = vmatprep.subr.mxu0 0.0
    %6864 = vmatpush1.msra.mxu0 0.0
    %6865 = vmatprep.subr.mxu0 0.0
    %6866 = vmatpush1.msra.mxu0 0.0
    %6867 = vmatprep.mubr.f32.mxu0 0.0
    %v6868 = vand.u32 %v5469, 4294901760
    %6869 = vmatmul.mubr.f32.gmra.mrb[0].mxu0 %v6868
    %v6870 = vpop.f32.mrb[0].mxu0
    %v6871 = vadd.f32 %v6778, %v6870
    %v6872 = vpop.f32.mrb[0].mxu0
    %6873 = vmatprep.mubr.f32.mxu0 0.0
    %v6874 = vand.u32 %v5475, 4294901760
    %6875 = vmatmul.mubr.f32.gmra.mrb[0].mxu0 %v6874
    %v6876 = vpop.f32.mrb[0].mxu0
    %v6877 = vadd.f32 %v6784, %v6876
    %v6878 = vpop.f32.mrb[0].mxu0
    %6879 = vdwg.mxu0
    %v6880 = vmul.f32 %v6871, %v35
    %v6881 = vmul.f32 %v6877, %v36
    %v6882 = vadd.f32 %v6880, %v6881
    %v6883 = vrot.slane %v6882, 4
    %v6884 = vadd.f32 %v6882, %v6883
    %v6885 = vrot.slane %v6884, 2
    %v6886 = vadd.f32 %v6884, %v6885
    %v6887 = vrot.slane %v6886, 1
    %v6888 = vadd.f32 %v6886, %v6887
    %v6889 = vmax.f32 %v6871, %v6877
    %v6890 = vrot.slane %v6889, 4
    %v6891 = vmax.f32 %v6889, %v6890
    %v6892 = vrot.slane %v6891, 2
    %v6893 = vmax.f32 %v6891, %v6892
    %v6894 = vrot.slane %v6893, 1
    %v6895 = vmax.f32 %v6893, %v6894
    %v6896 = vadd.f32 %v6187, %v6888
    %v6897 = vadd.f32 %v6193, %v6888
    %vm6898 = vcmp.gt.f32.partialorder %v6896, 0.0
    %vm6899 = vcmp.gt.f32.partialorder %v6897, 0.0
    %v6900 = vmul.f32 %v6896, 0.2
    %v6901 = vmul.f32 %v6897, 0.2
    %v6902 = vsel %vm6898, %v6896, %v6900
    %v6903 = vsel %vm6899, %v6897, %v6901
    %v6904 = vadd.f32 %v6187, %v6895
    %v6905 = vadd.f32 %v6193, %v6895
    %vm6906 = vcmp.gt.f32.partialorder %v6904, 0.0
    %vm6907 = vcmp.gt.f32.partialorder %v6905, 0.0
    %v6908 = vmul.f32 %v6904, 0.2
    %v6909 = vmul.f32 %v6905, 0.2
    %v6910 = vsel %vm6906, %v6904, %v6908
    %v6911 = vsel %vm6907, %v6905, %v6909
    %v6912 = vsub.f32 %v6902, %v6910
    %v6913 = vsub.f32 %v6903, %v6911
    %v6914 = vadd.f32 %v6912, %v32
    %v6915 = vadd.f32 %v6913, %v33
    %v6916 = vmul.f32 %v6914, 1.442695
    %v6917 = vpow.pop %v6916
    %v6918 = vmul.f32 %v6915, 1.442695
    %v6919 = vpow.pop %v6918
    %6920 = vmatprep.subr.mxu0 0.0
    %v6921 = vand.u32 %v54, 4294901760
    %6922 = vmatpush1.msra.mxu0 %v6921
    %6923 = vmatprep.subr.mxu0 0.0
    %v6924 = vand.u32 %v55, 4294901760
    %6925 = vmatpush1.msra.mxu0 %v6924
    %6926 = vmatprep.subr.mxu0 0.0
    %v6927 = vand.u32 %v56, 4294901760
    %6928 = vmatpush1.msra.mxu0 %v6927
    %6929 = vmatprep.subr.mxu0 0.0
    %v6930 = vand.u32 %v57, 4294901760
    %6931 = vmatpush1.msra.mxu0 %v6930
    %6932 = vmatprep.subr.mxu0 0.0
    %v6933 = vand.u32 %v58, 4294901760
    %6934 = vmatpush1.msra.mxu0 %v6933
    %6935 = vmatprep.subr.mxu0 0.0
    %v6936 = vand.u32 %v59, 4294901760
    %6937 = vmatpush1.msra.mxu0 %v6936
    %6938 = vmatprep.subr.mxu0 0.0
    %v6939 = vand.u32 %v60, 4294901760
    %6940 = vmatpush1.msra.mxu0 %v6939
    %6941 = vmatprep.subr.mxu0 0.0
    %v6942 = vand.u32 %v61, 4294901760
    %6943 = vmatpush1.msra.mxu0 %v6942
    %6944 = vmatprep.subr.mxu0 0.0
    %v6945 = vand.u32 %v62, 4294901760
    %6946 = vmatpush1.msra.mxu0 %v6945
    %6947 = vmatprep.subr.mxu0 0.0
    %v6948 = vand.u32 %v63, 4294901760
    %6949 = vmatpush1.msra.mxu0 %v6948
    %6950 = vmatprep.subr.mxu0 0.0
    %v6951 = vand.u32 %v64, 4294901760
    %6952 = vmatpush1.msra.mxu0 %v6951
    %6953 = vmatprep.subr.mxu0 0.0
    %v6954 = vand.u32 %v65, 4294901760
    %6955 = vmatpush1.msra.mxu0 %v6954
    %6956 = vmatprep.subr.mxu0 0.0
    %v6957 = vand.u32 %v66, 4294901760
    %6958 = vmatpush1.msra.mxu0 %v6957
    %6959 = vmatprep.subr.mxu0 0.0
    %v6960 = vand.u32 %v67, 4294901760
    %6961 = vmatpush1.msra.mxu0 %v6960
    %6962 = vmatprep.subr.mxu0 0.0
    %v6963 = vand.u32 %v68, 4294901760
    %6964 = vmatpush1.msra.mxu0 %v6963
    %6965 = vmatprep.subr.mxu0 0.0
    %v6966 = vand.u32 %v69, 4294901760
    %6967 = vmatpush1.msra.mxu0 %v6966
    %6968 = vmatprep.subr.mxu0 0.0
    %6969 = vmatpush1.msra.mxu0 0.0
    %6970 = vmatprep.subr.mxu0 0.0
    %6971 = vmatpush1.msra.mxu0 0.0
    %6972 = vmatprep.subr.mxu0 0.0
    %6973 = vmatpush1.msra.mxu0 0.0
    %6974 = vmatprep.subr.mxu0 0.0
    %6975 = vmatpush1.msra.mxu0 0.0
    %6976 = vmatprep.subr.mxu0 0.0
    %6977 = vmatpush1.msra.mxu0 0.0
    %6978 = vmatprep.subr.mxu0 0.0
    %6979 = vmatpush1.msra.mxu0 0.0
    %6980 = vmatprep.subr.mxu0 0.0
    %6981 = vmatpush1.msra.mxu0 0.0
    %6982 = vmatprep.subr.mxu0 0.0
    %6983 = vmatpush1.msra.mxu0 0.0
    %6984 = vmatprep.subr.mxu0 0.0
    %6985 = vmatpush1.msra.mxu0 0.0
    %6986 = vmatprep.subr.mxu0 0.0
    %6987 = vmatpush1.msra.mxu0 0.0
    %6988 = vmatprep.subr.mxu0 0.0
    %6989 = vmatpush1.msra.mxu0 0.0
    %6990 = vmatprep.subr.mxu0 0.0
    %6991 = vmatpush1.msra.mxu0 0.0
    %6992 = vmatprep.subr.mxu0 0.0
    %6993 = vmatpush1.msra.mxu0 0.0
    %6994 = vmatprep.subr.mxu0 0.0
    %6995 = vmatpush1.msra.mxu0 0.0
    %6996 = vmatprep.subr.mxu0 0.0
    %6997 = vmatpush1.msra.mxu0 0.0
    %6998 = vmatprep.subr.mxu0 0.0
    %6999 = vmatpush1.msra.mxu0 0.0
    %7000 = vmatprep.mubr.f32.mxu0 0.0
    %v7001 = vand.u32 %v6917, 4294901760
    %v7002 = vsub.f32 %v6917, %v7001
    %v7003 = vand.u32 %v7002, 4294901760
    %v7004 = vsub.f32 %v7002, %v7003
    %v7005 = vand.u32 %v7004, 4294901760
    %7006 = vmatmul.mubr.f32.gmra.mrb[0].mxu0 %v7005
    %v7007 = vpop.f32.mrb[0].mxu0
    %v7008 = vadd.f32 0.0, %v7007
    %v7009 = vpop.f32.mrb[0].mxu0
    %7010 = vmatprep.mubr.f32.mxu0 0.0
    %v7011 = vand.u32 %v6919, 4294901760
    %v7012 = vsub.f32 %v6919, %v7011
    %v7013 = vand.u32 %v7012, 4294901760
    %v7014 = vsub.f32 %v7012, %v7013
    %v7015 = vand.u32 %v7014, 4294901760
    %7016 = vmatmul.mubr.f32.gmra.mrb[0].mxu0 %v7015
    %v7017 = vpop.f32.mrb[0].mxu0
    %v7018 = vadd.f32 0.0, %v7017
    %v7019 = vpop.f32.mrb[0].mxu0
    %7020 = vdwg.mxu0
    %7021 = vmatprep.subr.mxu0 0.0
    %v7022 = vand.u32 %v54, 4294901760
    %v7023 = vsub.f32 %v54, %v7022
    %v7024 = vand.u32 %v7023, 4294901760
    %v7025 = vsub.f32 %v7023, %v7024
    %v7026 = vand.u32 %v7025, 4294901760
    %7027 = vmatpush1.msra.mxu0 %v7026
    %7028 = vmatprep.subr.mxu0 0.0
    %v7029 = vand.u32 %v55, 4294901760
    %v7030 = vsub.f32 %v55, %v7029
    %v7031 = vand.u32 %v7030, 4294901760
    %v7032 = vsub.f32 %v7030, %v7031
    %v7033 = vand.u32 %v7032, 4294901760
    %7034 = vmatpush1.msra.mxu0 %v7033
    %7035 = vmatprep.subr.mxu0 0.0
    %v7036 = vand.u32 %v56, 4294901760
    %v7037 = vsub.f32 %v56, %v7036
    %v7038 = vand.u32 %v7037, 4294901760
    %v7039 = vsub.f32 %v7037, %v7038
    %v7040 = vand.u32 %v7039, 4294901760
    %7041 = vmatpush1.msra.mxu0 %v7040
    %7042 = vmatprep.subr.mxu0 0.0
    %v7043 = vand.u32 %v57, 4294901760
    %v7044 = vsub.f32 %v57, %v7043
    %v7045 = vand.u32 %v7044, 4294901760
    %v7046 = vsub.f32 %v7044, %v7045
    %v7047 = vand.u32 %v7046, 4294901760
    %7048 = vmatpush1.msra.mxu0 %v7047
    %7049 = vmatprep.subr.mxu0 0.0
    %v7050 = vand.u32 %v58, 4294901760
    %v7051 = vsub.f32 %v58, %v7050
    %v7052 = vand.u32 %v7051, 4294901760
    %v7053 = vsub.f32 %v7051, %v7052
    %v7054 = vand.u32 %v7053, 4294901760
    %7055 = vmatpush1.msra.mxu0 %v7054
    %7056 = vmatprep.subr.mxu0 0.0
    %v7057 = vand.u32 %v59, 4294901760
    %v7058 = vsub.f32 %v59, %v7057
    %v7059 = vand.u32 %v7058, 4294901760
    %v7060 = vsub.f32 %v7058, %v7059
    %v7061 = vand.u32 %v7060, 4294901760
    %7062 = vmatpush1.msra.mxu0 %v7061
    %7063 = vmatprep.subr.mxu0 0.0
    %v7064 = vand.u32 %v60, 4294901760
    %v7065 = vsub.f32 %v60, %v7064
    %v7066 = vand.u32 %v7065, 4294901760
    %v7067 = vsub.f32 %v7065, %v7066
    %v7068 = vand.u32 %v7067, 4294901760
    %7069 = vmatpush1.msra.mxu0 %v7068
    %7070 = vmatprep.subr.mxu0 0.0
    %v7071 = vand.u32 %v61, 4294901760
    %v7072 = vsub.f32 %v61, %v7071
    %v7073 = vand.u32 %v7072, 4294901760
    %v7074 = vsub.f32 %v7072, %v7073
    %v7075 = vand.u32 %v7074, 4294901760
    %7076 = vmatpush1.msra.mxu0 %v7075
    %7077 = vmatprep.subr.mxu0 0.0
    %v7078 = vand.u32 %v62, 4294901760
    %v7079 = vsub.f32 %v62, %v7078
    %v7080 = vand.u32 %v7079, 4294901760
    %v7081 = vsub.f32 %v7079, %v7080
    %v7082 = vand.u32 %v7081, 4294901760
    %7083 = vmatpush1.msra.mxu0 %v7082
    %7084 = vmatprep.subr.mxu0 0.0
    %v7085 = vand.u32 %v63, 4294901760
    %v7086 = vsub.f32 %v63, %v7085
    %v7087 = vand.u32 %v7086, 4294901760
    %v7088 = vsub.f32 %v7086, %v7087
    %v7089 = vand.u32 %v7088, 4294901760
    %7090 = vmatpush1.msra.mxu0 %v7089
    %7091 = vmatprep.subr.mxu0 0.0
    %v7092 = vand.u32 %v64, 4294901760
    %v7093 = vsub.f32 %v64, %v7092
    %v7094 = vand.u32 %v7093, 4294901760
    %v7095 = vsub.f32 %v7093, %v7094
    %v7096 = vand.u32 %v7095, 4294901760
    %7097 = vmatpush1.msra.mxu0 %v7096
    %7098 = vmatprep.subr.mxu0 0.0
    %v7099 = vand.u32 %v65, 4294901760
    %v7100 = vsub.f32 %v65, %v7099
    %v7101 = vand.u32 %v7100, 4294901760
    %v7102 = vsub.f32 %v7100, %v7101
    %v7103 = vand.u32 %v7102, 4294901760
    %7104 = vmatpush1.msra.mxu0 %v7103
    %7105 = vmatprep.subr.mxu0 0.0
    %v7106 = vand.u32 %v66, 4294901760
    %v7107 = vsub.f32 %v66, %v7106
    %v7108 = vand.u32 %v7107, 4294901760
    %v7109 = vsub.f32 %v7107, %v7108
    %v7110 = vand.u32 %v7109, 4294901760
    %7111 = vmatpush1.msra.mxu0 %v7110
    %7112 = vmatprep.subr.mxu0 0.0
    %v7113 = vand.u32 %v67, 4294901760
    %v7114 = vsub.f32 %v67, %v7113
    %v7115 = vand.u32 %v7114, 4294901760
    %v7116 = vsub.f32 %v7114, %v7115
    %v7117 = vand.u32 %v7116, 4294901760
    %7118 = vmatpush1.msra.mxu0 %v7117
    %7119 = vmatprep.subr.mxu0 0.0
    %v7120 = vand.u32 %v68, 4294901760
    %v7121 = vsub.f32 %v68, %v7120
    %v7122 = vand.u32 %v7121, 4294901760
    %v7123 = vsub.f32 %v7121, %v7122
    %v7124 = vand.u32 %v7123, 4294901760
    %7125 = vmatpush1.msra.mxu0 %v7124
    %7126 = vmatprep.subr.mxu0 0.0
    %v7127 = vand.u32 %v69, 4294901760
    %v7128 = vsub.f32 %v69, %v7127
    %v7129 = vand.u32 %v7128, 4294901760
    %v7130 = vsub.f32 %v7128, %v7129
    %v7131 = vand.u32 %v7130, 4294901760
    %7132 = vmatpush1.msra.mxu0 %v7131
    %7133 = vmatprep.subr.mxu0 0.0
    %7134 = vmatpush1.msra.mxu0 0.0
    %7135 = vmatprep.subr.mxu0 0.0
    %7136 = vmatpush1.msra.mxu0 0.0
    %7137 = vmatprep.subr.mxu0 0.0
    %7138 = vmatpush1.msra.mxu0 0.0
    %7139 = vmatprep.subr.mxu0 0.0
    %7140 = vmatpush1.msra.mxu0 0.0
    %7141 = vmatprep.subr.mxu0 0.0
    %7142 = vmatpush1.msra.mxu0 0.0
    %7143 = vmatprep.subr.mxu0 0.0
    %7144 = vmatpush1.msra.mxu0 0.0
    %7145 = vmatprep.subr.mxu0 0.0
    %7146 = vmatpush1.msra.mxu0 0.0
    %7147 = vmatprep.subr.mxu0 0.0
    %7148 = vmatpush1.msra.mxu0 0.0
    %7149 = vmatprep.subr.mxu0 0.0
    %7150 = vmatpush1.msra.mxu0 0.0
    %7151 = vmatprep.subr.mxu0 0.0
    %7152 = vmatpush1.msra.mxu0 0.0
    %7153 = vmatprep.subr.mxu0 0.0
    %7154 = vmatpush1.msra.mxu0 0.0
    %7155 = vmatprep.subr.mxu0 0.0
    %7156 = vmatpush1.msra.mxu0 0.0
    %7157 = vmatprep.subr.mxu0 0.0
    %7158 = vmatpush1.msra.mxu0 0.0
    %7159 = vmatprep.subr.mxu0 0.0
    %7160 = vmatpush1.msra.mxu0 0.0
    %7161 = vmatprep.subr.mxu0 0.0
    %7162 = vmatpush1.msra.mxu0 0.0
    %7163 = vmatprep.subr.mxu0 0.0
    %7164 = vmatpush1.msra.mxu0 0.0
    %7165 = vmatprep.mubr.f32.mxu0 0.0
    %v7166 = vand.u32 %v6917, 4294901760
    %7167 = vmatmul.mubr.f32.gmra.mrb[0].mxu0 %v7166
    %v7168 = vpop.f32.mrb[0].mxu0
    %v7169 = vadd.f32 %v7008, %v7168
    %v7170 = vpop.f32.mrb[0].mxu0
    %7171 = vmatprep.mubr.f32.mxu0 0.0
    %v7172 = vand.u32 %v6919, 4294901760
    %7173 = vmatmul.mubr.f32.gmra.mrb[0].mxu0 %v7172
    %v7174 = vpop.f32.mrb[0].mxu0
    %v7175 = vadd.f32 %v7018, %v7174
    %v7176 = vpop.f32.mrb[0].mxu0
    %7177 = vdwg.mxu0
    %7178 = vmatprep.subr.mxu0 0.0
    %v7179 = vand.u32 %v54, 4294901760
    %v7180 = vsub.f32 %v54, %v7179
    %7181 = vmatpush1.msra.mxu0 %v7180
    %7182 = vmatprep.subr.mxu0 0.0
    %v7183 = vand.u32 %v55, 4294901760
    %v7184 = vsub.f32 %v55, %v7183
    %7185 = vmatpush1.msra.mxu0 %v7184
    %7186 = vmatprep.subr.mxu0 0.0
    %v7187 = vand.u32 %v56, 4294901760
    %v7188 = vsub.f32 %v56, %v7187
    %7189 = vmatpush1.msra.mxu0 %v7188
    %7190 = vmatprep.subr.mxu0 0.0
    %v7191 = vand.u32 %v57, 4294901760
    %v7192 = vsub.f32 %v57, %v7191
    %7193 = vmatpush1.msra.mxu0 %v7192
    %7194 = vmatprep.subr.mxu0 0.0
    %v7195 = vand.u32 %v58, 4294901760
    %v7196 = vsub.f32 %v58, %v7195
    %7197 = vmatpush1.msra.mxu0 %v7196
    %7198 = vmatprep.subr.mxu0 0.0
    %v7199 = vand.u32 %v59, 4294901760
    %v7200 = vsub.f32 %v59, %v7199
    %7201 = vmatpush1.msra.mxu0 %v7200
    %7202 = vmatprep.subr.mxu0 0.0
    %v7203 = vand.u32 %v60, 4294901760
    %v7204 = vsub.f32 %v60, %v7203
    %7205 = vmatpush1.msra.mxu0 %v7204
    %7206 = vmatprep.subr.mxu0 0.0
    %v7207 = vand.u32 %v61, 4294901760
    %v7208 = vsub.f32 %v61, %v7207
    %7209 = vmatpush1.msra.mxu0 %v7208
    %7210 = vmatprep.subr.mxu0 0.0
    %v7211 = vand.u32 %v62, 4294901760
    %v7212 = vsub.f32 %v62, %v7211
    %7213 = vmatpush1.msra.mxu0 %v7212
    %7214 = vmatprep.subr.mxu0 0.0
    %v7215 = vand.u32 %v63, 4294901760
    %v7216 = vsub.f32 %v63, %v7215
    %7217 = vmatpush1.msra.mxu0 %v7216
    %7218 = vmatprep.subr.mxu0 0.0
    %v7219 = vand.u32 %v64, 4294901760
    %v7220 = vsub.f32 %v64, %v7219
    %7221 = vmatpush1.msra.mxu0 %v7220
    %7222 = vmatprep.subr.mxu0 0.0
    %v7223 = vand.u32 %v65, 4294901760
    %v7224 = vsub.f32 %v65, %v7223
    %7225 = vmatpush1.msra.mxu0 %v7224
    %7226 = vmatprep.subr.mxu0 0.0
    %v7227 = vand.u32 %v66, 4294901760
    %v7228 = vsub.f32 %v66, %v7227
    %7229 = vmatpush1.msra.mxu0 %v7228
    %7230 = vmatprep.subr.mxu0 0.0
    %v7231 = vand.u32 %v67, 4294901760
    %v7232 = vsub.f32 %v67, %v7231
    %7233 = vmatpush1.msra.mxu0 %v7232
    %7234 = vmatprep.subr.mxu0 0.0
    %v7235 = vand.u32 %v68, 4294901760
    %v7236 = vsub.f32 %v68, %v7235
    %7237 = vmatpush1.msra.mxu0 %v7236
    %7238 = vmatprep.subr.mxu0 0.0
    %v7239 = vand.u32 %v69, 4294901760
    %v7240 = vsub.f32 %v69, %v7239
    %7241 = vmatpush1.msra.mxu0 %v7240
    %7242 = vmatprep.subr.mxu0 0.0
    %7243 = vmatpush1.msra.mxu0 0.0
    %7244 = vmatprep.subr.mxu0 0.0
    %7245 = vmatpush1.msra.mxu0 0.0
    %7246 = vmatprep.subr.mxu0 0.0
    %7247 = vmatpush1.msra.mxu0 0.0
    %7248 = vmatprep.subr.mxu0 0.0
    %7249 = vmatpush1.msra.mxu0 0.0
    %7250 = vmatprep.subr.mxu0 0.0
    %7251 = vmatpush1.msra.mxu0 0.0
    %7252 = vmatprep.subr.mxu0 0.0
    %7253 = vmatpush1.msra.mxu0 0.0
    %7254 = vmatprep.subr.mxu0 0.0
    %7255 = vmatpush1.msra.mxu0 0.0
    %7256 = vmatprep.subr.mxu0 0.0
    %7257 = vmatpush1.msra.mxu0 0.0
    %7258 = vmatprep.subr.mxu0 0.0
    %7259 = vmatpush1.msra.mxu0 0.0
    %7260 = vmatprep.subr.mxu0 0.0
    %7261 = vmatpush1.msra.mxu0 0.0
    %7262 = vmatprep.subr.mxu0 0.0
    %7263 = vmatpush1.msra.mxu0 0.0
    %7264 = vmatprep.subr.mxu0 0.0
    %7265 = vmatpush1.msra.mxu0 0.0
    %7266 = vmatprep.subr.mxu0 0.0
    %7267 = vmatpush1.msra.mxu0 0.0
    %7268 = vmatprep.subr.mxu0 0.0
    %7269 = vmatpush1.msra.mxu0 0.0
    %7270 = vmatprep.subr.mxu0 0.0
    %7271 = vmatpush1.msra.mxu0 0.0
    %7272 = vmatprep.subr.mxu0 0.0
    %7273 = vmatpush1.msra.mxu0 0.0
    %7274 = vmatprep.mubr.f32.mxu0 0.0
    %v7275 = vand.u32 %v6917, 4294901760
    %v7276 = vsub.f32 %v6917, %v7275
    %7277 = vmatmul.mubr.f32.gmra.mrb[0].mxu0 %v7276
    %v7278 = vpop.f32.mrb[0].mxu0
    %v7279 = vadd.f32 %v7169, %v7278
    %v7280 = vpop.f32.mrb[0].mxu0
    %7281 = vmatprep.mubr.f32.mxu0 0.0
    %v7282 = vand.u32 %v6919, 4294901760
    %v7283 = vsub.f32 %v6919, %v7282
    %7284 = vmatmul.mubr.f32.gmra.mrb[0].mxu0 %v7283
    %v7285 = vpop.f32.mrb[0].mxu0
    %v7286 = vadd.f32 %v7175, %v7285
    %v7287 = vpop.f32.mrb[0].mxu0
    %7288 = vdwg.mxu0
    %7289 = vmatprep.subr.mxu0 0.0
    %v7290 = vand.u32 %v54, 4294901760
    %7291 = vmatpush1.msra.mxu0 %v7290
    %7292 = vmatprep.subr.mxu0 0.0
    %v7293 = vand.u32 %v55, 4294901760
    %7294 = vmatpush1.msra.mxu0 %v7293
    %7295 = vmatprep.subr.mxu0 0.0
    %v7296 = vand.u32 %v56, 4294901760
    %7297 = vmatpush1.msra.mxu0 %v7296
    %7298 = vmatprep.subr.mxu0 0.0
    %v7299 = vand.u32 %v57, 4294901760
    %7300 = vmatpush1.msra.mxu0 %v7299
    %7301 = vmatprep.subr.mxu0 0.0
    %v7302 = vand.u32 %v58, 4294901760
    %7303 = vmatpush1.msra.mxu0 %v7302
    %7304 = vmatprep.subr.mxu0 0.0
    %v7305 = vand.u32 %v59, 4294901760
    %7306 = vmatpush1.msra.mxu0 %v7305
    %7307 = vmatprep.subr.mxu0 0.0
    %v7308 = vand.u32 %v60, 4294901760
    %7309 = vmatpush1.msra.mxu0 %v7308
    %7310 = vmatprep.subr.mxu0 0.0
    %v7311 = vand.u32 %v61, 4294901760
    %7312 = vmatpush1.msra.mxu0 %v7311
    %7313 = vmatprep.subr.mxu0 0.0
    %v7314 = vand.u32 %v62, 4294901760
    %7315 = vmatpush1.msra.mxu0 %v7314
    %7316 = vmatprep.subr.mxu0 0.0
    %v7317 = vand.u32 %v63, 4294901760
    %7318 = vmatpush1.msra.mxu0 %v7317
    %7319 = vmatprep.subr.mxu0 0.0
    %v7320 = vand.u32 %v64, 4294901760
    %7321 = vmatpush1.msra.mxu0 %v7320
    %7322 = vmatprep.subr.mxu0 0.0
    %v7323 = vand.u32 %v65, 4294901760
    %7324 = vmatpush1.msra.mxu0 %v7323
    %7325 = vmatprep.subr.mxu0 0.0
    %v7326 = vand.u32 %v66, 4294901760
    %7327 = vmatpush1.msra.mxu0 %v7326
    %7328 = vmatprep.subr.mxu0 0.0
    %v7329 = vand.u32 %v67, 4294901760
    %7330 = vmatpush1.msra.mxu0 %v7329
    %7331 = vmatprep.subr.mxu0 0.0
    %v7332 = vand.u32 %v68, 4294901760
    %7333 = vmatpush1.msra.mxu0 %v7332
    %7334 = vmatprep.subr.mxu0 0.0
    %v7335 = vand.u32 %v69, 4294901760
    %7336 = vmatpush1.msra.mxu0 %v7335
    %7337 = vmatprep.subr.mxu0 0.0
    %7338 = vmatpush1.msra.mxu0 0.0
    %7339 = vmatprep.subr.mxu0 0.0
    %7340 = vmatpush1.msra.mxu0 0.0
    %7341 = vmatprep.subr.mxu0 0.0
    %7342 = vmatpush1.msra.mxu0 0.0
    %7343 = vmatprep.subr.mxu0 0.0
    %7344 = vmatpush1.msra.mxu0 0.0
    %7345 = vmatprep.subr.mxu0 0.0
    %7346 = vmatpush1.msra.mxu0 0.0
    %7347 = vmatprep.subr.mxu0 0.0
    %7348 = vmatpush1.msra.mxu0 0.0
    %7349 = vmatprep.subr.mxu0 0.0
    %7350 = vmatpush1.msra.mxu0 0.0
    %7351 = vmatprep.subr.mxu0 0.0
    %7352 = vmatpush1.msra.mxu0 0.0
    %7353 = vmatprep.subr.mxu0 0.0
    %7354 = vmatpush1.msra.mxu0 0.0
    %7355 = vmatprep.subr.mxu0 0.0
    %7356 = vmatpush1.msra.mxu0 0.0
    %7357 = vmatprep.subr.mxu0 0.0
    %7358 = vmatpush1.msra.mxu0 0.0
    %7359 = vmatprep.subr.mxu0 0.0
    %7360 = vmatpush1.msra.mxu0 0.0
    %7361 = vmatprep.subr.mxu0 0.0
    %7362 = vmatpush1.msra.mxu0 0.0
    %7363 = vmatprep.subr.mxu0 0.0
    %7364 = vmatpush1.msra.mxu0 0.0
    %7365 = vmatprep.subr.mxu0 0.0
    %7366 = vmatpush1.msra.mxu0 0.0
    %7367 = vmatprep.subr.mxu0 0.0
    %7368 = vmatpush1.msra.mxu0 0.0
    %7369 = vmatprep.mubr.f32.mxu0 0.0
    %v7370 = vand.u32 %v6917, 4294901760
    %v7371 = vsub.f32 %v6917, %v7370
    %v7372 = vand.u32 %v7371, 4294901760
    %7373 = vmatmul.mubr.f32.gmra.mrb[0].mxu0 %v7372
    %v7374 = vpop.f32.mrb[0].mxu0
    %v7375 = vadd.f32 %v7279, %v7374
    %v7376 = vpop.f32.mrb[0].mxu0
    %7377 = vmatprep.mubr.f32.mxu0 0.0
    %v7378 = vand.u32 %v6919, 4294901760
    %v7379 = vsub.f32 %v6919, %v7378
    %v7380 = vand.u32 %v7379, 4294901760
    %7381 = vmatmul.mubr.f32.gmra.mrb[0].mxu0 %v7380
    %v7382 = vpop.f32.mrb[0].mxu0
    %v7383 = vadd.f32 %v7286, %v7382
    %v7384 = vpop.f32.mrb[0].mxu0
    %7385 = vdwg.mxu0
    %7386 = vmatprep.subr.mxu0 0.0
    %v7387 = vand.u32 %v54, 4294901760
    %v7388 = vsub.f32 %v54, %v7387
    %v7389 = vand.u32 %v7388, 4294901760
    %7390 = vmatpush1.msra.mxu0 %v7389
    %7391 = vmatprep.subr.mxu0 0.0
    %v7392 = vand.u32 %v55, 4294901760
    %v7393 = vsub.f32 %v55, %v7392
    %v7394 = vand.u32 %v7393, 4294901760
    %7395 = vmatpush1.msra.mxu0 %v7394
    %7396 = vmatprep.subr.mxu0 0.0
    %v7397 = vand.u32 %v56, 4294901760
    %v7398 = vsub.f32 %v56, %v7397
    %v7399 = vand.u32 %v7398, 4294901760
    %7400 = vmatpush1.msra.mxu0 %v7399
    %7401 = vmatprep.subr.mxu0 0.0
    %v7402 = vand.u32 %v57, 4294901760
    %v7403 = vsub.f32 %v57, %v7402
    %v7404 = vand.u32 %v7403, 4294901760
    %7405 = vmatpush1.msra.mxu0 %v7404
    %7406 = vmatprep.subr.mxu0 0.0
    %v7407 = vand.u32 %v58, 4294901760
    %v7408 = vsub.f32 %v58, %v7407
    %v7409 = vand.u32 %v7408, 4294901760
    %7410 = vmatpush1.msra.mxu0 %v7409
    %7411 = vmatprep.subr.mxu0 0.0
    %v7412 = vand.u32 %v59, 4294901760
    %v7413 = vsub.f32 %v59, %v7412
    %v7414 = vand.u32 %v7413, 4294901760
    %7415 = vmatpush1.msra.mxu0 %v7414
    %7416 = vmatprep.subr.mxu0 0.0
    %v7417 = vand.u32 %v60, 4294901760
    %v7418 = vsub.f32 %v60, %v7417
    %v7419 = vand.u32 %v7418, 4294901760
    %7420 = vmatpush1.msra.mxu0 %v7419
    %7421 = vmatprep.subr.mxu0 0.0
    %v7422 = vand.u32 %v61, 4294901760
    %v7423 = vsub.f32 %v61, %v7422
    %v7424 = vand.u32 %v7423, 4294901760
    %7425 = vmatpush1.msra.mxu0 %v7424
    %7426 = vmatprep.subr.mxu0 0.0
    %v7427 = vand.u32 %v62, 4294901760
    %v7428 = vsub.f32 %v62, %v7427
    %v7429 = vand.u32 %v7428, 4294901760
    %7430 = vmatpush1.msra.mxu0 %v7429
    %7431 = vmatprep.subr.mxu0 0.0
    %v7432 = vand.u32 %v63, 4294901760
    %v7433 = vsub.f32 %v63, %v7432
    %v7434 = vand.u32 %v7433, 4294901760
    %7435 = vmatpush1.msra.mxu0 %v7434
    %7436 = vmatprep.subr.mxu0 0.0
    %v7437 = vand.u32 %v64, 4294901760
    %v7438 = vsub.f32 %v64, %v7437
    %v7439 = vand.u32 %v7438, 4294901760
    %7440 = vmatpush1.msra.mxu0 %v7439
    %7441 = vmatprep.subr.mxu0 0.0
    %v7442 = vand.u32 %v65, 4294901760
    %v7443 = vsub.f32 %v65, %v7442
    %v7444 = vand.u32 %v7443, 4294901760
    %7445 = vmatpush1.msra.mxu0 %v7444
    %7446 = vmatprep.subr.mxu0 0.0
    %v7447 = vand.u32 %v66, 4294901760
    %v7448 = vsub.f32 %v66, %v7447
    %v7449 = vand.u32 %v7448, 4294901760
    %7450 = vmatpush1.msra.mxu0 %v7449
    %7451 = vmatprep.subr.mxu0 0.0
    %v7452 = vand.u32 %v67, 4294901760
    %v7453 = vsub.f32 %v67, %v7452
    %v7454 = vand.u32 %v7453, 4294901760
    %7455 = vmatpush1.msra.mxu0 %v7454
    %7456 = vmatprep.subr.mxu0 0.0
    %v7457 = vand.u32 %v68, 4294901760
    %v7458 = vsub.f32 %v68, %v7457
    %v7459 = vand.u32 %v7458, 4294901760
    %7460 = vmatpush1.msra.mxu0 %v7459
    %7461 = vmatprep.subr.mxu0 0.0
    %v7462 = vand.u32 %v69, 4294901760
    %v7463 = vsub.f32 %v69, %v7462
    %v7464 = vand.u32 %v7463, 4294901760
    %7465 = vmatpush1.msra.mxu0 %v7464
    %7466 = vmatprep.subr.mxu0 0.0
    %7467 = vmatpush1.msra.mxu0 0.0
    %7468 = vmatprep.subr.mxu0 0.0
    %7469 = vmatpush1.msra.mxu0 0.0
    %7470 = vmatprep.subr.mxu0 0.0
    %7471 = vmatpush1.msra.mxu0 0.0
    %7472 = vmatprep.subr.mxu0 0.0
    %7473 = vmatpush1.msra.mxu0 0.0
    %7474 = vmatprep.subr.mxu0 0.0
    %7475 = vmatpush1.msra.mxu0 0.0
    %7476 = vmatprep.subr.mxu0 0.0
    %7477 = vmatpush1.msra.mxu0 0.0
    %7478 = vmatprep.subr.mxu0 0.0
    %7479 = vmatpush1.msra.mxu0 0.0
    %7480 = vmatprep.subr.mxu0 0.0
    %7481 = vmatpush1.msra.mxu0 0.0
    %7482 = vmatprep.subr.mxu0 0.0
    %7483 = vmatpush1.msra.mxu0 0.0
    %7484 = vmatprep.subr.mxu0 0.0
    %7485 = vmatpush1.msra.mxu0 0.0
    %7486 = vmatprep.subr.mxu0 0.0
    %7487 = vmatpush1.msra.mxu0 0.0
    %7488 = vmatprep.subr.mxu0 0.0
    %7489 = vmatpush1.msra.mxu0 0.0
    %7490 = vmatprep.subr.mxu0 0.0
    %7491 = vmatpush1.msra.mxu0 0.0
    %7492 = vmatprep.subr.mxu0 0.0
    %7493 = vmatpush1.msra.mxu0 0.0
    %7494 = vmatprep.subr.mxu0 0.0
    %7495 = vmatpush1.msra.mxu0 0.0
    %7496 = vmatprep.subr.mxu0 0.0
    %7497 = vmatpush1.msra.mxu0 0.0
    %7498 = vmatprep.mubr.f32.mxu0 0.0
    %v7499 = vand.u32 %v6917, 4294901760
    %7500 = vmatmul.mubr.f32.gmra.mrb[0].mxu0 %v7499
    %v7501 = vpop.f32.mrb[0].mxu0
    %v7502 = vadd.f32 %v7375, %v7501
    %v7503 = vpop.f32.mrb[0].mxu0
    %7504 = vmatprep.mubr.f32.mxu0 0.0
    %v7505 = vand.u32 %v6919, 4294901760
    %7506 = vmatmul.mubr.f32.gmra.mrb[0].mxu0 %v7505
    %v7507 = vpop.f32.mrb[0].mxu0
    %v7508 = vadd.f32 %v7383, %v7507
    %v7509 = vpop.f32.mrb[0].mxu0
    %7510 = vdwg.mxu0
    %7511 = vmatprep.subr.mxu0 0.0
    %v7512 = vand.u32 %v54, 4294901760
    %7513 = vmatpush1.msra.mxu0 %v7512
    %7514 = vmatprep.subr.mxu0 0.0
    %v7515 = vand.u32 %v55, 4294901760
    %7516 = vmatpush1.msra.mxu0 %v7515
    %7517 = vmatprep.subr.mxu0 0.0
    %v7518 = vand.u32 %v56, 4294901760
    %7519 = vmatpush1.msra.mxu0 %v7518
    %7520 = vmatprep.subr.mxu0 0.0
    %v7521 = vand.u32 %v57, 4294901760
    %7522 = vmatpush1.msra.mxu0 %v7521
    %7523 = vmatprep.subr.mxu0 0.0
    %v7524 = vand.u32 %v58, 4294901760
    %7525 = vmatpush1.msra.mxu0 %v7524
    %7526 = vmatprep.subr.mxu0 0.0
    %v7527 = vand.u32 %v59, 4294901760
    %7528 = vmatpush1.msra.mxu0 %v7527
    %7529 = vmatprep.subr.mxu0 0.0
    %v7530 = vand.u32 %v60, 4294901760
    %7531 = vmatpush1.msra.mxu0 %v7530
    %7532 = vmatprep.subr.mxu0 0.0
    %v7533 = vand.u32 %v61, 4294901760
    %7534 = vmatpush1.msra.mxu0 %v7533
    %7535 = vmatprep.subr.mxu0 0.0
    %v7536 = vand.u32 %v62, 4294901760
    %7537 = vmatpush1.msra.mxu0 %v7536
    %7538 = vmatprep.subr.mxu0 0.0
    %v7539 = vand.u32 %v63, 4294901760
    %7540 = vmatpush1.msra.mxu0 %v7539
    %7541 = vmatprep.subr.mxu0 0.0
    %v7542 = vand.u32 %v64, 4294901760
    %7543 = vmatpush1.msra.mxu0 %v7542
    %7544 = vmatprep.subr.mxu0 0.0
    %v7545 = vand.u32 %v65, 4294901760
    %7546 = vmatpush1.msra.mxu0 %v7545
    %7547 = vmatprep.subr.mxu0 0.0
    %v7548 = vand.u32 %v66, 4294901760
    %7549 = vmatpush1.msra.mxu0 %v7548
    %7550 = vmatprep.subr.mxu0 0.0
    %v7551 = vand.u32 %v67, 4294901760
    %7552 = vmatpush1.msra.mxu0 %v7551
    %7553 = vmatprep.subr.mxu0 0.0
    %v7554 = vand.u32 %v68, 4294901760
    %7555 = vmatpush1.msra.mxu0 %v7554
    %7556 = vmatprep.subr.mxu0 0.0
    %v7557 = vand.u32 %v69, 4294901760
    %7558 = vmatpush1.msra.mxu0 %v7557
    %7559 = vmatprep.subr.mxu0 0.0
    %7560 = vmatpush1.msra.mxu0 0.0
    %7561 = vmatprep.subr.mxu0 0.0
    %7562 = vmatpush1.msra.mxu0 0.0
    %7563 = vmatprep.subr.mxu0 0.0
    %7564 = vmatpush1.msra.mxu0 0.0
    %7565 = vmatprep.subr.mxu0 0.0
    %7566 = vmatpush1.msra.mxu0 0.0
    %7567 = vmatprep.subr.mxu0 0.0
    %7568 = vmatpush1.msra.mxu0 0.0
    %7569 = vmatprep.subr.mxu0 0.0
    %7570 = vmatpush1.msra.mxu0 0.0
    %7571 = vmatprep.subr.mxu0 0.0
    %7572 = vmatpush1.msra.mxu0 0.0
    %7573 = vmatprep.subr.mxu0 0.0
    %7574 = vmatpush1.msra.mxu0 0.0
    %7575 = vmatprep.subr.mxu0 0.0
    %7576 = vmatpush1.msra.mxu0 0.0
    %7577 = vmatprep.subr.mxu0 0.0
    %7578 = vmatpush1.msra.mxu0 0.0
    %7579 = vmatprep.subr.mxu0 0.0
    %7580 = vmatpush1.msra.mxu0 0.0
    %7581 = vmatprep.subr.mxu0 0.0
    %7582 = vmatpush1.msra.mxu0 0.0
    %7583 = vmatprep.subr.mxu0 0.0
    %7584 = vmatpush1.msra.mxu0 0.0
    %7585 = vmatprep.subr.mxu0 0.0
    %7586 = vmatpush1.msra.mxu0 0.0
    %7587 = vmatprep.subr.mxu0 0.0
    %7588 = vmatpush1.msra.mxu0 0.0
    %7589 = vmatprep.subr.mxu0 0.0
    %7590 = vmatpush1.msra.mxu0 0.0
    %7591 = vmatprep.mubr.f32.mxu0 0.0
    %v7592 = vand.u32 %v6917, 4294901760
    %7593 = vmatmul.mubr.f32.gmra.mrb[0].mxu0 %v7592
    %v7594 = vpop.f32.mrb[0].mxu0
    %v7595 = vadd.f32 %v7502, %v7594
    %v7596 = vpop.f32.mrb[0].mxu0
    %7597 = vmatprep.mubr.f32.mxu0 0.0
    %v7598 = vand.u32 %v6919, 4294901760
    %7599 = vmatmul.mubr.f32.gmra.mrb[0].mxu0 %v7598
    %v7600 = vpop.f32.mrb[0].mxu0
    %v7601 = vadd.f32 %v7508, %v7600
    %v7602 = vpop.f32.mrb[0].mxu0
    %7603 = vdwg.mxu0
    %v7604 = vmax.f32 %v7595, 1e-20
    %v7605 = vmax.f32 %v7601, 1e-20
    %v7606 = vrcp.pop %v7604
    %v7607 = vrcp.pop %v7605
    %v7608 = vmul.f32 %v6917, %v7606
    %v7609 = vmul.f32 %v6919, %v7607
    %s7610 = scalar_lea.vmem [#allocation2], 1024
    %v7611 = vld [vmem:[%s7610] sm:$0xff]
    %v7612 = vld [vmem:[%s7610 + $0x8] sm:$0xff]
    %v7613 = vld [vmem:[%s7610 + $0x10] sm:$0xff]
    %v7614 = vld [vmem:[%s7610 + $0x18] sm:$0xff]
    %v7615 = vld [vmem:[%s7610 + $0x20] sm:$0xff]
    %v7616 = vld [vmem:[%s7610 + $0x28] sm:$0xff]
    %v7617 = vld [vmem:[%s7610 + $0x30] sm:$0xff]
    %v7618 = vld [vmem:[%s7610 + $0x38] sm:$0xff]
    %v7619 = vld [vmem:[%s7610 + $0x40] sm:$0xff]
    %v7620 = vld [vmem:[%s7610 + $0x48] sm:$0xff]
    %v7621 = vld [vmem:[%s7610 + $0x50] sm:$0xff]
    %v7622 = vld [vmem:[%s7610 + $0x58] sm:$0xff]
    %v7623 = vld [vmem:[%s7610 + $0x60] sm:$0xff]
    %v7624 = vld [vmem:[%s7610 + $0x68] sm:$0xff]
    %v7625 = vld [vmem:[%s7610 + $0x70] sm:$0xff]
    %v7626 = vld [vmem:[%s7610 + $0x78] sm:$0xff]
    %7627 = vmatprep.subr.mxu0 0.0
    %v7628 = vand.u32 %v5469, 4294901760
    %7629 = vmatpush1.msra.mxu0 %v7628
    %7630 = vmatprep.subr.mxu0 0.0
    %v7631 = vand.u32 %v5475, 4294901760
    %7632 = vmatpush1.msra.mxu0 %v7631
    %7633 = vmatprep.subr.mxu0 0.0
    %7634 = vmatpush1.msra.mxu0 0.0
    %7635 = vmatprep.subr.mxu0 0.0
    %7636 = vmatpush1.msra.mxu0 0.0
    %7637 = vmatprep.subr.mxu0 0.0
    %7638 = vmatpush1.msra.mxu0 0.0
    %7639 = vmatprep.subr.mxu0 0.0
    %7640 = vmatpush1.msra.mxu0 0.0
    %7641 = vmatprep.subr.mxu0 0.0
    %7642 = vmatpush1.msra.mxu0 0.0
    %7643 = vmatprep.subr.mxu0 0.0
    %7644 = vmatpush1.msra.mxu0 0.0
    %7645 = vmatprep.subr.mxu0 0.0
    %7646 = vmatpush1.msra.mxu0 0.0
    %7647 = vmatprep.subr.mxu0 0.0
    %7648 = vmatpush1.msra.mxu0 0.0
    %7649 = vmatprep.subr.mxu0 0.0
    %7650 = vmatpush1.msra.mxu0 0.0
    %7651 = vmatprep.subr.mxu0 0.0
    %7652 = vmatpush1.msra.mxu0 0.0
    %7653 = vmatprep.subr.mxu0 0.0
    %7654 = vmatpush1.msra.mxu0 0.0
    %7655 = vmatprep.subr.mxu0 0.0
    %7656 = vmatpush1.msra.mxu0 0.0
    %7657 = vmatprep.subr.mxu0 0.0
    %7658 = vmatpush1.msra.mxu0 0.0
    %7659 = vmatprep.subr.mxu0 0.0
    %7660 = vmatpush1.msra.mxu0 0.0
    %7661 = vmatprep.subr.mxu0 0.0
    %7662 = vmatpush1.msra.mxu0 0.0
    %7663 = vmatprep.subr.mxu0 0.0
    %7664 = vmatpush1.msra.mxu0 0.0
    %7665 = vmatprep.subr.mxu0 0.0
    %7666 = vmatpush1.msra.mxu0 0.0
    %7667 = vmatprep.subr.mxu0 0.0
    %7668 = vmatpush1.msra.mxu0 0.0
    %7669 = vmatprep.subr.mxu0 0.0
    %7670 = vmatpush1.msra.mxu0 0.0
    %7671 = vmatprep.subr.mxu0 0.0
    %7672 = vmatpush1.msra.mxu0 0.0
    %7673 = vmatprep.subr.mxu0 0.0
    %7674 = vmatpush1.msra.mxu0 0.0
    %7675 = vmatprep.subr.mxu0 0.0
    %7676 = vmatpush1.msra.mxu0 0.0
    %7677 = vmatprep.subr.mxu0 0.0
    %7678 = vmatpush1.msra.mxu0 0.0
    %7679 = vmatprep.subr.mxu0 0.0
    %7680 = vmatpush1.msra.mxu0 0.0
    %7681 = vmatprep.subr.mxu0 0.0
    %7682 = vmatpush1.msra.mxu0 0.0
    %7683 = vmatprep.subr.mxu0 0.0
    %7684 = vmatpush1.msra.mxu0 0.0
    %7685 = vmatprep.subr.mxu0 0.0
    %7686 = vmatpush1.msra.mxu0 0.0
    %7687 = vmatprep.subr.mxu0 0.0
    %7688 = vmatpush1.msra.mxu0 0.0
    %7689 = vmatprep.subr.mxu0 0.0
    %7690 = vmatpush1.msra.mxu0 0.0
    %7691 = vmatprep.subr.mxu0 0.0
    %7692 = vmatpush1.msra.mxu0 0.0
    %7693 = vmatprep.mubr.f32.mxu0 0.0
    %v7694 = vand.u32 %v2921, 4294901760
    %v7695 = vsub.f32 %v2921, %v7694
    %v7696 = vand.u32 %v7695, 4294901760
    %v7697 = vsub.f32 %v7695, %v7696
    %v7698 = vand.u32 %v7697, 4294901760
    %7699 = vmatmul.mubr.f32.gmra.mrb[0].mxu0 %v7698
    %v7700 = vpop.f32.mrb[0].mxu0
    %v7701 = vadd.f32 0.0, %v7700
    %v7702 = vpop.f32.mrb[0].mxu0
    %7703 = vmatprep.mubr.f32.mxu0 0.0
    %v7704 = vand.u32 %v2924, 4294901760
    %v7705 = vsub.f32 %v2924, %v7704
    %v7706 = vand.u32 %v7705, 4294901760
    %v7707 = vsub.f32 %v7705, %v7706
    %v7708 = vand.u32 %v7707, 4294901760
    %7709 = vmatmul.mubr.f32.gmra.mrb[0].mxu0 %v7708
    %v7710 = vpop.f32.mrb[0].mxu0
    %v7711 = vadd.f32 0.0, %v7710
    %v7712 = vpop.f32.mrb[0].mxu0
    %7713 = vmatprep.mubr.f32.mxu0 0.0
    %v7714 = vand.u32 %v2927, 4294901760
    %v7715 = vsub.f32 %v2927, %v7714
    %v7716 = vand.u32 %v7715, 4294901760
    %v7717 = vsub.f32 %v7715, %v7716
    %v7718 = vand.u32 %v7717, 4294901760
    %7719 = vmatmul.mubr.f32.gmra.mrb[0].mxu0 %v7718
    %v7720 = vpop.f32.mrb[0].mxu0
    %v7721 = vadd.f32 0.0, %v7720
    %v7722 = vpop.f32.mrb[0].mxu0
    %7723 = vmatprep.mubr.f32.mxu0 0.0
    %v7724 = vand.u32 %v2930, 4294901760
    %v7725 = vsub.f32 %v2930, %v7724
    %v7726 = vand.u32 %v7725, 4294901760
    %v7727 = vsub.f32 %v7725, %v7726
    %v7728 = vand.u32 %v7727, 4294901760
    %7729 = vmatmul.mubr.f32.gmra.mrb[0].mxu0 %v7728
    %v7730 = vpop.f32.mrb[0].mxu0
    %v7731 = vadd.f32 0.0, %v7730
    %v7732 = vpop.f32.mrb[0].mxu0
    %7733 = vmatprep.mubr.f32.mxu0 0.0
    %v7734 = vand.u32 %v2933, 4294901760
    %v7735 = vsub.f32 %v2933, %v7734
    %v7736 = vand.u32 %v7735, 4294901760
    %v7737 = vsub.f32 %v7735, %v7736
    %v7738 = vand.u32 %v7737, 4294901760
    %7739 = vmatmul.mubr.f32.gmra.mrb[0].mxu0 %v7738
    %v7740 = vpop.f32.mrb[0].mxu0
    %v7741 = vadd.f32 0.0, %v7740
    %v7742 = vpop.f32.mrb[0].mxu0
    %7743 = vmatprep.mubr.f32.mxu0 0.0
    %v7744 = vand.u32 %v2936, 4294901760
    %v7745 = vsub.f32 %v2936, %v7744
    %v7746 = vand.u32 %v7745, 4294901760
    %v7747 = vsub.f32 %v7745, %v7746
    %v7748 = vand.u32 %v7747, 4294901760
    %7749 = vmatmul.mubr.f32.gmra.mrb[0].mxu0 %v7748
    %v7750 = vpop.f32.mrb[0].mxu0
    %v7751 = vadd.f32 0.0, %v7750
    %v7752 = vpop.f32.mrb[0].mxu0
    %7753 = vmatprep.mubr.f32.mxu0 0.0
    %v7754 = vand.u32 %v2939, 4294901760
    %v7755 = vsub.f32 %v2939, %v7754
    %v7756 = vand.u32 %v7755, 4294901760
    %v7757 = vsub.f32 %v7755, %v7756
    %v7758 = vand.u32 %v7757, 4294901760
    %7759 = vmatmul.mubr.f32.gmra.mrb[0].mxu0 %v7758
    %v7760 = vpop.f32.mrb[0].mxu0
    %v7761 = vadd.f32 0.0, %v7760
    %v7762 = vpop.f32.mrb[0].mxu0
    %7763 = vmatprep.mubr.f32.mxu0 0.0
    %v7764 = vand.u32 %v2942, 4294901760
    %v7765 = vsub.f32 %v2942, %v7764
    %v7766 = vand.u32 %v7765, 4294901760
    %v7767 = vsub.f32 %v7765, %v7766
    %v7768 = vand.u32 %v7767, 4294901760
    %7769 = vmatmul.mubr.f32.gmra.mrb[0].mxu0 %v7768
    %v7770 = vpop.f32.mrb[0].mxu0
    %v7771 = vadd.f32 0.0, %v7770
    %v7772 = vpop.f32.mrb[0].mxu0
    %7773 = vmatprep.mubr.f32.mxu0 0.0
    %v7774 = vand.u32 %v2945, 4294901760
    %v7775 = vsub.f32 %v2945, %v7774
    %v7776 = vand.u32 %v7775, 4294901760
    %v7777 = vsub.f32 %v7775, %v7776
    %v7778 = vand.u32 %v7777, 4294901760
    %7779 = vmatmul.mubr.f32.gmra.mrb[0].mxu0 %v7778
    %v7780 = vpop.f32.mrb[0].mxu0
    %v7781 = vadd.f32 0.0, %v7780
    %v7782 = vpop.f32.mrb[0].mxu0
    %7783 = vmatprep.mubr.f32.mxu0 0.0
    %v7784 = vand.u32 %v2948, 4294901760
    %v7785 = vsub.f32 %v2948, %v7784
    %v7786 = vand.u32 %v7785, 4294901760
    %v7787 = vsub.f32 %v7785, %v7786
    %v7788 = vand.u32 %v7787, 4294901760
    %7789 = vmatmul.mubr.f32.gmra.mrb[0].mxu0 %v7788
    %v7790 = vpop.f32.mrb[0].mxu0
    %v7791 = vadd.f32 0.0, %v7790
    %v7792 = vpop.f32.mrb[0].mxu0
    %7793 = vmatprep.mubr.f32.mxu0 0.0
    %v7794 = vand.u32 %v2951, 4294901760
    %v7795 = vsub.f32 %v2951, %v7794
    %v7796 = vand.u32 %v7795, 4294901760
    %v7797 = vsub.f32 %v7795, %v7796
    %v7798 = vand.u32 %v7797, 4294901760
    %7799 = vmatmul.mubr.f32.gmra.mrb[0].mxu0 %v7798
    %v7800 = vpop.f32.mrb[0].mxu0
    %v7801 = vadd.f32 0.0, %v7800
    %v7802 = vpop.f32.mrb[0].mxu0
    %7803 = vmatprep.mubr.f32.mxu0 0.0
    %v7804 = vand.u32 %v2954, 4294901760
    %v7805 = vsub.f32 %v2954, %v7804
    %v7806 = vand.u32 %v7805, 4294901760
    %v7807 = vsub.f32 %v7805, %v7806
    %v7808 = vand.u32 %v7807, 4294901760
    %7809 = vmatmul.mubr.f32.gmra.mrb[0].mxu0 %v7808
    %v7810 = vpop.f32.mrb[0].mxu0
    %v7811 = vadd.f32 0.0, %v7810
    %v7812 = vpop.f32.mrb[0].mxu0
    %7813 = vmatprep.mubr.f32.mxu0 0.0
    %v7814 = vand.u32 %v2957, 4294901760
    %v7815 = vsub.f32 %v2957, %v7814
    %v7816 = vand.u32 %v7815, 4294901760
    %v7817 = vsub.f32 %v7815, %v7816
    %v7818 = vand.u32 %v7817, 4294901760
    %7819 = vmatmul.mubr.f32.gmra.mrb[0].mxu0 %v7818
    %v7820 = vpop.f32.mrb[0].mxu0
    %v7821 = vadd.f32 0.0, %v7820
    %v7822 = vpop.f32.mrb[0].mxu0
    %7823 = vmatprep.mubr.f32.mxu0 0.0
    %v7824 = vand.u32 %v2960, 4294901760
    %v7825 = vsub.f32 %v2960, %v7824
    %v7826 = vand.u32 %v7825, 4294901760
    %v7827 = vsub.f32 %v7825, %v7826
    %v7828 = vand.u32 %v7827, 4294901760
    %7829 = vmatmul.mubr.f32.gmra.mrb[0].mxu0 %v7828
    %v7830 = vpop.f32.mrb[0].mxu0
    %v7831 = vadd.f32 0.0, %v7830
    %v7832 = vpop.f32.mrb[0].mxu0
    %7833 = vmatprep.mubr.f32.mxu0 0.0
    %v7834 = vand.u32 %v2963, 4294901760
    %v7835 = vsub.f32 %v2963, %v7834
    %v7836 = vand.u32 %v7835, 4294901760
    %v7837 = vsub.f32 %v7835, %v7836
    %v7838 = vand.u32 %v7837, 4294901760
    %7839 = vmatmul.mubr.f32.gmra.mrb[0].mxu0 %v7838
    %v7840 = vpop.f32.mrb[0].mxu0
    %v7841 = vadd.f32 0.0, %v7840
    %v7842 = vpop.f32.mrb[0].mxu0
    %7843 = vmatprep.mubr.f32.mxu0 0.0
    %v7844 = vand.u32 %v2966, 4294901760
    %v7845 = vsub.f32 %v2966, %v7844
    %v7846 = vand.u32 %v7845, 4294901760
    %v7847 = vsub.f32 %v7845, %v7846
    %v7848 = vand.u32 %v7847, 4294901760
    %7849 = vmatmul.mubr.f32.gmra.mrb[0].mxu0 %v7848
    %v7850 = vpop.f32.mrb[0].mxu0
    %v7851 = vadd.f32 0.0, %v7850
    %v7852 = vpop.f32.mrb[0].mxu0
    %7853 = vdwg.mxu0
    %7854 = vmatprep.subr.mxu0 0.0
    %v7855 = vand.u32 %v5469, 4294901760
    %v7856 = vsub.f32 %v5469, %v7855
    %v7857 = vand.u32 %v7856, 4294901760
    %v7858 = vsub.f32 %v7856, %v7857
    %v7859 = vand.u32 %v7858, 4294901760
    %7860 = vmatpush1.msra.mxu0 %v7859
    %7861 = vmatprep.subr.mxu0 0.0
    %v7862 = vand.u32 %v5475, 4294901760
    %v7863 = vsub.f32 %v5475, %v7862
    %v7864 = vand.u32 %v7863, 4294901760
    %v7865 = vsub.f32 %v7863, %v7864
    %v7866 = vand.u32 %v7865, 4294901760
    %7867 = vmatpush1.msra.mxu0 %v7866
    %7868 = vmatprep.subr.mxu0 0.0
    %7869 = vmatpush1.msra.mxu0 0.0
    %7870 = vmatprep.subr.mxu0 0.0
    %7871 = vmatpush1.msra.mxu0 0.0
    %7872 = vmatprep.subr.mxu0 0.0
    %7873 = vmatpush1.msra.mxu0 0.0
    %7874 = vmatprep.subr.mxu0 0.0
    %7875 = vmatpush1.msra.mxu0 0.0
    %7876 = vmatprep.subr.mxu0 0.0
    %7877 = vmatpush1.msra.mxu0 0.0
    %7878 = vmatprep.subr.mxu0 0.0
    %7879 = vmatpush1.msra.mxu0 0.0
    %7880 = vmatprep.subr.mxu0 0.0
    %7881 = vmatpush1.msra.mxu0 0.0
    %7882 = vmatprep.subr.mxu0 0.0
    %7883 = vmatpush1.msra.mxu0 0.0
    %7884 = vmatprep.subr.mxu0 0.0
    %7885 = vmatpush1.msra.mxu0 0.0
    %7886 = vmatprep.subr.mxu0 0.0
    %7887 = vmatpush1.msra.mxu0 0.0
    %7888 = vmatprep.subr.mxu0 0.0
    %7889 = vmatpush1.msra.mxu0 0.0
    %7890 = vmatprep.subr.mxu0 0.0
    %7891 = vmatpush1.msra.mxu0 0.0
    %7892 = vmatprep.subr.mxu0 0.0
    %7893 = vmatpush1.msra.mxu0 0.0
    %7894 = vmatprep.subr.mxu0 0.0
    %7895 = vmatpush1.msra.mxu0 0.0
    %7896 = vmatprep.subr.mxu0 0.0
    %7897 = vmatpush1.msra.mxu0 0.0
    %7898 = vmatprep.subr.mxu0 0.0
    %7899 = vmatpush1.msra.mxu0 0.0
    %7900 = vmatprep.subr.mxu0 0.0
    %7901 = vmatpush1.msra.mxu0 0.0
    %7902 = vmatprep.subr.mxu0 0.0
    %7903 = vmatpush1.msra.mxu0 0.0
    %7904 = vmatprep.subr.mxu0 0.0
    %7905 = vmatpush1.msra.mxu0 0.0
    %7906 = vmatprep.subr.mxu0 0.0
    %7907 = vmatpush1.msra.mxu0 0.0
    %7908 = vmatprep.subr.mxu0 0.0
    %7909 = vmatpush1.msra.mxu0 0.0
    %7910 = vmatprep.subr.mxu0 0.0
    %7911 = vmatpush1.msra.mxu0 0.0
    %7912 = vmatprep.subr.mxu0 0.0
    %7913 = vmatpush1.msra.mxu0 0.0
    %7914 = vmatprep.subr.mxu0 0.0
    %7915 = vmatpush1.msra.mxu0 0.0
    %7916 = vmatprep.subr.mxu0 0.0
    %7917 = vmatpush1.msra.mxu0 0.0
    %7918 = vmatprep.subr.mxu0 0.0
    %7919 = vmatpush1.msra.mxu0 0.0
    %7920 = vmatprep.subr.mxu0 0.0
    %7921 = vmatpush1.msra.mxu0 0.0
    %7922 = vmatprep.subr.mxu0 0.0
    %7923 = vmatpush1.msra.mxu0 0.0
    %7924 = vmatprep.subr.mxu0 0.0
    %7925 = vmatpush1.msra.mxu0 0.0
    %7926 = vmatprep.subr.mxu0 0.0
    %7927 = vmatpush1.msra.mxu0 0.0
    %7928 = vmatprep.mubr.f32.mxu0 0.0
    %v7929 = vand.u32 %v2921, 4294901760
    %7930 = vmatmul.mubr.f32.gmra.mrb[0].mxu0 %v7929
    %v7931 = vpop.f32.mrb[0].mxu0
    %v7932 = vadd.f32 %v7701, %v7931
    %v7933 = vpop.f32.mrb[0].mxu0
    %7934 = vmatprep.mubr.f32.mxu0 0.0
    %v7935 = vand.u32 %v2924, 4294901760
    %7936 = vmatmul.mubr.f32.gmra.mrb[0].mxu0 %v7935
    %v7937 = vpop.f32.mrb[0].mxu0
    %v7938 = vadd.f32 %v7711, %v7937
    %v7939 = vpop.f32.mrb[0].mxu0
    %7940 = vmatprep.mubr.f32.mxu0 0.0
    %v7941 = vand.u32 %v2927, 4294901760
    %7942 = vmatmul.mubr.f32.gmra.mrb[0].mxu0 %v7941
    %v7943 = vpop.f32.mrb[0].mxu0
    %v7944 = vadd.f32 %v7721, %v7943
    %v7945 = vpop.f32.mrb[0].mxu0
    %7946 = vmatprep.mubr.f32.mxu0 0.0
    %v7947 = vand.u32 %v2930, 4294901760
    %7948 = vmatmul.mubr.f32.gmra.mrb[0].mxu0 %v7947
    %v7949 = vpop.f32.mrb[0].mxu0
    %v7950 = vadd.f32 %v7731, %v7949
    %v7951 = vpop.f32.mrb[0].mxu0
    %7952 = vmatprep.mubr.f32.mxu0 0.0
    %v7953 = vand.u32 %v2933, 4294901760
    %7954 = vmatmul.mubr.f32.gmra.mrb[0].mxu0 %v7953
    %v7955 = vpop.f32.mrb[0].mxu0
    %v7956 = vadd.f32 %v7741, %v7955
    %v7957 = vpop.f32.mrb[0].mxu0
    %7958 = vmatprep.mubr.f32.mxu0 0.0
    %v7959 = vand.u32 %v2936, 4294901760
    %7960 = vmatmul.mubr.f32.gmra.mrb[0].mxu0 %v7959
    %v7961 = vpop.f32.mrb[0].mxu0
    %v7962 = vadd.f32 %v7751, %v7961
    %v7963 = vpop.f32.mrb[0].mxu0
    %7964 = vmatprep.mubr.f32.mxu0 0.0
    %v7965 = vand.u32 %v2939, 4294901760
    %7966 = vmatmul.mubr.f32.gmra.mrb[0].mxu0 %v7965
    %v7967 = vpop.f32.mrb[0].mxu0
    %v7968 = vadd.f32 %v7761, %v7967
    %v7969 = vpop.f32.mrb[0].mxu0
    %7970 = vmatprep.mubr.f32.mxu0 0.0
    %v7971 = vand.u32 %v2942, 4294901760
    %7972 = vmatmul.mubr.f32.gmra.mrb[0].mxu0 %v7971
    %v7973 = vpop.f32.mrb[0].mxu0
    %v7974 = vadd.f32 %v7771, %v7973
    %v7975 = vpop.f32.mrb[0].mxu0
    %7976 = vmatprep.mubr.f32.mxu0 0.0
    %v7977 = vand.u32 %v2945, 4294901760
    %7978 = vmatmul.mubr.f32.gmra.mrb[0].mxu0 %v7977
    %v7979 = vpop.f32.mrb[0].mxu0
    %v7980 = vadd.f32 %v7781, %v7979
    %v7981 = vpop.f32.mrb[0].mxu0
    %7982 = vmatprep.mubr.f32.mxu0 0.0
    %v7983 = vand.u32 %v2948, 4294901760
    %7984 = vmatmul.mubr.f32.gmra.mrb[0].mxu0 %v7983
    %v7985 = vpop.f32.mrb[0].mxu0
    %v7986 = vadd.f32 %v7791, %v7985
    %v7987 = vpop.f32.mrb[0].mxu0
    %7988 = vmatprep.mubr.f32.mxu0 0.0
    %v7989 = vand.u32 %v2951, 4294901760
    %7990 = vmatmul.mubr.f32.gmra.mrb[0].mxu0 %v7989
    %v7991 = vpop.f32.mrb[0].mxu0
    %v7992 = vadd.f32 %v7801, %v7991
    %v7993 = vpop.f32.mrb[0].mxu0
    %7994 = vmatprep.mubr.f32.mxu0 0.0
    %v7995 = vand.u32 %v2954, 4294901760
    %7996 = vmatmul.mubr.f32.gmra.mrb[0].mxu0 %v7995
    %v7997 = vpop.f32.mrb[0].mxu0
    %v7998 = vadd.f32 %v7811, %v7997
    %v7999 = vpop.f32.mrb[0].mxu0
    %8000 = vmatprep.mubr.f32.mxu0 0.0
    %v8001 = vand.u32 %v2957, 4294901760
    %8002 = vmatmul.mubr.f32.gmra.mrb[0].mxu0 %v8001
    %v8003 = vpop.f32.mrb[0].mxu0
    %v8004 = vadd.f32 %v7821, %v8003
    %v8005 = vpop.f32.mrb[0].mxu0
    %8006 = vmatprep.mubr.f32.mxu0 0.0
    %v8007 = vand.u32 %v2960, 4294901760
    %8008 = vmatmul.mubr.f32.gmra.mrb[0].mxu0 %v8007
    %v8009 = vpop.f32.mrb[0].mxu0
    %v8010 = vadd.f32 %v7831, %v8009
    %v8011 = vpop.f32.mrb[0].mxu0
    %8012 = vmatprep.mubr.f32.mxu0 0.0
    %v8013 = vand.u32 %v2963, 4294901760
    %8014 = vmatmul.mubr.f32.gmra.mrb[0].mxu0 %v8013
    %v8015 = vpop.f32.mrb[0].mxu0
    %v8016 = vadd.f32 %v7841, %v8015
    %v8017 = vpop.f32.mrb[0].mxu0
    %8018 = vmatprep.mubr.f32.mxu0 0.0
    %v8019 = vand.u32 %v2966, 4294901760
    %8020 = vmatmul.mubr.f32.gmra.mrb[0].mxu0 %v8019
    %v8021 = vpop.f32.mrb[0].mxu0
    %v8022 = vadd.f32 %v7851, %v8021
    %v8023 = vpop.f32.mrb[0].mxu0
    %8024 = vdwg.mxu0
    %8025 = vmatprep.subr.mxu0 0.0
    %v8026 = vand.u32 %v5469, 4294901760
    %v8027 = vsub.f32 %v5469, %v8026
    %8028 = vmatpush1.msra.mxu0 %v8027
    %8029 = vmatprep.subr.mxu0 0.0
    %v8030 = vand.u32 %v5475, 4294901760
    %v8031 = vsub.f32 %v5475, %v8030
    %8032 = vmatpush1.msra.mxu0 %v8031
    %8033 = vmatprep.subr.mxu0 0.0
    %8034 = vmatpush1.msra.mxu0 0.0
    %8035 = vmatprep.subr.mxu0 0.0
    %8036 = vmatpush1.msra.mxu0 0.0
    %8037 = vmatprep.subr.mxu0 0.0
    %8038 = vmatpush1.msra.mxu0 0.0
    %8039 = vmatprep.subr.mxu0 0.0
    %8040 = vmatpush1.msra.mxu0 0.0
    %8041 = vmatprep.subr.mxu0 0.0
    %8042 = vmatpush1.msra.mxu0 0.0
    %8043 = vmatprep.subr.mxu0 0.0
    %8044 = vmatpush1.msra.mxu0 0.0
    %8045 = vmatprep.subr.mxu0 0.0
    %8046 = vmatpush1.msra.mxu0 0.0
    %8047 = vmatprep.subr.mxu0 0.0
    %8048 = vmatpush1.msra.mxu0 0.0
    %8049 = vmatprep.subr.mxu0 0.0
    %8050 = vmatpush1.msra.mxu0 0.0
    %8051 = vmatprep.subr.mxu0 0.0
    %8052 = vmatpush1.msra.mxu0 0.0
    %8053 = vmatprep.subr.mxu0 0.0
    %8054 = vmatpush1.msra.mxu0 0.0
    %8055 = vmatprep.subr.mxu0 0.0
    %8056 = vmatpush1.msra.mxu0 0.0
    %8057 = vmatprep.subr.mxu0 0.0
    %8058 = vmatpush1.msra.mxu0 0.0
    %8059 = vmatprep.subr.mxu0 0.0
    %8060 = vmatpush1.msra.mxu0 0.0
    %8061 = vmatprep.subr.mxu0 0.0
    %8062 = vmatpush1.msra.mxu0 0.0
    %8063 = vmatprep.subr.mxu0 0.0
    %8064 = vmatpush1.msra.mxu0 0.0
    %8065 = vmatprep.subr.mxu0 0.0
    %8066 = vmatpush1.msra.mxu0 0.0
    %8067 = vmatprep.subr.mxu0 0.0
    %8068 = vmatpush1.msra.mxu0 0.0
    %8069 = vmatprep.subr.mxu0 0.0
    %8070 = vmatpush1.msra.mxu0 0.0
    %8071 = vmatprep.subr.mxu0 0.0
    %8072 = vmatpush1.msra.mxu0 0.0
    %8073 = vmatprep.subr.mxu0 0.0
    %8074 = vmatpush1.msra.mxu0 0.0
    %8075 = vmatprep.subr.mxu0 0.0
    %8076 = vmatpush1.msra.mxu0 0.0
    %8077 = vmatprep.subr.mxu0 0.0
    %8078 = vmatpush1.msra.mxu0 0.0
    %8079 = vmatprep.subr.mxu0 0.0
    %8080 = vmatpush1.msra.mxu0 0.0
    %8081 = vmatprep.subr.mxu0 0.0
    %8082 = vmatpush1.msra.mxu0 0.0
    %8083 = vmatprep.subr.mxu0 0.0
    %8084 = vmatpush1.msra.mxu0 0.0
    %8085 = vmatprep.subr.mxu0 0.0
    %8086 = vmatpush1.msra.mxu0 0.0
    %8087 = vmatprep.subr.mxu0 0.0
    %8088 = vmatpush1.msra.mxu0 0.0
    %8089 = vmatprep.subr.mxu0 0.0
    %8090 = vmatpush1.msra.mxu0 0.0
    %8091 = vmatprep.subr.mxu0 0.0
    %8092 = vmatpush1.msra.mxu0 0.0
    %8093 = vmatprep.mubr.f32.mxu0 0.0
    %v8094 = vand.u32 %v2921, 4294901760
    %v8095 = vsub.f32 %v2921, %v8094
    %8096 = vmatmul.mubr.f32.gmra.mrb[0].mxu0 %v8095
    %v8097 = vpop.f32.mrb[0].mxu0
    %v8098 = vadd.f32 %v7932, %v8097
    %v8099 = vpop.f32.mrb[0].mxu0
    %8100 = vmatprep.mubr.f32.mxu0 0.0
    %v8101 = vand.u32 %v2924, 4294901760
    %v8102 = vsub.f32 %v2924, %v8101
    %8103 = vmatmul.mubr.f32.gmra.mrb[0].mxu0 %v8102
    %v8104 = vpop.f32.mrb[0].mxu0
    %v8105 = vadd.f32 %v7938, %v8104
    %v8106 = vpop.f32.mrb[0].mxu0
    %8107 = vmatprep.mubr.f32.mxu0 0.0
    %v8108 = vand.u32 %v2927, 4294901760
    %v8109 = vsub.f32 %v2927, %v8108
    %8110 = vmatmul.mubr.f32.gmra.mrb[0].mxu0 %v8109
    %v8111 = vpop.f32.mrb[0].mxu0
    %v8112 = vadd.f32 %v7944, %v8111
    %v8113 = vpop.f32.mrb[0].mxu0
    %8114 = vmatprep.mubr.f32.mxu0 0.0
    %v8115 = vand.u32 %v2930, 4294901760
    %v8116 = vsub.f32 %v2930, %v8115
    %8117 = vmatmul.mubr.f32.gmra.mrb[0].mxu0 %v8116
    %v8118 = vpop.f32.mrb[0].mxu0
    %v8119 = vadd.f32 %v7950, %v8118
    %v8120 = vpop.f32.mrb[0].mxu0
    %8121 = vmatprep.mubr.f32.mxu0 0.0
    %v8122 = vand.u32 %v2933, 4294901760
    %v8123 = vsub.f32 %v2933, %v8122
    %8124 = vmatmul.mubr.f32.gmra.mrb[0].mxu0 %v8123
    %v8125 = vpop.f32.mrb[0].mxu0
    %v8126 = vadd.f32 %v7956, %v8125
    %v8127 = vpop.f32.mrb[0].mxu0
    %8128 = vmatprep.mubr.f32.mxu0 0.0
    %v8129 = vand.u32 %v2936, 4294901760
    %v8130 = vsub.f32 %v2936, %v8129
    %8131 = vmatmul.mubr.f32.gmra.mrb[0].mxu0 %v8130
    %v8132 = vpop.f32.mrb[0].mxu0
    %v8133 = vadd.f32 %v7962, %v8132
    %v8134 = vpop.f32.mrb[0].mxu0
    %8135 = vmatprep.mubr.f32.mxu0 0.0
    %v8136 = vand.u32 %v2939, 4294901760
    %v8137 = vsub.f32 %v2939, %v8136
    %8138 = vmatmul.mubr.f32.gmra.mrb[0].mxu0 %v8137
    %v8139 = vpop.f32.mrb[0].mxu0
    %v8140 = vadd.f32 %v7968, %v8139
    %v8141 = vpop.f32.mrb[0].mxu0
    %8142 = vmatprep.mubr.f32.mxu0 0.0
    %v8143 = vand.u32 %v2942, 4294901760
    %v8144 = vsub.f32 %v2942, %v8143
    %8145 = vmatmul.mubr.f32.gmra.mrb[0].mxu0 %v8144
    %v8146 = vpop.f32.mrb[0].mxu0
    %v8147 = vadd.f32 %v7974, %v8146
    %v8148 = vpop.f32.mrb[0].mxu0
    %8149 = vmatprep.mubr.f32.mxu0 0.0
    %v8150 = vand.u32 %v2945, 4294901760
    %v8151 = vsub.f32 %v2945, %v8150
    %8152 = vmatmul.mubr.f32.gmra.mrb[0].mxu0 %v8151
    %v8153 = vpop.f32.mrb[0].mxu0
    %v8154 = vadd.f32 %v7980, %v8153
    %v8155 = vpop.f32.mrb[0].mxu0
    %8156 = vmatprep.mubr.f32.mxu0 0.0
    %v8157 = vand.u32 %v2948, 4294901760
    %v8158 = vsub.f32 %v2948, %v8157
    %8159 = vmatmul.mubr.f32.gmra.mrb[0].mxu0 %v8158
    %v8160 = vpop.f32.mrb[0].mxu0
    %v8161 = vadd.f32 %v7986, %v8160
    %v8162 = vpop.f32.mrb[0].mxu0
    %8163 = vmatprep.mubr.f32.mxu0 0.0
    %v8164 = vand.u32 %v2951, 4294901760
    %v8165 = vsub.f32 %v2951, %v8164
    %8166 = vmatmul.mubr.f32.gmra.mrb[0].mxu0 %v8165
    %v8167 = vpop.f32.mrb[0].mxu0
    %v8168 = vadd.f32 %v7992, %v8167
    %v8169 = vpop.f32.mrb[0].mxu0
    %8170 = vmatprep.mubr.f32.mxu0 0.0
    %v8171 = vand.u32 %v2954, 4294901760
    %v8172 = vsub.f32 %v2954, %v8171
    %8173 = vmatmul.mubr.f32.gmra.mrb[0].mxu0 %v8172
    %v8174 = vpop.f32.mrb[0].mxu0
    %v8175 = vadd.f32 %v7998, %v8174
    %v8176 = vpop.f32.mrb[0].mxu0
    %8177 = vmatprep.mubr.f32.mxu0 0.0
    %v8178 = vand.u32 %v2957, 4294901760
    %v8179 = vsub.f32 %v2957, %v8178
    %8180 = vmatmul.mubr.f32.gmra.mrb[0].mxu0 %v8179
    %v8181 = vpop.f32.mrb[0].mxu0
    %v8182 = vadd.f32 %v8004, %v8181
    %v8183 = vpop.f32.mrb[0].mxu0
    %8184 = vmatprep.mubr.f32.mxu0 0.0
    %v8185 = vand.u32 %v2960, 4294901760
    %v8186 = vsub.f32 %v2960, %v8185
    %8187 = vmatmul.mubr.f32.gmra.mrb[0].mxu0 %v8186
    %v8188 = vpop.f32.mrb[0].mxu0
    %v8189 = vadd.f32 %v8010, %v8188
    %v8190 = vpop.f32.mrb[0].mxu0
    %8191 = vmatprep.mubr.f32.mxu0 0.0
    %v8192 = vand.u32 %v2963, 4294901760
    %v8193 = vsub.f32 %v2963, %v8192
    %8194 = vmatmul.mubr.f32.gmra.mrb[0].mxu0 %v8193
    %v8195 = vpop.f32.mrb[0].mxu0
    %v8196 = vadd.f32 %v8016, %v8195
    %v8197 = vpop.f32.mrb[0].mxu0
    %8198 = vmatprep.mubr.f32.mxu0 0.0
    %v8199 = vand.u32 %v2966, 4294901760
    %v8200 = vsub.f32 %v2966, %v8199
    %8201 = vmatmul.mubr.f32.gmra.mrb[0].mxu0 %v8200
    %v8202 = vpop.f32.mrb[0].mxu0
    %v8203 = vadd.f32 %v8022, %v8202
    %v8204 = vpop.f32.mrb[0].mxu0
    %8205 = vdwg.mxu0
    %8206 = vmatprep.subr.mxu0 0.0
    %v8207 = vand.u32 %v5469, 4294901760
    %8208 = vmatpush1.msra.mxu0 %v8207
    %8209 = vmatprep.subr.mxu0 0.0
    %v8210 = vand.u32 %v5475, 4294901760
    %8211 = vmatpush1.msra.mxu0 %v8210
    %8212 = vmatprep.subr.mxu0 0.0
    %8213 = vmatpush1.msra.mxu0 0.0
    %8214 = vmatprep.subr.mxu0 0.0
    %8215 = vmatpush1.msra.mxu0 0.0
    %8216 = vmatprep.subr.mxu0 0.0
    %8217 = vmatpush1.msra.mxu0 0.0
    %8218 = vmatprep.subr.mxu0 0.0
    %8219 = vmatpush1.msra.mxu0 0.0
    %8220 = vmatprep.subr.mxu0 0.0
    %8221 = vmatpush1.msra.mxu0 0.0
    %8222 = vmatprep.subr.mxu0 0.0
    %8223 = vmatpush1.msra.mxu0 0.0
    %8224 = vmatprep.subr.mxu0 0.0
    %8225 = vmatpush1.msra.mxu0 0.0
    %8226 = vmatprep.subr.mxu0 0.0
    %8227 = vmatpush1.msra.mxu0 0.0
    %8228 = vmatprep.subr.mxu0 0.0
    %8229 = vmatpush1.msra.mxu0 0.0
    %8230 = vmatprep.subr.mxu0 0.0
    %8231 = vmatpush1.msra.mxu0 0.0
    %8232 = vmatprep.subr.mxu0 0.0
    %8233 = vmatpush1.msra.mxu0 0.0
    %8234 = vmatprep.subr.mxu0 0.0
    %8235 = vmatpush1.msra.mxu0 0.0
    %8236 = vmatprep.subr.mxu0 0.0
    %8237 = vmatpush1.msra.mxu0 0.0
    %8238 = vmatprep.subr.mxu0 0.0
    %8239 = vmatpush1.msra.mxu0 0.0
    %8240 = vmatprep.subr.mxu0 0.0
    %8241 = vmatpush1.msra.mxu0 0.0
    %8242 = vmatprep.subr.mxu0 0.0
    %8243 = vmatpush1.msra.mxu0 0.0
    %8244 = vmatprep.subr.mxu0 0.0
    %8245 = vmatpush1.msra.mxu0 0.0
    %8246 = vmatprep.subr.mxu0 0.0
    %8247 = vmatpush1.msra.mxu0 0.0
    %8248 = vmatprep.subr.mxu0 0.0
    %8249 = vmatpush1.msra.mxu0 0.0
    %8250 = vmatprep.subr.mxu0 0.0
    %8251 = vmatpush1.msra.mxu0 0.0
    %8252 = vmatprep.subr.mxu0 0.0
    %8253 = vmatpush1.msra.mxu0 0.0
    %8254 = vmatprep.subr.mxu0 0.0
    %8255 = vmatpush1.msra.mxu0 0.0
    %8256 = vmatprep.subr.mxu0 0.0
    %8257 = vmatpush1.msra.mxu0 0.0
    %8258 = vmatprep.subr.mxu0 0.0
    %8259 = vmatpush1.msra.mxu0 0.0
    %8260 = vmatprep.subr.mxu0 0.0
    %8261 = vmatpush1.msra.mxu0 0.0
    %8262 = vmatprep.subr.mxu0 0.0
    %8263 = vmatpush1.msra.mxu0 0.0
    %8264 = vmatprep.subr.mxu0 0.0
    %8265 = vmatpush1.msra.mxu0 0.0
    %8266 = vmatprep.subr.mxu0 0.0
    %8267 = vmatpush1.msra.mxu0 0.0
    %8268 = vmatprep.subr.mxu0 0.0
    %8269 = vmatpush1.msra.mxu0 0.0
    %8270 = vmatprep.subr.mxu0 0.0
    %8271 = vmatpush1.msra.mxu0 0.0
    %8272 = vmatprep.mubr.f32.mxu0 0.0
    %v8273 = vand.u32 %v2921, 4294901760
    %v8274 = vsub.f32 %v2921, %v8273
    %v8275 = vand.u32 %v8274, 4294901760
    %8276 = vmatmul.mubr.f32.gmra.mrb[0].mxu0 %v8275
    %v8277 = vpop.f32.mrb[0].mxu0
    %v8278 = vadd.f32 %v8098, %v8277
    %v8279 = vpop.f32.mrb[0].mxu0
    %8280 = vmatprep.mubr.f32.mxu0 0.0
    %v8281 = vand.u32 %v2924, 4294901760
    %v8282 = vsub.f32 %v2924, %v8281
    %v8283 = vand.u32 %v8282, 4294901760
    %8284 = vmatmul.mubr.f32.gmra.mrb[0].mxu0 %v8283
    %v8285 = vpop.f32.mrb[0].mxu0
    %v8286 = vadd.f32 %v8105, %v8285
    %v8287 = vpop.f32.mrb[0].mxu0
    %8288 = vmatprep.mubr.f32.mxu0 0.0
    %v8289 = vand.u32 %v2927, 4294901760
    %v8290 = vsub.f32 %v2927, %v8289
    %v8291 = vand.u32 %v8290, 4294901760
    %8292 = vmatmul.mubr.f32.gmra.mrb[0].mxu0 %v8291
    %v8293 = vpop.f32.mrb[0].mxu0
    %v8294 = vadd.f32 %v8112, %v8293
    %v8295 = vpop.f32.mrb[0].mxu0
    %8296 = vmatprep.mubr.f32.mxu0 0.0
    %v8297 = vand.u32 %v2930, 4294901760
    %v8298 = vsub.f32 %v2930, %v8297
    %v8299 = vand.u32 %v8298, 4294901760
    %8300 = vmatmul.mubr.f32.gmra.mrb[0].mxu0 %v8299
    %v8301 = vpop.f32.mrb[0].mxu0
    %v8302 = vadd.f32 %v8119, %v8301
    %v8303 = vpop.f32.mrb[0].mxu0
    %8304 = vmatprep.mubr.f32.mxu0 0.0
    %v8305 = vand.u32 %v2933, 4294901760
    %v8306 = vsub.f32 %v2933, %v8305
    %v8307 = vand.u32 %v8306, 4294901760
    %8308 = vmatmul.mubr.f32.gmra.mrb[0].mxu0 %v8307
    %v8309 = vpop.f32.mrb[0].mxu0
    %v8310 = vadd.f32 %v8126, %v8309
    %v8311 = vpop.f32.mrb[0].mxu0
    %8312 = vmatprep.mubr.f32.mxu0 0.0
    %v8313 = vand.u32 %v2936, 4294901760
    %v8314 = vsub.f32 %v2936, %v8313
    %v8315 = vand.u32 %v8314, 4294901760
    %8316 = vmatmul.mubr.f32.gmra.mrb[0].mxu0 %v8315
    %v8317 = vpop.f32.mrb[0].mxu0
    %v8318 = vadd.f32 %v8133, %v8317
    %v8319 = vpop.f32.mrb[0].mxu0
    %8320 = vmatprep.mubr.f32.mxu0 0.0
    %v8321 = vand.u32 %v2939, 4294901760
    %v8322 = vsub.f32 %v2939, %v8321
    %v8323 = vand.u32 %v8322, 4294901760
    %8324 = vmatmul.mubr.f32.gmra.mrb[0].mxu0 %v8323
    %v8325 = vpop.f32.mrb[0].mxu0
    %v8326 = vadd.f32 %v8140, %v8325
    %v8327 = vpop.f32.mrb[0].mxu0
    %8328 = vmatprep.mubr.f32.mxu0 0.0
    %v8329 = vand.u32 %v2942, 4294901760
    %v8330 = vsub.f32 %v2942, %v8329
    %v8331 = vand.u32 %v8330, 4294901760
    %8332 = vmatmul.mubr.f32.gmra.mrb[0].mxu0 %v8331
    %v8333 = vpop.f32.mrb[0].mxu0
    %v8334 = vadd.f32 %v8147, %v8333
    %v8335 = vpop.f32.mrb[0].mxu0
    %8336 = vmatprep.mubr.f32.mxu0 0.0
    %v8337 = vand.u32 %v2945, 4294901760
    %v8338 = vsub.f32 %v2945, %v8337
    %v8339 = vand.u32 %v8338, 4294901760
    %8340 = vmatmul.mubr.f32.gmra.mrb[0].mxu0 %v8339
    %v8341 = vpop.f32.mrb[0].mxu0
    %v8342 = vadd.f32 %v8154, %v8341
    %v8343 = vpop.f32.mrb[0].mxu0
    %8344 = vmatprep.mubr.f32.mxu0 0.0
    %v8345 = vand.u32 %v2948, 4294901760
    %v8346 = vsub.f32 %v2948, %v8345
    %v8347 = vand.u32 %v8346, 4294901760
    %8348 = vmatmul.mubr.f32.gmra.mrb[0].mxu0 %v8347
    %v8349 = vpop.f32.mrb[0].mxu0
    %v8350 = vadd.f32 %v8161, %v8349
    %v8351 = vpop.f32.mrb[0].mxu0
    %8352 = vmatprep.mubr.f32.mxu0 0.0
    %v8353 = vand.u32 %v2951, 4294901760
    %v8354 = vsub.f32 %v2951, %v8353
    %v8355 = vand.u32 %v8354, 4294901760
    %8356 = vmatmul.mubr.f32.gmra.mrb[0].mxu0 %v8355
    %v8357 = vpop.f32.mrb[0].mxu0
    %v8358 = vadd.f32 %v8168, %v8357
    %v8359 = vpop.f32.mrb[0].mxu0
    %8360 = vmatprep.mubr.f32.mxu0 0.0
    %v8361 = vand.u32 %v2954, 4294901760
    %v8362 = vsub.f32 %v2954, %v8361
    %v8363 = vand.u32 %v8362, 4294901760
    %8364 = vmatmul.mubr.f32.gmra.mrb[0].mxu0 %v8363
    %v8365 = vpop.f32.mrb[0].mxu0
    %v8366 = vadd.f32 %v8175, %v8365
    %v8367 = vpop.f32.mrb[0].mxu0
    %8368 = vmatprep.mubr.f32.mxu0 0.0
    %v8369 = vand.u32 %v2957, 4294901760
    %v8370 = vsub.f32 %v2957, %v8369
    %v8371 = vand.u32 %v8370, 4294901760
    %8372 = vmatmul.mubr.f32.gmra.mrb[0].mxu0 %v8371
    %v8373 = vpop.f32.mrb[0].mxu0
    %v8374 = vadd.f32 %v8182, %v8373
    %v8375 = vpop.f32.mrb[0].mxu0
    %8376 = vmatprep.mubr.f32.mxu0 0.0
    %v8377 = vand.u32 %v2960, 4294901760
    %v8378 = vsub.f32 %v2960, %v8377
    %v8379 = vand.u32 %v8378, 4294901760
    %8380 = vmatmul.mubr.f32.gmra.mrb[0].mxu0 %v8379
    %v8381 = vpop.f32.mrb[0].mxu0
    %v8382 = vadd.f32 %v8189, %v8381
    %v8383 = vpop.f32.mrb[0].mxu0
    %8384 = vmatprep.mubr.f32.mxu0 0.0
    %v8385 = vand.u32 %v2963, 4294901760
    %v8386 = vsub.f32 %v2963, %v8385
    %v8387 = vand.u32 %v8386, 4294901760
    %8388 = vmatmul.mubr.f32.gmra.mrb[0].mxu0 %v8387
    %v8389 = vpop.f32.mrb[0].mxu0
    %v8390 = vadd.f32 %v8196, %v8389
    %v8391 = vpop.f32.mrb[0].mxu0
    %8392 = vmatprep.mubr.f32.mxu0 0.0
    %v8393 = vand.u32 %v2966, 4294901760
    %v8394 = vsub.f32 %v2966, %v8393
    %v8395 = vand.u32 %v8394, 4294901760
    %8396 = vmatmul.mubr.f32.gmra.mrb[0].mxu0 %v8395
    %v8397 = vpop.f32.mrb[0].mxu0
    %v8398 = vadd.f32 %v8203, %v8397
    %v8399 = vpop.f32.mrb[0].mxu0
    %8400 = vdwg.mxu0
    %8401 = vmatprep.subr.mxu0 0.0
    %v8402 = vand.u32 %v5469, 4294901760
    %v8403 = vsub.f32 %v5469, %v8402
    %v8404 = vand.u32 %v8403, 4294901760
    %8405 = vmatpush1.msra.mxu0 %v8404
    %8406 = vmatprep.subr.mxu0 0.0
    %v8407 = vand.u32 %v5475, 4294901760
    %v8408 = vsub.f32 %v5475, %v8407
    %v8409 = vand.u32 %v8408, 4294901760
    %8410 = vmatpush1.msra.mxu0 %v8409
    %8411 = vmatprep.subr.mxu0 0.0
    %8412 = vmatpush1.msra.mxu0 0.0
    %8413 = vmatprep.subr.mxu0 0.0
    %8414 = vmatpush1.msra.mxu0 0.0
    %8415 = vmatprep.subr.mxu0 0.0
    %8416 = vmatpush1.msra.mxu0 0.0
    %8417 = vmatprep.subr.mxu0 0.0
    %8418 = vmatpush1.msra.mxu0 0.0
    %8419 = vmatprep.subr.mxu0 0.0
    %8420 = vmatpush1.msra.mxu0 0.0
    %8421 = vmatprep.subr.mxu0 0.0
    %8422 = vmatpush1.msra.mxu0 0.0
    %8423 = vmatprep.subr.mxu0 0.0
    %8424 = vmatpush1.msra.mxu0 0.0
    %8425 = vmatprep.subr.mxu0 0.0
    %8426 = vmatpush1.msra.mxu0 0.0
    %8427 = vmatprep.subr.mxu0 0.0
    %8428 = vmatpush1.msra.mxu0 0.0
    %8429 = vmatprep.subr.mxu0 0.0
    %8430 = vmatpush1.msra.mxu0 0.0
    %8431 = vmatprep.subr.mxu0 0.0
    %8432 = vmatpush1.msra.mxu0 0.0
    %8433 = vmatprep.subr.mxu0 0.0
    %8434 = vmatpush1.msra.mxu0 0.0
    %8435 = vmatprep.subr.mxu0 0.0
    %8436 = vmatpush1.msra.mxu0 0.0
    %8437 = vmatprep.subr.mxu0 0.0
    %8438 = vmatpush1.msra.mxu0 0.0
    %8439 = vmatprep.subr.mxu0 0.0
    %8440 = vmatpush1.msra.mxu0 0.0
    %8441 = vmatprep.subr.mxu0 0.0
    %8442 = vmatpush1.msra.mxu0 0.0
    %8443 = vmatprep.subr.mxu0 0.0
    %8444 = vmatpush1.msra.mxu0 0.0
    %8445 = vmatprep.subr.mxu0 0.0
    %8446 = vmatpush1.msra.mxu0 0.0
    %8447 = vmatprep.subr.mxu0 0.0
    %8448 = vmatpush1.msra.mxu0 0.0
    %8449 = vmatprep.subr.mxu0 0.0
    %8450 = vmatpush1.msra.mxu0 0.0
    %8451 = vmatprep.subr.mxu0 0.0
    %8452 = vmatpush1.msra.mxu0 0.0
    %8453 = vmatprep.subr.mxu0 0.0
    %8454 = vmatpush1.msra.mxu0 0.0
    %8455 = vmatprep.subr.mxu0 0.0
    %8456 = vmatpush1.msra.mxu0 0.0
    %8457 = vmatprep.subr.mxu0 0.0
    %8458 = vmatpush1.msra.mxu0 0.0
    %8459 = vmatprep.subr.mxu0 0.0
    %8460 = vmatpush1.msra.mxu0 0.0
    %8461 = vmatprep.subr.mxu0 0.0
    %8462 = vmatpush1.msra.mxu0 0.0
    %8463 = vmatprep.subr.mxu0 0.0
    %8464 = vmatpush1.msra.mxu0 0.0
    %8465 = vmatprep.subr.mxu0 0.0
    %8466 = vmatpush1.msra.mxu0 0.0
    %8467 = vmatprep.subr.mxu0 0.0
    %8468 = vmatpush1.msra.mxu0 0.0
    %8469 = vmatprep.subr.mxu0 0.0
    %8470 = vmatpush1.msra.mxu0 0.0
    %8471 = vmatprep.mubr.f32.mxu0 0.0
    %v8472 = vand.u32 %v2921, 4294901760
    %8473 = vmatmul.mubr.f32.gmra.mrb[0].mxu0 %v8472
    %v8474 = vpop.f32.mrb[0].mxu0
    %v8475 = vadd.f32 %v8278, %v8474
    %v8476 = vpop.f32.mrb[0].mxu0
    %8477 = vmatprep.mubr.f32.mxu0 0.0
    %v8478 = vand.u32 %v2924, 4294901760
    %8479 = vmatmul.mubr.f32.gmra.mrb[0].mxu0 %v8478
    %v8480 = vpop.f32.mrb[0].mxu0
    %v8481 = vadd.f32 %v8286, %v8480
    %v8482 = vpop.f32.mrb[0].mxu0
    %8483 = vmatprep.mubr.f32.mxu0 0.0
    %v8484 = vand.u32 %v2927, 4294901760
    %8485 = vmatmul.mubr.f32.gmra.mrb[0].mxu0 %v8484
    %v8486 = vpop.f32.mrb[0].mxu0
    %v8487 = vadd.f32 %v8294, %v8486
    %v8488 = vpop.f32.mrb[0].mxu0
    %8489 = vmatprep.mubr.f32.mxu0 0.0
    %v8490 = vand.u32 %v2930, 4294901760
    %8491 = vmatmul.mubr.f32.gmra.mrb[0].mxu0 %v8490
    %v8492 = vpop.f32.mrb[0].mxu0
    %v8493 = vadd.f32 %v8302, %v8492
    %v8494 = vpop.f32.mrb[0].mxu0
    %8495 = vmatprep.mubr.f32.mxu0 0.0
    %v8496 = vand.u32 %v2933, 4294901760
    %8497 = vmatmul.mubr.f32.gmra.mrb[0].mxu0 %v8496
    %v8498 = vpop.f32.mrb[0].mxu0
    %v8499 = vadd.f32 %v8310, %v8498
    %v8500 = vpop.f32.mrb[0].mxu0
    %8501 = vmatprep.mubr.f32.mxu0 0.0
    %v8502 = vand.u32 %v2936, 4294901760
    %8503 = vmatmul.mubr.f32.gmra.mrb[0].mxu0 %v8502
    %v8504 = vpop.f32.mrb[0].mxu0
    %v8505 = vadd.f32 %v8318, %v8504
    %v8506 = vpop.f32.mrb[0].mxu0
    %8507 = vmatprep.mubr.f32.mxu0 0.0
    %v8508 = vand.u32 %v2939, 4294901760
    %8509 = vmatmul.mubr.f32.gmra.mrb[0].mxu0 %v8508
    %v8510 = vpop.f32.mrb[0].mxu0
    %v8511 = vadd.f32 %v8326, %v8510
    %v8512 = vpop.f32.mrb[0].mxu0
    %8513 = vmatprep.mubr.f32.mxu0 0.0
    %v8514 = vand.u32 %v2942, 4294901760
    %8515 = vmatmul.mubr.f32.gmra.mrb[0].mxu0 %v8514
    %v8516 = vpop.f32.mrb[0].mxu0
    %v8517 = vadd.f32 %v8334, %v8516
    %v8518 = vpop.f32.mrb[0].mxu0
    %8519 = vmatprep.mubr.f32.mxu0 0.0
    %v8520 = vand.u32 %v2945, 4294901760
    %8521 = vmatmul.mubr.f32.gmra.mrb[0].mxu0 %v8520
    %v8522 = vpop.f32.mrb[0].mxu0
    %v8523 = vadd.f32 %v8342, %v8522
    %v8524 = vpop.f32.mrb[0].mxu0
    %8525 = vmatprep.mubr.f32.mxu0 0.0
    %v8526 = vand.u32 %v2948, 4294901760
    %8527 = vmatmul.mubr.f32.gmra.mrb[0].mxu0 %v8526
    %v8528 = vpop.f32.mrb[0].mxu0
    %v8529 = vadd.f32 %v8350, %v8528
    %v8530 = vpop.f32.mrb[0].mxu0
    %8531 = vmatprep.mubr.f32.mxu0 0.0
    %v8532 = vand.u32 %v2951, 4294901760
    %8533 = vmatmul.mubr.f32.gmra.mrb[0].mxu0 %v8532
    %v8534 = vpop.f32.mrb[0].mxu0
    %v8535 = vadd.f32 %v8358, %v8534
    %v8536 = vpop.f32.mrb[0].mxu0
    %8537 = vmatprep.mubr.f32.mxu0 0.0
    %v8538 = vand.u32 %v2954, 4294901760
    %8539 = vmatmul.mubr.f32.gmra.mrb[0].mxu0 %v8538
    %v8540 = vpop.f32.mrb[0].mxu0
    %v8541 = vadd.f32 %v8366, %v8540
    %v8542 = vpop.f32.mrb[0].mxu0
    %8543 = vmatprep.mubr.f32.mxu0 0.0
    %v8544 = vand.u32 %v2957, 4294901760
    %8545 = vmatmul.mubr.f32.gmra.mrb[0].mxu0 %v8544
    %v8546 = vpop.f32.mrb[0].mxu0
    %v8547 = vadd.f32 %v8374, %v8546
    %v8548 = vpop.f32.mrb[0].mxu0
    %8549 = vmatprep.mubr.f32.mxu0 0.0
    %v8550 = vand.u32 %v2960, 4294901760
    %8551 = vmatmul.mubr.f32.gmra.mrb[0].mxu0 %v8550
    %v8552 = vpop.f32.mrb[0].mxu0
    %v8553 = vadd.f32 %v8382, %v8552
    %v8554 = vpop.f32.mrb[0].mxu0
    %8555 = vmatprep.mubr.f32.mxu0 0.0
    %v8556 = vand.u32 %v2963, 4294901760
    %8557 = vmatmul.mubr.f32.gmra.mrb[0].mxu0 %v8556
    %v8558 = vpop.f32.mrb[0].mxu0
    %v8559 = vadd.f32 %v8390, %v8558
    %v8560 = vpop.f32.mrb[0].mxu0
    %8561 = vmatprep.mubr.f32.mxu0 0.0
    %v8562 = vand.u32 %v2966, 4294901760
    %8563 = vmatmul.mubr.f32.gmra.mrb[0].mxu0 %v8562
    %v8564 = vpop.f32.mrb[0].mxu0
    %v8565 = vadd.f32 %v8398, %v8564
    %v8566 = vpop.f32.mrb[0].mxu0
    %8567 = vdwg.mxu0
    %8568 = vmatprep.subr.mxu0 0.0
    %v8569 = vand.u32 %v5469, 4294901760
    %8570 = vmatpush1.msra.mxu0 %v8569
    %8571 = vmatprep.subr.mxu0 0.0
    %v8572 = vand.u32 %v5475, 4294901760
    %8573 = vmatpush1.msra.mxu0 %v8572
    %8574 = vmatprep.subr.mxu0 0.0
    %8575 = vmatpush1.msra.mxu0 0.0
    %8576 = vmatprep.subr.mxu0 0.0
    %8577 = vmatpush1.msra.mxu0 0.0
    %8578 = vmatprep.subr.mxu0 0.0
    %8579 = vmatpush1.msra.mxu0 0.0
    %8580 = vmatprep.subr.mxu0 0.0
    %8581 = vmatpush1.msra.mxu0 0.0
    %8582 = vmatprep.subr.mxu0 0.0
    %8583 = vmatpush1.msra.mxu0 0.0
    %8584 = vmatprep.subr.mxu0 0.0
    %8585 = vmatpush1.msra.mxu0 0.0
    %8586 = vmatprep.subr.mxu0 0.0
    %8587 = vmatpush1.msra.mxu0 0.0
    %8588 = vmatprep.subr.mxu0 0.0
    %8589 = vmatpush1.msra.mxu0 0.0
    %8590 = vmatprep.subr.mxu0 0.0
    %8591 = vmatpush1.msra.mxu0 0.0
    %8592 = vmatprep.subr.mxu0 0.0
    %8593 = vmatpush1.msra.mxu0 0.0
    %8594 = vmatprep.subr.mxu0 0.0
    %8595 = vmatpush1.msra.mxu0 0.0
    %8596 = vmatprep.subr.mxu0 0.0
    %8597 = vmatpush1.msra.mxu0 0.0
    %8598 = vmatprep.subr.mxu0 0.0
    %8599 = vmatpush1.msra.mxu0 0.0
    %8600 = vmatprep.subr.mxu0 0.0
    %8601 = vmatpush1.msra.mxu0 0.0
    %8602 = vmatprep.subr.mxu0 0.0
    %8603 = vmatpush1.msra.mxu0 0.0
    %8604 = vmatprep.subr.mxu0 0.0
    %8605 = vmatpush1.msra.mxu0 0.0
    %8606 = vmatprep.subr.mxu0 0.0
    %8607 = vmatpush1.msra.mxu0 0.0
    %8608 = vmatprep.subr.mxu0 0.0
    %8609 = vmatpush1.msra.mxu0 0.0
    %8610 = vmatprep.subr.mxu0 0.0
    %8611 = vmatpush1.msra.mxu0 0.0
    %8612 = vmatprep.subr.mxu0 0.0
    %8613 = vmatpush1.msra.mxu0 0.0
    %8614 = vmatprep.subr.mxu0 0.0
    %8615 = vmatpush1.msra.mxu0 0.0
    %8616 = vmatprep.subr.mxu0 0.0
    %8617 = vmatpush1.msra.mxu0 0.0
    %8618 = vmatprep.subr.mxu0 0.0
    %8619 = vmatpush1.msra.mxu0 0.0
    %8620 = vmatprep.subr.mxu0 0.0
    %8621 = vmatpush1.msra.mxu0 0.0
    %8622 = vmatprep.subr.mxu0 0.0
    %8623 = vmatpush1.msra.mxu0 0.0
    %8624 = vmatprep.subr.mxu0 0.0
    %8625 = vmatpush1.msra.mxu0 0.0
    %8626 = vmatprep.subr.mxu0 0.0
    %8627 = vmatpush1.msra.mxu0 0.0
    %8628 = vmatprep.subr.mxu0 0.0
    %8629 = vmatpush1.msra.mxu0 0.0
    %8630 = vmatprep.subr.mxu0 0.0
    %8631 = vmatpush1.msra.mxu0 0.0
    %8632 = vmatprep.subr.mxu0 0.0
    %8633 = vmatpush1.msra.mxu0 0.0
    %8634 = vmatprep.mubr.f32.mxu0 0.0
    %v8635 = vand.u32 %v2921, 4294901760
    %8636 = vmatmul.mubr.f32.gmra.mrb[0].mxu0 %v8635
    %v8637 = vpop.f32.mrb[0].mxu0
    %v8638 = vadd.f32 %v8475, %v8637
    %v8639 = vpop.f32.mrb[0].mxu0
    %8640 = vmatprep.mubr.f32.mxu0 0.0
    %v8641 = vand.u32 %v2924, 4294901760
    %8642 = vmatmul.mubr.f32.gmra.mrb[0].mxu0 %v8641
    %v8643 = vpop.f32.mrb[0].mxu0
    %v8644 = vadd.f32 %v8481, %v8643
    %v8645 = vpop.f32.mrb[0].mxu0
    %8646 = vmatprep.mubr.f32.mxu0 0.0
    %v8647 = vand.u32 %v2927, 4294901760
    %8648 = vmatmul.mubr.f32.gmra.mrb[0].mxu0 %v8647
    %v8649 = vpop.f32.mrb[0].mxu0
    %v8650 = vadd.f32 %v8487, %v8649
    %v8651 = vpop.f32.mrb[0].mxu0
    %8652 = vmatprep.mubr.f32.mxu0 0.0
    %v8653 = vand.u32 %v2930, 4294901760
    %8654 = vmatmul.mubr.f32.gmra.mrb[0].mxu0 %v8653
    %v8655 = vpop.f32.mrb[0].mxu0
    %v8656 = vadd.f32 %v8493, %v8655
    %v8657 = vpop.f32.mrb[0].mxu0
    %8658 = vmatprep.mubr.f32.mxu0 0.0
    %v8659 = vand.u32 %v2933, 4294901760
    %8660 = vmatmul.mubr.f32.gmra.mrb[0].mxu0 %v8659
    %v8661 = vpop.f32.mrb[0].mxu0
    %v8662 = vadd.f32 %v8499, %v8661
    %v8663 = vpop.f32.mrb[0].mxu0
    %8664 = vmatprep.mubr.f32.mxu0 0.0
    %v8665 = vand.u32 %v2936, 4294901760
    %8666 = vmatmul.mubr.f32.gmra.mrb[0].mxu0 %v8665
    %v8667 = vpop.f32.mrb[0].mxu0
    %v8668 = vadd.f32 %v8505, %v8667
    %v8669 = vpop.f32.mrb[0].mxu0
    %8670 = vmatprep.mubr.f32.mxu0 0.0
    %v8671 = vand.u32 %v2939, 4294901760
    %8672 = vmatmul.mubr.f32.gmra.mrb[0].mxu0 %v8671
    %v8673 = vpop.f32.mrb[0].mxu0
    %v8674 = vadd.f32 %v8511, %v8673
    %v8675 = vpop.f32.mrb[0].mxu0
    %8676 = vmatprep.mubr.f32.mxu0 0.0
    %v8677 = vand.u32 %v2942, 4294901760
    %8678 = vmatmul.mubr.f32.gmra.mrb[0].mxu0 %v8677
    %v8679 = vpop.f32.mrb[0].mxu0
    %v8680 = vadd.f32 %v8517, %v8679
    %v8681 = vpop.f32.mrb[0].mxu0
    %8682 = vmatprep.mubr.f32.mxu0 0.0
    %v8683 = vand.u32 %v2945, 4294901760
    %8684 = vmatmul.mubr.f32.gmra.mrb[0].mxu0 %v8683
    %v8685 = vpop.f32.mrb[0].mxu0
    %v8686 = vadd.f32 %v8523, %v8685
    %v8687 = vpop.f32.mrb[0].mxu0
    %8688 = vmatprep.mubr.f32.mxu0 0.0
    %v8689 = vand.u32 %v2948, 4294901760
    %8690 = vmatmul.mubr.f32.gmra.mrb[0].mxu0 %v8689
    %v8691 = vpop.f32.mrb[0].mxu0
    %v8692 = vadd.f32 %v8529, %v8691
    %v8693 = vpop.f32.mrb[0].mxu0
    %8694 = vmatprep.mubr.f32.mxu0 0.0
    %v8695 = vand.u32 %v2951, 4294901760
    %8696 = vmatmul.mubr.f32.gmra.mrb[0].mxu0 %v8695
    %v8697 = vpop.f32.mrb[0].mxu0
    %v8698 = vadd.f32 %v8535, %v8697
    %v8699 = vpop.f32.mrb[0].mxu0
    %8700 = vmatprep.mubr.f32.mxu0 0.0
    %v8701 = vand.u32 %v2954, 4294901760
    %8702 = vmatmul.mubr.f32.gmra.mrb[0].mxu0 %v8701
    %v8703 = vpop.f32.mrb[0].mxu0
    %v8704 = vadd.f32 %v8541, %v8703
    %v8705 = vpop.f32.mrb[0].mxu0
    %8706 = vmatprep.mubr.f32.mxu0 0.0
    %v8707 = vand.u32 %v2957, 4294901760
    %8708 = vmatmul.mubr.f32.gmra.mrb[0].mxu0 %v8707
    %v8709 = vpop.f32.mrb[0].mxu0
    %v8710 = vadd.f32 %v8547, %v8709
    %v8711 = vpop.f32.mrb[0].mxu0
    %8712 = vmatprep.mubr.f32.mxu0 0.0
    %v8713 = vand.u32 %v2960, 4294901760
    %8714 = vmatmul.mubr.f32.gmra.mrb[0].mxu0 %v8713
    %v8715 = vpop.f32.mrb[0].mxu0
    %v8716 = vadd.f32 %v8553, %v8715
    %v8717 = vpop.f32.mrb[0].mxu0
    %8718 = vmatprep.mubr.f32.mxu0 0.0
    %v8719 = vand.u32 %v2963, 4294901760
    %8720 = vmatmul.mubr.f32.gmra.mrb[0].mxu0 %v8719
    %v8721 = vpop.f32.mrb[0].mxu0
    %v8722 = vadd.f32 %v8559, %v8721
    %v8723 = vpop.f32.mrb[0].mxu0
    %8724 = vmatprep.mubr.f32.mxu0 0.0
    %v8725 = vand.u32 %v2966, 4294901760
    %8726 = vmatmul.mubr.f32.gmra.mrb[0].mxu0 %v8725
    %v8727 = vpop.f32.mrb[0].mxu0
    %v8728 = vadd.f32 %v8565, %v8727
    %v8729 = vpop.f32.mrb[0].mxu0
    %8730 = vdwg.mxu0
    %v8731 = vmul.f32 %v8638, %v7611
    %v8732 = vmul.f32 %v8644, %v7612
    %v8733 = vmul.f32 %v8650, %v7613
    %v8734 = vmul.f32 %v8656, %v7614
    %v8735 = vmul.f32 %v8662, %v7615
    %v8736 = vmul.f32 %v8668, %v7616
    %v8737 = vmul.f32 %v8674, %v7617
    %v8738 = vmul.f32 %v8680, %v7618
    %v8739 = vmul.f32 %v8686, %v7619
    %v8740 = vmul.f32 %v8692, %v7620
    %v8741 = vmul.f32 %v8698, %v7621
    %v8742 = vmul.f32 %v8704, %v7622
    %v8743 = vmul.f32 %v8710, %v7623
    %v8744 = vmul.f32 %v8716, %v7624
    %v8745 = vmul.f32 %v8722, %v7625
    %v8746 = vmul.f32 %v8728, %v7626
    %8747 = vmatprep.subr.mxu0 0.0
    %v8748 = vand.u32 %v8731, 4294901760
    %8749 = vmatpush1.msra.mxu0 %v8748
    %8750 = vmatprep.subr.mxu0 0.0
    %v8751 = vand.u32 %v8732, 4294901760
    %8752 = vmatpush1.msra.mxu0 %v8751
    %8753 = vmatprep.subr.mxu0 0.0
    %v8754 = vand.u32 %v8733, 4294901760
    %8755 = vmatpush1.msra.mxu0 %v8754
    %8756 = vmatprep.subr.mxu0 0.0
    %v8757 = vand.u32 %v8734, 4294901760
    %8758 = vmatpush1.msra.mxu0 %v8757
    %8759 = vmatprep.subr.mxu0 0.0
    %v8760 = vand.u32 %v8735, 4294901760
    %8761 = vmatpush1.msra.mxu0 %v8760
    %8762 = vmatprep.subr.mxu0 0.0
    %v8763 = vand.u32 %v8736, 4294901760
    %8764 = vmatpush1.msra.mxu0 %v8763
    %8765 = vmatprep.subr.mxu0 0.0
    %v8766 = vand.u32 %v8737, 4294901760
    %8767 = vmatpush1.msra.mxu0 %v8766
    %8768 = vmatprep.subr.mxu0 0.0
    %v8769 = vand.u32 %v8738, 4294901760
    %8770 = vmatpush1.msra.mxu0 %v8769
    %8771 = vmatprep.subr.mxu0 0.0
    %v8772 = vand.u32 %v8739, 4294901760
    %8773 = vmatpush1.msra.mxu0 %v8772
    %8774 = vmatprep.subr.mxu0 0.0
    %v8775 = vand.u32 %v8740, 4294901760
    %8776 = vmatpush1.msra.mxu0 %v8775
    %8777 = vmatprep.subr.mxu0 0.0
    %v8778 = vand.u32 %v8741, 4294901760
    %8779 = vmatpush1.msra.mxu0 %v8778
    %8780 = vmatprep.subr.mxu0 0.0
    %v8781 = vand.u32 %v8742, 4294901760
    %8782 = vmatpush1.msra.mxu0 %v8781
    %8783 = vmatprep.subr.mxu0 0.0
    %v8784 = vand.u32 %v8743, 4294901760
    %8785 = vmatpush1.msra.mxu0 %v8784
    %8786 = vmatprep.subr.mxu0 0.0
    %v8787 = vand.u32 %v8744, 4294901760
    %8788 = vmatpush1.msra.mxu0 %v8787
    %8789 = vmatprep.subr.mxu0 0.0
    %v8790 = vand.u32 %v8745, 4294901760
    %8791 = vmatpush1.msra.mxu0 %v8790
    %8792 = vmatprep.subr.mxu0 0.0
    %v8793 = vand.u32 %v8746, 4294901760
    %8794 = vmatpush1.msra.mxu0 %v8793
    %8795 = vmatprep.subr.mxu0 0.0
    %8796 = vmatpush1.msra.mxu0 0.0
    %8797 = vmatprep.subr.mxu0 0.0
    %8798 = vmatpush1.msra.mxu0 0.0
    %8799 = vmatprep.subr.mxu0 0.0
    %8800 = vmatpush1.msra.mxu0 0.0
    %8801 = vmatprep.subr.mxu0 0.0
    %8802 = vmatpush1.msra.mxu0 0.0
    %8803 = vmatprep.subr.mxu0 0.0
    %8804 = vmatpush1.msra.mxu0 0.0
    %8805 = vmatprep.subr.mxu0 0.0
    %8806 = vmatpush1.msra.mxu0 0.0
    %8807 = vmatprep.subr.mxu0 0.0
    %8808 = vmatpush1.msra.mxu0 0.0
    %8809 = vmatprep.subr.mxu0 0.0
    %8810 = vmatpush1.msra.mxu0 0.0
    %8811 = vmatprep.subr.mxu0 0.0
    %8812 = vmatpush1.msra.mxu0 0.0
    %8813 = vmatprep.subr.mxu0 0.0
    %8814 = vmatpush1.msra.mxu0 0.0
    %8815 = vmatprep.subr.mxu0 0.0
    %8816 = vmatpush1.msra.mxu0 0.0
    %8817 = vmatprep.subr.mxu0 0.0
    %8818 = vmatpush1.msra.mxu0 0.0
    %8819 = vmatprep.subr.mxu0 0.0
    %8820 = vmatpush1.msra.mxu0 0.0
    %8821 = vmatprep.subr.mxu0 0.0
    %8822 = vmatpush1.msra.mxu0 0.0
    %8823 = vmatprep.subr.mxu0 0.0
    %8824 = vmatpush1.msra.mxu0 0.0
    %8825 = vmatprep.subr.mxu0 0.0
    %8826 = vmatpush1.msra.mxu0 0.0
    %8827 = vmatprep.mubr.f32.mxu0 0.0
    %v8828 = vand.u32 %v7608, 4294901760
    %v8829 = vsub.f32 %v7608, %v8828
    %v8830 = vand.u32 %v8829, 4294901760
    %v8831 = vsub.f32 %v8829, %v8830
    %v8832 = vand.u32 %v8831, 4294901760
    %8833 = vmatmul.mubr.f32.gmra.mrb[0].mxu0 %v8832
    %v8834 = vpop.f32.mrb[0].mxu0
    %v8835 = vadd.f32 0.0, %v8834
    %v8836 = vpop.f32.mrb[0].mxu0
    %8837 = vmatprep.mubr.f32.mxu0 0.0
    %v8838 = vand.u32 %v7609, 4294901760
    %v8839 = vsub.f32 %v7609, %v8838
    %v8840 = vand.u32 %v8839, 4294901760
    %v8841 = vsub.f32 %v8839, %v8840
    %v8842 = vand.u32 %v8841, 4294901760
    %8843 = vmatmul.mubr.f32.gmra.mrb[0].mxu0 %v8842
    %v8844 = vpop.f32.mrb[0].mxu0
    %v8845 = vadd.f32 0.0, %v8844
    %v8846 = vpop.f32.mrb[0].mxu0
    %8847 = vdwg.mxu0
    %8848 = vmatprep.subr.mxu0 0.0
    %v8849 = vand.u32 %v8731, 4294901760
    %v8850 = vsub.f32 %v8731, %v8849
    %v8851 = vand.u32 %v8850, 4294901760
    %v8852 = vsub.f32 %v8850, %v8851
    %v8853 = vand.u32 %v8852, 4294901760
    %8854 = vmatpush1.msra.mxu0 %v8853
    %8855 = vmatprep.subr.mxu0 0.0
    %v8856 = vand.u32 %v8732, 4294901760
    %v8857 = vsub.f32 %v8732, %v8856
    %v8858 = vand.u32 %v8857, 4294901760
    %v8859 = vsub.f32 %v8857, %v8858
    %v8860 = vand.u32 %v8859, 4294901760
    %8861 = vmatpush1.msra.mxu0 %v8860
    %8862 = vmatprep.subr.mxu0 0.0
    %v8863 = vand.u32 %v8733, 4294901760
    %v8864 = vsub.f32 %v8733, %v8863
    %v8865 = vand.u32 %v8864, 4294901760
    %v8866 = vsub.f32 %v8864, %v8865
    %v8867 = vand.u32 %v8866, 4294901760
    %8868 = vmatpush1.msra.mxu0 %v8867
    %8869 = vmatprep.subr.mxu0 0.0
    %v8870 = vand.u32 %v8734, 4294901760
    %v8871 = vsub.f32 %v8734, %v8870
    %v8872 = vand.u32 %v8871, 4294901760
    %v8873 = vsub.f32 %v8871, %v8872
    %v8874 = vand.u32 %v8873, 4294901760
    %8875 = vmatpush1.msra.mxu0 %v8874
    %8876 = vmatprep.subr.mxu0 0.0
    %v8877 = vand.u32 %v8735, 4294901760
    %v8878 = vsub.f32 %v8735, %v8877
    %v8879 = vand.u32 %v8878, 4294901760
    %v8880 = vsub.f32 %v8878, %v8879
    %v8881 = vand.u32 %v8880, 4294901760
    %8882 = vmatpush1.msra.mxu0 %v8881
    %8883 = vmatprep.subr.mxu0 0.0
    %v8884 = vand.u32 %v8736, 4294901760
    %v8885 = vsub.f32 %v8736, %v8884
    %v8886 = vand.u32 %v8885, 4294901760
    %v8887 = vsub.f32 %v8885, %v8886
    %v8888 = vand.u32 %v8887, 4294901760
    %8889 = vmatpush1.msra.mxu0 %v8888
    %8890 = vmatprep.subr.mxu0 0.0
    %v8891 = vand.u32 %v8737, 4294901760
    %v8892 = vsub.f32 %v8737, %v8891
    %v8893 = vand.u32 %v8892, 4294901760
    %v8894 = vsub.f32 %v8892, %v8893
    %v8895 = vand.u32 %v8894, 4294901760
    %8896 = vmatpush1.msra.mxu0 %v8895
    %8897 = vmatprep.subr.mxu0 0.0
    %v8898 = vand.u32 %v8738, 4294901760
    %v8899 = vsub.f32 %v8738, %v8898
    %v8900 = vand.u32 %v8899, 4294901760
    %v8901 = vsub.f32 %v8899, %v8900
    %v8902 = vand.u32 %v8901, 4294901760
    %8903 = vmatpush1.msra.mxu0 %v8902
    %8904 = vmatprep.subr.mxu0 0.0
    %v8905 = vand.u32 %v8739, 4294901760
    %v8906 = vsub.f32 %v8739, %v8905
    %v8907 = vand.u32 %v8906, 4294901760
    %v8908 = vsub.f32 %v8906, %v8907
    %v8909 = vand.u32 %v8908, 4294901760
    %8910 = vmatpush1.msra.mxu0 %v8909
    %8911 = vmatprep.subr.mxu0 0.0
    %v8912 = vand.u32 %v8740, 4294901760
    %v8913 = vsub.f32 %v8740, %v8912
    %v8914 = vand.u32 %v8913, 4294901760
    %v8915 = vsub.f32 %v8913, %v8914
    %v8916 = vand.u32 %v8915, 4294901760
    %8917 = vmatpush1.msra.mxu0 %v8916
    %8918 = vmatprep.subr.mxu0 0.0
    %v8919 = vand.u32 %v8741, 4294901760
    %v8920 = vsub.f32 %v8741, %v8919
    %v8921 = vand.u32 %v8920, 4294901760
    %v8922 = vsub.f32 %v8920, %v8921
    %v8923 = vand.u32 %v8922, 4294901760
    %8924 = vmatpush1.msra.mxu0 %v8923
    %8925 = vmatprep.subr.mxu0 0.0
    %v8926 = vand.u32 %v8742, 4294901760
    %v8927 = vsub.f32 %v8742, %v8926
    %v8928 = vand.u32 %v8927, 4294901760
    %v8929 = vsub.f32 %v8927, %v8928
    %v8930 = vand.u32 %v8929, 4294901760
    %8931 = vmatpush1.msra.mxu0 %v8930
    %8932 = vmatprep.subr.mxu0 0.0
    %v8933 = vand.u32 %v8743, 4294901760
    %v8934 = vsub.f32 %v8743, %v8933
    %v8935 = vand.u32 %v8934, 4294901760
    %v8936 = vsub.f32 %v8934, %v8935
    %v8937 = vand.u32 %v8936, 4294901760
    %8938 = vmatpush1.msra.mxu0 %v8937
    %8939 = vmatprep.subr.mxu0 0.0
    %v8940 = vand.u32 %v8744, 4294901760
    %v8941 = vsub.f32 %v8744, %v8940
    %v8942 = vand.u32 %v8941, 4294901760
    %v8943 = vsub.f32 %v8941, %v8942
    %v8944 = vand.u32 %v8943, 4294901760
    %8945 = vmatpush1.msra.mxu0 %v8944
    %8946 = vmatprep.subr.mxu0 0.0
    %v8947 = vand.u32 %v8745, 4294901760
    %v8948 = vsub.f32 %v8745, %v8947
    %v8949 = vand.u32 %v8948, 4294901760
    %v8950 = vsub.f32 %v8948, %v8949
    %v8951 = vand.u32 %v8950, 4294901760
    %8952 = vmatpush1.msra.mxu0 %v8951
    %8953 = vmatprep.subr.mxu0 0.0
    %v8954 = vand.u32 %v8746, 4294901760
    %v8955 = vsub.f32 %v8746, %v8954
    %v8956 = vand.u32 %v8955, 4294901760
    %v8957 = vsub.f32 %v8955, %v8956
    %v8958 = vand.u32 %v8957, 4294901760
    %8959 = vmatpush1.msra.mxu0 %v8958
    %8960 = vmatprep.subr.mxu0 0.0
    %8961 = vmatpush1.msra.mxu0 0.0
    %8962 = vmatprep.subr.mxu0 0.0
    %8963 = vmatpush1.msra.mxu0 0.0
    %8964 = vmatprep.subr.mxu0 0.0
    %8965 = vmatpush1.msra.mxu0 0.0
    %8966 = vmatprep.subr.mxu0 0.0
    %8967 = vmatpush1.msra.mxu0 0.0
    %8968 = vmatprep.subr.mxu0 0.0
    %8969 = vmatpush1.msra.mxu0 0.0
    %8970 = vmatprep.subr.mxu0 0.0
    %8971 = vmatpush1.msra.mxu0 0.0
    %8972 = vmatprep.subr.mxu0 0.0
    %8973 = vmatpush1.msra.mxu0 0.0
    %8974 = vmatprep.subr.mxu0 0.0
    %8975 = vmatpush1.msra.mxu0 0.0
    %8976 = vmatprep.subr.mxu0 0.0
    %8977 = vmatpush1.msra.mxu0 0.0
    %8978 = vmatprep.subr.mxu0 0.0
    %8979 = vmatpush1.msra.mxu0 0.0
    %8980 = vmatprep.subr.mxu0 0.0
    %8981 = vmatpush1.msra.mxu0 0.0
    %8982 = vmatprep.subr.mxu0 0.0
    %8983 = vmatpush1.msra.mxu0 0.0
    %8984 = vmatprep.subr.mxu0 0.0
    %8985 = vmatpush1.msra.mxu0 0.0
    %8986 = vmatprep.subr.mxu0 0.0
    %8987 = vmatpush1.msra.mxu0 0.0
    %8988 = vmatprep.subr.mxu0 0.0
    %8989 = vmatpush1.msra.mxu0 0.0
    %8990 = vmatprep.subr.mxu0 0.0
    %8991 = vmatpush1.msra.mxu0 0.0
    %8992 = vmatprep.mubr.f32.mxu0 0.0
    %v8993 = vand.u32 %v7608, 4294901760
    %8994 = vmatmul.mubr.f32.gmra.mrb[0].mxu0 %v8993
    %v8995 = vpop.f32.mrb[0].mxu0
    %v8996 = vadd.f32 %v8835, %v8995
    %v8997 = vpop.f32.mrb[0].mxu0
    %8998 = vmatprep.mubr.f32.mxu0 0.0
    %v8999 = vand.u32 %v7609, 4294901760
    %9000 = vmatmul.mubr.f32.gmra.mrb[0].mxu0 %v8999
    %v9001 = vpop.f32.mrb[0].mxu0
    %v9002 = vadd.f32 %v8845, %v9001
    %v9003 = vpop.f32.mrb[0].mxu0
    %9004 = vdwg.mxu0
    %9005 = vmatprep.subr.mxu0 0.0
    %v9006 = vand.u32 %v8731, 4294901760
    %v9007 = vsub.f32 %v8731, %v9006
    %9008 = vmatpush1.msra.mxu0 %v9007
    %9009 = vmatprep.subr.mxu0 0.0
    %v9010 = vand.u32 %v8732, 4294901760
    %v9011 = vsub.f32 %v8732, %v9010
    %9012 = vmatpush1.msra.mxu0 %v9011
    %9013 = vmatprep.subr.mxu0 0.0
    %v9014 = vand.u32 %v8733, 4294901760
    %v9015 = vsub.f32 %v8733, %v9014
    %9016 = vmatpush1.msra.mxu0 %v9015
    %9017 = vmatprep.subr.mxu0 0.0
    %v9018 = vand.u32 %v8734, 4294901760
    %v9019 = vsub.f32 %v8734, %v9018
    %9020 = vmatpush1.msra.mxu0 %v9019
    %9021 = vmatprep.subr.mxu0 0.0
    %v9022 = vand.u32 %v8735, 4294901760
    %v9023 = vsub.f32 %v8735, %v9022
    %9024 = vmatpush1.msra.mxu0 %v9023
    %9025 = vmatprep.subr.mxu0 0.0
    %v9026 = vand.u32 %v8736, 4294901760
    %v9027 = vsub.f32 %v8736, %v9026
    %9028 = vmatpush1.msra.mxu0 %v9027
    %9029 = vmatprep.subr.mxu0 0.0
    %v9030 = vand.u32 %v8737, 4294901760
    %v9031 = vsub.f32 %v8737, %v9030
    %9032 = vmatpush1.msra.mxu0 %v9031
    %9033 = vmatprep.subr.mxu0 0.0
    %v9034 = vand.u32 %v8738, 4294901760
    %v9035 = vsub.f32 %v8738, %v9034
    %9036 = vmatpush1.msra.mxu0 %v9035
    %9037 = vmatprep.subr.mxu0 0.0
    %v9038 = vand.u32 %v8739, 4294901760
    %v9039 = vsub.f32 %v8739, %v9038
    %9040 = vmatpush1.msra.mxu0 %v9039
    %9041 = vmatprep.subr.mxu0 0.0
    %v9042 = vand.u32 %v8740, 4294901760
    %v9043 = vsub.f32 %v8740, %v9042
    %9044 = vmatpush1.msra.mxu0 %v9043
    %9045 = vmatprep.subr.mxu0 0.0
    %v9046 = vand.u32 %v8741, 4294901760
    %v9047 = vsub.f32 %v8741, %v9046
    %9048 = vmatpush1.msra.mxu0 %v9047
    %9049 = vmatprep.subr.mxu0 0.0
    %v9050 = vand.u32 %v8742, 4294901760
    %v9051 = vsub.f32 %v8742, %v9050
    %9052 = vmatpush1.msra.mxu0 %v9051
    %9053 = vmatprep.subr.mxu0 0.0
    %v9054 = vand.u32 %v8743, 4294901760
    %v9055 = vsub.f32 %v8743, %v9054
    %9056 = vmatpush1.msra.mxu0 %v9055
    %9057 = vmatprep.subr.mxu0 0.0
    %v9058 = vand.u32 %v8744, 4294901760
    %v9059 = vsub.f32 %v8744, %v9058
    %9060 = vmatpush1.msra.mxu0 %v9059
    %9061 = vmatprep.subr.mxu0 0.0
    %v9062 = vand.u32 %v8745, 4294901760
    %v9063 = vsub.f32 %v8745, %v9062
    %9064 = vmatpush1.msra.mxu0 %v9063
    %9065 = vmatprep.subr.mxu0 0.0
    %v9066 = vand.u32 %v8746, 4294901760
    %v9067 = vsub.f32 %v8746, %v9066
    %9068 = vmatpush1.msra.mxu0 %v9067
    %9069 = vmatprep.subr.mxu0 0.0
    %9070 = vmatpush1.msra.mxu0 0.0
    %9071 = vmatprep.subr.mxu0 0.0
    %9072 = vmatpush1.msra.mxu0 0.0
    %9073 = vmatprep.subr.mxu0 0.0
    %9074 = vmatpush1.msra.mxu0 0.0
    %9075 = vmatprep.subr.mxu0 0.0
    %9076 = vmatpush1.msra.mxu0 0.0
    %9077 = vmatprep.subr.mxu0 0.0
    %9078 = vmatpush1.msra.mxu0 0.0
    %9079 = vmatprep.subr.mxu0 0.0
    %9080 = vmatpush1.msra.mxu0 0.0
    %9081 = vmatprep.subr.mxu0 0.0
    %9082 = vmatpush1.msra.mxu0 0.0
    %9083 = vmatprep.subr.mxu0 0.0
    %9084 = vmatpush1.msra.mxu0 0.0
    %9085 = vmatprep.subr.mxu0 0.0
    %9086 = vmatpush1.msra.mxu0 0.0
    %9087 = vmatprep.subr.mxu0 0.0
    %9088 = vmatpush1.msra.mxu0 0.0
    %9089 = vmatprep.subr.mxu0 0.0
    %9090 = vmatpush1.msra.mxu0 0.0
    %9091 = vmatprep.subr.mxu0 0.0
    %9092 = vmatpush1.msra.mxu0 0.0
    %9093 = vmatprep.subr.mxu0 0.0
    %9094 = vmatpush1.msra.mxu0 0.0
    %9095 = vmatprep.subr.mxu0 0.0
    %9096 = vmatpush1.msra.mxu0 0.0
    %9097 = vmatprep.subr.mxu0 0.0
    %9098 = vmatpush1.msra.mxu0 0.0
    %9099 = vmatprep.subr.mxu0 0.0
    %9100 = vmatpush1.msra.mxu0 0.0
    %9101 = vmatprep.mubr.f32.mxu0 0.0
    %v9102 = vand.u32 %v7608, 4294901760
    %v9103 = vsub.f32 %v7608, %v9102
    %9104 = vmatmul.mubr.f32.gmra.mrb[0].mxu0 %v9103
    %v9105 = vpop.f32.mrb[0].mxu0
    %v9106 = vadd.f32 %v8996, %v9105
    %v9107 = vpop.f32.mrb[0].mxu0
    %9108 = vmatprep.mubr.f32.mxu0 0.0
    %v9109 = vand.u32 %v7609, 4294901760
    %v9110 = vsub.f32 %v7609, %v9109
    %9111 = vmatmul.mubr.f32.gmra.mrb[0].mxu0 %v9110
    %v9112 = vpop.f32.mrb[0].mxu0
    %v9113 = vadd.f32 %v9002, %v9112
    %v9114 = vpop.f32.mrb[0].mxu0
    %9115 = vdwg.mxu0
    %9116 = vmatprep.subr.mxu0 0.0
    %v9117 = vand.u32 %v8731, 4294901760
    %9118 = vmatpush1.msra.mxu0 %v9117
    %9119 = vmatprep.subr.mxu0 0.0
    %v9120 = vand.u32 %v8732, 4294901760
    %9121 = vmatpush1.msra.mxu0 %v9120
    %9122 = vmatprep.subr.mxu0 0.0
    %v9123 = vand.u32 %v8733, 4294901760
    %9124 = vmatpush1.msra.mxu0 %v9123
    %9125 = vmatprep.subr.mxu0 0.0
    %v9126 = vand.u32 %v8734, 4294901760
    %9127 = vmatpush1.msra.mxu0 %v9126
    %9128 = vmatprep.subr.mxu0 0.0
    %v9129 = vand.u32 %v8735, 4294901760
    %9130 = vmatpush1.msra.mxu0 %v9129
    %9131 = vmatprep.subr.mxu0 0.0
    %v9132 = vand.u32 %v8736, 4294901760
    %9133 = vmatpush1.msra.mxu0 %v9132
    %9134 = vmatprep.subr.mxu0 0.0
    %v9135 = vand.u32 %v8737, 4294901760
    %9136 = vmatpush1.msra.mxu0 %v9135
    %9137 = vmatprep.subr.mxu0 0.0
    %v9138 = vand.u32 %v8738, 4294901760
    %9139 = vmatpush1.msra.mxu0 %v9138
    %9140 = vmatprep.subr.mxu0 0.0
    %v9141 = vand.u32 %v8739, 4294901760
    %9142 = vmatpush1.msra.mxu0 %v9141
    %9143 = vmatprep.subr.mxu0 0.0
    %v9144 = vand.u32 %v8740, 4294901760
    %9145 = vmatpush1.msra.mxu0 %v9144
    %9146 = vmatprep.subr.mxu0 0.0
    %v9147 = vand.u32 %v8741, 4294901760
    %9148 = vmatpush1.msra.mxu0 %v9147
    %9149 = vmatprep.subr.mxu0 0.0
    %v9150 = vand.u32 %v8742, 4294901760
    %9151 = vmatpush1.msra.mxu0 %v9150
    %9152 = vmatprep.subr.mxu0 0.0
    %v9153 = vand.u32 %v8743, 4294901760
    %9154 = vmatpush1.msra.mxu0 %v9153
    %9155 = vmatprep.subr.mxu0 0.0
    %v9156 = vand.u32 %v8744, 4294901760
    %9157 = vmatpush1.msra.mxu0 %v9156
    %9158 = vmatprep.subr.mxu0 0.0
    %v9159 = vand.u32 %v8745, 4294901760
    %9160 = vmatpush1.msra.mxu0 %v9159
    %9161 = vmatprep.subr.mxu0 0.0
    %v9162 = vand.u32 %v8746, 4294901760
    %9163 = vmatpush1.msra.mxu0 %v9162
    %9164 = vmatprep.subr.mxu0 0.0
    %9165 = vmatpush1.msra.mxu0 0.0
    %9166 = vmatprep.subr.mxu0 0.0
    %9167 = vmatpush1.msra.mxu0 0.0
    %9168 = vmatprep.subr.mxu0 0.0
    %9169 = vmatpush1.msra.mxu0 0.0
    %9170 = vmatprep.subr.mxu0 0.0
    %9171 = vmatpush1.msra.mxu0 0.0
    %9172 = vmatprep.subr.mxu0 0.0
    %9173 = vmatpush1.msra.mxu0 0.0
    %9174 = vmatprep.subr.mxu0 0.0
    %9175 = vmatpush1.msra.mxu0 0.0
    %9176 = vmatprep.subr.mxu0 0.0
    %9177 = vmatpush1.msra.mxu0 0.0
    %9178 = vmatprep.subr.mxu0 0.0
    %9179 = vmatpush1.msra.mxu0 0.0
    %9180 = vmatprep.subr.mxu0 0.0
    %9181 = vmatpush1.msra.mxu0 0.0
    %9182 = vmatprep.subr.mxu0 0.0
    %9183 = vmatpush1.msra.mxu0 0.0
    %9184 = vmatprep.subr.mxu0 0.0
    %9185 = vmatpush1.msra.mxu0 0.0
    %9186 = vmatprep.subr.mxu0 0.0
    %9187 = vmatpush1.msra.mxu0 0.0
    %9188 = vmatprep.subr.mxu0 0.0
    %9189 = vmatpush1.msra.mxu0 0.0
    %9190 = vmatprep.subr.mxu0 0.0
    %9191 = vmatpush1.msra.mxu0 0.0
    %9192 = vmatprep.subr.mxu0 0.0
    %9193 = vmatpush1.msra.mxu0 0.0
    %9194 = vmatprep.subr.mxu0 0.0
    %9195 = vmatpush1.msra.mxu0 0.0
    %9196 = vmatprep.mubr.f32.mxu0 0.0
    %v9197 = vand.u32 %v7608, 4294901760
    %v9198 = vsub.f32 %v7608, %v9197
    %v9199 = vand.u32 %v9198, 4294901760
    %9200 = vmatmul.mubr.f32.gmra.mrb[0].mxu0 %v9199
    %v9201 = vpop.f32.mrb[0].mxu0
    %v9202 = vadd.f32 %v9106, %v9201
    %v9203 = vpop.f32.mrb[0].mxu0
    %9204 = vmatprep.mubr.f32.mxu0 0.0
    %v9205 = vand.u32 %v7609, 4294901760
    %v9206 = vsub.f32 %v7609, %v9205
    %v9207 = vand.u32 %v9206, 4294901760
    %9208 = vmatmul.mubr.f32.gmra.mrb[0].mxu0 %v9207
    %v9209 = vpop.f32.mrb[0].mxu0
    %v9210 = vadd.f32 %v9113, %v9209
    %v9211 = vpop.f32.mrb[0].mxu0
    %9212 = vdwg.mxu0
    %9213 = vmatprep.subr.mxu0 0.0
    %v9214 = vand.u32 %v8731, 4294901760
    %v9215 = vsub.f32 %v8731, %v9214
    %v9216 = vand.u32 %v9215, 4294901760
    %9217 = vmatpush1.msra.mxu0 %v9216
    %9218 = vmatprep.subr.mxu0 0.0
    %v9219 = vand.u32 %v8732, 4294901760
    %v9220 = vsub.f32 %v8732, %v9219
    %v9221 = vand.u32 %v9220, 4294901760
    %9222 = vmatpush1.msra.mxu0 %v9221
    %9223 = vmatprep.subr.mxu0 0.0
    %v9224 = vand.u32 %v8733, 4294901760
    %v9225 = vsub.f32 %v8733, %v9224
    %v9226 = vand.u32 %v9225, 4294901760
    %9227 = vmatpush1.msra.mxu0 %v9226
    %9228 = vmatprep.subr.mxu0 0.0
    %v9229 = vand.u32 %v8734, 4294901760
    %v9230 = vsub.f32 %v8734, %v9229
    %v9231 = vand.u32 %v9230, 4294901760
    %9232 = vmatpush1.msra.mxu0 %v9231
    %9233 = vmatprep.subr.mxu0 0.0
    %v9234 = vand.u32 %v8735, 4294901760
    %v9235 = vsub.f32 %v8735, %v9234
    %v9236 = vand.u32 %v9235, 4294901760
    %9237 = vmatpush1.msra.mxu0 %v9236
    %9238 = vmatprep.subr.mxu0 0.0
    %v9239 = vand.u32 %v8736, 4294901760
    %v9240 = vsub.f32 %v8736, %v9239
    %v9241 = vand.u32 %v9240, 4294901760
    %9242 = vmatpush1.msra.mxu0 %v9241
    %9243 = vmatprep.subr.mxu0 0.0
    %v9244 = vand.u32 %v8737, 4294901760
    %v9245 = vsub.f32 %v8737, %v9244
    %v9246 = vand.u32 %v9245, 4294901760
    %9247 = vmatpush1.msra.mxu0 %v9246
    %9248 = vmatprep.subr.mxu0 0.0
    %v9249 = vand.u32 %v8738, 4294901760
    %v9250 = vsub.f32 %v8738, %v9249
    %v9251 = vand.u32 %v9250, 4294901760
    %9252 = vmatpush1.msra.mxu0 %v9251
    %9253 = vmatprep.subr.mxu0 0.0
    %v9254 = vand.u32 %v8739, 4294901760
    %v9255 = vsub.f32 %v8739, %v9254
    %v9256 = vand.u32 %v9255, 4294901760
    %9257 = vmatpush1.msra.mxu0 %v9256
    %9258 = vmatprep.subr.mxu0 0.0
    %v9259 = vand.u32 %v8740, 4294901760
    %v9260 = vsub.f32 %v8740, %v9259
    %v9261 = vand.u32 %v9260, 4294901760
    %9262 = vmatpush1.msra.mxu0 %v9261
    %9263 = vmatprep.subr.mxu0 0.0
    %v9264 = vand.u32 %v8741, 4294901760
    %v9265 = vsub.f32 %v8741, %v9264
    %v9266 = vand.u32 %v9265, 4294901760
    %9267 = vmatpush1.msra.mxu0 %v9266
    %9268 = vmatprep.subr.mxu0 0.0
    %v9269 = vand.u32 %v8742, 4294901760
    %v9270 = vsub.f32 %v8742, %v9269
    %v9271 = vand.u32 %v9270, 4294901760
    %9272 = vmatpush1.msra.mxu0 %v9271
    %9273 = vmatprep.subr.mxu0 0.0
    %v9274 = vand.u32 %v8743, 4294901760
    %v9275 = vsub.f32 %v8743, %v9274
    %v9276 = vand.u32 %v9275, 4294901760
    %9277 = vmatpush1.msra.mxu0 %v9276
    %9278 = vmatprep.subr.mxu0 0.0
    %v9279 = vand.u32 %v8744, 4294901760
    %v9280 = vsub.f32 %v8744, %v9279
    %v9281 = vand.u32 %v9280, 4294901760
    %9282 = vmatpush1.msra.mxu0 %v9281
    %9283 = vmatprep.subr.mxu0 0.0
    %v9284 = vand.u32 %v8745, 4294901760
    %v9285 = vsub.f32 %v8745, %v9284
    %v9286 = vand.u32 %v9285, 4294901760
    %9287 = vmatpush1.msra.mxu0 %v9286
    %9288 = vmatprep.subr.mxu0 0.0
    %v9289 = vand.u32 %v8746, 4294901760
    %v9290 = vsub.f32 %v8746, %v9289
    %v9291 = vand.u32 %v9290, 4294901760
    %9292 = vmatpush1.msra.mxu0 %v9291
    %9293 = vmatprep.subr.mxu0 0.0
    %9294 = vmatpush1.msra.mxu0 0.0
    %9295 = vmatprep.subr.mxu0 0.0
    %9296 = vmatpush1.msra.mxu0 0.0
    %9297 = vmatprep.subr.mxu0 0.0
    %9298 = vmatpush1.msra.mxu0 0.0
    %9299 = vmatprep.subr.mxu0 0.0
    %9300 = vmatpush1.msra.mxu0 0.0
    %9301 = vmatprep.subr.mxu0 0.0
    %9302 = vmatpush1.msra.mxu0 0.0
    %9303 = vmatprep.subr.mxu0 0.0
    %9304 = vmatpush1.msra.mxu0 0.0
    %9305 = vmatprep.subr.mxu0 0.0
    %9306 = vmatpush1.msra.mxu0 0.0
    %9307 = vmatprep.subr.mxu0 0.0
    %9308 = vmatpush1.msra.mxu0 0.0
    %9309 = vmatprep.subr.mxu0 0.0
    %9310 = vmatpush1.msra.mxu0 0.0
    %9311 = vmatprep.subr.mxu0 0.0
    %9312 = vmatpush1.msra.mxu0 0.0
    %9313 = vmatprep.subr.mxu0 0.0
    %9314 = vmatpush1.msra.mxu0 0.0
    %9315 = vmatprep.subr.mxu0 0.0
    %9316 = vmatpush1.msra.mxu0 0.0
    %9317 = vmatprep.subr.mxu0 0.0
    %9318 = vmatpush1.msra.mxu0 0.0
    %9319 = vmatprep.subr.mxu0 0.0
    %9320 = vmatpush1.msra.mxu0 0.0
    %9321 = vmatprep.subr.mxu0 0.0
    %9322 = vmatpush1.msra.mxu0 0.0
    %9323 = vmatprep.subr.mxu0 0.0
    %9324 = vmatpush1.msra.mxu0 0.0
    %9325 = vmatprep.mubr.f32.mxu0 0.0
    %v9326 = vand.u32 %v7608, 4294901760
    %9327 = vmatmul.mubr.f32.gmra.mrb[0].mxu0 %v9326
    %v9328 = vpop.f32.mrb[0].mxu0
    %v9329 = vadd.f32 %v9202, %v9328
    %v9330 = vpop.f32.mrb[0].mxu0
    %9331 = vmatprep.mubr.f32.mxu0 0.0
    %v9332 = vand.u32 %v7609, 4294901760
    %9333 = vmatmul.mubr.f32.gmra.mrb[0].mxu0 %v9332
    %v9334 = vpop.f32.mrb[0].mxu0
    %v9335 = vadd.f32 %v9210, %v9334
    %v9336 = vpop.f32.mrb[0].mxu0
    %9337 = vdwg.mxu0
    %9338 = vmatprep.subr.mxu0 0.0
    %v9339 = vand.u32 %v8731, 4294901760
    %9340 = vmatpush1.msra.mxu0 %v9339
    %9341 = vmatprep.subr.mxu0 0.0
    %v9342 = vand.u32 %v8732, 4294901760
    %9343 = vmatpush1.msra.mxu0 %v9342
    %9344 = vmatprep.subr.mxu0 0.0
    %v9345 = vand.u32 %v8733, 4294901760
    %9346 = vmatpush1.msra.mxu0 %v9345
    %9347 = vmatprep.subr.mxu0 0.0
    %v9348 = vand.u32 %v8734, 4294901760
    %9349 = vmatpush1.msra.mxu0 %v9348
    %9350 = vmatprep.subr.mxu0 0.0
    %v9351 = vand.u32 %v8735, 4294901760
    %9352 = vmatpush1.msra.mxu0 %v9351
    %9353 = vmatprep.subr.mxu0 0.0
    %v9354 = vand.u32 %v8736, 4294901760
    %9355 = vmatpush1.msra.mxu0 %v9354
    %9356 = vmatprep.subr.mxu0 0.0
    %v9357 = vand.u32 %v8737, 4294901760
    %9358 = vmatpush1.msra.mxu0 %v9357
    %9359 = vmatprep.subr.mxu0 0.0
    %v9360 = vand.u32 %v8738, 4294901760
    %9361 = vmatpush1.msra.mxu0 %v9360
    %9362 = vmatprep.subr.mxu0 0.0
    %v9363 = vand.u32 %v8739, 4294901760
    %9364 = vmatpush1.msra.mxu0 %v9363
    %9365 = vmatprep.subr.mxu0 0.0
    %v9366 = vand.u32 %v8740, 4294901760
    %9367 = vmatpush1.msra.mxu0 %v9366
    %9368 = vmatprep.subr.mxu0 0.0
    %v9369 = vand.u32 %v8741, 4294901760
    %9370 = vmatpush1.msra.mxu0 %v9369
    %9371 = vmatprep.subr.mxu0 0.0
    %v9372 = vand.u32 %v8742, 4294901760
    %9373 = vmatpush1.msra.mxu0 %v9372
    %9374 = vmatprep.subr.mxu0 0.0
    %v9375 = vand.u32 %v8743, 4294901760
    %9376 = vmatpush1.msra.mxu0 %v9375
    %9377 = vmatprep.subr.mxu0 0.0
    %v9378 = vand.u32 %v8744, 4294901760
    %9379 = vmatpush1.msra.mxu0 %v9378
    %9380 = vmatprep.subr.mxu0 0.0
    %v9381 = vand.u32 %v8745, 4294901760
    %9382 = vmatpush1.msra.mxu0 %v9381
    %9383 = vmatprep.subr.mxu0 0.0
    %v9384 = vand.u32 %v8746, 4294901760
    %9385 = vmatpush1.msra.mxu0 %v9384
    %9386 = vmatprep.subr.mxu0 0.0
    %9387 = vmatpush1.msra.mxu0 0.0
    %9388 = vmatprep.subr.mxu0 0.0
    %9389 = vmatpush1.msra.mxu0 0.0
    %9390 = vmatprep.subr.mxu0 0.0
    %9391 = vmatpush1.msra.mxu0 0.0
    %9392 = vmatprep.subr.mxu0 0.0
    %9393 = vmatpush1.msra.mxu0 0.0
    %9394 = vmatprep.subr.mxu0 0.0
    %9395 = vmatpush1.msra.mxu0 0.0
    %9396 = vmatprep.subr.mxu0 0.0
    %9397 = vmatpush1.msra.mxu0 0.0
    %9398 = vmatprep.subr.mxu0 0.0
    %9399 = vmatpush1.msra.mxu0 0.0
    %9400 = vmatprep.subr.mxu0 0.0
    %9401 = vmatpush1.msra.mxu0 0.0
    %9402 = vmatprep.subr.mxu0 0.0
    %9403 = vmatpush1.msra.mxu0 0.0
    %9404 = vmatprep.subr.mxu0 0.0
    %9405 = vmatpush1.msra.mxu0 0.0
    %9406 = vmatprep.subr.mxu0 0.0
    %9407 = vmatpush1.msra.mxu0 0.0
    %9408 = vmatprep.subr.mxu0 0.0
    %9409 = vmatpush1.msra.mxu0 0.0
    %9410 = vmatprep.subr.mxu0 0.0
    %9411 = vmatpush1.msra.mxu0 0.0
    %9412 = vmatprep.subr.mxu0 0.0
    %9413 = vmatpush1.msra.mxu0 0.0
    %9414 = vmatprep.subr.mxu0 0.0
    %9415 = vmatpush1.msra.mxu0 0.0
    %9416 = vmatprep.subr.mxu0 0.0
    %9417 = vmatpush1.msra.mxu0 0.0
    %9418 = vmatprep.mubr.f32.mxu0 0.0
    %v9419 = vand.u32 %v7608, 4294901760
    %9420 = vmatmul.mubr.f32.gmra.mrb[0].mxu0 %v9419
    %v9421 = vpop.f32.mrb[0].mxu0
    %v9422 = vadd.f32 %v9329, %v9421
    %v9423 = vpop.f32.mrb[0].mxu0
    %9424 = vmatprep.mubr.f32.mxu0 0.0
    %v9425 = vand.u32 %v7609, 4294901760
    %9426 = vmatmul.mubr.f32.gmra.mrb[0].mxu0 %v9425
    %v9427 = vpop.f32.mrb[0].mxu0
    %v9428 = vadd.f32 %v9335, %v9427
    %v9429 = vpop.f32.mrb[0].mxu0
    %9430 = vdwg.mxu0
    %s9431 = scalar_lea.vmem [#allocation2], 1152
    %v9432 = vld [vmem:[%s9431] sm:$0xff]
    %v9433 = vld [vmem:[%s9431 + $0x8] sm:$0xff]
    %v9434 = vld [vmem:[%s9431 + $0x10] sm:$0xff]
    %v9435 = vld [vmem:[%s9431 + $0x18] sm:$0xff]
    %v9436 = vld [vmem:[%s9431 + $0x20] sm:$0xff]
    %v9437 = vld [vmem:[%s9431 + $0x28] sm:$0xff]
    %v9438 = vld [vmem:[%s9431 + $0x30] sm:$0xff]
    %v9439 = vld [vmem:[%s9431 + $0x38] sm:$0xff]
    %v9440 = vld [vmem:[%s9431 + $0x40] sm:$0xff]
    %v9441 = vld [vmem:[%s9431 + $0x48] sm:$0xff]
    %v9442 = vld [vmem:[%s9431 + $0x50] sm:$0xff]
    %v9443 = vld [vmem:[%s9431 + $0x58] sm:$0xff]
    %v9444 = vld [vmem:[%s9431 + $0x60] sm:$0xff]
    %v9445 = vld [vmem:[%s9431 + $0x68] sm:$0xff]
    %v9446 = vld [vmem:[%s9431 + $0x70] sm:$0xff]
    %v9447 = vld [vmem:[%s9431 + $0x78] sm:$0xff]
    %s9448 = scalar_lea.vmem %s0, 64
    %v9449 = vld [vmem:[%s9448] sm:$0xff]
    %v9450 = vld [vmem:[%s9448 + $0x8] sm:$0xff]
    %9451 = vmatprep.subr.mxu0 0.0
    %v9452 = vand.u32 %v9432, 4294901760
    %9453 = vmatpush1.msra.mxu0 %v9452
    %9454 = vmatprep.subr.mxu0 0.0
    %v9455 = vand.u32 %v9433, 4294901760
    %9456 = vmatpush1.msra.mxu0 %v9455
    %9457 = vmatprep.subr.mxu0 0.0
    %v9458 = vand.u32 %v9434, 4294901760
    %9459 = vmatpush1.msra.mxu0 %v9458
    %9460 = vmatprep.subr.mxu0 0.0
    %v9461 = vand.u32 %v9435, 4294901760
    %9462 = vmatpush1.msra.mxu0 %v9461
    %9463 = vmatprep.subr.mxu0 0.0
    %v9464 = vand.u32 %v9436, 4294901760
    %9465 = vmatpush1.msra.mxu0 %v9464
    %9466 = vmatprep.subr.mxu0 0.0
    %v9467 = vand.u32 %v9437, 4294901760
    %9468 = vmatpush1.msra.mxu0 %v9467
    %9469 = vmatprep.subr.mxu0 0.0
    %v9470 = vand.u32 %v9438, 4294901760
    %9471 = vmatpush1.msra.mxu0 %v9470
    %9472 = vmatprep.subr.mxu0 0.0
    %v9473 = vand.u32 %v9439, 4294901760
    %9474 = vmatpush1.msra.mxu0 %v9473
    %9475 = vmatprep.subr.mxu0 0.0
    %v9476 = vand.u32 %v9440, 4294901760
    %9477 = vmatpush1.msra.mxu0 %v9476
    %9478 = vmatprep.subr.mxu0 0.0
    %v9479 = vand.u32 %v9441, 4294901760
    %9480 = vmatpush1.msra.mxu0 %v9479
    %9481 = vmatprep.subr.mxu0 0.0
    %v9482 = vand.u32 %v9442, 4294901760
    %9483 = vmatpush1.msra.mxu0 %v9482
    %9484 = vmatprep.subr.mxu0 0.0
    %v9485 = vand.u32 %v9443, 4294901760
    %9486 = vmatpush1.msra.mxu0 %v9485
    %9487 = vmatprep.subr.mxu0 0.0
    %v9488 = vand.u32 %v9444, 4294901760
    %9489 = vmatpush1.msra.mxu0 %v9488
    %9490 = vmatprep.subr.mxu0 0.0
    %v9491 = vand.u32 %v9445, 4294901760
    %9492 = vmatpush1.msra.mxu0 %v9491
    %9493 = vmatprep.subr.mxu0 0.0
    %v9494 = vand.u32 %v9446, 4294901760
    %9495 = vmatpush1.msra.mxu0 %v9494
    %9496 = vmatprep.subr.mxu0 0.0
    %v9497 = vand.u32 %v9447, 4294901760
    %9498 = vmatpush1.msra.mxu0 %v9497
    %9499 = vmatprep.subr.mxu0 0.0
    %9500 = vmatpush1.msra.mxu0 0.0
    %9501 = vmatprep.subr.mxu0 0.0
    %9502 = vmatpush1.msra.mxu0 0.0
    %9503 = vmatprep.subr.mxu0 0.0
    %9504 = vmatpush1.msra.mxu0 0.0
    %9505 = vmatprep.subr.mxu0 0.0
    %9506 = vmatpush1.msra.mxu0 0.0
    %9507 = vmatprep.subr.mxu0 0.0
    %9508 = vmatpush1.msra.mxu0 0.0
    %9509 = vmatprep.subr.mxu0 0.0
    %9510 = vmatpush1.msra.mxu0 0.0
    %9511 = vmatprep.subr.mxu0 0.0
    %9512 = vmatpush1.msra.mxu0 0.0
    %9513 = vmatprep.subr.mxu0 0.0
    %9514 = vmatpush1.msra.mxu0 0.0
    %9515 = vmatprep.subr.mxu0 0.0
    %9516 = vmatpush1.msra.mxu0 0.0
    %9517 = vmatprep.subr.mxu0 0.0
    %9518 = vmatpush1.msra.mxu0 0.0
    %9519 = vmatprep.subr.mxu0 0.0
    %9520 = vmatpush1.msra.mxu0 0.0
    %9521 = vmatprep.subr.mxu0 0.0
    %9522 = vmatpush1.msra.mxu0 0.0
    %9523 = vmatprep.subr.mxu0 0.0
    %9524 = vmatpush1.msra.mxu0 0.0
    %9525 = vmatprep.subr.mxu0 0.0
    %9526 = vmatpush1.msra.mxu0 0.0
    %9527 = vmatprep.subr.mxu0 0.0
    %9528 = vmatpush1.msra.mxu0 0.0
    %9529 = vmatprep.subr.mxu0 0.0
    %9530 = vmatpush1.msra.mxu0 0.0
    %9531 = vmatprep.mubr.f32.mxu0 0.0
    %v9532 = vand.u32 %v9422, 4294901760
    %v9533 = vsub.f32 %v9422, %v9532
    %v9534 = vand.u32 %v9533, 4294901760
    %v9535 = vsub.f32 %v9533, %v9534
    %v9536 = vand.u32 %v9535, 4294901760
    %9537 = vmatmul.mubr.f32.gmra.mrb[0].mxu0 %v9536
    %v9538 = vpop.f32.mrb[0].mxu0
    %v9539 = vadd.f32 %v9449, %v9538
    %v9540 = vpop.f32.mrb[0].mxu0
    %9541 = vmatprep.mubr.f32.mxu0 0.0
    %v9542 = vand.u32 %v9428, 4294901760
    %v9543 = vsub.f32 %v9428, %v9542
    %v9544 = vand.u32 %v9543, 4294901760
    %v9545 = vsub.f32 %v9543, %v9544
    %v9546 = vand.u32 %v9545, 4294901760
    %9547 = vmatmul.mubr.f32.gmra.mrb[0].mxu0 %v9546
    %v9548 = vpop.f32.mrb[0].mxu0
    %v9549 = vadd.f32 %v9450, %v9548
    %v9550 = vpop.f32.mrb[0].mxu0
    %9551 = vdwg.mxu0
    %9552 = vmatprep.subr.mxu0 0.0
    %v9553 = vand.u32 %v9432, 4294901760
    %v9554 = vsub.f32 %v9432, %v9553
    %v9555 = vand.u32 %v9554, 4294901760
    %v9556 = vsub.f32 %v9554, %v9555
    %v9557 = vand.u32 %v9556, 4294901760
    %9558 = vmatpush1.msra.mxu0 %v9557
    %9559 = vmatprep.subr.mxu0 0.0
    %v9560 = vand.u32 %v9433, 4294901760
    %v9561 = vsub.f32 %v9433, %v9560
    %v9562 = vand.u32 %v9561, 4294901760
    %v9563 = vsub.f32 %v9561, %v9562
    %v9564 = vand.u32 %v9563, 4294901760
    %9565 = vmatpush1.msra.mxu0 %v9564
    %9566 = vmatprep.subr.mxu0 0.0
    %v9567 = vand.u32 %v9434, 4294901760
    %v9568 = vsub.f32 %v9434, %v9567
    %v9569 = vand.u32 %v9568, 4294901760
    %v9570 = vsub.f32 %v9568, %v9569
    %v9571 = vand.u32 %v9570, 4294901760
    %9572 = vmatpush1.msra.mxu0 %v9571
    %9573 = vmatprep.subr.mxu0 0.0
    %v9574 = vand.u32 %v9435, 4294901760
    %v9575 = vsub.f32 %v9435, %v9574
    %v9576 = vand.u32 %v9575, 4294901760
    %v9577 = vsub.f32 %v9575, %v9576
    %v9578 = vand.u32 %v9577, 4294901760
    %9579 = vmatpush1.msra.mxu0 %v9578
    %9580 = vmatprep.subr.mxu0 0.0
    %v9581 = vand.u32 %v9436, 4294901760
    %v9582 = vsub.f32 %v9436, %v9581
    %v9583 = vand.u32 %v9582, 4294901760
    %v9584 = vsub.f32 %v9582, %v9583
    %v9585 = vand.u32 %v9584, 4294901760
    %9586 = vmatpush1.msra.mxu0 %v9585
    %9587 = vmatprep.subr.mxu0 0.0
    %v9588 = vand.u32 %v9437, 4294901760
    %v9589 = vsub.f32 %v9437, %v9588
    %v9590 = vand.u32 %v9589, 4294901760
    %v9591 = vsub.f32 %v9589, %v9590
    %v9592 = vand.u32 %v9591, 4294901760
    %9593 = vmatpush1.msra.mxu0 %v9592
    %9594 = vmatprep.subr.mxu0 0.0
    %v9595 = vand.u32 %v9438, 4294901760
    %v9596 = vsub.f32 %v9438, %v9595
    %v9597 = vand.u32 %v9596, 4294901760
    %v9598 = vsub.f32 %v9596, %v9597
    %v9599 = vand.u32 %v9598, 4294901760
    %9600 = vmatpush1.msra.mxu0 %v9599
    %9601 = vmatprep.subr.mxu0 0.0
    %v9602 = vand.u32 %v9439, 4294901760
    %v9603 = vsub.f32 %v9439, %v9602
    %v9604 = vand.u32 %v9603, 4294901760
    %v9605 = vsub.f32 %v9603, %v9604
    %v9606 = vand.u32 %v9605, 4294901760
    %9607 = vmatpush1.msra.mxu0 %v9606
    %9608 = vmatprep.subr.mxu0 0.0
    %v9609 = vand.u32 %v9440, 4294901760
    %v9610 = vsub.f32 %v9440, %v9609
    %v9611 = vand.u32 %v9610, 4294901760
    %v9612 = vsub.f32 %v9610, %v9611
    %v9613 = vand.u32 %v9612, 4294901760
    %9614 = vmatpush1.msra.mxu0 %v9613
    %9615 = vmatprep.subr.mxu0 0.0
    %v9616 = vand.u32 %v9441, 4294901760
    %v9617 = vsub.f32 %v9441, %v9616
    %v9618 = vand.u32 %v9617, 4294901760
    %v9619 = vsub.f32 %v9617, %v9618
    %v9620 = vand.u32 %v9619, 4294901760
    %9621 = vmatpush1.msra.mxu0 %v9620
    %9622 = vmatprep.subr.mxu0 0.0
    %v9623 = vand.u32 %v9442, 4294901760
    %v9624 = vsub.f32 %v9442, %v9623
    %v9625 = vand.u32 %v9624, 4294901760
    %v9626 = vsub.f32 %v9624, %v9625
    %v9627 = vand.u32 %v9626, 4294901760
    %9628 = vmatpush1.msra.mxu0 %v9627
    %9629 = vmatprep.subr.mxu0 0.0
    %v9630 = vand.u32 %v9443, 4294901760
    %v9631 = vsub.f32 %v9443, %v9630
    %v9632 = vand.u32 %v9631, 4294901760
    %v9633 = vsub.f32 %v9631, %v9632
    %v9634 = vand.u32 %v9633, 4294901760
    %9635 = vmatpush1.msra.mxu0 %v9634
    %9636 = vmatprep.subr.mxu0 0.0
    %v9637 = vand.u32 %v9444, 4294901760
    %v9638 = vsub.f32 %v9444, %v9637
    %v9639 = vand.u32 %v9638, 4294901760
    %v9640 = vsub.f32 %v9638, %v9639
    %v9641 = vand.u32 %v9640, 4294901760
    %9642 = vmatpush1.msra.mxu0 %v9641
    %9643 = vmatprep.subr.mxu0 0.0
    %v9644 = vand.u32 %v9445, 4294901760
    %v9645 = vsub.f32 %v9445, %v9644
    %v9646 = vand.u32 %v9645, 4294901760
    %v9647 = vsub.f32 %v9645, %v9646
    %v9648 = vand.u32 %v9647, 4294901760
    %9649 = vmatpush1.msra.mxu0 %v9648
    %9650 = vmatprep.subr.mxu0 0.0
    %v9651 = vand.u32 %v9446, 4294901760
    %v9652 = vsub.f32 %v9446, %v9651
    %v9653 = vand.u32 %v9652, 4294901760
    %v9654 = vsub.f32 %v9652, %v9653
    %v9655 = vand.u32 %v9654, 4294901760
    %9656 = vmatpush1.msra.mxu0 %v9655
    %9657 = vmatprep.subr.mxu0 0.0
    %v9658 = vand.u32 %v9447, 4294901760
    %v9659 = vsub.f32 %v9447, %v9658
    %v9660 = vand.u32 %v9659, 4294901760
    %v9661 = vsub.f32 %v9659, %v9660
    %v9662 = vand.u32 %v9661, 4294901760
    %9663 = vmatpush1.msra.mxu0 %v9662
    %9664 = vmatprep.subr.mxu0 0.0
    %9665 = vmatpush1.msra.mxu0 0.0
    %9666 = vmatprep.subr.mxu0 0.0
    %9667 = vmatpush1.msra.mxu0 0.0
    %9668 = vmatprep.subr.mxu0 0.0
    %9669 = vmatpush1.msra.mxu0 0.0
    %9670 = vmatprep.subr.mxu0 0.0
    %9671 = vmatpush1.msra.mxu0 0.0
    %9672 = vmatprep.subr.mxu0 0.0
    %9673 = vmatpush1.msra.mxu0 0.0
    %9674 = vmatprep.subr.mxu0 0.0
    %9675 = vmatpush1.msra.mxu0 0.0
    %9676 = vmatprep.subr.mxu0 0.0
    %9677 = vmatpush1.msra.mxu0 0.0
    %9678 = vmatprep.subr.mxu0 0.0
    %9679 = vmatpush1.msra.mxu0 0.0
    %9680 = vmatprep.subr.mxu0 0.0
    %9681 = vmatpush1.msra.mxu0 0.0
    %9682 = vmatprep.subr.mxu0 0.0
    %9683 = vmatpush1.msra.mxu0 0.0
    %9684 = vmatprep.subr.mxu0 0.0
    %9685 = vmatpush1.msra.mxu0 0.0
    %9686 = vmatprep.subr.mxu0 0.0
    %9687 = vmatpush1.msra.mxu0 0.0
    %9688 = vmatprep.subr.mxu0 0.0
    %9689 = vmatpush1.msra.mxu0 0.0
    %9690 = vmatprep.subr.mxu0 0.0
    %9691 = vmatpush1.msra.mxu0 0.0
    %9692 = vmatprep.subr.mxu0 0.0
    %9693 = vmatpush1.msra.mxu0 0.0
    %9694 = vmatprep.subr.mxu0 0.0
    %9695 = vmatpush1.msra.mxu0 0.0
    %9696 = vmatprep.mubr.f32.mxu0 0.0
    %v9697 = vand.u32 %v9422, 4294901760
    %9698 = vmatmul.mubr.f32.gmra.mrb[0].mxu0 %v9697
    %v9699 = vpop.f32.mrb[0].mxu0
    %v9700 = vadd.f32 %v9539, %v9699
    %v9701 = vpop.f32.mrb[0].mxu0
    %9702 = vmatprep.mubr.f32.mxu0 0.0
    %v9703 = vand.u32 %v9428, 4294901760
    %9704 = vmatmul.mubr.f32.gmra.mrb[0].mxu0 %v9703
    %v9705 = vpop.f32.mrb[0].mxu0
    %v9706 = vadd.f32 %v9549, %v9705
    %v9707 = vpop.f32.mrb[0].mxu0
    %9708 = vdwg.mxu0
    %9709 = vmatprep.subr.mxu0 0.0
    %v9710 = vand.u32 %v9432, 4294901760
    %v9711 = vsub.f32 %v9432, %v9710
    %9712 = vmatpush1.msra.mxu0 %v9711
    %9713 = vmatprep.subr.mxu0 0.0
    %v9714 = vand.u32 %v9433, 4294901760
    %v9715 = vsub.f32 %v9433, %v9714
    %9716 = vmatpush1.msra.mxu0 %v9715
    %9717 = vmatprep.subr.mxu0 0.0
    %v9718 = vand.u32 %v9434, 4294901760
    %v9719 = vsub.f32 %v9434, %v9718
    %9720 = vmatpush1.msra.mxu0 %v9719
    %9721 = vmatprep.subr.mxu0 0.0
    %v9722 = vand.u32 %v9435, 4294901760
    %v9723 = vsub.f32 %v9435, %v9722
    %9724 = vmatpush1.msra.mxu0 %v9723
    %9725 = vmatprep.subr.mxu0 0.0
    %v9726 = vand.u32 %v9436, 4294901760
    %v9727 = vsub.f32 %v9436, %v9726
    %9728 = vmatpush1.msra.mxu0 %v9727
    %9729 = vmatprep.subr.mxu0 0.0
    %v9730 = vand.u32 %v9437, 4294901760
    %v9731 = vsub.f32 %v9437, %v9730
    %9732 = vmatpush1.msra.mxu0 %v9731
    %9733 = vmatprep.subr.mxu0 0.0
    %v9734 = vand.u32 %v9438, 4294901760
    %v9735 = vsub.f32 %v9438, %v9734
    %9736 = vmatpush1.msra.mxu0 %v9735
    %9737 = vmatprep.subr.mxu0 0.0
    %v9738 = vand.u32 %v9439, 4294901760
    %v9739 = vsub.f32 %v9439, %v9738
    %9740 = vmatpush1.msra.mxu0 %v9739
    %9741 = vmatprep.subr.mxu0 0.0
    %v9742 = vand.u32 %v9440, 4294901760
    %v9743 = vsub.f32 %v9440, %v9742
    %9744 = vmatpush1.msra.mxu0 %v9743
    %9745 = vmatprep.subr.mxu0 0.0
    %v9746 = vand.u32 %v9441, 4294901760
    %v9747 = vsub.f32 %v9441, %v9746
    %9748 = vmatpush1.msra.mxu0 %v9747
    %9749 = vmatprep.subr.mxu0 0.0
    %v9750 = vand.u32 %v9442, 4294901760
    %v9751 = vsub.f32 %v9442, %v9750
    %9752 = vmatpush1.msra.mxu0 %v9751
    %9753 = vmatprep.subr.mxu0 0.0
    %v9754 = vand.u32 %v9443, 4294901760
    %v9755 = vsub.f32 %v9443, %v9754
    %9756 = vmatpush1.msra.mxu0 %v9755
    %9757 = vmatprep.subr.mxu0 0.0
    %v9758 = vand.u32 %v9444, 4294901760
    %v9759 = vsub.f32 %v9444, %v9758
    %9760 = vmatpush1.msra.mxu0 %v9759
    %9761 = vmatprep.subr.mxu0 0.0
    %v9762 = vand.u32 %v9445, 4294901760
    %v9763 = vsub.f32 %v9445, %v9762
    %9764 = vmatpush1.msra.mxu0 %v9763
    %9765 = vmatprep.subr.mxu0 0.0
    %v9766 = vand.u32 %v9446, 4294901760
    %v9767 = vsub.f32 %v9446, %v9766
    %9768 = vmatpush1.msra.mxu0 %v9767
    %9769 = vmatprep.subr.mxu0 0.0
    %v9770 = vand.u32 %v9447, 4294901760
    %v9771 = vsub.f32 %v9447, %v9770
    %9772 = vmatpush1.msra.mxu0 %v9771
    %9773 = vmatprep.subr.mxu0 0.0
    %9774 = vmatpush1.msra.mxu0 0.0
    %9775 = vmatprep.subr.mxu0 0.0
    %9776 = vmatpush1.msra.mxu0 0.0
    %9777 = vmatprep.subr.mxu0 0.0
    %9778 = vmatpush1.msra.mxu0 0.0
    %9779 = vmatprep.subr.mxu0 0.0
    %9780 = vmatpush1.msra.mxu0 0.0
    %9781 = vmatprep.subr.mxu0 0.0
    %9782 = vmatpush1.msra.mxu0 0.0
    %9783 = vmatprep.subr.mxu0 0.0
    %9784 = vmatpush1.msra.mxu0 0.0
    %9785 = vmatprep.subr.mxu0 0.0
    %9786 = vmatpush1.msra.mxu0 0.0
    %9787 = vmatprep.subr.mxu0 0.0
    %9788 = vmatpush1.msra.mxu0 0.0
    %9789 = vmatprep.subr.mxu0 0.0
    %9790 = vmatpush1.msra.mxu0 0.0
    %9791 = vmatprep.subr.mxu0 0.0
    %9792 = vmatpush1.msra.mxu0 0.0
    %9793 = vmatprep.subr.mxu0 0.0
    %9794 = vmatpush1.msra.mxu0 0.0
    %9795 = vmatprep.subr.mxu0 0.0
    %9796 = vmatpush1.msra.mxu0 0.0
    %9797 = vmatprep.subr.mxu0 0.0
    %9798 = vmatpush1.msra.mxu0 0.0
    %9799 = vmatprep.subr.mxu0 0.0
    %9800 = vmatpush1.msra.mxu0 0.0
    %9801 = vmatprep.subr.mxu0 0.0
    %9802 = vmatpush1.msra.mxu0 0.0
    %9803 = vmatprep.subr.mxu0 0.0
    %9804 = vmatpush1.msra.mxu0 0.0
    %9805 = vmatprep.mubr.f32.mxu0 0.0
    %v9806 = vand.u32 %v9422, 4294901760
    %v9807 = vsub.f32 %v9422, %v9806
    %9808 = vmatmul.mubr.f32.gmra.mrb[0].mxu0 %v9807
    %v9809 = vpop.f32.mrb[0].mxu0
    %v9810 = vadd.f32 %v9700, %v9809
    %v9811 = vpop.f32.mrb[0].mxu0
    %9812 = vmatprep.mubr.f32.mxu0 0.0
    %v9813 = vand.u32 %v9428, 4294901760
    %v9814 = vsub.f32 %v9428, %v9813
    %9815 = vmatmul.mubr.f32.gmra.mrb[0].mxu0 %v9814
    %v9816 = vpop.f32.mrb[0].mxu0
    %v9817 = vadd.f32 %v9706, %v9816
    %v9818 = vpop.f32.mrb[0].mxu0
    %9819 = vdwg.mxu0
    %9820 = vmatprep.subr.mxu0 0.0
    %v9821 = vand.u32 %v9432, 4294901760
    %9822 = vmatpush1.msra.mxu0 %v9821
    %9823 = vmatprep.subr.mxu0 0.0
    %v9824 = vand.u32 %v9433, 4294901760
    %9825 = vmatpush1.msra.mxu0 %v9824
    %9826 = vmatprep.subr.mxu0 0.0
    %v9827 = vand.u32 %v9434, 4294901760
    %9828 = vmatpush1.msra.mxu0 %v9827
    %9829 = vmatprep.subr.mxu0 0.0
    %v9830 = vand.u32 %v9435, 4294901760
    %9831 = vmatpush1.msra.mxu0 %v9830
    %9832 = vmatprep.subr.mxu0 0.0
    %v9833 = vand.u32 %v9436, 4294901760
    %9834 = vmatpush1.msra.mxu0 %v9833
    %9835 = vmatprep.subr.mxu0 0.0
    %v9836 = vand.u32 %v9437, 4294901760
    %9837 = vmatpush1.msra.mxu0 %v9836
    %9838 = vmatprep.subr.mxu0 0.0
    %v9839 = vand.u32 %v9438, 4294901760
    %9840 = vmatpush1.msra.mxu0 %v9839
    %9841 = vmatprep.subr.mxu0 0.0
    %v9842 = vand.u32 %v9439, 4294901760
    %9843 = vmatpush1.msra.mxu0 %v9842
    %9844 = vmatprep.subr.mxu0 0.0
    %v9845 = vand.u32 %v9440, 4294901760
    %9846 = vmatpush1.msra.mxu0 %v9845
    %9847 = vmatprep.subr.mxu0 0.0
    %v9848 = vand.u32 %v9441, 4294901760
    %9849 = vmatpush1.msra.mxu0 %v9848
    %9850 = vmatprep.subr.mxu0 0.0
    %v9851 = vand.u32 %v9442, 4294901760
    %9852 = vmatpush1.msra.mxu0 %v9851
    %9853 = vmatprep.subr.mxu0 0.0
    %v9854 = vand.u32 %v9443, 4294901760
    %9855 = vmatpush1.msra.mxu0 %v9854
    %9856 = vmatprep.subr.mxu0 0.0
    %v9857 = vand.u32 %v9444, 4294901760
    %9858 = vmatpush1.msra.mxu0 %v9857
    %9859 = vmatprep.subr.mxu0 0.0
    %v9860 = vand.u32 %v9445, 4294901760
    %9861 = vmatpush1.msra.mxu0 %v9860
    %9862 = vmatprep.subr.mxu0 0.0
    %v9863 = vand.u32 %v9446, 4294901760
    %9864 = vmatpush1.msra.mxu0 %v9863
    %9865 = vmatprep.subr.mxu0 0.0
    %v9866 = vand.u32 %v9447, 4294901760
    %9867 = vmatpush1.msra.mxu0 %v9866
    %9868 = vmatprep.subr.mxu0 0.0
    %9869 = vmatpush1.msra.mxu0 0.0
    %9870 = vmatprep.subr.mxu0 0.0
    %9871 = vmatpush1.msra.mxu0 0.0
    %9872 = vmatprep.subr.mxu0 0.0
    %9873 = vmatpush1.msra.mxu0 0.0
    %9874 = vmatprep.subr.mxu0 0.0
    %9875 = vmatpush1.msra.mxu0 0.0
    %9876 = vmatprep.subr.mxu0 0.0
    %9877 = vmatpush1.msra.mxu0 0.0
    %9878 = vmatprep.subr.mxu0 0.0
    %9879 = vmatpush1.msra.mxu0 0.0
    %9880 = vmatprep.subr.mxu0 0.0
    %9881 = vmatpush1.msra.mxu0 0.0
    %9882 = vmatprep.subr.mxu0 0.0
    %9883 = vmatpush1.msra.mxu0 0.0
    %9884 = vmatprep.subr.mxu0 0.0
    %9885 = vmatpush1.msra.mxu0 0.0
    %9886 = vmatprep.subr.mxu0 0.0
    %9887 = vmatpush1.msra.mxu0 0.0
    %9888 = vmatprep.subr.mxu0 0.0
    %9889 = vmatpush1.msra.mxu0 0.0
    %9890 = vmatprep.subr.mxu0 0.0
    %9891 = vmatpush1.msra.mxu0 0.0
    %9892 = vmatprep.subr.mxu0 0.0
    %9893 = vmatpush1.msra.mxu0 0.0
    %9894 = vmatprep.subr.mxu0 0.0
    %9895 = vmatpush1.msra.mxu0 0.0
    %9896 = vmatprep.subr.mxu0 0.0
    %9897 = vmatpush1.msra.mxu0 0.0
    %9898 = vmatprep.subr.mxu0 0.0
    %9899 = vmatpush1.msra.mxu0 0.0
    %9900 = vmatprep.mubr.f32.mxu0 0.0
    %v9901 = vand.u32 %v9422, 4294901760
    %v9902 = vsub.f32 %v9422, %v9901
    %v9903 = vand.u32 %v9902, 4294901760
    %9904 = vmatmul.mubr.f32.gmra.mrb[0].mxu0 %v9903
    %v9905 = vpop.f32.mrb[0].mxu0
    %v9906 = vadd.f32 %v9810, %v9905
    %v9907 = vpop.f32.mrb[0].mxu0
    %9908 = vmatprep.mubr.f32.mxu0 0.0
    %v9909 = vand.u32 %v9428, 4294901760
    %v9910 = vsub.f32 %v9428, %v9909
    %v9911 = vand.u32 %v9910, 4294901760
    %9912 = vmatmul.mubr.f32.gmra.mrb[0].mxu0 %v9911
    %v9913 = vpop.f32.mrb[0].mxu0
    %v9914 = vadd.f32 %v9817, %v9913
    %v9915 = vpop.f32.mrb[0].mxu0
    %9916 = vdwg.mxu0
    %9917 = vmatprep.subr.mxu0 0.0
    %v9918 = vand.u32 %v9432, 4294901760
    %v9919 = vsub.f32 %v9432, %v9918
    %v9920 = vand.u32 %v9919, 4294901760
    %9921 = vmatpush1.msra.mxu0 %v9920
    %9922 = vmatprep.subr.mxu0 0.0
    %v9923 = vand.u32 %v9433, 4294901760
    %v9924 = vsub.f32 %v9433, %v9923
    %v9925 = vand.u32 %v9924, 4294901760
    %9926 = vmatpush1.msra.mxu0 %v9925
    %9927 = vmatprep.subr.mxu0 0.0
    %v9928 = vand.u32 %v9434, 4294901760
    %v9929 = vsub.f32 %v9434, %v9928
    %v9930 = vand.u32 %v9929, 4294901760
    %9931 = vmatpush1.msra.mxu0 %v9930
    %9932 = vmatprep.subr.mxu0 0.0
    %v9933 = vand.u32 %v9435, 4294901760
    %v9934 = vsub.f32 %v9435, %v9933
    %v9935 = vand.u32 %v9934, 4294901760
    %9936 = vmatpush1.msra.mxu0 %v9935
    %9937 = vmatprep.subr.mxu0 0.0
    %v9938 = vand.u32 %v9436, 4294901760
    %v9939 = vsub.f32 %v9436, %v9938
    %v9940 = vand.u32 %v9939, 4294901760
    %9941 = vmatpush1.msra.mxu0 %v9940
    %9942 = vmatprep.subr.mxu0 0.0
    %v9943 = vand.u32 %v9437, 4294901760
    %v9944 = vsub.f32 %v9437, %v9943
    %v9945 = vand.u32 %v9944, 4294901760
    %9946 = vmatpush1.msra.mxu0 %v9945
    %9947 = vmatprep.subr.mxu0 0.0
    %v9948 = vand.u32 %v9438, 4294901760
    %v9949 = vsub.f32 %v9438, %v9948
    %v9950 = vand.u32 %v9949, 4294901760
    %9951 = vmatpush1.msra.mxu0 %v9950
    %9952 = vmatprep.subr.mxu0 0.0
    %v9953 = vand.u32 %v9439, 4294901760
    %v9954 = vsub.f32 %v9439, %v9953
    %v9955 = vand.u32 %v9954, 4294901760
    %9956 = vmatpush1.msra.mxu0 %v9955
    %9957 = vmatprep.subr.mxu0 0.0
    %v9958 = vand.u32 %v9440, 4294901760
    %v9959 = vsub.f32 %v9440, %v9958
    %v9960 = vand.u32 %v9959, 4294901760
    %9961 = vmatpush1.msra.mxu0 %v9960
    %9962 = vmatprep.subr.mxu0 0.0
    %v9963 = vand.u32 %v9441, 4294901760
    %v9964 = vsub.f32 %v9441, %v9963
    %v9965 = vand.u32 %v9964, 4294901760
    %9966 = vmatpush1.msra.mxu0 %v9965
    %9967 = vmatprep.subr.mxu0 0.0
    %v9968 = vand.u32 %v9442, 4294901760
    %v9969 = vsub.f32 %v9442, %v9968
    %v9970 = vand.u32 %v9969, 4294901760
    %9971 = vmatpush1.msra.mxu0 %v9970
    %9972 = vmatprep.subr.mxu0 0.0
    %v9973 = vand.u32 %v9443, 4294901760
    %v9974 = vsub.f32 %v9443, %v9973
    %v9975 = vand.u32 %v9974, 4294901760
    %9976 = vmatpush1.msra.mxu0 %v9975
    %9977 = vmatprep.subr.mxu0 0.0
    %v9978 = vand.u32 %v9444, 4294901760
    %v9979 = vsub.f32 %v9444, %v9978
    %v9980 = vand.u32 %v9979, 4294901760
    %9981 = vmatpush1.msra.mxu0 %v9980
    %9982 = vmatprep.subr.mxu0 0.0
    %v9983 = vand.u32 %v9445, 4294901760
    %v9984 = vsub.f32 %v9445, %v9983
    %v9985 = vand.u32 %v9984, 4294901760
    %9986 = vmatpush1.msra.mxu0 %v9985
    %9987 = vmatprep.subr.mxu0 0.0
    %v9988 = vand.u32 %v9446, 4294901760
    %v9989 = vsub.f32 %v9446, %v9988
    %v9990 = vand.u32 %v9989, 4294901760
    %9991 = vmatpush1.msra.mxu0 %v9990
    %9992 = vmatprep.subr.mxu0 0.0
    %v9993 = vand.u32 %v9447, 4294901760
    %v9994 = vsub.f32 %v9447, %v9993
    %v9995 = vand.u32 %v9994, 4294901760
    %9996 = vmatpush1.msra.mxu0 %v9995
    %9997 = vmatprep.subr.mxu0 0.0
    %9998 = vmatpush1.msra.mxu0 0.0
    %9999 = vmatprep.subr.mxu0 0.0
    %10000 = vmatpush1.msra.mxu0 0.0
    %10001 = vmatprep.subr.mxu0 0.0
    %10002 = vmatpush1.msra.mxu0 0.0
    %10003 = vmatprep.subr.mxu0 0.0
    %10004 = vmatpush1.msra.mxu0 0.0
    %10005 = vmatprep.subr.mxu0 0.0
    %10006 = vmatpush1.msra.mxu0 0.0
    %10007 = vmatprep.subr.mxu0 0.0
    %10008 = vmatpush1.msra.mxu0 0.0
    %10009 = vmatprep.subr.mxu0 0.0
    %10010 = vmatpush1.msra.mxu0 0.0
    %10011 = vmatprep.subr.mxu0 0.0
    %10012 = vmatpush1.msra.mxu0 0.0
    %10013 = vmatprep.subr.mxu0 0.0
    %10014 = vmatpush1.msra.mxu0 0.0
    %10015 = vmatprep.subr.mxu0 0.0
    %10016 = vmatpush1.msra.mxu0 0.0
    %10017 = vmatprep.subr.mxu0 0.0
    %10018 = vmatpush1.msra.mxu0 0.0
    %10019 = vmatprep.subr.mxu0 0.0
    %10020 = vmatpush1.msra.mxu0 0.0
    %10021 = vmatprep.subr.mxu0 0.0
    %10022 = vmatpush1.msra.mxu0 0.0
    %10023 = vmatprep.subr.mxu0 0.0
    %10024 = vmatpush1.msra.mxu0 0.0
    %10025 = vmatprep.subr.mxu0 0.0
    %10026 = vmatpush1.msra.mxu0 0.0
    %10027 = vmatprep.subr.mxu0 0.0
    %10028 = vmatpush1.msra.mxu0 0.0
    %10029 = vmatprep.mubr.f32.mxu0 0.0
    %v10030 = vand.u32 %v9422, 4294901760
    %10031 = vmatmul.mubr.f32.gmra.mrb[0].mxu0 %v10030
    %v10032 = vpop.f32.mrb[0].mxu0
    %v10033 = vadd.f32 %v9906, %v10032
    %v10034 = vpop.f32.mrb[0].mxu0
    %10035 = vmatprep.mubr.f32.mxu0 0.0
    %v10036 = vand.u32 %v9428, 4294901760
    %10037 = vmatmul.mubr.f32.gmra.mrb[0].mxu0 %v10036
    %v10038 = vpop.f32.mrb[0].mxu0
    %v10039 = vadd.f32 %v9914, %v10038
    %v10040 = vpop.f32.mrb[0].mxu0
    %10041 = vdwg.mxu0
    %10042 = vmatprep.subr.mxu0 0.0
    %v10043 = vand.u32 %v9432, 4294901760
    %10044 = vmatpush1.msra.mxu0 %v10043
    %10045 = vmatprep.subr.mxu0 0.0
    %v10046 = vand.u32 %v9433, 4294901760
    %10047 = vmatpush1.msra.mxu0 %v10046
    %10048 = vmatprep.subr.mxu0 0.0
    %v10049 = vand.u32 %v9434, 4294901760
    %10050 = vmatpush1.msra.mxu0 %v10049
    %10051 = vmatprep.subr.mxu0 0.0
    %v10052 = vand.u32 %v9435, 4294901760
    %10053 = vmatpush1.msra.mxu0 %v10052
    %10054 = vmatprep.subr.mxu0 0.0
    %v10055 = vand.u32 %v9436, 4294901760
    %10056 = vmatpush1.msra.mxu0 %v10055
    %10057 = vmatprep.subr.mxu0 0.0
    %v10058 = vand.u32 %v9437, 4294901760
    %10059 = vmatpush1.msra.mxu0 %v10058
    %10060 = vmatprep.subr.mxu0 0.0
    %v10061 = vand.u32 %v9438, 4294901760
    %10062 = vmatpush1.msra.mxu0 %v10061
    %10063 = vmatprep.subr.mxu0 0.0
    %v10064 = vand.u32 %v9439, 4294901760
    %10065 = vmatpush1.msra.mxu0 %v10064
    %10066 = vmatprep.subr.mxu0 0.0
    %v10067 = vand.u32 %v9440, 4294901760
    %10068 = vmatpush1.msra.mxu0 %v10067
    %10069 = vmatprep.subr.mxu0 0.0
    %v10070 = vand.u32 %v9441, 4294901760
    %10071 = vmatpush1.msra.mxu0 %v10070
    %10072 = vmatprep.subr.mxu0 0.0
    %v10073 = vand.u32 %v9442, 4294901760
    %10074 = vmatpush1.msra.mxu0 %v10073
    %10075 = vmatprep.subr.mxu0 0.0
    %v10076 = vand.u32 %v9443, 4294901760
    %10077 = vmatpush1.msra.mxu0 %v10076
    %10078 = vmatprep.subr.mxu0 0.0
    %v10079 = vand.u32 %v9444, 4294901760
    %10080 = vmatpush1.msra.mxu0 %v10079
    %10081 = vmatprep.subr.mxu0 0.0
    %v10082 = vand.u32 %v9445, 4294901760
    %10083 = vmatpush1.msra.mxu0 %v10082
    %10084 = vmatprep.subr.mxu0 0.0
    %v10085 = vand.u32 %v9446, 4294901760
    %10086 = vmatpush1.msra.mxu0 %v10085
    %10087 = vmatprep.subr.mxu0 0.0
    %v10088 = vand.u32 %v9447, 4294901760
    %10089 = vmatpush1.msra.mxu0 %v10088
    %10090 = vmatprep.subr.mxu0 0.0
    %10091 = vmatpush1.msra.mxu0 0.0
    %10092 = vmatprep.subr.mxu0 0.0
    %10093 = vmatpush1.msra.mxu0 0.0
    %10094 = vmatprep.subr.mxu0 0.0
    %10095 = vmatpush1.msra.mxu0 0.0
    %10096 = vmatprep.subr.mxu0 0.0
    %10097 = vmatpush1.msra.mxu0 0.0
    %10098 = vmatprep.subr.mxu0 0.0
    %10099 = vmatpush1.msra.mxu0 0.0
    %10100 = vmatprep.subr.mxu0 0.0
    %10101 = vmatpush1.msra.mxu0 0.0
    %10102 = vmatprep.subr.mxu0 0.0
    %10103 = vmatpush1.msra.mxu0 0.0
    %10104 = vmatprep.subr.mxu0 0.0
    %10105 = vmatpush1.msra.mxu0 0.0
    %10106 = vmatprep.subr.mxu0 0.0
    %10107 = vmatpush1.msra.mxu0 0.0
    %10108 = vmatprep.subr.mxu0 0.0
    %10109 = vmatpush1.msra.mxu0 0.0
    %10110 = vmatprep.subr.mxu0 0.0
    %10111 = vmatpush1.msra.mxu0 0.0
    %10112 = vmatprep.subr.mxu0 0.0
    %10113 = vmatpush1.msra.mxu0 0.0
    %10114 = vmatprep.subr.mxu0 0.0
    %10115 = vmatpush1.msra.mxu0 0.0
    %10116 = vmatprep.subr.mxu0 0.0
    %10117 = vmatpush1.msra.mxu0 0.0
    %10118 = vmatprep.subr.mxu0 0.0
    %10119 = vmatpush1.msra.mxu0 0.0
    %10120 = vmatprep.subr.mxu0 0.0
    %10121 = vmatpush1.msra.mxu0 0.0
    %10122 = vmatprep.mubr.f32.mxu0 0.0
    %v10123 = vand.u32 %v9422, 4294901760
    %10124 = vmatmul.mubr.f32.gmra.mrb[0].mxu0 %v10123
    %v10125 = vpop.f32.mrb[0].mxu0
    %v10126 = vadd.f32 %v10033, %v10125
    %v10127 = vpop.f32.mrb[0].mxu0
    %10128 = vmatprep.mubr.f32.mxu0 0.0
    %v10129 = vand.u32 %v9428, 4294901760
    %10130 = vmatmul.mubr.f32.gmra.mrb[0].mxu0 %v10129
    %v10131 = vpop.f32.mrb[0].mxu0
    %v10132 = vadd.f32 %v10039, %v10131
    %v10133 = vpop.f32.mrb[0].mxu0
    %10134 = vdwg.mxu0
    %v10135 = vmax.f32 %v10126, 0.0
    %v10136 = vmax.f32 %v10132, 0.0
    %s10137 = scalar_lea.vmem [#allocation2], 1280
    %v10138 = vld [vmem:[%s10137] sm:$0xff]
    %v10139 = vld [vmem:[%s10137 + $0x8] sm:$0xff]
    %v10140 = vld [vmem:[%s10137 + $0x10] sm:$0xff]
    %v10141 = vld [vmem:[%s10137 + $0x18] sm:$0xff]
    %v10142 = vld [vmem:[%s10137 + $0x20] sm:$0xff]
    %v10143 = vld [vmem:[%s10137 + $0x28] sm:$0xff]
    %v10144 = vld [vmem:[%s10137 + $0x30] sm:$0xff]
    %v10145 = vld [vmem:[%s10137 + $0x38] sm:$0xff]
    %v10146 = vld [vmem:[%s10137 + $0x40] sm:$0xff]
    %v10147 = vld [vmem:[%s10137 + $0x48] sm:$0xff]
    %v10148 = vld [vmem:[%s10137 + $0x50] sm:$0xff]
    %v10149 = vld [vmem:[%s10137 + $0x58] sm:$0xff]
    %v10150 = vld [vmem:[%s10137 + $0x60] sm:$0xff]
    %v10151 = vld [vmem:[%s10137 + $0x68] sm:$0xff]
    %v10152 = vld [vmem:[%s10137 + $0x70] sm:$0xff]
    %v10153 = vld [vmem:[%s10137 + $0x78] sm:$0xff]
    %s10154 = scalar_lea.vmem %s0, 80
    %v10155 = vld [vmem:[%s10154] sm:$0xff]
    %v10156 = vld [vmem:[%s10154 + $0x8] sm:$0xff]
    %10157 = vmatprep.subr.mxu0 0.0
    %v10158 = vand.u32 %v10138, 4294901760
    %10159 = vmatpush1.msra.mxu0 %v10158
    %10160 = vmatprep.subr.mxu0 0.0
    %v10161 = vand.u32 %v10139, 4294901760
    %10162 = vmatpush1.msra.mxu0 %v10161
    %10163 = vmatprep.subr.mxu0 0.0
    %v10164 = vand.u32 %v10140, 4294901760
    %10165 = vmatpush1.msra.mxu0 %v10164
    %10166 = vmatprep.subr.mxu0 0.0
    %v10167 = vand.u32 %v10141, 4294901760
    %10168 = vmatpush1.msra.mxu0 %v10167
    %10169 = vmatprep.subr.mxu0 0.0
    %v10170 = vand.u32 %v10142, 4294901760
    %10171 = vmatpush1.msra.mxu0 %v10170
    %10172 = vmatprep.subr.mxu0 0.0
    %v10173 = vand.u32 %v10143, 4294901760
    %10174 = vmatpush1.msra.mxu0 %v10173
    %10175 = vmatprep.subr.mxu0 0.0
    %v10176 = vand.u32 %v10144, 4294901760
    %10177 = vmatpush1.msra.mxu0 %v10176
    %10178 = vmatprep.subr.mxu0 0.0
    %v10179 = vand.u32 %v10145, 4294901760
    %10180 = vmatpush1.msra.mxu0 %v10179
    %10181 = vmatprep.subr.mxu0 0.0
    %v10182 = vand.u32 %v10146, 4294901760
    %10183 = vmatpush1.msra.mxu0 %v10182
    %10184 = vmatprep.subr.mxu0 0.0
    %v10185 = vand.u32 %v10147, 4294901760
    %10186 = vmatpush1.msra.mxu0 %v10185
    %10187 = vmatprep.subr.mxu0 0.0
    %v10188 = vand.u32 %v10148, 4294901760
    %10189 = vmatpush1.msra.mxu0 %v10188
    %10190 = vmatprep.subr.mxu0 0.0
    %v10191 = vand.u32 %v10149, 4294901760
    %10192 = vmatpush1.msra.mxu0 %v10191
    %10193 = vmatprep.subr.mxu0 0.0
    %v10194 = vand.u32 %v10150, 4294901760
    %10195 = vmatpush1.msra.mxu0 %v10194
    %10196 = vmatprep.subr.mxu0 0.0
    %v10197 = vand.u32 %v10151, 4294901760
    %10198 = vmatpush1.msra.mxu0 %v10197
    %10199 = vmatprep.subr.mxu0 0.0
    %v10200 = vand.u32 %v10152, 4294901760
    %10201 = vmatpush1.msra.mxu0 %v10200
    %10202 = vmatprep.subr.mxu0 0.0
    %v10203 = vand.u32 %v10153, 4294901760
    %10204 = vmatpush1.msra.mxu0 %v10203
    %10205 = vmatprep.subr.mxu0 0.0
    %10206 = vmatpush1.msra.mxu0 0.0
    %10207 = vmatprep.subr.mxu0 0.0
    %10208 = vmatpush1.msra.mxu0 0.0
    %10209 = vmatprep.subr.mxu0 0.0
    %10210 = vmatpush1.msra.mxu0 0.0
    %10211 = vmatprep.subr.mxu0 0.0
    %10212 = vmatpush1.msra.mxu0 0.0
    %10213 = vmatprep.subr.mxu0 0.0
    %10214 = vmatpush1.msra.mxu0 0.0
    %10215 = vmatprep.subr.mxu0 0.0
    %10216 = vmatpush1.msra.mxu0 0.0
    %10217 = vmatprep.subr.mxu0 0.0
    %10218 = vmatpush1.msra.mxu0 0.0
    %10219 = vmatprep.subr.mxu0 0.0
    %10220 = vmatpush1.msra.mxu0 0.0
    %10221 = vmatprep.subr.mxu0 0.0
    %10222 = vmatpush1.msra.mxu0 0.0
    %10223 = vmatprep.subr.mxu0 0.0
    %10224 = vmatpush1.msra.mxu0 0.0
    %10225 = vmatprep.subr.mxu0 0.0
    %10226 = vmatpush1.msra.mxu0 0.0
    %10227 = vmatprep.subr.mxu0 0.0
    %10228 = vmatpush1.msra.mxu0 0.0
    %10229 = vmatprep.subr.mxu0 0.0
    %10230 = vmatpush1.msra.mxu0 0.0
    %10231 = vmatprep.subr.mxu0 0.0
    %10232 = vmatpush1.msra.mxu0 0.0
    %10233 = vmatprep.subr.mxu0 0.0
    %10234 = vmatpush1.msra.mxu0 0.0
    %10235 = vmatprep.subr.mxu0 0.0
    %10236 = vmatpush1.msra.mxu0 0.0
    %10237 = vmatprep.mubr.f32.mxu0 0.0
    %v10238 = vand.u32 %v10135, 4294901760
    %v10239 = vsub.f32 %v10135, %v10238
    %v10240 = vand.u32 %v10239, 4294901760
    %v10241 = vsub.f32 %v10239, %v10240
    %v10242 = vand.u32 %v10241, 4294901760
    %10243 = vmatmul.mubr.f32.gmra.mrb[0].mxu0 %v10242
    %v10244 = vpop.f32.mrb[0].mxu0
    %v10245 = vadd.f32 %v10155, %v10244
    %v10246 = vpop.f32.mrb[0].mxu0
    %10247 = vmatprep.mubr.f32.mxu0 0.0
    %v10248 = vand.u32 %v10136, 4294901760
    %v10249 = vsub.f32 %v10136, %v10248
    %v10250 = vand.u32 %v10249, 4294901760
    %v10251 = vsub.f32 %v10249, %v10250
    %v10252 = vand.u32 %v10251, 4294901760
    %10253 = vmatmul.mubr.f32.gmra.mrb[0].mxu0 %v10252
    %v10254 = vpop.f32.mrb[0].mxu0
    %v10255 = vadd.f32 %v10156, %v10254
    %v10256 = vpop.f32.mrb[0].mxu0
    %10257 = vdwg.mxu0
    %10258 = vmatprep.subr.mxu0 0.0
    %v10259 = vand.u32 %v10138, 4294901760
    %v10260 = vsub.f32 %v10138, %v10259
    %v10261 = vand.u32 %v10260, 4294901760
    %v10262 = vsub.f32 %v10260, %v10261
    %v10263 = vand.u32 %v10262, 4294901760
    %10264 = vmatpush1.msra.mxu0 %v10263
    %10265 = vmatprep.subr.mxu0 0.0
    %v10266 = vand.u32 %v10139, 4294901760
    %v10267 = vsub.f32 %v10139, %v10266
    %v10268 = vand.u32 %v10267, 4294901760
    %v10269 = vsub.f32 %v10267, %v10268
    %v10270 = vand.u32 %v10269, 4294901760
    %10271 = vmatpush1.msra.mxu0 %v10270
    %10272 = vmatprep.subr.mxu0 0.0
    %v10273 = vand.u32 %v10140, 4294901760
    %v10274 = vsub.f32 %v10140, %v10273
    %v10275 = vand.u32 %v10274, 4294901760
    %v10276 = vsub.f32 %v10274, %v10275
    %v10277 = vand.u32 %v10276, 4294901760
    %10278 = vmatpush1.msra.mxu0 %v10277
    %10279 = vmatprep.subr.mxu0 0.0
    %v10280 = vand.u32 %v10141, 4294901760
    %v10281 = vsub.f32 %v10141, %v10280
    %v10282 = vand.u32 %v10281, 4294901760
    %v10283 = vsub.f32 %v10281, %v10282
    %v10284 = vand.u32 %v10283, 4294901760
    %10285 = vmatpush1.msra.mxu0 %v10284
    %10286 = vmatprep.subr.mxu0 0.0
    %v10287 = vand.u32 %v10142, 4294901760
    %v10288 = vsub.f32 %v10142, %v10287
    %v10289 = vand.u32 %v10288, 4294901760
    %v10290 = vsub.f32 %v10288, %v10289
    %v10291 = vand.u32 %v10290, 4294901760
    %10292 = vmatpush1.msra.mxu0 %v10291
    %10293 = vmatprep.subr.mxu0 0.0
    %v10294 = vand.u32 %v10143, 4294901760
    %v10295 = vsub.f32 %v10143, %v10294
    %v10296 = vand.u32 %v10295, 4294901760
    %v10297 = vsub.f32 %v10295, %v10296
    %v10298 = vand.u32 %v10297, 4294901760
    %10299 = vmatpush1.msra.mxu0 %v10298
    %10300 = vmatprep.subr.mxu0 0.0
    %v10301 = vand.u32 %v10144, 4294901760
    %v10302 = vsub.f32 %v10144, %v10301
    %v10303 = vand.u32 %v10302, 4294901760
    %v10304 = vsub.f32 %v10302, %v10303
    %v10305 = vand.u32 %v10304, 4294901760
    %10306 = vmatpush1.msra.mxu0 %v10305
    %10307 = vmatprep.subr.mxu0 0.0
    %v10308 = vand.u32 %v10145, 4294901760
    %v10309 = vsub.f32 %v10145, %v10308
    %v10310 = vand.u32 %v10309, 4294901760
    %v10311 = vsub.f32 %v10309, %v10310
    %v10312 = vand.u32 %v10311, 4294901760
    %10313 = vmatpush1.msra.mxu0 %v10312
    %10314 = vmatprep.subr.mxu0 0.0
    %v10315 = vand.u32 %v10146, 4294901760
    %v10316 = vsub.f32 %v10146, %v10315
    %v10317 = vand.u32 %v10316, 4294901760
    %v10318 = vsub.f32 %v10316, %v10317
    %v10319 = vand.u32 %v10318, 4294901760
    %10320 = vmatpush1.msra.mxu0 %v10319
    %10321 = vmatprep.subr.mxu0 0.0
    %v10322 = vand.u32 %v10147, 4294901760
    %v10323 = vsub.f32 %v10147, %v10322
    %v10324 = vand.u32 %v10323, 4294901760
    %v10325 = vsub.f32 %v10323, %v10324
    %v10326 = vand.u32 %v10325, 4294901760
    %10327 = vmatpush1.msra.mxu0 %v10326
    %10328 = vmatprep.subr.mxu0 0.0
    %v10329 = vand.u32 %v10148, 4294901760
    %v10330 = vsub.f32 %v10148, %v10329
    %v10331 = vand.u32 %v10330, 4294901760
    %v10332 = vsub.f32 %v10330, %v10331
    %v10333 = vand.u32 %v10332, 4294901760
    %10334 = vmatpush1.msra.mxu0 %v10333
    %10335 = vmatprep.subr.mxu0 0.0
    %v10336 = vand.u32 %v10149, 4294901760
    %v10337 = vsub.f32 %v10149, %v10336
    %v10338 = vand.u32 %v10337, 4294901760
    %v10339 = vsub.f32 %v10337, %v10338
    %v10340 = vand.u32 %v10339, 4294901760
    %10341 = vmatpush1.msra.mxu0 %v10340
    %10342 = vmatprep.subr.mxu0 0.0
    %v10343 = vand.u32 %v10150, 4294901760
    %v10344 = vsub.f32 %v10150, %v10343
    %v10345 = vand.u32 %v10344, 4294901760
    %v10346 = vsub.f32 %v10344, %v10345
    %v10347 = vand.u32 %v10346, 4294901760
    %10348 = vmatpush1.msra.mxu0 %v10347
    %10349 = vmatprep.subr.mxu0 0.0
    %v10350 = vand.u32 %v10151, 4294901760
    %v10351 = vsub.f32 %v10151, %v10350
    %v10352 = vand.u32 %v10351, 4294901760
    %v10353 = vsub.f32 %v10351, %v10352
    %v10354 = vand.u32 %v10353, 4294901760
    %10355 = vmatpush1.msra.mxu0 %v10354
    %10356 = vmatprep.subr.mxu0 0.0
    %v10357 = vand.u32 %v10152, 4294901760
    %v10358 = vsub.f32 %v10152, %v10357
    %v10359 = vand.u32 %v10358, 4294901760
    %v10360 = vsub.f32 %v10358, %v10359
    %v10361 = vand.u32 %v10360, 4294901760
    %10362 = vmatpush1.msra.mxu0 %v10361
    %10363 = vmatprep.subr.mxu0 0.0
    %v10364 = vand.u32 %v10153, 4294901760
    %v10365 = vsub.f32 %v10153, %v10364
    %v10366 = vand.u32 %v10365, 4294901760
    %v10367 = vsub.f32 %v10365, %v10366
    %v10368 = vand.u32 %v10367, 4294901760
    %10369 = vmatpush1.msra.mxu0 %v10368
    %10370 = vmatprep.subr.mxu0 0.0
    %10371 = vmatpush1.msra.mxu0 0.0
    %10372 = vmatprep.subr.mxu0 0.0
    %10373 = vmatpush1.msra.mxu0 0.0
    %10374 = vmatprep.subr.mxu0 0.0
    %10375 = vmatpush1.msra.mxu0 0.0
    %10376 = vmatprep.subr.mxu0 0.0
    %10377 = vmatpush1.msra.mxu0 0.0
    %10378 = vmatprep.subr.mxu0 0.0
    %10379 = vmatpush1.msra.mxu0 0.0
    %10380 = vmatprep.subr.mxu0 0.0
    %10381 = vmatpush1.msra.mxu0 0.0
    %10382 = vmatprep.subr.mxu0 0.0
    %10383 = vmatpush1.msra.mxu0 0.0
    %10384 = vmatprep.subr.mxu0 0.0
    %10385 = vmatpush1.msra.mxu0 0.0
    %10386 = vmatprep.subr.mxu0 0.0
    %10387 = vmatpush1.msra.mxu0 0.0
    %10388 = vmatprep.subr.mxu0 0.0
    %10389 = vmatpush1.msra.mxu0 0.0
    %10390 = vmatprep.subr.mxu0 0.0
    %10391 = vmatpush1.msra.mxu0 0.0
    %10392 = vmatprep.subr.mxu0 0.0
    %10393 = vmatpush1.msra.mxu0 0.0
    %10394 = vmatprep.subr.mxu0 0.0
    %10395 = vmatpush1.msra.mxu0 0.0
    %10396 = vmatprep.subr.mxu0 0.0
    %10397 = vmatpush1.msra.mxu0 0.0
    %10398 = vmatprep.subr.mxu0 0.0
    %10399 = vmatpush1.msra.mxu0 0.0
    %10400 = vmatprep.subr.mxu0 0.0
    %10401 = vmatpush1.msra.mxu0 0.0
    %10402 = vmatprep.mubr.f32.mxu0 0.0
    %v10403 = vand.u32 %v10135, 4294901760
    %10404 = vmatmul.mubr.f32.gmra.mrb[0].mxu0 %v10403
    %v10405 = vpop.f32.mrb[0].mxu0
    %v10406 = vadd.f32 %v10245, %v10405
    %v10407 = vpop.f32.mrb[0].mxu0
    %10408 = vmatprep.mubr.f32.mxu0 0.0
    %v10409 = vand.u32 %v10136, 4294901760
    %10410 = vmatmul.mubr.f32.gmra.mrb[0].mxu0 %v10409
    %v10411 = vpop.f32.mrb[0].mxu0
    %v10412 = vadd.f32 %v10255, %v10411
    %v10413 = vpop.f32.mrb[0].mxu0
    %10414 = vdwg.mxu0
    %10415 = vmatprep.subr.mxu0 0.0
    %v10416 = vand.u32 %v10138, 4294901760
    %v10417 = vsub.f32 %v10138, %v10416
    %10418 = vmatpush1.msra.mxu0 %v10417
    %10419 = vmatprep.subr.mxu0 0.0
    %v10420 = vand.u32 %v10139, 4294901760
    %v10421 = vsub.f32 %v10139, %v10420
    %10422 = vmatpush1.msra.mxu0 %v10421
    %10423 = vmatprep.subr.mxu0 0.0
    %v10424 = vand.u32 %v10140, 4294901760
    %v10425 = vsub.f32 %v10140, %v10424
    %10426 = vmatpush1.msra.mxu0 %v10425
    %10427 = vmatprep.subr.mxu0 0.0
    %v10428 = vand.u32 %v10141, 4294901760
    %v10429 = vsub.f32 %v10141, %v10428
    %10430 = vmatpush1.msra.mxu0 %v10429
    %10431 = vmatprep.subr.mxu0 0.0
    %v10432 = vand.u32 %v10142, 4294901760
    %v10433 = vsub.f32 %v10142, %v10432
    %10434 = vmatpush1.msra.mxu0 %v10433
    %10435 = vmatprep.subr.mxu0 0.0
    %v10436 = vand.u32 %v10143, 4294901760
    %v10437 = vsub.f32 %v10143, %v10436
    %10438 = vmatpush1.msra.mxu0 %v10437
    %10439 = vmatprep.subr.mxu0 0.0
    %v10440 = vand.u32 %v10144, 4294901760
    %v10441 = vsub.f32 %v10144, %v10440
    %10442 = vmatpush1.msra.mxu0 %v10441
    %10443 = vmatprep.subr.mxu0 0.0
    %v10444 = vand.u32 %v10145, 4294901760
    %v10445 = vsub.f32 %v10145, %v10444
    %10446 = vmatpush1.msra.mxu0 %v10445
    %10447 = vmatprep.subr.mxu0 0.0
    %v10448 = vand.u32 %v10146, 4294901760
    %v10449 = vsub.f32 %v10146, %v10448
    %10450 = vmatpush1.msra.mxu0 %v10449
    %10451 = vmatprep.subr.mxu0 0.0
    %v10452 = vand.u32 %v10147, 4294901760
    %v10453 = vsub.f32 %v10147, %v10452
    %10454 = vmatpush1.msra.mxu0 %v10453
    %10455 = vmatprep.subr.mxu0 0.0
    %v10456 = vand.u32 %v10148, 4294901760
    %v10457 = vsub.f32 %v10148, %v10456
    %10458 = vmatpush1.msra.mxu0 %v10457
    %10459 = vmatprep.subr.mxu0 0.0
    %v10460 = vand.u32 %v10149, 4294901760
    %v10461 = vsub.f32 %v10149, %v10460
    %10462 = vmatpush1.msra.mxu0 %v10461
    %10463 = vmatprep.subr.mxu0 0.0
    %v10464 = vand.u32 %v10150, 4294901760
    %v10465 = vsub.f32 %v10150, %v10464
    %10466 = vmatpush1.msra.mxu0 %v10465
    %10467 = vmatprep.subr.mxu0 0.0
    %v10468 = vand.u32 %v10151, 4294901760
    %v10469 = vsub.f32 %v10151, %v10468
    %10470 = vmatpush1.msra.mxu0 %v10469
    %10471 = vmatprep.subr.mxu0 0.0
    %v10472 = vand.u32 %v10152, 4294901760
    %v10473 = vsub.f32 %v10152, %v10472
    %10474 = vmatpush1.msra.mxu0 %v10473
    %10475 = vmatprep.subr.mxu0 0.0
    %v10476 = vand.u32 %v10153, 4294901760
    %v10477 = vsub.f32 %v10153, %v10476
    %10478 = vmatpush1.msra.mxu0 %v10477
    %10479 = vmatprep.subr.mxu0 0.0
    %10480 = vmatpush1.msra.mxu0 0.0
    %10481 = vmatprep.subr.mxu0 0.0
    %10482 = vmatpush1.msra.mxu0 0.0
    %10483 = vmatprep.subr.mxu0 0.0
    %10484 = vmatpush1.msra.mxu0 0.0
    %10485 = vmatprep.subr.mxu0 0.0
    %10486 = vmatpush1.msra.mxu0 0.0
    %10487 = vmatprep.subr.mxu0 0.0
    %10488 = vmatpush1.msra.mxu0 0.0
    %10489 = vmatprep.subr.mxu0 0.0
    %10490 = vmatpush1.msra.mxu0 0.0
    %10491 = vmatprep.subr.mxu0 0.0
    %10492 = vmatpush1.msra.mxu0 0.0
    %10493 = vmatprep.subr.mxu0 0.0
    %10494 = vmatpush1.msra.mxu0 0.0
    %10495 = vmatprep.subr.mxu0 0.0
    %10496 = vmatpush1.msra.mxu0 0.0
    %10497 = vmatprep.subr.mxu0 0.0
    %10498 = vmatpush1.msra.mxu0 0.0
    %10499 = vmatprep.subr.mxu0 0.0
    %10500 = vmatpush1.msra.mxu0 0.0
    %10501 = vmatprep.subr.mxu0 0.0
    %10502 = vmatpush1.msra.mxu0 0.0
    %10503 = vmatprep.subr.mxu0 0.0
    %10504 = vmatpush1.msra.mxu0 0.0
    %10505 = vmatprep.subr.mxu0 0.0
    %10506 = vmatpush1.msra.mxu0 0.0
    %10507 = vmatprep.subr.mxu0 0.0
    %10508 = vmatpush1.msra.mxu0 0.0
    %10509 = vmatprep.subr.mxu0 0.0
    %10510 = vmatpush1.msra.mxu0 0.0
    %10511 = vmatprep.mubr.f32.mxu0 0.0
    %v10512 = vand.u32 %v10135, 4294901760
    %v10513 = vsub.f32 %v10135, %v10512
    %10514 = vmatmul.mubr.f32.gmra.mrb[0].mxu0 %v10513
    %v10515 = vpop.f32.mrb[0].mxu0
    %v10516 = vadd.f32 %v10406, %v10515
    %v10517 = vpop.f32.mrb[0].mxu0
    %10518 = vmatprep.mubr.f32.mxu0 0.0
    %v10519 = vand.u32 %v10136, 4294901760
    %v10520 = vsub.f32 %v10136, %v10519
    %10521 = vmatmul.mubr.f32.gmra.mrb[0].mxu0 %v10520
    %v10522 = vpop.f32.mrb[0].mxu0
    %v10523 = vadd.f32 %v10412, %v10522
    %v10524 = vpop.f32.mrb[0].mxu0
    %10525 = vdwg.mxu0
    %10526 = vmatprep.subr.mxu0 0.0
    %v10527 = vand.u32 %v10138, 4294901760
    %10528 = vmatpush1.msra.mxu0 %v10527
    %10529 = vmatprep.subr.mxu0 0.0
    %v10530 = vand.u32 %v10139, 4294901760
    %10531 = vmatpush1.msra.mxu0 %v10530
    %10532 = vmatprep.subr.mxu0 0.0
    %v10533 = vand.u32 %v10140, 4294901760
    %10534 = vmatpush1.msra.mxu0 %v10533
    %10535 = vmatprep.subr.mxu0 0.0
    %v10536 = vand.u32 %v10141, 4294901760
    %10537 = vmatpush1.msra.mxu0 %v10536
    %10538 = vmatprep.subr.mxu0 0.0
    %v10539 = vand.u32 %v10142, 4294901760
    %10540 = vmatpush1.msra.mxu0 %v10539
    %10541 = vmatprep.subr.mxu0 0.0
    %v10542 = vand.u32 %v10143, 4294901760
    %10543 = vmatpush1.msra.mxu0 %v10542
    %10544 = vmatprep.subr.mxu0 0.0
    %v10545 = vand.u32 %v10144, 4294901760
    %10546 = vmatpush1.msra.mxu0 %v10545
    %10547 = vmatprep.subr.mxu0 0.0
    %v10548 = vand.u32 %v10145, 4294901760
    %10549 = vmatpush1.msra.mxu0 %v10548
    %10550 = vmatprep.subr.mxu0 0.0
    %v10551 = vand.u32 %v10146, 4294901760
    %10552 = vmatpush1.msra.mxu0 %v10551
    %10553 = vmatprep.subr.mxu0 0.0
    %v10554 = vand.u32 %v10147, 4294901760
    %10555 = vmatpush1.msra.mxu0 %v10554
    %10556 = vmatprep.subr.mxu0 0.0
    %v10557 = vand.u32 %v10148, 4294901760
    %10558 = vmatpush1.msra.mxu0 %v10557
    %10559 = vmatprep.subr.mxu0 0.0
    %v10560 = vand.u32 %v10149, 4294901760
    %10561 = vmatpush1.msra.mxu0 %v10560
    %10562 = vmatprep.subr.mxu0 0.0
    %v10563 = vand.u32 %v10150, 4294901760
    %10564 = vmatpush1.msra.mxu0 %v10563
    %10565 = vmatprep.subr.mxu0 0.0
    %v10566 = vand.u32 %v10151, 4294901760
    %10567 = vmatpush1.msra.mxu0 %v10566
    %10568 = vmatprep.subr.mxu0 0.0
    %v10569 = vand.u32 %v10152, 4294901760
    %10570 = vmatpush1.msra.mxu0 %v10569
    %10571 = vmatprep.subr.mxu0 0.0
    %v10572 = vand.u32 %v10153, 4294901760
    %10573 = vmatpush1.msra.mxu0 %v10572
    %10574 = vmatprep.subr.mxu0 0.0
    %10575 = vmatpush1.msra.mxu0 0.0
    %10576 = vmatprep.subr.mxu0 0.0
    %10577 = vmatpush1.msra.mxu0 0.0
    %10578 = vmatprep.subr.mxu0 0.0
    %10579 = vmatpush1.msra.mxu0 0.0
    %10580 = vmatprep.subr.mxu0 0.0
    %10581 = vmatpush1.msra.mxu0 0.0
    %10582 = vmatprep.subr.mxu0 0.0
    %10583 = vmatpush1.msra.mxu0 0.0
    %10584 = vmatprep.subr.mxu0 0.0
    %10585 = vmatpush1.msra.mxu0 0.0
    %10586 = vmatprep.subr.mxu0 0.0
    %10587 = vmatpush1.msra.mxu0 0.0
    %10588 = vmatprep.subr.mxu0 0.0
    %10589 = vmatpush1.msra.mxu0 0.0
    %10590 = vmatprep.subr.mxu0 0.0
    %10591 = vmatpush1.msra.mxu0 0.0
    %10592 = vmatprep.subr.mxu0 0.0
    %10593 = vmatpush1.msra.mxu0 0.0
    %10594 = vmatprep.subr.mxu0 0.0
    %10595 = vmatpush1.msra.mxu0 0.0
    %10596 = vmatprep.subr.mxu0 0.0
    %10597 = vmatpush1.msra.mxu0 0.0
    %10598 = vmatprep.subr.mxu0 0.0
    %10599 = vmatpush1.msra.mxu0 0.0
    %10600 = vmatprep.subr.mxu0 0.0
    %10601 = vmatpush1.msra.mxu0 0.0
    %10602 = vmatprep.subr.mxu0 0.0
    %10603 = vmatpush1.msra.mxu0 0.0
    %10604 = vmatprep.subr.mxu0 0.0
    %10605 = vmatpush1.msra.mxu0 0.0
    %10606 = vmatprep.mubr.f32.mxu0 0.0
    %v10607 = vand.u32 %v10135, 4294901760
    %v10608 = vsub.f32 %v10135, %v10607
    %v10609 = vand.u32 %v10608, 4294901760
    %10610 = vmatmul.mubr.f32.gmra.mrb[0].mxu0 %v10609
    %v10611 = vpop.f32.mrb[0].mxu0
    %v10612 = vadd.f32 %v10516, %v10611
    %v10613 = vpop.f32.mrb[0].mxu0
    %10614 = vmatprep.mubr.f32.mxu0 0.0
    %v10615 = vand.u32 %v10136, 4294901760
    %v10616 = vsub.f32 %v10136, %v10615
    %v10617 = vand.u32 %v10616, 4294901760
    %10618 = vmatmul.mubr.f32.gmra.mrb[0].mxu0 %v10617
    %v10619 = vpop.f32.mrb[0].mxu0
    %v10620 = vadd.f32 %v10523, %v10619
    %v10621 = vpop.f32.mrb[0].mxu0
    %10622 = vdwg.mxu0
    %10623 = vmatprep.subr.mxu0 0.0
    %v10624 = vand.u32 %v10138, 4294901760
    %v10625 = vsub.f32 %v10138, %v10624
    %v10626 = vand.u32 %v10625, 4294901760
    %10627 = vmatpush1.msra.mxu0 %v10626
    %10628 = vmatprep.subr.mxu0 0.0
    %v10629 = vand.u32 %v10139, 4294901760
    %v10630 = vsub.f32 %v10139, %v10629
    %v10631 = vand.u32 %v10630, 4294901760
    %10632 = vmatpush1.msra.mxu0 %v10631
    %10633 = vmatprep.subr.mxu0 0.0
    %v10634 = vand.u32 %v10140, 4294901760
    %v10635 = vsub.f32 %v10140, %v10634
    %v10636 = vand.u32 %v10635, 4294901760
    %10637 = vmatpush1.msra.mxu0 %v10636
    %10638 = vmatprep.subr.mxu0 0.0
    %v10639 = vand.u32 %v10141, 4294901760
    %v10640 = vsub.f32 %v10141, %v10639
    %v10641 = vand.u32 %v10640, 4294901760
    %10642 = vmatpush1.msra.mxu0 %v10641
    %10643 = vmatprep.subr.mxu0 0.0
    %v10644 = vand.u32 %v10142, 4294901760
    %v10645 = vsub.f32 %v10142, %v10644
    %v10646 = vand.u32 %v10645, 4294901760
    %10647 = vmatpush1.msra.mxu0 %v10646
    %10648 = vmatprep.subr.mxu0 0.0
    %v10649 = vand.u32 %v10143, 4294901760
    %v10650 = vsub.f32 %v10143, %v10649
    %v10651 = vand.u32 %v10650, 4294901760
    %10652 = vmatpush1.msra.mxu0 %v10651
    %10653 = vmatprep.subr.mxu0 0.0
    %v10654 = vand.u32 %v10144, 4294901760
    %v10655 = vsub.f32 %v10144, %v10654
    %v10656 = vand.u32 %v10655, 4294901760
    %10657 = vmatpush1.msra.mxu0 %v10656
    %10658 = vmatprep.subr.mxu0 0.0
    %v10659 = vand.u32 %v10145, 4294901760
    %v10660 = vsub.f32 %v10145, %v10659
    %v10661 = vand.u32 %v10660, 4294901760
    %10662 = vmatpush1.msra.mxu0 %v10661
    %10663 = vmatprep.subr.mxu0 0.0
    %v10664 = vand.u32 %v10146, 4294901760
    %v10665 = vsub.f32 %v10146, %v10664
    %v10666 = vand.u32 %v10665, 4294901760
    %10667 = vmatpush1.msra.mxu0 %v10666
    %10668 = vmatprep.subr.mxu0 0.0
    %v10669 = vand.u32 %v10147, 4294901760
    %v10670 = vsub.f32 %v10147, %v10669
    %v10671 = vand.u32 %v10670, 4294901760
    %10672 = vmatpush1.msra.mxu0 %v10671
    %10673 = vmatprep.subr.mxu0 0.0
    %v10674 = vand.u32 %v10148, 4294901760
    %v10675 = vsub.f32 %v10148, %v10674
    %v10676 = vand.u32 %v10675, 4294901760
    %10677 = vmatpush1.msra.mxu0 %v10676
    %10678 = vmatprep.subr.mxu0 0.0
    %v10679 = vand.u32 %v10149, 4294901760
    %v10680 = vsub.f32 %v10149, %v10679
    %v10681 = vand.u32 %v10680, 4294901760
    %10682 = vmatpush1.msra.mxu0 %v10681
    %10683 = vmatprep.subr.mxu0 0.0
    %v10684 = vand.u32 %v10150, 4294901760
    %v10685 = vsub.f32 %v10150, %v10684
    %v10686 = vand.u32 %v10685, 4294901760
    %10687 = vmatpush1.msra.mxu0 %v10686
    %10688 = vmatprep.subr.mxu0 0.0
    %v10689 = vand.u32 %v10151, 4294901760
    %v10690 = vsub.f32 %v10151, %v10689
    %v10691 = vand.u32 %v10690, 4294901760
    %10692 = vmatpush1.msra.mxu0 %v10691
    %10693 = vmatprep.subr.mxu0 0.0
    %v10694 = vand.u32 %v10152, 4294901760
    %v10695 = vsub.f32 %v10152, %v10694
    %v10696 = vand.u32 %v10695, 4294901760
    %10697 = vmatpush1.msra.mxu0 %v10696
    %10698 = vmatprep.subr.mxu0 0.0
    %v10699 = vand.u32 %v10153, 4294901760
    %v10700 = vsub.f32 %v10153, %v10699
    %v10701 = vand.u32 %v10700, 4294901760
    %10702 = vmatpush1.msra.mxu0 %v10701
    %10703 = vmatprep.subr.mxu0 0.0
    %10704 = vmatpush1.msra.mxu0 0.0
    %10705 = vmatprep.subr.mxu0 0.0
    %10706 = vmatpush1.msra.mxu0 0.0
    %10707 = vmatprep.subr.mxu0 0.0
    %10708 = vmatpush1.msra.mxu0 0.0
    %10709 = vmatprep.subr.mxu0 0.0
    %10710 = vmatpush1.msra.mxu0 0.0
    %10711 = vmatprep.subr.mxu0 0.0
    %10712 = vmatpush1.msra.mxu0 0.0
    %10713 = vmatprep.subr.mxu0 0.0
    %10714 = vmatpush1.msra.mxu0 0.0
    %10715 = vmatprep.subr.mxu0 0.0
    %10716 = vmatpush1.msra.mxu0 0.0
    %10717 = vmatprep.subr.mxu0 0.0
    %10718 = vmatpush1.msra.mxu0 0.0
    %10719 = vmatprep.subr.mxu0 0.0
    %10720 = vmatpush1.msra.mxu0 0.0
    %10721 = vmatprep.subr.mxu0 0.0
    %10722 = vmatpush1.msra.mxu0 0.0
    %10723 = vmatprep.subr.mxu0 0.0
    %10724 = vmatpush1.msra.mxu0 0.0
    %10725 = vmatprep.subr.mxu0 0.0
    %10726 = vmatpush1.msra.mxu0 0.0
    %10727 = vmatprep.subr.mxu0 0.0
    %10728 = vmatpush1.msra.mxu0 0.0
    %10729 = vmatprep.subr.mxu0 0.0
    %10730 = vmatpush1.msra.mxu0 0.0
    %10731 = vmatprep.subr.mxu0 0.0
    %10732 = vmatpush1.msra.mxu0 0.0
    %10733 = vmatprep.subr.mxu0 0.0
    %10734 = vmatpush1.msra.mxu0 0.0
    %10735 = vmatprep.mubr.f32.mxu0 0.0
    %v10736 = vand.u32 %v10135, 4294901760
    %10737 = vmatmul.mubr.f32.gmra.mrb[0].mxu0 %v10736
    %v10738 = vpop.f32.mrb[0].mxu0
    %v10739 = vadd.f32 %v10612, %v10738
    %v10740 = vpop.f32.mrb[0].mxu0
    %10741 = vmatprep.mubr.f32.mxu0 0.0
    %v10742 = vand.u32 %v10136, 4294901760
    %10743 = vmatmul.mubr.f32.gmra.mrb[0].mxu0 %v10742
    %v10744 = vpop.f32.mrb[0].mxu0
    %v10745 = vadd.f32 %v10620, %v10744
    %v10746 = vpop.f32.mrb[0].mxu0
    %10747 = vdwg.mxu0
    %10748 = vmatprep.subr.mxu0 0.0
    %v10749 = vand.u32 %v10138, 4294901760
    %10750 = vmatpush1.msra.mxu0 %v10749
    %10751 = vmatprep.subr.mxu0 0.0
    %v10752 = vand.u32 %v10139, 4294901760
    %10753 = vmatpush1.msra.mxu0 %v10752
    %10754 = vmatprep.subr.mxu0 0.0
    %v10755 = vand.u32 %v10140, 4294901760
    %10756 = vmatpush1.msra.mxu0 %v10755
    %10757 = vmatprep.subr.mxu0 0.0
    %v10758 = vand.u32 %v10141, 4294901760
    %10759 = vmatpush1.msra.mxu0 %v10758
    %10760 = vmatprep.subr.mxu0 0.0
    %v10761 = vand.u32 %v10142, 4294901760
    %10762 = vmatpush1.msra.mxu0 %v10761
    %10763 = vmatprep.subr.mxu0 0.0
    %v10764 = vand.u32 %v10143, 4294901760
    %10765 = vmatpush1.msra.mxu0 %v10764
    %10766 = vmatprep.subr.mxu0 0.0
    %v10767 = vand.u32 %v10144, 4294901760
    %10768 = vmatpush1.msra.mxu0 %v10767
    %10769 = vmatprep.subr.mxu0 0.0
    %v10770 = vand.u32 %v10145, 4294901760
    %10771 = vmatpush1.msra.mxu0 %v10770
    %10772 = vmatprep.subr.mxu0 0.0
    %v10773 = vand.u32 %v10146, 4294901760
    %10774 = vmatpush1.msra.mxu0 %v10773
    %10775 = vmatprep.subr.mxu0 0.0
    %v10776 = vand.u32 %v10147, 4294901760
    %10777 = vmatpush1.msra.mxu0 %v10776
    %10778 = vmatprep.subr.mxu0 0.0
    %v10779 = vand.u32 %v10148, 4294901760
    %10780 = vmatpush1.msra.mxu0 %v10779
    %10781 = vmatprep.subr.mxu0 0.0
    %v10782 = vand.u32 %v10149, 4294901760
    %10783 = vmatpush1.msra.mxu0 %v10782
    %10784 = vmatprep.subr.mxu0 0.0
    %v10785 = vand.u32 %v10150, 4294901760
    %10786 = vmatpush1.msra.mxu0 %v10785
    %10787 = vmatprep.subr.mxu0 0.0
    %v10788 = vand.u32 %v10151, 4294901760
    %10789 = vmatpush1.msra.mxu0 %v10788
    %10790 = vmatprep.subr.mxu0 0.0
    %v10791 = vand.u32 %v10152, 4294901760
    %10792 = vmatpush1.msra.mxu0 %v10791
    %10793 = vmatprep.subr.mxu0 0.0
    %v10794 = vand.u32 %v10153, 4294901760
    %10795 = vmatpush1.msra.mxu0 %v10794
    %10796 = vmatprep.subr.mxu0 0.0
    %10797 = vmatpush1.msra.mxu0 0.0
    %10798 = vmatprep.subr.mxu0 0.0
    %10799 = vmatpush1.msra.mxu0 0.0
    %10800 = vmatprep.subr.mxu0 0.0
    %10801 = vmatpush1.msra.mxu0 0.0
    %10802 = vmatprep.subr.mxu0 0.0
    %10803 = vmatpush1.msra.mxu0 0.0
    %10804 = vmatprep.subr.mxu0 0.0
    %10805 = vmatpush1.msra.mxu0 0.0
    %10806 = vmatprep.subr.mxu0 0.0
    %10807 = vmatpush1.msra.mxu0 0.0
    %10808 = vmatprep.subr.mxu0 0.0
    %10809 = vmatpush1.msra.mxu0 0.0
    %10810 = vmatprep.subr.mxu0 0.0
    %10811 = vmatpush1.msra.mxu0 0.0
    %10812 = vmatprep.subr.mxu0 0.0
    %10813 = vmatpush1.msra.mxu0 0.0
    %10814 = vmatprep.subr.mxu0 0.0
    %10815 = vmatpush1.msra.mxu0 0.0
    %10816 = vmatprep.subr.mxu0 0.0
    %10817 = vmatpush1.msra.mxu0 0.0
    %10818 = vmatprep.subr.mxu0 0.0
    %10819 = vmatpush1.msra.mxu0 0.0
    %10820 = vmatprep.subr.mxu0 0.0
    %10821 = vmatpush1.msra.mxu0 0.0
    %10822 = vmatprep.subr.mxu0 0.0
    %10823 = vmatpush1.msra.mxu0 0.0
    %10824 = vmatprep.subr.mxu0 0.0
    %10825 = vmatpush1.msra.mxu0 0.0
    %10826 = vmatprep.subr.mxu0 0.0
    %10827 = vmatpush1.msra.mxu0 0.0
    %10828 = vmatprep.mubr.f32.mxu0 0.0
    %v10829 = vand.u32 %v10135, 4294901760
    %10830 = vmatmul.mubr.f32.gmra.mrb[0].mxu0 %v10829
    %v10831 = vpop.f32.mrb[0].mxu0
    %v10832 = vadd.f32 %v10739, %v10831
    %v10833 = vpop.f32.mrb[0].mxu0
    %10834 = vmatprep.mubr.f32.mxu0 0.0
    %v10835 = vand.u32 %v10136, 4294901760
    %10836 = vmatmul.mubr.f32.gmra.mrb[0].mxu0 %v10835
    %v10837 = vpop.f32.mrb[0].mxu0
    %v10838 = vadd.f32 %v10745, %v10837
    %v10839 = vpop.f32.mrb[0].mxu0
    %10840 = vdwg.mxu0
    %10841 = vst [vmem:[#allocation5] sm:$0xff] %v10832
    %10842 = vst [vmem:[#allocation5 + $0x8] sm:$0xff] %v10838
    // Predicated region
    $region18: #{tpu_custom_call.1} parent=1 // pred_check
      _
    $region19: #{tpu_custom_call.1} parent=1 // pred_check_branch
      %10844 = sbr.rel (0) target = $region21
    $region20: #{tpu_custom_call.1} parent=1 // pred_region
      %s10846 = ssub.s32 256, 256
      %10847 = vsyncadd [#allocation4], %s10846
      %s10848 = sshll.u32 [#allocation5], 4
      %s10849 = int_to_ptr.vmem [resolvable:$true] %s10848
      %10854 = dma.vmem_to_hbm [thread:$0]  %s10849, 256, %s3, [#allocation4], 128, 128, 8
    $region21: #{tpu_custom_call.1} parent=1 // pred_fallthru
      _
    // Predicated region
    $region22: #{tpu_custom_call.1} parent=1 // pred_check
      _
    $region23: #{tpu_custom_call.1} parent=1 // pred_check_branch
      %10856 = sbr.rel (0) target = $region25
    $region24: #{tpu_custom_call.1} parent=1 // pred_region
      %10857 = dma.done [#allocation4], 256
    $region25: #{tpu_custom_call.1} parent=1 // pred_fallthru
      _
    %10858 = vsyncpa [#allocation3], 1
    %10859 = vsyncpa [#allocation4], 1

</llo_original>
